<compile_context>
chip_gen: v6e
topology: v6e:2x2x1
jax: 0.10.0
libtpu: 0.0.40
codegen_flags: <defaults>
</compile_context>

<pallas_src>
import functools

import jax
import jax.numpy as jnp
from jax.experimental import pallas as pl
from jax.experimental.pallas import tpu as pltpu


class settings:
    CODE_LEN = 512
    event = 4
    BATCH_SIZE = 8


_VMEM = pl.BlockSpec(memory_space=pltpu.MemorySpace.VMEM)
_ANY = pl.BlockSpec(memory_space=pl.ANY)

# Static offsets into the packed bias slab (all 128-lane aligned).
_B_I1, _B_I2, _B_I3 = 0, 1024, 1536          # VIB_I: lin1(1024), lin2(512), lin3(512)
_B_T1, _B_T2, _B_T3 = 2048, 3072, 3584       # VIB_T
_B_C1, _B_C2, _B_C3 = 4096, 4224, 4352       # classifier_corre (each padded to 128)
_B_ATT = 4480                                # attention bias (lane 0 of last 128)
_BIAS_W = 4608


# ---------------------------------------------------------------------------
# Fused kernel: the whole forward.  Rows [:B] clean; [B:] noisy (train only).
# Big tower weights arrive via manual async DMA overlapped with compute.
# ---------------------------------------------------------------------------
def _fused_forward_kernel(img_ref, txt_ref, bias_ref, w_att_ref,
                          wc1_ref, wc2_ref, wc3_ref,
                          wi1_hbm, wi2_hbm, wi3_hbm, wt1_hbm, wt2_hbm, wt3_hbm,
                          head_ref, fa_ref, ci_ref, ct_ref,
                          wi1_v, wi2_v, wi3_v, wt1_v, wt2_v, wt3_v, sem,
                          *, batch, with_noise):
    hbm_ws = (wi1_hbm, wi2_hbm, wi3_hbm, wt1_hbm, wt2_hbm, wt3_hbm)
    vmem_ws = (wi1_v, wi2_v, wi3_v, wt1_v, wt2_v, wt3_v)
    copies = [pltpu.make_async_copy(h, v, sem.at[i])
              for i, (h, v) in enumerate(zip(hbm_ws, vmem_ws))]
    for cp in copies:          # issue every weight DMA up front
        cp.start()

    def bias(off, n):
        return bias_ref[:, off:off + n]            # (1, n) f32, static slice

    def mm(x, w, b, act=None):
        # bf16 MXU matmul with f32 accumulation; bias/activation on the VPU.
        y = jnp.dot(x.astype(jnp.bfloat16), w,
                    preferred_element_type=jnp.float32) + b
        if act == "relu":
            y = jnp.maximum(y, 0.0)
        return y

    # ---- VIB_I : (fc @ lin1 folded, +BN) -> ReLU -> Lin+BN+ReLU -> Lin ----
    x = img_ref[...]                               # (M, 512)
    copies[0].wait()
    h = mm(x, wi1_v[...], bias(_B_I1, 1024), "relu")
    copies[1].wait()
    h = mm(h, wi2_v[...], bias(_B_I2, 512), "relu")
    copies[2].wait()
    code_i = mm(h, wi3_v[...], bias(_B_I3, 512))   # (M, 512)

    # ---- VIB_T ----
    x = txt_ref[...]                               # (M, 768)
    copies[3].wait()
    h = mm(x, wt1_v[...], bias(_B_T1, 1024), "relu")
    copies[4].wait()
    h = mm(h, wt2_v[...], bias(_B_T2, 512), "relu")
    copies[5].wait()
    code_t = mm(h, wt3_v[...], bias(_B_T3, 512))   # (M, 512)

    # ---- Attention_ast (Linear(512,1)+sigmoid) as a VPU lane-reduction ----
    wa = w_att_ref[...]                            # (1, 512) f32
    ba = bias_ref[:, _B_ATT:_B_ATT + 1]            # (1, 1)   f32
    a1 = jax.nn.sigmoid(jnp.sum(code_i * wa, axis=-1, keepdims=True) + ba)
    a2 = jax.nn.sigmoid(jnp.sum(code_t * wa, axis=-1, keepdims=True) + ba)
    m = jnp.maximum(a1, a2)                        # 2-way softmax over (a1,a2)
    e1 = jnp.exp(a1 - m)
    e2 = jnp.exp(a2 - m)
    den = e1 + e2
    f_a = (e1 / den) * code_i + (e2 / den) * code_t   # (M, 512)

    # ---- fcModal.classifier_corre (BN folded) -> label_pred ----
    h = mm(f_a, wc1_ref[...], bias(_B_C1, 128), "relu")
    h = mm(h, wc2_ref[...], bias(_B_C2, 128), "relu")
    lp = mm(h, wc3_ref[...], bias(_B_C3, 128))     # (M, 128); lanes >= 2 exactly 0
    # NOTE: the domain_classifier (event_pred) is dead code in the torch
    # forward (never returned / never used) and is eliminated.

    if with_noise:
        # loss_mse = mse(F.normalize(label_pred), F.normalize(label_pred3))
        def l2norm_rows(v):
            n = jnp.sqrt(jnp.sum(v * v, axis=-1, keepdims=True))
            return v / jnp.maximum(n, 1e-12)

        diff = l2norm_rows(lp[:batch]) - l2norm_rows(lp[batch:])
        # padded lanes are exactly zero in both branches -> contribute 0.
        loss_mse = jnp.sum(diff * diff) * (1.0 / (batch * 2))
        lane_h = jax.lax.broadcasted_iota(jnp.int32, (batch, 128), 1)
        # lanes 0..1: label_pred; lane 2: loss_mse.  Relies on the zero padding
        # of w_cc3/b_cc3 making lane 2 of lp exactly 0 (true for zero pads).
        head_ref[...] = lp[:batch] + jnp.where(lane_h == 2, loss_mse, 0.0)
    else:
        head_ref[...] = lp[:batch]

    fa_ref[...] = f_a[:batch]
    ci_ref[...] = code_i[:batch]
    ct_ref[...] = code_t[:batch]


# ---------------------------------------------------------------------------
# Parameter construction (PyTorch-style, f32, true shapes)
# ---------------------------------------------------------------------------
def init_linear(key, din, dout):
    kw, kb = jax.random.split(key)
    bound = 1.0 / (din ** 0.5)
    return {
        "w": jax.random.uniform(kw, (din, dout), jnp.float32, -bound, bound),
        "b": jax.random.uniform(kb, (dout,), jnp.float32, -bound, bound),
    }


def init_bn(dim):
    return {
        "gamma": jnp.ones((dim,), jnp.float32),
        "beta": jnp.zeros((dim,), jnp.float32),
        "mean": jnp.zeros((dim,), jnp.float32),
        "var": jnp.ones((dim,), jnp.float32),
    }


def init_channel_compress(key, in_ch, out_ch):
    k1, k2, k3 = jax.random.split(key, 3)
    return {
        "lin1": init_linear(k1, in_ch, 1000), "bn1": init_bn(1000),
        "lin2": init_linear(k2, 1000, 500), "bn2": init_bn(500),
        "lin3": init_linear(k3, 500, out_ch),
    }


def init_vib(key, fc_in):
    kfc, kcc = jax.random.split(key)
    return {
        "fc": init_linear(kfc, fc_in, 512),
        "bottleneck": init_channel_compress(kcc, 512, 512),
        # VIB classifier head is computed but never returned in torch -> dead code.
    }


def init_fcmodal(key):
    k1, k2, k3, k4, k5 = jax.random.split(key, 5)
    h = 64
    return {
        "cc_lin1": init_linear(k1, settings.CODE_LEN, h), "cc_bn1": init_bn(h),
        "cc_lin2": init_linear(k2, h, h), "cc_bn2": init_bn(h),
        "cc_lin3": init_linear(k3, h, 2),
        # domain_classifier / fc_encode: initialized for parity, unused in forward.
        "dom_lin1": init_linear(k4, settings.CODE_LEN, 256),
        "dom_lin2": init_linear(k5, 256, settings.event),
    }


def init_params(key):
    ki, kt, ka, kf = jax.random.split(key, 4)
    return {
        "vib_i": init_vib(ki, 512),
        "vib_t": init_vib(kt, 768),
        "att": init_linear(ka, settings.CODE_LEN, 1),
        "fcmodal": init_fcmodal(kf),
    }


# ---------------------------------------------------------------------------
# One-time kernel-parameter preparation: fold eval-BN, fold fc into lin1,
# pad to lane multiples, cast weights to bf16, pack biases into one slab.
# ---------------------------------------------------------------------------
def _fold_bn(lin, bn, eps=1e-5):
    scale = bn["gamma"] / jnp.sqrt(bn["var"] + eps)
    w = lin["w"] * scale[None, :]
    b = (lin["b"] - bn["mean"]) * scale + bn["beta"]
    return w, b


def _pad2(w, rows, cols):
    return jnp.pad(w, ((0, rows - w.shape[0]), (0, cols - w.shape[1])))


def _pad1(b, n):
    return jnp.pad(b, (0, n - b.shape[0]))


def _prep_tower(vib):
    cc = vib["bottleneck"]
    # Fold BN1 into lin1, then fold the VIB fc (no nonlinearity in between).
    w1, b1 = _fold_bn(cc["lin1"], cc["bn1"])          # (512,1000),(1000,)
    wA = vib["fc"]["w"] @ w1                           # (fc_in,1000)
    bA = vib["fc"]["b"] @ w1 + b1                      # (1000,)
    wA = _pad2(wA, wA.shape[0], 1024)
    bA = _pad1(bA, 1024)

    w2, b2 = _fold_bn(cc["lin2"], cc["bn2"])          # (1000,500),(500,)
    w2 = _pad2(w2, 1024, 512)
    b2 = _pad1(b2, 512)

    w3 = _pad2(cc["lin3"]["w"], 512, 512)             # (500,512) -> (512,512)
    b3 = cc["lin3"]["b"]                               # (512,)
    return (wA, w2, w3), (bA, b2, b3)


def prepare_kernel_params(params):
    (wi1, wi2, wi3), (bi1, bi2, bi3) = _prep_tower(params["vib_i"])
    (wt1, wt2, wt3), (bt1, bt2, bt3) = _prep_tower(params["vib_t"])

    fm = params["fcmodal"]
    wc1, bc1 = _fold_bn(fm["cc_lin1"], fm["cc_bn1"])
    wc1 = _pad2(wc1, 512, 128)
    bc1 = _pad1(bc1, 128)
    wc2, bc2 = _fold_bn(fm["cc_lin2"], fm["cc_bn2"])
    wc2 = _pad2(wc2, 128, 128)
    bc2 = _pad1(bc2, 128)
    wc3 = _pad2(fm["cc_lin3"]["w"], 128, 128)
    bc3 = _pad1(fm["cc_lin3"]["b"], 128)

    att_slot = jnp.zeros((128,), jnp.float32).at[0].set(params["att"]["b"][0])
    bias_slab = jnp.concatenate(
        [bi1, bi2, bi3, bt1, bt2, bt3, bc1, bc2, bc3, att_slot]
    ).reshape(1, _BIAS_W).astype(jnp.float32)

    bf16 = lambda w: w.astype(jnp.bfloat16)
    return (
        bias_slab,
        params["att"]["w"].reshape(1, -1).astype(jnp.float32),   # (1,512)
        bf16(wc1), bf16(wc2), bf16(wc3),
        bf16(wi1), bf16(wi2), bf16(wi3),
        bf16(wt1), bf16(wt2), bf16(wt3),
    )


# ---------------------------------------------------------------------------
# Forward
# ---------------------------------------------------------------------------
@functools.partial(jax.jit, static_argnames=("step",))
def teacher_model2_forward(kernel_args, img, txt, label, event, noise_key,
                           step="test"):
    del label, event  # only used by the (unimplemented) torch 'train' losses
    B = img.shape[0]
    with_noise = (step == "train")

    if with_noise:
        noise_std = 0.1
        k1, k2 = jax.random.split(noise_key)
        img3 = (img + noise_std * jax.random.normal(k1, img.shape)).astype(jnp.float32)
        txt3 = (txt + noise_std * jax.random.normal(k2, txt.shape)).astype(jnp.float32)
        img_all = jnp.concatenate([img.astype(jnp.float32), img3], axis=0)   # (2B,512)
        txt_all = jnp.concatenate([txt.astype(jnp.float32), txt3], axis=0)   # (2B,768)
    else:
        # Noisy branch only feeds loss_mse, which is dead when step != 'train'.
        img_all = img.astype(jnp.float32)
        txt_all = txt.astype(jnp.float32)

    kern = functools.partial(_fused_forward_kernel, batch=B,
                             with_noise=with_noise)

    in_specs = [_VMEM] * 7 + [_ANY] * 6   # img, txt, biases, att, 3 head ws | 6 tower ws

    head, F_A, code_I, code_T = pl.pallas_call(
        kern,
        out_shape=(
            jax.ShapeDtypeStruct((B, 128), jnp.float32),               # label_pred (+loss)
            jax.ShapeDtypeStruct((B, settings.CODE_LEN), jnp.float32), # F_A
            jax.ShapeDtypeStruct((B, 512), jnp.float32),               # code_I
            jax.ShapeDtypeStruct((B, 512), jnp.float32),               # code_T
        ),
        in_specs=in_specs,
        out_specs=(_VMEM,) * 4,
        scratch_shapes=[
            pltpu.VMEM((512, 1024), jnp.bfloat16),    # VIB_I lin1 (fc folded)
            pltpu.VMEM((1024, 512), jnp.bfloat16),    # VIB_I lin2
            pltpu.VMEM((512, 512), jnp.bfloat16),     # VIB_I lin3
            pltpu.VMEM((768, 1024), jnp.bfloat16),    # VIB_T lin1 (fc folded)
            pltpu.VMEM((1024, 512), jnp.bfloat16),    # VIB_T lin2
            pltpu.VMEM((512, 512), jnp.bfloat16),     # VIB_T lin3
            pltpu.SemaphoreType.DMA((6,)),
        ],
        compiler_params=pltpu.CompilerParams(vmem_limit_bytes=16 * 1024 * 1024),
    )(img_all, txt_all, *kernel_args)

    label_pred = head[:, :2]
    if step == "train":
        loss_mse = head[0, 2]
        # TODO(synk): train-mode KLDivLoss + per-sample event-conditioned CE
        # python loop are data-dependent host control flow; not translated.
        loss = 0.1 * loss_mse
    else:
        loss = jnp.float32(0.0)
    return loss, label_pred, F_A, code_I, code_T


# ---------------------------------------------------------------------------
# Pure-JAX f32 eval-mode reference (for a tolerance check against the kernel)
# ---------------------------------------------------------------------------
def _reference_forward(params, img, txt):
    def bn(x, b):
        return (x - b["mean"]) / jnp.sqrt(b["var"] + 1e-5) * b["gamma"] + b["beta"]

    def lin(x, l):
        return x @ l["w"] + l["b"]

    def tower(v, x):
        x = lin(x, v["fc"])
        cc = v["bottleneck"]
        h = jax.nn.relu(bn(lin(x, cc["lin1"]), cc["bn1"]))
        h = jax.nn.relu(bn(lin(h, cc["lin2"]), cc["bn2"]))
        return lin(h, cc["lin3"])

    code_i = tower(params["vib_i"], img)
    code_t = tower(params["vib_t"], txt)
    a1 = jax.nn.sigmoid(lin(code_i, params["att"]))
    a2 = jax.nn.sigmoid(lin(code_t, params["att"]))
    att = jax.nn.softmax(jnp.concatenate([a1, a2], axis=1), axis=1)
    f_a = att[:, :1] * code_i + att[:, 1:] * code_t
    fm = params["fcmodal"]
    h = jax.nn.relu(bn(lin(f_a, fm["cc_lin1"]), fm["cc_bn1"]))
    h = jax.nn.relu(bn(lin(h, fm["cc_lin2"]), fm["cc_bn2"]))
    lp = lin(h, fm["cc_lin3"])
    return lp, f_a, code_i, code_t


# ---------------------------------------------------------------------------
if __name__ == "__main__":
    key = jax.random.PRNGKey(0)
    kp, kimg, ktxt, knoise = jax.random.split(key, 4)

    params = init_params(kp)
    kernel_args = prepare_kernel_params(params)   # fold BN+fc, pad, pack, cast

    B = settings.BATCH_SIZE
    img = jax.random.normal(kimg, (B, 512), jnp.float32)
    txt = jax.random.normal(ktxt, (B, 768), jnp.float32)
    label = jnp.zeros((B,), jnp.int32)
    event = jnp.array([0, 1, 2, 3, 0, 1, 2, 3], jnp.int32)

    out = teacher_model2_forward(kernel_args, img, txt, label, event, knoise,
                                 step="test")
    out = jax.block_until_ready(out)
    loss, label_pred, F_A, code_I, code_T = out

    assert loss.shape == ()
    assert label_pred.shape == (B, 2)
    assert F_A.shape == (B, settings.CODE_LEN)
    assert code_I.shape == (B, 512) and code_T.shape == (B, 512)
    assert bool(jnp.isfinite(label_pred).all())
    assert bool(jnp.isfinite(F_A).all())
    assert bool(jnp.isfinite(code_I).all()) and bool(jnp.isfinite(code_T).all())

    # Tolerance check vs. pure-JAX f32 reference (bf16 weights -> small drift).
    ref_lp, ref_fa, ref_ci, ref_ct = _reference_forward(params, img, txt)

    def _check(name, got, want, tol=0.05):
        err = float(jnp.max(jnp.abs(got - want)))
        scale = float(jnp.max(jnp.abs(want))) + 1.0
        assert err <= tol * scale, f"{name}: max err {err:.4f} (scale {scale:.2f})"

    _check("label_pred", label_pred, ref_lp)
    _check("F_A", F_A, ref_fa)
    _check("code_I", code_I, ref_ci)
    _check("code_T", code_T, ref_ct)

    print("KERNEL_OK")
</pallas_src>

<mosaic_0001>
module attributes {stable_mosaic.version = 11 : i64} {
  func.func @_fused_forward_kernel(%arg0: memref<8x512xf32, #tpu.memory_space<vmem>>, %arg1: memref<8x768xf32, #tpu.memory_space<vmem>>, %arg2: memref<1x4608xf32, #tpu.memory_space<vmem>>, %arg3: memref<1x512xf32, #tpu.memory_space<vmem>>, %arg4: memref<512x128xbf16, #tpu.memory_space<vmem>>, %arg5: memref<128x128xbf16, #tpu.memory_space<vmem>>, %arg6: memref<128x128xbf16, #tpu.memory_space<vmem>>, %arg7: memref<512x1024xbf16, #tpu.memory_space<any>>, %arg8: memref<1024x512xbf16, #tpu.memory_space<any>>, %arg9: memref<512x512xbf16, #tpu.memory_space<any>>, %arg10: memref<768x1024xbf16, #tpu.memory_space<any>>, %arg11: memref<1024x512xbf16, #tpu.memory_space<any>>, %arg12: memref<512x512xbf16, #tpu.memory_space<any>>, %arg13: memref<8x128xf32, #tpu.memory_space<vmem>>, %arg14: memref<8x512xf32, #tpu.memory_space<vmem>>, %arg15: memref<8x512xf32, #tpu.memory_space<vmem>>, %arg16: memref<8x512xf32, #tpu.memory_space<vmem>>, %arg17: memref<512x1024xbf16, #tpu.memory_space<vmem>>, %arg18: memref<1024x512xbf16, #tpu.memory_space<vmem>>, %arg19: memref<512x512xbf16, #tpu.memory_space<vmem>>, %arg20: memref<768x1024xbf16, #tpu.memory_space<vmem>>, %arg21: memref<1024x512xbf16, #tpu.memory_space<vmem>>, %arg22: memref<512x512xbf16, #tpu.memory_space<vmem>>, %arg23: memref<6x!tpu.dma_semaphore, #tpu.memory_space<semaphore_mem>>) attributes {dimension_semantics = [], scalar_prefetch = 0 : i64, scratch_operands = 7 : i64, tpu.core_type = #tpu.core_type<tc>} {
    %c0_i32 = arith.constant 0 : i32
    %0 = tpu.memref_slice %arg23[%c0_i32] : memref<6x!tpu.dma_semaphore, #tpu.memory_space<semaphore_mem>> -> memref<1x!tpu.dma_semaphore, #tpu.memory_space<semaphore_mem>>
    %1 = tpu.memref_squeeze %0 : memref<1x!tpu.dma_semaphore, #tpu.memory_space<semaphore_mem>> -> memref<!tpu.dma_semaphore, #tpu.memory_space<semaphore_mem>>
    tpu.enqueue_dma source(%arg7 : memref<512x1024xbf16, #tpu.memory_space<any>>) target(%arg17 : memref<512x1024xbf16, #tpu.memory_space<vmem>>) target_semaphore(%1 : memref<!tpu.dma_semaphore, #tpu.memory_space<semaphore_mem>>)
    %c1_i32 = arith.constant 1 : i32
    %2 = tpu.memref_slice %arg23[%c1_i32] : memref<6x!tpu.dma_semaphore, #tpu.memory_space<semaphore_mem>> -> memref<1x!tpu.dma_semaphore, #tpu.memory_space<semaphore_mem>>
    %3 = tpu.memref_squeeze %2 : memref<1x!tpu.dma_semaphore, #tpu.memory_space<semaphore_mem>> -> memref<!tpu.dma_semaphore, #tpu.memory_space<semaphore_mem>>
    tpu.enqueue_dma source(%arg8 : memref<1024x512xbf16, #tpu.memory_space<any>>) target(%arg18 : memref<1024x512xbf16, #tpu.memory_space<vmem>>) target_semaphore(%3 : memref<!tpu.dma_semaphore, #tpu.memory_space<semaphore_mem>>)
    %c2_i32 = arith.constant 2 : i32
    %4 = tpu.memref_slice %arg23[%c2_i32] : memref<6x!tpu.dma_semaphore, #tpu.memory_space<semaphore_mem>> -> memref<1x!tpu.dma_semaphore, #tpu.memory_space<semaphore_mem>>
    %5 = tpu.memref_squeeze %4 : memref<1x!tpu.dma_semaphore, #tpu.memory_space<semaphore_mem>> -> memref<!tpu.dma_semaphore, #tpu.memory_space<semaphore_mem>>
    tpu.enqueue_dma source(%arg9 : memref<512x512xbf16, #tpu.memory_space<any>>) target(%arg19 : memref<512x512xbf16, #tpu.memory_space<vmem>>) target_semaphore(%5 : memref<!tpu.dma_semaphore, #tpu.memory_space<semaphore_mem>>)
    %c3_i32 = arith.constant 3 : i32
    %6 = tpu.memref_slice %arg23[%c3_i32] : memref<6x!tpu.dma_semaphore, #tpu.memory_space<semaphore_mem>> -> memref<1x!tpu.dma_semaphore, #tpu.memory_space<semaphore_mem>>
    %7 = tpu.memref_squeeze %6 : memref<1x!tpu.dma_semaphore, #tpu.memory_space<semaphore_mem>> -> memref<!tpu.dma_semaphore, #tpu.memory_space<semaphore_mem>>
    tpu.enqueue_dma source(%arg10 : memref<768x1024xbf16, #tpu.memory_space<any>>) target(%arg20 : memref<768x1024xbf16, #tpu.memory_space<vmem>>) target_semaphore(%7 : memref<!tpu.dma_semaphore, #tpu.memory_space<semaphore_mem>>)
    %c4_i32 = arith.constant 4 : i32
    %8 = tpu.memref_slice %arg23[%c4_i32] : memref<6x!tpu.dma_semaphore, #tpu.memory_space<semaphore_mem>> -> memref<1x!tpu.dma_semaphore, #tpu.memory_space<semaphore_mem>>
    %9 = tpu.memref_squeeze %8 : memref<1x!tpu.dma_semaphore, #tpu.memory_space<semaphore_mem>> -> memref<!tpu.dma_semaphore, #tpu.memory_space<semaphore_mem>>
    tpu.enqueue_dma source(%arg11 : memref<1024x512xbf16, #tpu.memory_space<any>>) target(%arg21 : memref<1024x512xbf16, #tpu.memory_space<vmem>>) target_semaphore(%9 : memref<!tpu.dma_semaphore, #tpu.memory_space<semaphore_mem>>)
    %c5_i32 = arith.constant 5 : i32
    %10 = tpu.memref_slice %arg23[%c5_i32] : memref<6x!tpu.dma_semaphore, #tpu.memory_space<semaphore_mem>> -> memref<1x!tpu.dma_semaphore, #tpu.memory_space<semaphore_mem>>
    %11 = tpu.memref_squeeze %10 : memref<1x!tpu.dma_semaphore, #tpu.memory_space<semaphore_mem>> -> memref<!tpu.dma_semaphore, #tpu.memory_space<semaphore_mem>>
    tpu.enqueue_dma source(%arg12 : memref<512x512xbf16, #tpu.memory_space<any>>) target(%arg22 : memref<512x512xbf16, #tpu.memory_space<vmem>>) target_semaphore(%11 : memref<!tpu.dma_semaphore, #tpu.memory_space<semaphore_mem>>)
    %c0 = arith.constant 0 : index
    %c0_0 = arith.constant 0 : index
    %12 = vector.load %arg0[%c0, %c0_0] : memref<8x512xf32, #tpu.memory_space<vmem>>, vector<8x512xf32>
    %c0_i32_1 = arith.constant 0 : i32
    %13 = tpu.memref_slice %arg23[%c0_i32_1] : memref<6x!tpu.dma_semaphore, #tpu.memory_space<semaphore_mem>> -> memref<1x!tpu.dma_semaphore, #tpu.memory_space<semaphore_mem>>
    %14 = tpu.memref_squeeze %13 : memref<1x!tpu.dma_semaphore, #tpu.memory_space<semaphore_mem>> -> memref<!tpu.dma_semaphore, #tpu.memory_space<semaphore_mem>>
    tpu.wait_dma2 semaphore(%14 : memref<!tpu.dma_semaphore, #tpu.memory_space<semaphore_mem>>) src(%arg7 : memref<512x1024xbf16, #tpu.memory_space<any>>) dst(%arg17 : memref<512x1024xbf16, #tpu.memory_space<vmem>>)
    %c0_2 = arith.constant 0 : index
    %c0_3 = arith.constant 0 : index
    %15 = vector.load %arg17[%c0_2, %c0_3] : memref<512x1024xbf16, #tpu.memory_space<vmem>>, vector<512x1024xbf16>
    %c0_4 = arith.constant 0 : index
    %c0_5 = arith.constant 0 : index
    %16 = vector.load %arg2[%c0_4, %c0_5] : memref<1x4608xf32, #tpu.memory_space<vmem>>, vector<1x1024xf32>
    %17 = arith.truncf %12 : vector<8x512xf32> to vector<8x512xbf16>
    %cst = arith.constant dense<0.000000e+00> : vector<8x1024xf32>
    %18 = tpu.matmul %17, %15, %cst {dimension_numbers = #tpu.dot_dimension_numbers<[1], [0], [0], [1], [0, 0, 1, 1], [], []>} : vector<8x512xbf16>, vector<512x1024xbf16>, vector<8x1024xf32> -> vector<8x1024xf32>
    %19 = vector.broadcast %16 : vector<1x1024xf32> to vector<8x1024xf32>
    %20 = arith.addf %18, %19 : vector<8x1024xf32>
    %cst_6 = arith.constant 0.000000e+00 : f32
    %21 = vector.broadcast %cst_6 : f32 to vector<8x1024xf32>
    %22 = arith.maximumf %20, %21 : vector<8x1024xf32>
    %c1_i32_7 = arith.constant 1 : i32
    %23 = tpu.memref_slice %arg23[%c1_i32_7] : memref<6x!tpu.dma_semaphore, #tpu.memory_space<semaphore_mem>> -> memref<1x!tpu.dma_semaphore, #tpu.memory_space<semaphore_mem>>
    %24 = tpu.memref_squeeze %23 : memref<1x!tpu.dma_semaphore, #tpu.memory_space<semaphore_mem>> -> memref<!tpu.dma_semaphore, #tpu.memory_space<semaphore_mem>>
    tpu.wait_dma2 semaphore(%24 : memref<!tpu.dma_semaphore, #tpu.memory_space<semaphore_mem>>) src(%arg8 : memref<1024x512xbf16, #tpu.memory_space<any>>) dst(%arg18 : memref<1024x512xbf16, #tpu.memory_space<vmem>>)
    %c0_8 = arith.constant 0 : index
    %c0_9 = arith.constant 0 : index
    %25 = vector.load %arg18[%c0_8, %c0_9] : memref<1024x512xbf16, #tpu.memory_space<vmem>>, vector<1024x512xbf16>
    %c0_10 = arith.constant 0 : index
    %c1024 = arith.constant 1024 : index
    %26 = vector.load %arg2[%c0_10, %c1024] : memref<1x4608xf32, #tpu.memory_space<vmem>>, vector<1x512xf32>
    %27 = arith.truncf %22 : vector<8x1024xf32> to vector<8x1024xbf16>
    %cst_11 = arith.constant dense<0.000000e+00> : vector<8x512xf32>
    %28 = tpu.matmul %27, %25, %cst_11 {dimension_numbers = #tpu.dot_dimension_numbers<[1], [0], [0], [1], [0, 0, 1, 1], [], []>} : vector<8x1024xbf16>, vector<1024x512xbf16>, vector<8x512xf32> -> vector<8x512xf32>
    %29 = vector.broadcast %26 : vector<1x512xf32> to vector<8x512xf32>
    %30 = arith.addf %28, %29 : vector<8x512xf32>
    %cst_12 = arith.constant 0.000000e+00 : f32
    %31 = vector.broadcast %cst_12 : f32 to vector<8x512xf32>
    %32 = arith.maximumf %30, %31 : vector<8x512xf32>
    %c2_i32_13 = arith.constant 2 : i32
    %33 = tpu.memref_slice %arg23[%c2_i32_13] : memref<6x!tpu.dma_semaphore, #tpu.memory_space<semaphore_mem>> -> memref<1x!tpu.dma_semaphore, #tpu.memory_space<semaphore_mem>>
    %34 = tpu.memref_squeeze %33 : memref<1x!tpu.dma_semaphore, #tpu.memory_space<semaphore_mem>> -> memref<!tpu.dma_semaphore, #tpu.memory_space<semaphore_mem>>
    tpu.wait_dma2 semaphore(%34 : memref<!tpu.dma_semaphore, #tpu.memory_space<semaphore_mem>>) src(%arg9 : memref<512x512xbf16, #tpu.memory_space<any>>) dst(%arg19 : memref<512x512xbf16, #tpu.memory_space<vmem>>)
    %c0_14 = arith.constant 0 : index
    %c0_15 = arith.constant 0 : index
    %35 = vector.load %arg19[%c0_14, %c0_15] : memref<512x512xbf16, #tpu.memory_space<vmem>>, vector<512x512xbf16>
    %c0_16 = arith.constant 0 : index
    %c1536 = arith.constant 1536 : index
    %36 = vector.load %arg2[%c0_16, %c1536] : memref<1x4608xf32, #tpu.memory_space<vmem>>, vector<1x512xf32>
    %37 = arith.truncf %32 : vector<8x512xf32> to vector<8x512xbf16>
    %cst_17 = arith.constant dense<0.000000e+00> : vector<8x512xf32>
    %38 = tpu.matmul %37, %35, %cst_17 {dimension_numbers = #tpu.dot_dimension_numbers<[1], [0], [0], [1], [0, 0, 1, 1], [], []>} : vector<8x512xbf16>, vector<512x512xbf16>, vector<8x512xf32> -> vector<8x512xf32>
    %39 = vector.broadcast %36 : vector<1x512xf32> to vector<8x512xf32>
    %40 = arith.addf %38, %39 : vector<8x512xf32>
    %c0_18 = arith.constant 0 : index
    %c0_19 = arith.constant 0 : index
    %41 = vector.load %arg1[%c0_18, %c0_19] : memref<8x768xf32, #tpu.memory_space<vmem>>, vector<8x768xf32>
    %c3_i32_20 = arith.constant 3 : i32
    %42 = tpu.memref_slice %arg23[%c3_i32_20] : memref<6x!tpu.dma_semaphore, #tpu.memory_space<semaphore_mem>> -> memref<1x!tpu.dma_semaphore, #tpu.memory_space<semaphore_mem>>
    %43 = tpu.memref_squeeze %42 : memref<1x!tpu.dma_semaphore, #tpu.memory_space<semaphore_mem>> -> memref<!tpu.dma_semaphore, #tpu.memory_space<semaphore_mem>>
    tpu.wait_dma2 semaphore(%43 : memref<!tpu.dma_semaphore, #tpu.memory_space<semaphore_mem>>) src(%arg10 : memref<768x1024xbf16, #tpu.memory_space<any>>) dst(%arg20 : memref<768x1024xbf16, #tpu.memory_space<vmem>>)
    %c0_21 = arith.constant 0 : index
    %c0_22 = arith.constant 0 : index
    %44 = vector.load %arg20[%c0_21, %c0_22] : memref<768x1024xbf16, #tpu.memory_space<vmem>>, vector<768x1024xbf16>
    %c0_23 = arith.constant 0 : index
    %c2048 = arith.constant 2048 : index
    %45 = vector.load %arg2[%c0_23, %c2048] : memref<1x4608xf32, #tpu.memory_space<vmem>>, vector<1x1024xf32>
    %46 = arith.truncf %41 : vector<8x768xf32> to vector<8x768xbf16>
    %cst_24 = arith.constant dense<0.000000e+00> : vector<8x1024xf32>
    %47 = tpu.matmul %46, %44, %cst_24 {dimension_numbers = #tpu.dot_dimension_numbers<[1], [0], [0], [1], [0, 0, 1, 1], [], []>} : vector<8x768xbf16>, vector<768x1024xbf16>, vector<8x1024xf32> -> vector<8x1024xf32>
    %48 = vector.broadcast %45 : vector<1x1024xf32> to vector<8x1024xf32>
    %49 = arith.addf %47, %48 : vector<8x1024xf32>
    %cst_25 = arith.constant 0.000000e+00 : f32
    %50 = vector.broadcast %cst_25 : f32 to vector<8x1024xf32>
    %51 = arith.maximumf %49, %50 : vector<8x1024xf32>
    %c4_i32_26 = arith.constant 4 : i32
    %52 = tpu.memref_slice %arg23[%c4_i32_26] : memref<6x!tpu.dma_semaphore, #tpu.memory_space<semaphore_mem>> -> memref<1x!tpu.dma_semaphore, #tpu.memory_space<semaphore_mem>>
    %53 = tpu.memref_squeeze %52 : memref<1x!tpu.dma_semaphore, #tpu.memory_space<semaphore_mem>> -> memref<!tpu.dma_semaphore, #tpu.memory_space<semaphore_mem>>
    tpu.wait_dma2 semaphore(%53 : memref<!tpu.dma_semaphore, #tpu.memory_space<semaphore_mem>>) src(%arg11 : memref<1024x512xbf16, #tpu.memory_space<any>>) dst(%arg21 : memref<1024x512xbf16, #tpu.memory_space<vmem>>)
    %c0_27 = arith.constant 0 : index
    %c0_28 = arith.constant 0 : index
    %54 = vector.load %arg21[%c0_27, %c0_28] : memref<1024x512xbf16, #tpu.memory_space<vmem>>, vector<1024x512xbf16>
    %c0_29 = arith.constant 0 : index
    %c3072 = arith.constant 3072 : index
    %55 = vector.load %arg2[%c0_29, %c3072] : memref<1x4608xf32, #tpu.memory_space<vmem>>, vector<1x512xf32>
    %56 = arith.truncf %51 : vector<8x1024xf32> to vector<8x1024xbf16>
    %cst_30 = arith.constant dense<0.000000e+00> : vector<8x512xf32>
    %57 = tpu.matmul %56, %54, %cst_30 {dimension_numbers = #tpu.dot_dimension_numbers<[1], [0], [0], [1], [0, 0, 1, 1], [], []>} : vector<8x1024xbf16>, vector<1024x512xbf16>, vector<8x512xf32> -> vector<8x512xf32>
    %58 = vector.broadcast %55 : vector<1x512xf32> to vector<8x512xf32>
    %59 = arith.addf %57, %58 : vector<8x512xf32>
    %cst_31 = arith.constant 0.000000e+00 : f32
    %60 = vector.broadcast %cst_31 : f32 to vector<8x512xf32>
    %61 = arith.maximumf %59, %60 : vector<8x512xf32>
    %c5_i32_32 = arith.constant 5 : i32
    %62 = tpu.memref_slice %arg23[%c5_i32_32] : memref<6x!tpu.dma_semaphore, #tpu.memory_space<semaphore_mem>> -> memref<1x!tpu.dma_semaphore, #tpu.memory_space<semaphore_mem>>
    %63 = tpu.memref_squeeze %62 : memref<1x!tpu.dma_semaphore, #tpu.memory_space<semaphore_mem>> -> memref<!tpu.dma_semaphore, #tpu.memory_space<semaphore_mem>>
    tpu.wait_dma2 semaphore(%63 : memref<!tpu.dma_semaphore, #tpu.memory_space<semaphore_mem>>) src(%arg12 : memref<512x512xbf16, #tpu.memory_space<any>>) dst(%arg22 : memref<512x512xbf16, #tpu.memory_space<vmem>>)
    %c0_33 = arith.constant 0 : index
    %c0_34 = arith.constant 0 : index
    %64 = vector.load %arg22[%c0_33, %c0_34] : memref<512x512xbf16, #tpu.memory_space<vmem>>, vector<512x512xbf16>
    %c0_35 = arith.constant 0 : index
    %c3584 = arith.constant 3584 : index
    %65 = vector.load %arg2[%c0_35, %c3584] : memref<1x4608xf32, #tpu.memory_space<vmem>>, vector<1x512xf32>
    %66 = arith.truncf %61 : vector<8x512xf32> to vector<8x512xbf16>
    %cst_36 = arith.constant dense<0.000000e+00> : vector<8x512xf32>
    %67 = tpu.matmul %66, %64, %cst_36 {dimension_numbers = #tpu.dot_dimension_numbers<[1], [0], [0], [1], [0, 0, 1, 1], [], []>} : vector<8x512xbf16>, vector<512x512xbf16>, vector<8x512xf32> -> vector<8x512xf32>
    %68 = vector.broadcast %65 : vector<1x512xf32> to vector<8x512xf32>
    %69 = arith.addf %67, %68 : vector<8x512xf32>
    %c0_37 = arith.constant 0 : index
    %c0_38 = arith.constant 0 : index
    %70 = vector.load %arg3[%c0_37, %c0_38] : memref<1x512xf32, #tpu.memory_space<vmem>>, vector<1x512xf32>
    %c0_39 = arith.constant 0 : index
    %c4480 = arith.constant 4480 : index
    %71 = vector.load %arg2[%c0_39, %c4480] : memref<1x4608xf32, #tpu.memory_space<vmem>>, vector<1x1xf32>
    %72 = vector.broadcast %70 : vector<1x512xf32> to vector<8x512xf32>
    %73 = arith.mulf %40, %72 : vector<8x512xf32>
    %cst_40 = arith.constant dense<0.000000e+00> : vector<8xf32>
    %74 = vector.multi_reduction <add>, %73, %cst_40 [1] : vector<8x512xf32> to vector<8xf32>
    %75 = vector.shape_cast %74 : vector<8xf32> to vector<8x1xf32>
    %76 = vector.broadcast %71 : vector<1x1xf32> to vector<8x1xf32>
    %77 = arith.addf %75, %76 : vector<8x1xf32>
    %78 = arith.negf %77 : vector<8x1xf32>
    %79 = math.exp %78 : vector<8x1xf32>
    %cst_41 = arith.constant 1.000000e+00 : f32
    %80 = vector.broadcast %cst_41 : f32 to vector<8x1xf32>
    %81 = arith.addf %80, %79 : vector<8x1xf32>
    %82 = arith.divf %80, %81 : vector<8x1xf32>
    %83 = vector.broadcast %70 : vector<1x512xf32> to vector<8x512xf32>
    %84 = arith.mulf %69, %83 : vector<8x512xf32>
    %cst_42 = arith.constant dense<0.000000e+00> : vector<8xf32>
    %85 = vector.multi_reduction <add>, %84, %cst_42 [1] : vector<8x512xf32> to vector<8xf32>
    %86 = vector.shape_cast %85 : vector<8xf32> to vector<8x1xf32>
    %87 = vector.broadcast %71 : vector<1x1xf32> to vector<8x1xf32>
    %88 = arith.addf %86, %87 : vector<8x1xf32>
    %89 = arith.negf %88 : vector<8x1xf32>
    %90 = math.exp %89 : vector<8x1xf32>
    %cst_43 = arith.constant 1.000000e+00 : f32
    %91 = vector.broadcast %cst_43 : f32 to vector<8x1xf32>
    %92 = arith.addf %91, %90 : vector<8x1xf32>
    %93 = arith.divf %91, %92 : vector<8x1xf32>
    %94 = arith.maximumf %82, %93 : vector<8x1xf32>
    %95 = arith.subf %82, %94 : vector<8x1xf32>
    %96 = math.exp %95 : vector<8x1xf32>
    %97 = arith.subf %93, %94 : vector<8x1xf32>
    %98 = math.exp %97 : vector<8x1xf32>
    %99 = arith.addf %96, %98 : vector<8x1xf32>
    %100 = arith.divf %96, %99 : vector<8x1xf32>
    %101 = vector.broadcast %100 : vector<8x1xf32> to vector<8x512xf32>
    %102 = arith.mulf %101, %40 : vector<8x512xf32>
    %103 = arith.divf %98, %99 : vector<8x1xf32>
    %104 = vector.broadcast %103 : vector<8x1xf32> to vector<8x512xf32>
    %105 = arith.mulf %104, %69 : vector<8x512xf32>
    %106 = arith.addf %102, %105 : vector<8x512xf32>
    %c0_44 = arith.constant 0 : index
    %c0_45 = arith.constant 0 : index
    %107 = vector.load %arg4[%c0_44, %c0_45] : memref<512x128xbf16, #tpu.memory_space<vmem>>, vector<512x128xbf16>
    %c0_46 = arith.constant 0 : index
    %c4096 = arith.constant 4096 : index
    %108 = vector.load %arg2[%c0_46, %c4096] : memref<1x4608xf32, #tpu.memory_space<vmem>>, vector<1x128xf32>
    %109 = arith.truncf %106 : vector<8x512xf32> to vector<8x512xbf16>
    %cst_47 = arith.constant dense<0.000000e+00> : vector<8x128xf32>
    %110 = tpu.matmul %109, %107, %cst_47 {dimension_numbers = #tpu.dot_dimension_numbers<[1], [0], [0], [1], [0, 0, 1, 1], [], []>} : vector<8x512xbf16>, vector<512x128xbf16>, vector<8x128xf32> -> vector<8x128xf32>
    %111 = vector.broadcast %108 : vector<1x128xf32> to vector<8x128xf32>
    %112 = arith.addf %110, %111 : vector<8x128xf32>
    %cst_48 = arith.constant 0.000000e+00 : f32
    %113 = vector.broadcast %cst_48 : f32 to vector<8x128xf32>
    %114 = arith.maximumf %112, %113 : vector<8x128xf32>
    %c0_49 = arith.constant 0 : index
    %c0_50 = arith.constant 0 : index
    %115 = vector.load %arg5[%c0_49, %c0_50] : memref<128x128xbf16, #tpu.memory_space<vmem>>, vector<128x128xbf16>
    %c0_51 = arith.constant 0 : index
    %c4224 = arith.constant 4224 : index
    %116 = vector.load %arg2[%c0_51, %c4224] : memref<1x4608xf32, #tpu.memory_space<vmem>>, vector<1x128xf32>
    %117 = arith.truncf %114 : vector<8x128xf32> to vector<8x128xbf16>
    %cst_52 = arith.constant dense<0.000000e+00> : vector<8x128xf32>
    %118 = tpu.matmul %117, %115, %cst_52 {dimension_numbers = #tpu.dot_dimension_numbers<[1], [0], [0], [1], [0, 0, 1, 1], [], []>} : vector<8x128xbf16>, vector<128x128xbf16>, vector<8x128xf32> -> vector<8x128xf32>
    %119 = vector.broadcast %116 : vector<1x128xf32> to vector<8x128xf32>
    %120 = arith.addf %118, %119 : vector<8x128xf32>
    %cst_53 = arith.constant 0.000000e+00 : f32
    %121 = vector.broadcast %cst_53 : f32 to vector<8x128xf32>
    %122 = arith.maximumf %120, %121 : vector<8x128xf32>
    %c0_54 = arith.constant 0 : index
    %c0_55 = arith.constant 0 : index
    %123 = vector.load %arg6[%c0_54, %c0_55] : memref<128x128xbf16, #tpu.memory_space<vmem>>, vector<128x128xbf16>
    %c0_56 = arith.constant 0 : index
    %c4352 = arith.constant 4352 : index
    %124 = vector.load %arg2[%c0_56, %c4352] : memref<1x4608xf32, #tpu.memory_space<vmem>>, vector<1x128xf32>
    %125 = arith.truncf %122 : vector<8x128xf32> to vector<8x128xbf16>
    %cst_57 = arith.constant dense<0.000000e+00> : vector<8x128xf32>
    %126 = tpu.matmul %125, %123, %cst_57 {dimension_numbers = #tpu.dot_dimension_numbers<[1], [0], [0], [1], [0, 0, 1, 1], [], []>} : vector<8x128xbf16>, vector<128x128xbf16>, vector<8x128xf32> -> vector<8x128xf32>
    %127 = vector.broadcast %124 : vector<1x128xf32> to vector<8x128xf32>
    %128 = arith.addf %126, %127 : vector<8x128xf32>
    %c0_58 = arith.constant 0 : index
    %c0_59 = arith.constant 0 : index
    %129 = vector.load %arg13[%c0_58, %c0_59] : memref<8x128xf32, #tpu.memory_space<vmem>>, vector<8x128xf32>
    tpu.vector_store %arg13[%c0_58, %c0_59], %128 {strides = array<i32>} : memref<8x128xf32, #tpu.memory_space<vmem>>, vector<8x128xf32>,
    %c0_60 = arith.constant 0 : index
    %c0_61 = arith.constant 0 : index
    %130 = vector.load %arg14[%c0_60, %c0_61] : memref<8x512xf32, #tpu.memory_space<vmem>>, vector<8x512xf32>
    tpu.vector_store %arg14[%c0_60, %c0_61], %106 {strides = array<i32>} : memref<8x512xf32, #tpu.memory_space<vmem>>, vector<8x512xf32>,
    %c0_62 = arith.constant 0 : index
    %c0_63 = arith.constant 0 : index
    %131 = vector.load %arg15[%c0_62, %c0_63] : memref<8x512xf32, #tpu.memory_space<vmem>>, vector<8x512xf32>
    tpu.vector_store %arg15[%c0_62, %c0_63], %40 {strides = array<i32>} : memref<8x512xf32, #tpu.memory_space<vmem>>, vector<8x512xf32>,
    %c0_64 = arith.constant 0 : index
    %c0_65 = arith.constant 0 : index
    %132 = vector.load %arg16[%c0_64, %c0_65] : memref<8x512xf32, #tpu.memory_space<vmem>>, vector<8x512xf32>
    tpu.vector_store %arg16[%c0_64, %c0_65], %69 {strides = array<i32>} : memref<8x512xf32, #tpu.memory_space<vmem>>, vector<8x512xf32>,
    return
  }
}

</mosaic_0001>

<llo_original>
// kernel: teacher_model2_forward.1
$region0: #{teacher_model2_forward.1}
  #allocation0 [shape = 'u32[]', space=smem, size = 0x4, offset = 0x4, fixed_abs, tag = 'smem constant byte address 0x4 - core index']
  #allocation1 [shape = 'u32[144,128]{1,0:T(1,128)}', space=vmem, size = 0x12000, scoped, tag = 'internal scratch']
  #allocation2 [shape = 'bf16[512,1024]{1,0:T(8,128)(2,1)}', space=vmem, size = 0x100000, scoped, tag = 'scratch operand']
  #allocation3 [shape = 'bf16[1024,512]{1,0:T(8,128)(2,1)}', space=vmem, size = 0x100000, scoped, tag = 'scratch operand']
  #allocation4 [shape = 'bf16[512,512]{1,0:T(8,128)(2,1)}', space=vmem, size = 0x80000, scoped, tag = 'scratch operand']
  #allocation5 [shape = 'bf16[768,1024]{1,0:T(8,128)(2,1)}', space=vmem, size = 0x180000, scoped, tag = 'scratch operand']
  #allocation6 [shape = 'bf16[1024,512]{1,0:T(8,128)(2,1)}', space=vmem, size = 0x100000, scoped, tag = 'scratch operand']
  #allocation7 [shape = 'bf16[512,512]{1,0:T(8,128)(2,1)}', space=vmem, size = 0x80000, scoped, tag = 'scratch operand']
  #allocation8 [shape = 's32[6]{0}', space=sflag, size = 0x18, scoped, tag = 'scratch operand']
  #allocation25 [shape = 's32[]', space=sflag, size = 0x4, offset = 0, fixed_abs, tag = 'sflag constant byte address 0x0 - dummy sync flag']
  #allocation26 [shape = 's32[]', space=sflag, size = 0x4, offset = 0, fixed_abs, tag = 'sflag constant byte address 0x0 - dummy sync flag']
  #allocation27 [shape = 'u32[]', space=smem, size = 0x4, offset = 0x44, fixed_abs, tag = 'smem constant byte address 0x44 - assertion arg 0']
  #allocation28 [shape = 'u32[]', space=smem, size = 0x4, offset = 0x48, fixed_abs, tag = 'smem constant byte address 0x48 - assertion arg 1']
  #allocation29 [shape = 's32[]', space=sflag, size = 0x4, offset = 0, fixed_abs, tag = 'sflag constant byte address 0x0 - dummy sync flag']
  #allocation30 [shape = 's32[]', space=sflag, size = 0x4, offset = 0, fixed_abs, tag = 'sflag constant byte address 0x0 - dummy sync flag']
  #allocation31 [shape = 's32[]', space=sflag, size = 0x4, offset = 0, fixed_abs, tag = 'sflag constant byte address 0x0 - dummy sync flag']
  #allocation32 [shape = 's32[]', space=sflag, size = 0x4, offset = 0, fixed_abs, tag = 'sflag constant byte address 0x0 - dummy sync flag']
  #allocation33 [shape = 's32[]', space=sflag, size = 0x4, offset = 0, fixed_abs, tag = 'sflag constant byte address 0x0 - dummy sync flag']
  #allocation34 [shape = 's32[]', space=sflag, size = 0x4, offset = 0, fixed_abs, tag = 'sflag constant byte address 0x0 - dummy sync flag']
  #allocation35 [shape = 's32[]', space=sflag, size = 0x4, offset = 0, fixed_abs, tag = 'sflag constant byte address 0x0 - dummy sync flag']
  #allocation36 [shape = 's32[]', space=sflag, size = 0x4, offset = 0, fixed_abs, tag = 'sflag constant byte address 0x0 - dummy sync flag']
  #allocation37 [shape = 's32[]', space=sflag, size = 0x4, offset = 0, fixed_abs, tag = 'sflag constant byte address 0x0 - dummy sync flag']
  #allocation38 [shape = 's32[]', space=sflag, size = 0x4, offset = 0, fixed_abs, tag = 'sflag constant byte address 0x0 - dummy sync flag']
  %s0 = inlined_call_operand.hbm [shape: f32[8,512], index: 0, kind: input, shape index: {}]
  %s1 = inlined_call_operand.hbm [shape: f32[8,768], index: 1, kind: input, shape index: {}]
  %s2 = inlined_call_operand.hbm [shape: f32[1,4608], index: 2, kind: input, shape index: {}]
  %s3 = inlined_call_operand.hbm [shape: f32[1,512], index: 3, kind: input, shape index: {}]
  %s4 = inlined_call_operand.hbm [shape: bf16[512,128], index: 4, kind: input, shape index: {}]
  %s5 = inlined_call_operand.hbm [shape: bf16[128,128], index: 5, kind: input, shape index: {}]
  %s6 = inlined_call_operand.hbm [shape: bf16[128,128], index: 6, kind: input, shape index: {}]
  %s7 = inlined_call_operand.hbm [shape: bf16[512,1024], index: 7, kind: input, shape index: {}]
  %s8 = inlined_call_operand.hbm [shape: bf16[1024,512], index: 8, kind: input, shape index: {}]
  %s9 = inlined_call_operand.hbm [shape: bf16[512,512], index: 9, kind: input, shape index: {}]
  %s10 = inlined_call_operand.hbm [shape: bf16[768,1024], index: 10, kind: input, shape index: {}]
  %s11 = inlined_call_operand.hbm [shape: bf16[1024,512], index: 11, kind: input, shape index: {}]
  %s12 = inlined_call_operand.hbm [shape: bf16[512,512], index: 12, kind: input, shape index: {}]
  %s13 = inlined_call_operand.vmem [shape: f32[8,128], index: 13, kind: output, shape index: {0}]
  %s14 = inlined_call_operand.hbm [shape: f32[8,512], index: 14, kind: output, shape index: {1}]
  %s15 = inlined_call_operand.hbm [shape: f32[8,512], index: 15, kind: output, shape index: {2}]
  %s16 = inlined_call_operand.hbm [shape: f32[8,512], index: 16, kind: output, shape index: {3}]
  %17 = xla_tuple %s13, %s14, %s15, %s16
  %s18 = sld [smem:[#allocation0]]
  $region114: #{teacher_model2_forward.1} parent=0
    _
  %s20 = ssub.s32 1, %s18
  %s21 = scalar_select 0, %s20, %s18
  $region1: #{teacher_model2_forward.1} parent=0
    #allocation9 [shape = 'u8[16384]{0}', space=vmem, size = 0x4000, scoped, tag = 'input window, operand 0, single buffered']
    #allocation10 [shape = 's32[1]{0}', space=sflag, size = 0x4, scoped, tag = 'scoped memory for teacher_model2_forward.1']
    #allocation11 [shape = 's32[1]{0}', space=sflag, size = 0x4, scoped, tag = 'scoped memory for teacher_model2_forward.1']
    #allocation12 [shape = 'u8[24576]{0}', space=vmem, size = 0x6000, scoped, tag = 'input window, operand 1, single buffered']
    #allocation13 [shape = 's32[1]{0}', space=sflag, size = 0x4, scoped, tag = 'scoped memory for teacher_model2_forward.1']
    #allocation14 [shape = 'u8[18432]{0}', space=vmem, size = 0x4800, scoped, tag = 'input window, operand 2, single buffered']
    #allocation15 [shape = 'u8[2048]{0}', space=vmem, size = 0x800, scoped, tag = 'input window, operand 3, single buffered']
    #allocation16 [shape = 's32[1]{0}', space=sflag, size = 0x4, scoped, tag = 'scoped memory for teacher_model2_forward.1']
    #allocation17 [shape = 'u8[131072]{0}', space=vmem, size = 0x20000, scoped, tag = 'input window, operand 4, single buffered']
    #allocation18 [shape = 'u8[32768]{0}', space=vmem, size = 0x8000, scoped, tag = 'input window, operand 5, single buffered']
    #allocation19 [shape = 's32[1]{0}', space=sflag, size = 0x4, scoped, tag = 'scoped memory for teacher_model2_forward.1']
    #allocation20 [shape = 'u8[32768]{0}', space=vmem, size = 0x8000, scoped, tag = 'input window, operand 6, single buffered']
    #allocation21 [shape = 'u8[16384]{0}', space=vmem, size = 0x4000, scoped, tag = 'output window, operand 1, single buffered']
    #allocation22 [shape = 'u8[16384]{0}', space=vmem, size = 0x4000, scoped, tag = 'output window, operand 2, single buffered']
    #allocation23 [shape = 's32[1]{0}', space=sflag, size = 0x4, scoped, tag = 'scoped memory for teacher_model2_forward.1']
    #allocation24 [shape = 'u8[16384]{0}', space=vmem, size = 0x4000, scoped, tag = 'output window, operand 3, single buffered']
    %22 = vsyncpa [#allocation10], 0
    %23 = vsyncpa [#allocation13], 0
    %24 = vsyncpa [#allocation16], 0
    %25 = vsyncpa [#allocation19], 0
    %26 = vsyncpa [#allocation11], 0
    %27 = vsyncpa [#allocation23], 0
    // Predicated region
    $region2: #{teacher_model2_forward.1} parent=1 // pred_check
      _
    $region3: #{teacher_model2_forward.1} parent=1 // pred_check_branch
      %29 = sbr.rel (0) target = $region5
    $region4: #{teacher_model2_forward.1} parent=1 // pred_region
      %s31 = ssub.s32 512, 512
      %32 = vsyncadd [#allocation10], %s31
      %s34 = sshll.u32 [#allocation9], 4
      %s35 = int_to_ptr.vmem [resolvable:$true] %s34
      %37 = dma.hbm_to_vmem [thread:$0]  %s0, 512, %s35, [#allocation10]
    $region5: #{teacher_model2_forward.1} parent=1 // pred_fallthru
      _
    // Predicated region
    $region6: #{teacher_model2_forward.1} parent=1 // pred_check
      _
    $region7: #{teacher_model2_forward.1} parent=1 // pred_check_branch
      %39 = sbr.rel (0) target = $region9
    $region8: #{teacher_model2_forward.1} parent=1 // pred_region
      %s41 = ssub.s32 768, 768
      %42 = vsyncadd [#allocation13], %s41
      %s44 = sshll.u32 [#allocation12], 4
      %s45 = int_to_ptr.vmem [resolvable:$true] %s44
      %47 = dma.hbm_to_vmem [thread:$0]  %s1, 768, %s45, [#allocation13]
    $region9: #{teacher_model2_forward.1} parent=1 // pred_fallthru
      _
    // Predicated region
    $region10: #{teacher_model2_forward.1} parent=1 // pred_check
      _
    $region11: #{teacher_model2_forward.1} parent=1 // pred_check_branch
      %49 = sbr.rel (0) target = $region13
    $region12: #{teacher_model2_forward.1} parent=1 // pred_region
      %s51 = ssub.s32 576, 576
      %52 = vsyncadd [#allocation13], %s51
      %s54 = sshll.u32 [#allocation14], 4
      %s55 = int_to_ptr.vmem [resolvable:$true] %s54
      %57 = dma.hbm_to_vmem [thread:$0]  %s2, 576, %s55, [#allocation13]
    $region13: #{teacher_model2_forward.1} parent=1 // pred_fallthru
      _
    // Predicated region
    $region14: #{teacher_model2_forward.1} parent=1 // pred_check
      _
    $region15: #{teacher_model2_forward.1} parent=1 // pred_check_branch
      %59 = sbr.rel (0) target = $region17
    $region16: #{teacher_model2_forward.1} parent=1 // pred_region
      %s61 = ssub.s32 64, 64
      %62 = vsyncadd [#allocation16], %s61
      %s64 = sshll.u32 [#allocation15], 4
      %s65 = int_to_ptr.vmem [resolvable:$true] %s64
      %67 = dma.hbm_to_vmem [thread:$0]  %s3, 64, %s65, [#allocation16]
    $region17: #{teacher_model2_forward.1} parent=1 // pred_fallthru
      _
    // Predicated region
    $region18: #{teacher_model2_forward.1} parent=1 // pred_check
      _
    $region19: #{teacher_model2_forward.1} parent=1 // pred_check_branch
      %69 = sbr.rel (0) target = $region21
    $region20: #{teacher_model2_forward.1} parent=1 // pred_region
      %s71 = ssub.s32 4096, 4096
      %72 = vsyncadd [#allocation16], %s71
      %s73 = sshll.u32 [#allocation17], 4
      %s74 = int_to_ptr.vmem [resolvable:$true] %s73
      %79 = dma.hbm_to_vmem [thread:$0]  %s4, 4096, %s74, [#allocation16], 64, 64, 4
    $region21: #{teacher_model2_forward.1} parent=1 // pred_fallthru
      _
    // Predicated region
    $region22: #{teacher_model2_forward.1} parent=1 // pred_check
      _
    $region23: #{teacher_model2_forward.1} parent=1 // pred_check_branch
      %81 = sbr.rel (0) target = $region25
    $region24: #{teacher_model2_forward.1} parent=1 // pred_region
      %s83 = ssub.s32 1024, 1024
      %84 = vsyncadd [#allocation19], %s83
      %s85 = sshll.u32 [#allocation18], 4
      %s86 = int_to_ptr.vmem [resolvable:$true] %s85
      %91 = dma.hbm_to_vmem [thread:$0]  %s5, 1024, %s86, [#allocation19], 64, 64, 4
    $region25: #{teacher_model2_forward.1} parent=1 // pred_fallthru
      _
    // Predicated region
    $region26: #{teacher_model2_forward.1} parent=1 // pred_check
      _
    $region27: #{teacher_model2_forward.1} parent=1 // pred_check_branch
      %93 = sbr.rel (0) target = $region29
    $region28: #{teacher_model2_forward.1} parent=1 // pred_region
      %s95 = ssub.s32 1024, 1024
      %96 = vsyncadd [#allocation19], %s95
      %s97 = sshll.u32 [#allocation20], 4
      %s98 = int_to_ptr.vmem [resolvable:$true] %s97
      %103 = dma.hbm_to_vmem [thread:$0]  %s6, 1024, %s98, [#allocation19], 64, 64, 4
    $region29: #{teacher_model2_forward.1} parent=1 // pred_fallthru
      _
    // Predicated region
    $region30: #{teacher_model2_forward.1} parent=1 // pred_check
      _
    $region31: #{teacher_model2_forward.1} parent=1 // pred_check_branch
      %105 = sbr.rel (0) target = $region33
    $region32: #{teacher_model2_forward.1} parent=1 // pred_region
      %106 = dma.done [#allocation10], 512
    $region33: #{teacher_model2_forward.1} parent=1 // pred_fallthru
      _
    // Predicated region
    $region34: #{teacher_model2_forward.1} parent=1 // pred_check
      _
    $region35: #{teacher_model2_forward.1} parent=1 // pred_check_branch
      %108 = sbr.rel (0) target = $region37
    $region36: #{teacher_model2_forward.1} parent=1 // pred_region
      %109 = dma.done [#allocation13], 768
    $region37: #{teacher_model2_forward.1} parent=1 // pred_fallthru
      _
    // Predicated region
    $region38: #{teacher_model2_forward.1} parent=1 // pred_check
      _
    $region39: #{teacher_model2_forward.1} parent=1 // pred_check_branch
      %111 = sbr.rel (0) target = $region41
    $region40: #{teacher_model2_forward.1} parent=1 // pred_region
      %112 = dma.done [#allocation13], 576
    $region41: #{teacher_model2_forward.1} parent=1 // pred_fallthru
      _
    // Predicated region
    $region42: #{teacher_model2_forward.1} parent=1 // pred_check
      _
    $region43: #{teacher_model2_forward.1} parent=1 // pred_check_branch
      %114 = sbr.rel (0) target = $region45
    $region44: #{teacher_model2_forward.1} parent=1 // pred_region
      %115 = dma.done [#allocation16], 64
    $region45: #{teacher_model2_forward.1} parent=1 // pred_fallthru
      _
    // Predicated region
    $region46: #{teacher_model2_forward.1} parent=1 // pred_check
      _
    $region47: #{teacher_model2_forward.1} parent=1 // pred_check_branch
      %117 = sbr.rel (0) target = $region49
    $region48: #{teacher_model2_forward.1} parent=1 // pred_region
      %118 = dma.done [#allocation16], 4096
    $region49: #{teacher_model2_forward.1} parent=1 // pred_fallthru
      _
    // Predicated region
    $region50: #{teacher_model2_forward.1} parent=1 // pred_check
      _
    $region51: #{teacher_model2_forward.1} parent=1 // pred_check_branch
      %120 = sbr.rel (0) target = $region53
    $region52: #{teacher_model2_forward.1} parent=1 // pred_region
      %121 = dma.done [#allocation19], 1024
    $region53: #{teacher_model2_forward.1} parent=1 // pred_fallthru
      _
    // Predicated region
    $region54: #{teacher_model2_forward.1} parent=1 // pred_check
      _
    $region55: #{teacher_model2_forward.1} parent=1 // pred_check_branch
      %123 = sbr.rel (0) target = $region57
    $region56: #{teacher_model2_forward.1} parent=1 // pred_region
      %124 = dma.done [#allocation19], 1024
    $region57: #{teacher_model2_forward.1} parent=1 // pred_fallthru
      _
    // Predicated region
    $region58: #{teacher_model2_forward.1} parent=1 // pred_check
      _
    $region59: #{teacher_model2_forward.1} parent=1 // pred_check_branch
      %127 = sbr.rel target = $region61
    $region60: #{teacher_model2_forward.1} parent=1 // pred_region
      %128 = sst [smem:[#allocation27]] [#allocation26]
      %129 = sst [smem:[#allocation28]] [#allocation25]
    $region61: #{teacher_model2_forward.1} parent=1 // pred_fallthru
      _
    %131 = shalt.err (0)
    %s133 = sshll.u32 [#allocation2], 4
    %s134 = int_to_ptr.vmem [resolvable:$true] %s133
    %136 = dma.hbm_to_vmem [thread:$0]  %s7, 32768, %s134, [#allocation8]
    %s137 = scalar_lea.sflag [#allocation8], 1
    // Predicated region
    $region62: #{teacher_model2_forward.1} parent=1 // pred_check
      _
    $region63: #{teacher_model2_forward.1} parent=1 // pred_check_branch
      %139 = sbr.rel target = $region65
    $region64: #{teacher_model2_forward.1} parent=1 // pred_region
      %140 = sst [smem:[#allocation27]] [#allocation30]
      %141 = sst [smem:[#allocation28]] [#allocation29]
    $region65: #{teacher_model2_forward.1} parent=1 // pred_fallthru
      _
    %143 = shalt.err (0)
    %s145 = sshll.u32 [#allocation3], 4
    %s146 = int_to_ptr.vmem [resolvable:$true] %s145
    %148 = dma.hbm_to_vmem [thread:$0]  %s8, 32768, %s146, %s137
    %s149 = scalar_lea.sflag [#allocation8], 2
    // Predicated region
    $region66: #{teacher_model2_forward.1} parent=1 // pred_check
      _
    $region67: #{teacher_model2_forward.1} parent=1 // pred_check_branch
      %151 = sbr.rel target = $region69
    $region68: #{teacher_model2_forward.1} parent=1 // pred_region
      %152 = sst [smem:[#allocation27]] [#allocation32]
      %153 = sst [smem:[#allocation28]] [#allocation31]
    $region69: #{teacher_model2_forward.1} parent=1 // pred_fallthru
      _
    %155 = shalt.err (0)
    %s157 = sshll.u32 [#allocation4], 4
    %s158 = int_to_ptr.vmem [resolvable:$true] %s157
    %160 = dma.hbm_to_vmem [thread:$0]  %s9, 16384, %s158, %s149
    %s161 = scalar_lea.sflag [#allocation8], 3
    // Predicated region
    $region70: #{teacher_model2_forward.1} parent=1 // pred_check
      _
    $region71: #{teacher_model2_forward.1} parent=1 // pred_check_branch
      %163 = sbr.rel target = $region73
    $region72: #{teacher_model2_forward.1} parent=1 // pred_region
      %164 = sst [smem:[#allocation27]] [#allocation34]
      %165 = sst [smem:[#allocation28]] [#allocation33]
    $region73: #{teacher_model2_forward.1} parent=1 // pred_fallthru
      _
    %167 = shalt.err (0)
    %s169 = sshll.u32 [#allocation5], 4
    %s170 = int_to_ptr.vmem [resolvable:$true] %s169
    %172 = dma.hbm_to_vmem [thread:$0]  %s10, 49152, %s170, %s161
    %s173 = scalar_lea.sflag [#allocation8], 4
    // Predicated region
    $region74: #{teacher_model2_forward.1} parent=1 // pred_check
      _
    $region75: #{teacher_model2_forward.1} parent=1 // pred_check_branch
      %175 = sbr.rel target = $region77
    $region76: #{teacher_model2_forward.1} parent=1 // pred_region
      %176 = sst [smem:[#allocation27]] [#allocation36]
      %177 = sst [smem:[#allocation28]] [#allocation35]
    $region77: #{teacher_model2_forward.1} parent=1 // pred_fallthru
      _
    %179 = shalt.err (0)
    %s181 = sshll.u32 [#allocation6], 4
    %s182 = int_to_ptr.vmem [resolvable:$true] %s181
    %184 = dma.hbm_to_vmem [thread:$0]  %s11, 32768, %s182, %s173
    %s185 = scalar_lea.sflag [#allocation8], 5
    // Predicated region
    $region78: #{teacher_model2_forward.1} parent=1 // pred_check
      _
    $region79: #{teacher_model2_forward.1} parent=1 // pred_check_branch
      %187 = sbr.rel target = $region81
    $region80: #{teacher_model2_forward.1} parent=1 // pred_region
      %188 = sst [smem:[#allocation27]] [#allocation38]
      %189 = sst [smem:[#allocation28]] [#allocation37]
    $region81: #{teacher_model2_forward.1} parent=1 // pred_fallthru
      _
    %191 = shalt.err (0)
    %s193 = sshll.u32 [#allocation7], 4
    %s194 = int_to_ptr.vmem [resolvable:$true] %s193
    %196 = dma.hbm_to_vmem [thread:$0]  %s12, 16384, %s194, %s185
    %v197 = vld [vmem:[#allocation9] sm:$0xff]
    %v198 = vld [vmem:[#allocation9 + $0x8] sm:$0xff]
    %v199 = vld [vmem:[#allocation9 + $0x10] sm:$0xff]
    %v200 = vld [vmem:[#allocation9 + $0x18] sm:$0xff]
    %s201 = smul.u32 4, 64
    %s202 = smul.u32 %s201, 8
    %s203 = sshll.u32 %s202, 4
    %204 = dma.done [#allocation8], %s203
    %v205 = vld [vmem:[#allocation2] sm:$0xff]
    %v206 = vld [vmem:[#allocation2 + $0x8] sm:$0xff]
    %v207 = vld [vmem:[#allocation2 + $0x10] sm:$0xff]
    %v208 = vld [vmem:[#allocation2 + $0x18] sm:$0xff]
    %v209 = vld [vmem:[#allocation2 + $0x20] sm:$0xff]
    %v210 = vld [vmem:[#allocation2 + $0x28] sm:$0xff]
    %v211 = vld [vmem:[#allocation2 + $0x30] sm:$0xff]
    %v212 = vld [vmem:[#allocation2 + $0x38] sm:$0xff]
    %v213 = vld [vmem:[#allocation2 + $0x40] sm:$0xff]
    %v214 = vld [vmem:[#allocation2 + $0x48] sm:$0xff]
    %v215 = vld [vmem:[#allocation2 + $0x50] sm:$0xff]
    %v216 = vld [vmem:[#allocation2 + $0x58] sm:$0xff]
    %v217 = vld [vmem:[#allocation2 + $0x60] sm:$0xff]
    %v218 = vld [vmem:[#allocation2 + $0x68] sm:$0xff]
    %v219 = vld [vmem:[#allocation2 + $0x70] sm:$0xff]
    %v220 = vld [vmem:[#allocation2 + $0x78] sm:$0xff]
    %v221 = vld [vmem:[#allocation2 + $0x80] sm:$0xff]
    %v222 = vld [vmem:[#allocation2 + $0x88] sm:$0xff]
    %v223 = vld [vmem:[#allocation2 + $0x90] sm:$0xff]
    %v224 = vld [vmem:[#allocation2 + $0x98] sm:$0xff]
    %v225 = vld [vmem:[#allocation2 + $0xa0] sm:$0xff]
    %v226 = vld [vmem:[#allocation2 + $0xa8] sm:$0xff]
    %v227 = vld [vmem:[#allocation2 + $0xb0] sm:$0xff]
    %v228 = vld [vmem:[#allocation2 + $0xb8] sm:$0xff]
    %v229 = vld [vmem:[#allocation2 + $0xc0] sm:$0xff]
    %v230 = vld [vmem:[#allocation2 + $0xc8] sm:$0xff]
    %v231 = vld [vmem:[#allocation2 + $0xd0] sm:$0xff]
    %v232 = vld [vmem:[#allocation2 + $0xd8] sm:$0xff]
    %v233 = vld [vmem:[#allocation2 + $0xe0] sm:$0xff]
    %v234 = vld [vmem:[#allocation2 + $0xe8] sm:$0xff]
    %v235 = vld [vmem:[#allocation2 + $0xf0] sm:$0xff]
    %v236 = vld [vmem:[#allocation2 + $0xf8] sm:$0xff]
    %v237 = vld [vmem:[#allocation2 + $0x100] sm:$0xff]
    %v238 = vld [vmem:[#allocation2 + $0x108] sm:$0xff]
    %v239 = vld [vmem:[#allocation2 + $0x110] sm:$0xff]
    %v240 = vld [vmem:[#allocation2 + $0x118] sm:$0xff]
    %v241 = vld [vmem:[#allocation2 + $0x120] sm:$0xff]
    %v242 = vld [vmem:[#allocation2 + $0x128] sm:$0xff]
    %v243 = vld [vmem:[#allocation2 + $0x130] sm:$0xff]
    %v244 = vld [vmem:[#allocation2 + $0x138] sm:$0xff]
    %v245 = vld [vmem:[#allocation2 + $0x140] sm:$0xff]
    %v246 = vld [vmem:[#allocation2 + $0x148] sm:$0xff]
    %v247 = vld [vmem:[#allocation2 + $0x150] sm:$0xff]
    %v248 = vld [vmem:[#allocation2 + $0x158] sm:$0xff]
    %v249 = vld [vmem:[#allocation2 + $0x160] sm:$0xff]
    %v250 = vld [vmem:[#allocation2 + $0x168] sm:$0xff]
    %v251 = vld [vmem:[#allocation2 + $0x170] sm:$0xff]
    %v252 = vld [vmem:[#allocation2 + $0x178] sm:$0xff]
    %v253 = vld [vmem:[#allocation2 + $0x180] sm:$0xff]
    %v254 = vld [vmem:[#allocation2 + $0x188] sm:$0xff]
    %v255 = vld [vmem:[#allocation2 + $0x190] sm:$0xff]
    %v256 = vld [vmem:[#allocation2 + $0x198] sm:$0xff]
    %v257 = vld [vmem:[#allocation2 + $0x1a0] sm:$0xff]
    %v258 = vld [vmem:[#allocation2 + $0x1a8] sm:$0xff]
    %v259 = vld [vmem:[#allocation2 + $0x1b0] sm:$0xff]
    %v260 = vld [vmem:[#allocation2 + $0x1b8] sm:$0xff]
    %v261 = vld [vmem:[#allocation2 + $0x1c0] sm:$0xff]
    %v262 = vld [vmem:[#allocation2 + $0x1c8] sm:$0xff]
    %v263 = vld [vmem:[#allocation2 + $0x1d0] sm:$0xff]
    %v264 = vld [vmem:[#allocation2 + $0x1d8] sm:$0xff]
    %v265 = vld [vmem:[#allocation2 + $0x1e0] sm:$0xff]
    %v266 = vld [vmem:[#allocation2 + $0x1e8] sm:$0xff]
    %v267 = vld [vmem:[#allocation2 + $0x1f0] sm:$0xff]
    %v268 = vld [vmem:[#allocation2 + $0x1f8] sm:$0xff]
    %v269 = vld [vmem:[#allocation2 + $0x200] sm:$0xff]
    %v270 = vld [vmem:[#allocation2 + $0x208] sm:$0xff]
    %v271 = vld [vmem:[#allocation2 + $0x210] sm:$0xff]
    %v272 = vld [vmem:[#allocation2 + $0x218] sm:$0xff]
    %v273 = vld [vmem:[#allocation2 + $0x220] sm:$0xff]
    %v274 = vld [vmem:[#allocation2 + $0x228] sm:$0xff]
    %v275 = vld [vmem:[#allocation2 + $0x230] sm:$0xff]
    %v276 = vld [vmem:[#allocation2 + $0x238] sm:$0xff]
    %v277 = vld [vmem:[#allocation2 + $0x240] sm:$0xff]
    %v278 = vld [vmem:[#allocation2 + $0x248] sm:$0xff]
    %v279 = vld [vmem:[#allocation2 + $0x250] sm:$0xff]
    %v280 = vld [vmem:[#allocation2 + $0x258] sm:$0xff]
    %v281 = vld [vmem:[#allocation2 + $0x260] sm:$0xff]
    %v282 = vld [vmem:[#allocation2 + $0x268] sm:$0xff]
    %v283 = vld [vmem:[#allocation2 + $0x270] sm:$0xff]
    %v284 = vld [vmem:[#allocation2 + $0x278] sm:$0xff]
    %v285 = vld [vmem:[#allocation2 + $0x280] sm:$0xff]
    %v286 = vld [vmem:[#allocation2 + $0x288] sm:$0xff]
    %v287 = vld [vmem:[#allocation2 + $0x290] sm:$0xff]
    %v288 = vld [vmem:[#allocation2 + $0x298] sm:$0xff]
    %v289 = vld [vmem:[#allocation2 + $0x2a0] sm:$0xff]
    %v290 = vld [vmem:[#allocation2 + $0x2a8] sm:$0xff]
    %v291 = vld [vmem:[#allocation2 + $0x2b0] sm:$0xff]
    %v292 = vld [vmem:[#allocation2 + $0x2b8] sm:$0xff]
    %v293 = vld [vmem:[#allocation2 + $0x2c0] sm:$0xff]
    %v294 = vld [vmem:[#allocation2 + $0x2c8] sm:$0xff]
    %v295 = vld [vmem:[#allocation2 + $0x2d0] sm:$0xff]
    %v296 = vld [vmem:[#allocation2 + $0x2d8] sm:$0xff]
    %v297 = vld [vmem:[#allocation2 + $0x2e0] sm:$0xff]
    %v298 = vld [vmem:[#allocation2 + $0x2e8] sm:$0xff]
    %v299 = vld [vmem:[#allocation2 + $0x2f0] sm:$0xff]
    %v300 = vld [vmem:[#allocation2 + $0x2f8] sm:$0xff]
    %v301 = vld [vmem:[#allocation2 + $0x300] sm:$0xff]
    %v302 = vld [vmem:[#allocation2 + $0x308] sm:$0xff]
    %v303 = vld [vmem:[#allocation2 + $0x310] sm:$0xff]
    %v304 = vld [vmem:[#allocation2 + $0x318] sm:$0xff]
    %v305 = vld [vmem:[#allocation2 + $0x320] sm:$0xff]
    %v306 = vld [vmem:[#allocation2 + $0x328] sm:$0xff]
    %v307 = vld [vmem:[#allocation2 + $0x330] sm:$0xff]
    %v308 = vld [vmem:[#allocation2 + $0x338] sm:$0xff]
    %v309 = vld [vmem:[#allocation2 + $0x340] sm:$0xff]
    %v310 = vld [vmem:[#allocation2 + $0x348] sm:$0xff]
    %v311 = vld [vmem:[#allocation2 + $0x350] sm:$0xff]
    %v312 = vld [vmem:[#allocation2 + $0x358] sm:$0xff]
    %v313 = vld [vmem:[#allocation2 + $0x360] sm:$0xff]
    %v314 = vld [vmem:[#allocation2 + $0x368] sm:$0xff]
    %v315 = vld [vmem:[#allocation2 + $0x370] sm:$0xff]
    %v316 = vld [vmem:[#allocation2 + $0x378] sm:$0xff]
    %v317 = vld [vmem:[#allocation2 + $0x380] sm:$0xff]
    %v318 = vld [vmem:[#allocation2 + $0x388] sm:$0xff]
    %v319 = vld [vmem:[#allocation2 + $0x390] sm:$0xff]
    %v320 = vld [vmem:[#allocation2 + $0x398] sm:$0xff]
    %v321 = vld [vmem:[#allocation2 + $0x3a0] sm:$0xff]
    %v322 = vld [vmem:[#allocation2 + $0x3a8] sm:$0xff]
    %v323 = vld [vmem:[#allocation2 + $0x3b0] sm:$0xff]
    %v324 = vld [vmem:[#allocation2 + $0x3b8] sm:$0xff]
    %v325 = vld [vmem:[#allocation2 + $0x3c0] sm:$0xff]
    %v326 = vld [vmem:[#allocation2 + $0x3c8] sm:$0xff]
    %v327 = vld [vmem:[#allocation2 + $0x3d0] sm:$0xff]
    %v328 = vld [vmem:[#allocation2 + $0x3d8] sm:$0xff]
    %v329 = vld [vmem:[#allocation2 + $0x3e0] sm:$0xff]
    %v330 = vld [vmem:[#allocation2 + $0x3e8] sm:$0xff]
    %v331 = vld [vmem:[#allocation2 + $0x3f0] sm:$0xff]
    %v332 = vld [vmem:[#allocation2 + $0x3f8] sm:$0xff]
    %v333 = vld [vmem:[#allocation2 + $0x400] sm:$0xff]
    %v334 = vld [vmem:[#allocation2 + $0x408] sm:$0xff]
    %v335 = vld [vmem:[#allocation2 + $0x410] sm:$0xff]
    %v336 = vld [vmem:[#allocation2 + $0x418] sm:$0xff]
    %v337 = vld [vmem:[#allocation2 + $0x420] sm:$0xff]
    %v338 = vld [vmem:[#allocation2 + $0x428] sm:$0xff]
    %v339 = vld [vmem:[#allocation2 + $0x430] sm:$0xff]
    %v340 = vld [vmem:[#allocation2 + $0x438] sm:$0xff]
    %v341 = vld [vmem:[#allocation2 + $0x440] sm:$0xff]
    %v342 = vld [vmem:[#allocation2 + $0x448] sm:$0xff]
    %v343 = vld [vmem:[#allocation2 + $0x450] sm:$0xff]
    %v344 = vld [vmem:[#allocation2 + $0x458] sm:$0xff]
    %v345 = vld [vmem:[#allocation2 + $0x460] sm:$0xff]
    %v346 = vld [vmem:[#allocation2 + $0x468] sm:$0xff]
    %v347 = vld [vmem:[#allocation2 + $0x470] sm:$0xff]
    %v348 = vld [vmem:[#allocation2 + $0x478] sm:$0xff]
    %v349 = vld [vmem:[#allocation2 + $0x480] sm:$0xff]
    %v350 = vld [vmem:[#allocation2 + $0x488] sm:$0xff]
    %v351 = vld [vmem:[#allocation2 + $0x490] sm:$0xff]
    %v352 = vld [vmem:[#allocation2 + $0x498] sm:$0xff]
    %v353 = vld [vmem:[#allocation2 + $0x4a0] sm:$0xff]
    %v354 = vld [vmem:[#allocation2 + $0x4a8] sm:$0xff]
    %v355 = vld [vmem:[#allocation2 + $0x4b0] sm:$0xff]
    %v356 = vld [vmem:[#allocation2 + $0x4b8] sm:$0xff]
    %v357 = vld [vmem:[#allocation2 + $0x4c0] sm:$0xff]
    %v358 = vld [vmem:[#allocation2 + $0x4c8] sm:$0xff]
    %v359 = vld [vmem:[#allocation2 + $0x4d0] sm:$0xff]
    %v360 = vld [vmem:[#allocation2 + $0x4d8] sm:$0xff]
    %v361 = vld [vmem:[#allocation2 + $0x4e0] sm:$0xff]
    %v362 = vld [vmem:[#allocation2 + $0x4e8] sm:$0xff]
    %v363 = vld [vmem:[#allocation2 + $0x4f0] sm:$0xff]
    %v364 = vld [vmem:[#allocation2 + $0x4f8] sm:$0xff]
    %v365 = vld [vmem:[#allocation2 + $0x500] sm:$0xff]
    %v366 = vld [vmem:[#allocation2 + $0x508] sm:$0xff]
    %v367 = vld [vmem:[#allocation2 + $0x510] sm:$0xff]
    %v368 = vld [vmem:[#allocation2 + $0x518] sm:$0xff]
    %v369 = vld [vmem:[#allocation2 + $0x520] sm:$0xff]
    %v370 = vld [vmem:[#allocation2 + $0x528] sm:$0xff]
    %v371 = vld [vmem:[#allocation2 + $0x530] sm:$0xff]
    %v372 = vld [vmem:[#allocation2 + $0x538] sm:$0xff]
    %v373 = vld [vmem:[#allocation2 + $0x540] sm:$0xff]
    %v374 = vld [vmem:[#allocation2 + $0x548] sm:$0xff]
    %v375 = vld [vmem:[#allocation2 + $0x550] sm:$0xff]
    %v376 = vld [vmem:[#allocation2 + $0x558] sm:$0xff]
    %v377 = vld [vmem:[#allocation2 + $0x560] sm:$0xff]
    %v378 = vld [vmem:[#allocation2 + $0x568] sm:$0xff]
    %v379 = vld [vmem:[#allocation2 + $0x570] sm:$0xff]
    %v380 = vld [vmem:[#allocation2 + $0x578] sm:$0xff]
    %v381 = vld [vmem:[#allocation2 + $0x580] sm:$0xff]
    %v382 = vld [vmem:[#allocation2 + $0x588] sm:$0xff]
    %v383 = vld [vmem:[#allocation2 + $0x590] sm:$0xff]
    %v384 = vld [vmem:[#allocation2 + $0x598] sm:$0xff]
    %v385 = vld [vmem:[#allocation2 + $0x5a0] sm:$0xff]
    %v386 = vld [vmem:[#allocation2 + $0x5a8] sm:$0xff]
    %v387 = vld [vmem:[#allocation2 + $0x5b0] sm:$0xff]
    %v388 = vld [vmem:[#allocation2 + $0x5b8] sm:$0xff]
    %v389 = vld [vmem:[#allocation2 + $0x5c0] sm:$0xff]
    %v390 = vld [vmem:[#allocation2 + $0x5c8] sm:$0xff]
    %v391 = vld [vmem:[#allocation2 + $0x5d0] sm:$0xff]
    %v392 = vld [vmem:[#allocation2 + $0x5d8] sm:$0xff]
    %v393 = vld [vmem:[#allocation2 + $0x5e0] sm:$0xff]
    %v394 = vld [vmem:[#allocation2 + $0x5e8] sm:$0xff]
    %v395 = vld [vmem:[#allocation2 + $0x5f0] sm:$0xff]
    %v396 = vld [vmem:[#allocation2 + $0x5f8] sm:$0xff]
    %v397 = vld [vmem:[#allocation2 + $0x600] sm:$0xff]
    %v398 = vld [vmem:[#allocation2 + $0x608] sm:$0xff]
    %v399 = vld [vmem:[#allocation2 + $0x610] sm:$0xff]
    %v400 = vld [vmem:[#allocation2 + $0x618] sm:$0xff]
    %v401 = vld [vmem:[#allocation2 + $0x620] sm:$0xff]
    %v402 = vld [vmem:[#allocation2 + $0x628] sm:$0xff]
    %v403 = vld [vmem:[#allocation2 + $0x630] sm:$0xff]
    %v404 = vld [vmem:[#allocation2 + $0x638] sm:$0xff]
    %v405 = vld [vmem:[#allocation2 + $0x640] sm:$0xff]
    %v406 = vld [vmem:[#allocation2 + $0x648] sm:$0xff]
    %v407 = vld [vmem:[#allocation2 + $0x650] sm:$0xff]
    %v408 = vld [vmem:[#allocation2 + $0x658] sm:$0xff]
    %v409 = vld [vmem:[#allocation2 + $0x660] sm:$0xff]
    %v410 = vld [vmem:[#allocation2 + $0x668] sm:$0xff]
    %v411 = vld [vmem:[#allocation2 + $0x670] sm:$0xff]
    %v412 = vld [vmem:[#allocation2 + $0x678] sm:$0xff]
    %v413 = vld [vmem:[#allocation2 + $0x680] sm:$0xff]
    %v414 = vld [vmem:[#allocation2 + $0x688] sm:$0xff]
    %v415 = vld [vmem:[#allocation2 + $0x690] sm:$0xff]
    %v416 = vld [vmem:[#allocation2 + $0x698] sm:$0xff]
    %v417 = vld [vmem:[#allocation2 + $0x6a0] sm:$0xff]
    %v418 = vld [vmem:[#allocation2 + $0x6a8] sm:$0xff]
    %v419 = vld [vmem:[#allocation2 + $0x6b0] sm:$0xff]
    %v420 = vld [vmem:[#allocation2 + $0x6b8] sm:$0xff]
    %v421 = vld [vmem:[#allocation2 + $0x6c0] sm:$0xff]
    %v422 = vld [vmem:[#allocation2 + $0x6c8] sm:$0xff]
    %v423 = vld [vmem:[#allocation2 + $0x6d0] sm:$0xff]
    %v424 = vld [vmem:[#allocation2 + $0x6d8] sm:$0xff]
    %v425 = vld [vmem:[#allocation2 + $0x6e0] sm:$0xff]
    %v426 = vld [vmem:[#allocation2 + $0x6e8] sm:$0xff]
    %v427 = vld [vmem:[#allocation2 + $0x6f0] sm:$0xff]
    %v428 = vld [vmem:[#allocation2 + $0x6f8] sm:$0xff]
    %v429 = vld [vmem:[#allocation2 + $0x700] sm:$0xff]
    %v430 = vld [vmem:[#allocation2 + $0x708] sm:$0xff]
    %v431 = vld [vmem:[#allocation2 + $0x710] sm:$0xff]
    %v432 = vld [vmem:[#allocation2 + $0x718] sm:$0xff]
    %v433 = vld [vmem:[#allocation2 + $0x720] sm:$0xff]
    %v434 = vld [vmem:[#allocation2 + $0x728] sm:$0xff]
    %v435 = vld [vmem:[#allocation2 + $0x730] sm:$0xff]
    %v436 = vld [vmem:[#allocation2 + $0x738] sm:$0xff]
    %v437 = vld [vmem:[#allocation2 + $0x740] sm:$0xff]
    %v438 = vld [vmem:[#allocation2 + $0x748] sm:$0xff]
    %v439 = vld [vmem:[#allocation2 + $0x750] sm:$0xff]
    %v440 = vld [vmem:[#allocation2 + $0x758] sm:$0xff]
    %v441 = vld [vmem:[#allocation2 + $0x760] sm:$0xff]
    %v442 = vld [vmem:[#allocation2 + $0x768] sm:$0xff]
    %v443 = vld [vmem:[#allocation2 + $0x770] sm:$0xff]
    %v444 = vld [vmem:[#allocation2 + $0x778] sm:$0xff]
    %v445 = vld [vmem:[#allocation2 + $0x780] sm:$0xff]
    %v446 = vld [vmem:[#allocation2 + $0x788] sm:$0xff]
    %v447 = vld [vmem:[#allocation2 + $0x790] sm:$0xff]
    %v448 = vld [vmem:[#allocation2 + $0x798] sm:$0xff]
    %v449 = vld [vmem:[#allocation2 + $0x7a0] sm:$0xff]
    %v450 = vld [vmem:[#allocation2 + $0x7a8] sm:$0xff]
    %v451 = vld [vmem:[#allocation2 + $0x7b0] sm:$0xff]
    %v452 = vld [vmem:[#allocation2 + $0x7b8] sm:$0xff]
    %v453 = vld [vmem:[#allocation2 + $0x7c0] sm:$0xff]
    %v454 = vld [vmem:[#allocation2 + $0x7c8] sm:$0xff]
    %v455 = vld [vmem:[#allocation2 + $0x7d0] sm:$0xff]
    %v456 = vld [vmem:[#allocation2 + $0x7d8] sm:$0xff]
    %v457 = vld [vmem:[#allocation2 + $0x7e0] sm:$0xff]
    %v458 = vld [vmem:[#allocation2 + $0x7e8] sm:$0xff]
    %v459 = vld [vmem:[#allocation2 + $0x7f0] sm:$0xff]
    %v460 = vld [vmem:[#allocation2 + $0x7f8] sm:$0xff]
    %v461 = vld [vmem:[#allocation14] sm:$0xff]
    %v462 = vpack.c.bf16 %v197, %v197
    %v463 = vpack.c.bf16 %v198, %v198
    %v464 = vpack.c.bf16 %v199, %v199
    %v465 = vpack.c.bf16 %v200, %v200
    %v467 = vlaneseq
    %v468 = vshrl.u32 %v467, 7
    %v469 = vsub.s32 0, %v468
    %v470 = vrot.slane %v461, %v469
    %v471 = vlaneseq
    %v472 = vshrl.u32 %v471, 7
    %v473 = vsub.s32 1, %v472
    %v474 = vrot.slane %v461, %v473
    %v475 = vlaneseq
    %v476 = vshrl.u32 %v475, 7
    %v477 = vsub.s32 2, %v476
    %v478 = vrot.slane %v461, %v477
    %v479 = vlaneseq
    %v480 = vshrl.u32 %v479, 7
    %v481 = vsub.s32 3, %v480
    %v482 = vrot.slane %v461, %v481
    %v483 = vlaneseq
    %v484 = vshrl.u32 %v483, 7
    %v485 = vsub.s32 4, %v484
    %v486 = vrot.slane %v461, %v485
    %v487 = vlaneseq
    %v488 = vshrl.u32 %v487, 7
    %v489 = vsub.s32 5, %v488
    %v490 = vrot.slane %v461, %v489
    %v491 = vlaneseq
    %v492 = vshrl.u32 %v491, 7
    %v493 = vsub.s32 6, %v492
    %v494 = vrot.slane %v461, %v493
    %v495 = vlaneseq
    %v496 = vshrl.u32 %v495, 7
    %v497 = vsub.s32 7, %v496
    %v498 = vrot.slane %v461, %v497
    %v763 = vunpack.c.l.b16 %v205
    %v764 = vunpack.c.h.b16 %v205
    %v765 = vunpack.c.l.b16 %v206
    %v766 = vunpack.c.h.b16 %v206
    %v767 = vunpack.c.l.b16 %v207
    %v768 = vunpack.c.h.b16 %v207
    %v769 = vunpack.c.l.b16 %v208
    %v770 = vunpack.c.h.b16 %v208
    %v771 = vunpack.c.l.b16 %v209
    %v772 = vunpack.c.h.b16 %v209
    %v773 = vunpack.c.l.b16 %v210
    %v774 = vunpack.c.h.b16 %v210
    %v775 = vunpack.c.l.b16 %v211
    %v776 = vunpack.c.h.b16 %v211
    %v777 = vunpack.c.l.b16 %v212
    %v778 = vunpack.c.h.b16 %v212
    %v779 = vunpack.c.l.b16 %v213
    %v780 = vunpack.c.h.b16 %v213
    %v781 = vunpack.c.l.b16 %v214
    %v782 = vunpack.c.h.b16 %v214
    %v783 = vunpack.c.l.b16 %v215
    %v784 = vunpack.c.h.b16 %v215
    %v785 = vunpack.c.l.b16 %v216
    %v786 = vunpack.c.h.b16 %v216
    %v787 = vunpack.c.l.b16 %v217
    %v788 = vunpack.c.h.b16 %v217
    %v789 = vunpack.c.l.b16 %v218
    %v790 = vunpack.c.h.b16 %v218
    %v791 = vunpack.c.l.b16 %v219
    %v792 = vunpack.c.h.b16 %v219
    %v793 = vunpack.c.l.b16 %v220
    %v794 = vunpack.c.h.b16 %v220
    %v795 = vunpack.c.l.b16 %v221
    %v796 = vunpack.c.h.b16 %v221
    %v797 = vunpack.c.l.b16 %v222
    %v798 = vunpack.c.h.b16 %v222
    %v799 = vunpack.c.l.b16 %v223
    %v800 = vunpack.c.h.b16 %v223
    %v801 = vunpack.c.l.b16 %v224
    %v802 = vunpack.c.h.b16 %v224
    %v803 = vunpack.c.l.b16 %v225
    %v804 = vunpack.c.h.b16 %v225
    %v805 = vunpack.c.l.b16 %v226
    %v806 = vunpack.c.h.b16 %v226
    %v807 = vunpack.c.l.b16 %v227
    %v808 = vunpack.c.h.b16 %v227
    %v809 = vunpack.c.l.b16 %v228
    %v810 = vunpack.c.h.b16 %v228
    %v811 = vunpack.c.l.b16 %v229
    %v812 = vunpack.c.h.b16 %v229
    %v813 = vunpack.c.l.b16 %v230
    %v814 = vunpack.c.h.b16 %v230
    %v815 = vunpack.c.l.b16 %v231
    %v816 = vunpack.c.h.b16 %v231
    %v817 = vunpack.c.l.b16 %v232
    %v818 = vunpack.c.h.b16 %v232
    %v819 = vunpack.c.l.b16 %v233
    %v820 = vunpack.c.h.b16 %v233
    %v821 = vunpack.c.l.b16 %v234
    %v822 = vunpack.c.h.b16 %v234
    %v823 = vunpack.c.l.b16 %v235
    %v824 = vunpack.c.h.b16 %v235
    %v825 = vunpack.c.l.b16 %v236
    %v826 = vunpack.c.h.b16 %v236
    %v827 = vunpack.c.l.b16 %v237
    %v828 = vunpack.c.h.b16 %v237
    %v829 = vunpack.c.l.b16 %v238
    %v830 = vunpack.c.h.b16 %v238
    %v831 = vunpack.c.l.b16 %v239
    %v832 = vunpack.c.h.b16 %v239
    %v833 = vunpack.c.l.b16 %v240
    %v834 = vunpack.c.h.b16 %v240
    %v835 = vunpack.c.l.b16 %v241
    %v836 = vunpack.c.h.b16 %v241
    %v837 = vunpack.c.l.b16 %v242
    %v838 = vunpack.c.h.b16 %v242
    %v839 = vunpack.c.l.b16 %v243
    %v840 = vunpack.c.h.b16 %v243
    %v841 = vunpack.c.l.b16 %v244
    %v842 = vunpack.c.h.b16 %v244
    %v843 = vunpack.c.l.b16 %v245
    %v844 = vunpack.c.h.b16 %v245
    %v845 = vunpack.c.l.b16 %v246
    %v846 = vunpack.c.h.b16 %v246
    %v847 = vunpack.c.l.b16 %v247
    %v848 = vunpack.c.h.b16 %v247
    %v849 = vunpack.c.l.b16 %v248
    %v850 = vunpack.c.h.b16 %v248
    %v851 = vunpack.c.l.b16 %v249
    %v852 = vunpack.c.h.b16 %v249
    %v853 = vunpack.c.l.b16 %v250
    %v854 = vunpack.c.h.b16 %v250
    %v855 = vunpack.c.l.b16 %v251
    %v856 = vunpack.c.h.b16 %v251
    %v857 = vunpack.c.l.b16 %v252
    %v858 = vunpack.c.h.b16 %v252
    %v859 = vunpack.c.l.b16 %v253
    %v860 = vunpack.c.h.b16 %v253
    %v861 = vunpack.c.l.b16 %v254
    %v862 = vunpack.c.h.b16 %v254
    %v863 = vunpack.c.l.b16 %v255
    %v864 = vunpack.c.h.b16 %v255
    %v865 = vunpack.c.l.b16 %v256
    %v866 = vunpack.c.h.b16 %v256
    %v867 = vunpack.c.l.b16 %v257
    %v868 = vunpack.c.h.b16 %v257
    %v869 = vunpack.c.l.b16 %v258
    %v870 = vunpack.c.h.b16 %v258
    %v871 = vunpack.c.l.b16 %v259
    %v872 = vunpack.c.h.b16 %v259
    %v873 = vunpack.c.l.b16 %v260
    %v874 = vunpack.c.h.b16 %v260
    %v875 = vunpack.c.l.b16 %v261
    %v876 = vunpack.c.h.b16 %v261
    %v877 = vunpack.c.l.b16 %v262
    %v878 = vunpack.c.h.b16 %v262
    %v879 = vunpack.c.l.b16 %v263
    %v880 = vunpack.c.h.b16 %v263
    %v881 = vunpack.c.l.b16 %v264
    %v882 = vunpack.c.h.b16 %v264
    %v883 = vunpack.c.l.b16 %v265
    %v884 = vunpack.c.h.b16 %v265
    %v885 = vunpack.c.l.b16 %v266
    %v886 = vunpack.c.h.b16 %v266
    %v887 = vunpack.c.l.b16 %v267
    %v888 = vunpack.c.h.b16 %v267
    %v889 = vunpack.c.l.b16 %v268
    %v890 = vunpack.c.h.b16 %v268
    %v891 = vunpack.c.l.b16 %v269
    %v892 = vunpack.c.h.b16 %v269
    %v893 = vunpack.c.l.b16 %v270
    %v894 = vunpack.c.h.b16 %v270
    %v895 = vunpack.c.l.b16 %v271
    %v896 = vunpack.c.h.b16 %v271
    %v897 = vunpack.c.l.b16 %v272
    %v898 = vunpack.c.h.b16 %v272
    %v899 = vunpack.c.l.b16 %v273
    %v900 = vunpack.c.h.b16 %v273
    %v901 = vunpack.c.l.b16 %v274
    %v902 = vunpack.c.h.b16 %v274
    %v903 = vunpack.c.l.b16 %v275
    %v904 = vunpack.c.h.b16 %v275
    %v905 = vunpack.c.l.b16 %v276
    %v906 = vunpack.c.h.b16 %v276
    %v907 = vunpack.c.l.b16 %v277
    %v908 = vunpack.c.h.b16 %v277
    %v909 = vunpack.c.l.b16 %v278
    %v910 = vunpack.c.h.b16 %v278
    %v911 = vunpack.c.l.b16 %v279
    %v912 = vunpack.c.h.b16 %v279
    %v913 = vunpack.c.l.b16 %v280
    %v914 = vunpack.c.h.b16 %v280
    %v915 = vunpack.c.l.b16 %v281
    %v916 = vunpack.c.h.b16 %v281
    %v917 = vunpack.c.l.b16 %v282
    %v918 = vunpack.c.h.b16 %v282
    %v919 = vunpack.c.l.b16 %v283
    %v920 = vunpack.c.h.b16 %v283
    %v921 = vunpack.c.l.b16 %v284
    %v922 = vunpack.c.h.b16 %v284
    %v923 = vunpack.c.l.b16 %v285
    %v924 = vunpack.c.h.b16 %v285
    %v925 = vunpack.c.l.b16 %v286
    %v926 = vunpack.c.h.b16 %v286
    %v927 = vunpack.c.l.b16 %v287
    %v928 = vunpack.c.h.b16 %v287
    %v929 = vunpack.c.l.b16 %v288
    %v930 = vunpack.c.h.b16 %v288
    %v931 = vunpack.c.l.b16 %v289
    %v932 = vunpack.c.h.b16 %v289
    %v933 = vunpack.c.l.b16 %v290
    %v934 = vunpack.c.h.b16 %v290
    %v935 = vunpack.c.l.b16 %v291
    %v936 = vunpack.c.h.b16 %v291
    %v937 = vunpack.c.l.b16 %v292
    %v938 = vunpack.c.h.b16 %v292
    %v939 = vunpack.c.l.b16 %v293
    %v940 = vunpack.c.h.b16 %v293
    %v941 = vunpack.c.l.b16 %v294
    %v942 = vunpack.c.h.b16 %v294
    %v943 = vunpack.c.l.b16 %v295
    %v944 = vunpack.c.h.b16 %v295
    %v945 = vunpack.c.l.b16 %v296
    %v946 = vunpack.c.h.b16 %v296
    %v947 = vunpack.c.l.b16 %v297
    %v948 = vunpack.c.h.b16 %v297
    %v949 = vunpack.c.l.b16 %v298
    %v950 = vunpack.c.h.b16 %v298
    %v951 = vunpack.c.l.b16 %v299
    %v952 = vunpack.c.h.b16 %v299
    %v953 = vunpack.c.l.b16 %v300
    %v954 = vunpack.c.h.b16 %v300
    %v955 = vunpack.c.l.b16 %v301
    %v956 = vunpack.c.h.b16 %v301
    %v957 = vunpack.c.l.b16 %v302
    %v958 = vunpack.c.h.b16 %v302
    %v959 = vunpack.c.l.b16 %v303
    %v960 = vunpack.c.h.b16 %v303
    %v961 = vunpack.c.l.b16 %v304
    %v962 = vunpack.c.h.b16 %v304
    %v963 = vunpack.c.l.b16 %v305
    %v964 = vunpack.c.h.b16 %v305
    %v965 = vunpack.c.l.b16 %v306
    %v966 = vunpack.c.h.b16 %v306
    %v967 = vunpack.c.l.b16 %v307
    %v968 = vunpack.c.h.b16 %v307
    %v969 = vunpack.c.l.b16 %v308
    %v970 = vunpack.c.h.b16 %v308
    %v971 = vunpack.c.l.b16 %v309
    %v972 = vunpack.c.h.b16 %v309
    %v973 = vunpack.c.l.b16 %v310
    %v974 = vunpack.c.h.b16 %v310
    %v975 = vunpack.c.l.b16 %v311
    %v976 = vunpack.c.h.b16 %v311
    %v977 = vunpack.c.l.b16 %v312
    %v978 = vunpack.c.h.b16 %v312
    %v979 = vunpack.c.l.b16 %v313
    %v980 = vunpack.c.h.b16 %v313
    %v981 = vunpack.c.l.b16 %v314
    %v982 = vunpack.c.h.b16 %v314
    %v983 = vunpack.c.l.b16 %v315
    %v984 = vunpack.c.h.b16 %v315
    %v985 = vunpack.c.l.b16 %v316
    %v986 = vunpack.c.h.b16 %v316
    %v987 = vunpack.c.l.b16 %v317
    %v988 = vunpack.c.h.b16 %v317
    %v989 = vunpack.c.l.b16 %v318
    %v990 = vunpack.c.h.b16 %v318
    %v991 = vunpack.c.l.b16 %v319
    %v992 = vunpack.c.h.b16 %v319
    %v993 = vunpack.c.l.b16 %v320
    %v994 = vunpack.c.h.b16 %v320
    %v995 = vunpack.c.l.b16 %v321
    %v996 = vunpack.c.h.b16 %v321
    %v997 = vunpack.c.l.b16 %v322
    %v998 = vunpack.c.h.b16 %v322
    %v999 = vunpack.c.l.b16 %v323
    %v1000 = vunpack.c.h.b16 %v323
    %v1001 = vunpack.c.l.b16 %v324
    %v1002 = vunpack.c.h.b16 %v324
    %v1003 = vunpack.c.l.b16 %v325
    %v1004 = vunpack.c.h.b16 %v325
    %v1005 = vunpack.c.l.b16 %v326
    %v1006 = vunpack.c.h.b16 %v326
    %v1007 = vunpack.c.l.b16 %v327
    %v1008 = vunpack.c.h.b16 %v327
    %v1009 = vunpack.c.l.b16 %v328
    %v1010 = vunpack.c.h.b16 %v328
    %v1011 = vunpack.c.l.b16 %v329
    %v1012 = vunpack.c.h.b16 %v329
    %v1013 = vunpack.c.l.b16 %v330
    %v1014 = vunpack.c.h.b16 %v330
    %v1015 = vunpack.c.l.b16 %v331
    %v1016 = vunpack.c.h.b16 %v331
    %v1017 = vunpack.c.l.b16 %v332
    %v1018 = vunpack.c.h.b16 %v332
    %v1019 = vunpack.c.l.b16 %v333
    %v1020 = vunpack.c.h.b16 %v333
    %v1021 = vunpack.c.l.b16 %v334
    %v1022 = vunpack.c.h.b16 %v334
    %v1023 = vunpack.c.l.b16 %v335
    %v1024 = vunpack.c.h.b16 %v335
    %v1025 = vunpack.c.l.b16 %v336
    %v1026 = vunpack.c.h.b16 %v336
    %v1027 = vunpack.c.l.b16 %v337
    %v1028 = vunpack.c.h.b16 %v337
    %v1029 = vunpack.c.l.b16 %v338
    %v1030 = vunpack.c.h.b16 %v338
    %v1031 = vunpack.c.l.b16 %v339
    %v1032 = vunpack.c.h.b16 %v339
    %v1033 = vunpack.c.l.b16 %v340
    %v1034 = vunpack.c.h.b16 %v340
    %v1035 = vunpack.c.l.b16 %v341
    %v1036 = vunpack.c.h.b16 %v341
    %v1037 = vunpack.c.l.b16 %v342
    %v1038 = vunpack.c.h.b16 %v342
    %v1039 = vunpack.c.l.b16 %v343
    %v1040 = vunpack.c.h.b16 %v343
    %v1041 = vunpack.c.l.b16 %v344
    %v1042 = vunpack.c.h.b16 %v344
    %v1043 = vunpack.c.l.b16 %v345
    %v1044 = vunpack.c.h.b16 %v345
    %v1045 = vunpack.c.l.b16 %v346
    %v1046 = vunpack.c.h.b16 %v346
    %v1047 = vunpack.c.l.b16 %v347
    %v1048 = vunpack.c.h.b16 %v347
    %v1049 = vunpack.c.l.b16 %v348
    %v1050 = vunpack.c.h.b16 %v348
    %v1051 = vunpack.c.l.b16 %v349
    %v1052 = vunpack.c.h.b16 %v349
    %v1053 = vunpack.c.l.b16 %v350
    %v1054 = vunpack.c.h.b16 %v350
    %v1055 = vunpack.c.l.b16 %v351
    %v1056 = vunpack.c.h.b16 %v351
    %v1057 = vunpack.c.l.b16 %v352
    %v1058 = vunpack.c.h.b16 %v352
    %v1059 = vunpack.c.l.b16 %v353
    %v1060 = vunpack.c.h.b16 %v353
    %v1061 = vunpack.c.l.b16 %v354
    %v1062 = vunpack.c.h.b16 %v354
    %v1063 = vunpack.c.l.b16 %v355
    %v1064 = vunpack.c.h.b16 %v355
    %v1065 = vunpack.c.l.b16 %v356
    %v1066 = vunpack.c.h.b16 %v356
    %v1067 = vunpack.c.l.b16 %v357
    %v1068 = vunpack.c.h.b16 %v357
    %v1069 = vunpack.c.l.b16 %v358
    %v1070 = vunpack.c.h.b16 %v358
    %v1071 = vunpack.c.l.b16 %v359
    %v1072 = vunpack.c.h.b16 %v359
    %v1073 = vunpack.c.l.b16 %v360
    %v1074 = vunpack.c.h.b16 %v360
    %v1075 = vunpack.c.l.b16 %v361
    %v1076 = vunpack.c.h.b16 %v361
    %v1077 = vunpack.c.l.b16 %v362
    %v1078 = vunpack.c.h.b16 %v362
    %v1079 = vunpack.c.l.b16 %v363
    %v1080 = vunpack.c.h.b16 %v363
    %v1081 = vunpack.c.l.b16 %v364
    %v1082 = vunpack.c.h.b16 %v364
    %v1083 = vunpack.c.l.b16 %v365
    %v1084 = vunpack.c.h.b16 %v365
    %v1085 = vunpack.c.l.b16 %v366
    %v1086 = vunpack.c.h.b16 %v366
    %v1087 = vunpack.c.l.b16 %v367
    %v1088 = vunpack.c.h.b16 %v367
    %v1089 = vunpack.c.l.b16 %v368
    %v1090 = vunpack.c.h.b16 %v368
    %v1091 = vunpack.c.l.b16 %v369
    %v1092 = vunpack.c.h.b16 %v369
    %v1093 = vunpack.c.l.b16 %v370
    %v1094 = vunpack.c.h.b16 %v370
    %v1095 = vunpack.c.l.b16 %v371
    %v1096 = vunpack.c.h.b16 %v371
    %v1097 = vunpack.c.l.b16 %v372
    %v1098 = vunpack.c.h.b16 %v372
    %v1099 = vunpack.c.l.b16 %v373
    %v1100 = vunpack.c.h.b16 %v373
    %v1101 = vunpack.c.l.b16 %v374
    %v1102 = vunpack.c.h.b16 %v374
    %v1103 = vunpack.c.l.b16 %v375
    %v1104 = vunpack.c.h.b16 %v375
    %v1105 = vunpack.c.l.b16 %v376
    %v1106 = vunpack.c.h.b16 %v376
    %v1107 = vunpack.c.l.b16 %v377
    %v1108 = vunpack.c.h.b16 %v377
    %v1109 = vunpack.c.l.b16 %v378
    %v1110 = vunpack.c.h.b16 %v378
    %v1111 = vunpack.c.l.b16 %v379
    %v1112 = vunpack.c.h.b16 %v379
    %v1113 = vunpack.c.l.b16 %v380
    %v1114 = vunpack.c.h.b16 %v380
    %v1115 = vunpack.c.l.b16 %v381
    %v1116 = vunpack.c.h.b16 %v381
    %v1117 = vunpack.c.l.b16 %v382
    %v1118 = vunpack.c.h.b16 %v382
    %v1119 = vunpack.c.l.b16 %v383
    %v1120 = vunpack.c.h.b16 %v383
    %v1121 = vunpack.c.l.b16 %v384
    %v1122 = vunpack.c.h.b16 %v384
    %v1123 = vunpack.c.l.b16 %v385
    %v1124 = vunpack.c.h.b16 %v385
    %v1125 = vunpack.c.l.b16 %v386
    %v1126 = vunpack.c.h.b16 %v386
    %v1127 = vunpack.c.l.b16 %v387
    %v1128 = vunpack.c.h.b16 %v387
    %v1129 = vunpack.c.l.b16 %v388
    %v1130 = vunpack.c.h.b16 %v388
    %v1131 = vunpack.c.l.b16 %v389
    %v1132 = vunpack.c.h.b16 %v389
    %v1133 = vunpack.c.l.b16 %v390
    %v1134 = vunpack.c.h.b16 %v390
    %v1135 = vunpack.c.l.b16 %v391
    %v1136 = vunpack.c.h.b16 %v391
    %v1137 = vunpack.c.l.b16 %v392
    %v1138 = vunpack.c.h.b16 %v392
    %v1139 = vunpack.c.l.b16 %v393
    %v1140 = vunpack.c.h.b16 %v393
    %v1141 = vunpack.c.l.b16 %v394
    %v1142 = vunpack.c.h.b16 %v394
    %v1143 = vunpack.c.l.b16 %v395
    %v1144 = vunpack.c.h.b16 %v395
    %v1145 = vunpack.c.l.b16 %v396
    %v1146 = vunpack.c.h.b16 %v396
    %v1147 = vunpack.c.l.b16 %v397
    %v1148 = vunpack.c.h.b16 %v397
    %v1149 = vunpack.c.l.b16 %v398
    %v1150 = vunpack.c.h.b16 %v398
    %v1151 = vunpack.c.l.b16 %v399
    %v1152 = vunpack.c.h.b16 %v399
    %v1153 = vunpack.c.l.b16 %v400
    %v1154 = vunpack.c.h.b16 %v400
    %v1155 = vunpack.c.l.b16 %v401
    %v1156 = vunpack.c.h.b16 %v401
    %v1157 = vunpack.c.l.b16 %v402
    %v1158 = vunpack.c.h.b16 %v402
    %v1159 = vunpack.c.l.b16 %v403
    %v1160 = vunpack.c.h.b16 %v403
    %v1161 = vunpack.c.l.b16 %v404
    %v1162 = vunpack.c.h.b16 %v404
    %v1163 = vunpack.c.l.b16 %v405
    %v1164 = vunpack.c.h.b16 %v405
    %v1165 = vunpack.c.l.b16 %v406
    %v1166 = vunpack.c.h.b16 %v406
    %v1167 = vunpack.c.l.b16 %v407
    %v1168 = vunpack.c.h.b16 %v407
    %v1169 = vunpack.c.l.b16 %v408
    %v1170 = vunpack.c.h.b16 %v408
    %v1171 = vunpack.c.l.b16 %v409
    %v1172 = vunpack.c.h.b16 %v409
    %v1173 = vunpack.c.l.b16 %v410
    %v1174 = vunpack.c.h.b16 %v410
    %v1175 = vunpack.c.l.b16 %v411
    %v1176 = vunpack.c.h.b16 %v411
    %v1177 = vunpack.c.l.b16 %v412
    %v1178 = vunpack.c.h.b16 %v412
    %v1179 = vunpack.c.l.b16 %v413
    %v1180 = vunpack.c.h.b16 %v413
    %v1181 = vunpack.c.l.b16 %v414
    %v1182 = vunpack.c.h.b16 %v414
    %v1183 = vunpack.c.l.b16 %v415
    %v1184 = vunpack.c.h.b16 %v415
    %v1185 = vunpack.c.l.b16 %v416
    %v1186 = vunpack.c.h.b16 %v416
    %v1187 = vunpack.c.l.b16 %v417
    %v1188 = vunpack.c.h.b16 %v417
    %v1189 = vunpack.c.l.b16 %v418
    %v1190 = vunpack.c.h.b16 %v418
    %v1191 = vunpack.c.l.b16 %v419
    %v1192 = vunpack.c.h.b16 %v419
    %v1193 = vunpack.c.l.b16 %v420
    %v1194 = vunpack.c.h.b16 %v420
    %v1195 = vunpack.c.l.b16 %v421
    %v1196 = vunpack.c.h.b16 %v421
    %v1197 = vunpack.c.l.b16 %v422
    %v1198 = vunpack.c.h.b16 %v422
    %v1199 = vunpack.c.l.b16 %v423
    %v1200 = vunpack.c.h.b16 %v423
    %v1201 = vunpack.c.l.b16 %v424
    %v1202 = vunpack.c.h.b16 %v424
    %v1203 = vunpack.c.l.b16 %v425
    %v1204 = vunpack.c.h.b16 %v425
    %v1205 = vunpack.c.l.b16 %v426
    %v1206 = vunpack.c.h.b16 %v426
    %v1207 = vunpack.c.l.b16 %v427
    %v1208 = vunpack.c.h.b16 %v427
    %v1209 = vunpack.c.l.b16 %v428
    %v1210 = vunpack.c.h.b16 %v428
    %v1211 = vunpack.c.l.b16 %v429
    %v1212 = vunpack.c.h.b16 %v429
    %v1213 = vunpack.c.l.b16 %v430
    %v1214 = vunpack.c.h.b16 %v430
    %v1215 = vunpack.c.l.b16 %v431
    %v1216 = vunpack.c.h.b16 %v431
    %v1217 = vunpack.c.l.b16 %v432
    %v1218 = vunpack.c.h.b16 %v432
    %v1219 = vunpack.c.l.b16 %v433
    %v1220 = vunpack.c.h.b16 %v433
    %v1221 = vunpack.c.l.b16 %v434
    %v1222 = vunpack.c.h.b16 %v434
    %v1223 = vunpack.c.l.b16 %v435
    %v1224 = vunpack.c.h.b16 %v435
    %v1225 = vunpack.c.l.b16 %v436
    %v1226 = vunpack.c.h.b16 %v436
    %v1227 = vunpack.c.l.b16 %v437
    %v1228 = vunpack.c.h.b16 %v437
    %v1229 = vunpack.c.l.b16 %v438
    %v1230 = vunpack.c.h.b16 %v438
    %v1231 = vunpack.c.l.b16 %v439
    %v1232 = vunpack.c.h.b16 %v439
    %v1233 = vunpack.c.l.b16 %v440
    %v1234 = vunpack.c.h.b16 %v440
    %v1235 = vunpack.c.l.b16 %v441
    %v1236 = vunpack.c.h.b16 %v441
    %v1237 = vunpack.c.l.b16 %v442
    %v1238 = vunpack.c.h.b16 %v442
    %v1239 = vunpack.c.l.b16 %v443
    %v1240 = vunpack.c.h.b16 %v443
    %v1241 = vunpack.c.l.b16 %v444
    %v1242 = vunpack.c.h.b16 %v444
    %v1243 = vunpack.c.l.b16 %v445
    %v1244 = vunpack.c.h.b16 %v445
    %v1245 = vunpack.c.l.b16 %v446
    %v1246 = vunpack.c.h.b16 %v446
    %v1247 = vunpack.c.l.b16 %v447
    %v1248 = vunpack.c.h.b16 %v447
    %v1249 = vunpack.c.l.b16 %v448
    %v1250 = vunpack.c.h.b16 %v448
    %v1251 = vunpack.c.l.b16 %v449
    %v1252 = vunpack.c.h.b16 %v449
    %v1253 = vunpack.c.l.b16 %v450
    %v1254 = vunpack.c.h.b16 %v450
    %v1255 = vunpack.c.l.b16 %v451
    %v1256 = vunpack.c.h.b16 %v451
    %v1257 = vunpack.c.l.b16 %v452
    %v1258 = vunpack.c.h.b16 %v452
    %v1259 = vunpack.c.l.b16 %v453
    %v1260 = vunpack.c.h.b16 %v453
    %v1261 = vunpack.c.l.b16 %v454
    %v1262 = vunpack.c.h.b16 %v454
    %v1263 = vunpack.c.l.b16 %v455
    %v1264 = vunpack.c.h.b16 %v455
    %v1265 = vunpack.c.l.b16 %v456
    %v1266 = vunpack.c.h.b16 %v456
    %v1267 = vunpack.c.l.b16 %v457
    %v1268 = vunpack.c.h.b16 %v457
    %v1269 = vunpack.c.l.b16 %v458
    %v1270 = vunpack.c.h.b16 %v458
    %v1271 = vunpack.c.l.b16 %v459
    %v1272 = vunpack.c.h.b16 %v459
    %v1273 = vunpack.c.l.b16 %v460
    %v1274 = vunpack.c.h.b16 %v460
    %v1275 = vpack.c.b16 %v771, %v763
    %v1276 = vpack.c.b16 %v772, %v764
    %v1277 = vpack.c.b16 %v773, %v765
    %v1278 = vpack.c.b16 %v774, %v766
    %v1279 = vpack.c.b16 %v775, %v767
    %v1280 = vpack.c.b16 %v776, %v768
    %v1281 = vpack.c.b16 %v777, %v769
    %v1282 = vpack.c.b16 %v778, %v770
    %v1283 = vpack.c.b16 %v787, %v779
    %v1284 = vpack.c.b16 %v788, %v780
    %v1285 = vpack.c.b16 %v789, %v781
    %v1286 = vpack.c.b16 %v790, %v782
    %v1287 = vpack.c.b16 %v791, %v783
    %v1288 = vpack.c.b16 %v792, %v784
    %v1289 = vpack.c.b16 %v793, %v785
    %v1290 = vpack.c.b16 %v794, %v786
    %v1291 = vpack.c.b16 %v803, %v795
    %v1292 = vpack.c.b16 %v804, %v796
    %v1293 = vpack.c.b16 %v805, %v797
    %v1294 = vpack.c.b16 %v806, %v798
    %v1295 = vpack.c.b16 %v807, %v799
    %v1296 = vpack.c.b16 %v808, %v800
    %v1297 = vpack.c.b16 %v809, %v801
    %v1298 = vpack.c.b16 %v810, %v802
    %v1299 = vpack.c.b16 %v819, %v811
    %v1300 = vpack.c.b16 %v820, %v812
    %v1301 = vpack.c.b16 %v821, %v813
    %v1302 = vpack.c.b16 %v822, %v814
    %v1303 = vpack.c.b16 %v823, %v815
    %v1304 = vpack.c.b16 %v824, %v816
    %v1305 = vpack.c.b16 %v825, %v817
    %v1306 = vpack.c.b16 %v826, %v818
    %v1307 = vpack.c.b16 %v835, %v827
    %v1308 = vpack.c.b16 %v836, %v828
    %v1309 = vpack.c.b16 %v837, %v829
    %v1310 = vpack.c.b16 %v838, %v830
    %v1311 = vpack.c.b16 %v839, %v831
    %v1312 = vpack.c.b16 %v840, %v832
    %v1313 = vpack.c.b16 %v841, %v833
    %v1314 = vpack.c.b16 %v842, %v834
    %v1315 = vpack.c.b16 %v851, %v843
    %v1316 = vpack.c.b16 %v852, %v844
    %v1317 = vpack.c.b16 %v853, %v845
    %v1318 = vpack.c.b16 %v854, %v846
    %v1319 = vpack.c.b16 %v855, %v847
    %v1320 = vpack.c.b16 %v856, %v848
    %v1321 = vpack.c.b16 %v857, %v849
    %v1322 = vpack.c.b16 %v858, %v850
    %v1323 = vpack.c.b16 %v867, %v859
    %v1324 = vpack.c.b16 %v868, %v860
    %v1325 = vpack.c.b16 %v869, %v861
    %v1326 = vpack.c.b16 %v870, %v862
    %v1327 = vpack.c.b16 %v871, %v863
    %v1328 = vpack.c.b16 %v872, %v864
    %v1329 = vpack.c.b16 %v873, %v865
    %v1330 = vpack.c.b16 %v874, %v866
    %v1331 = vpack.c.b16 %v883, %v875
    %v1332 = vpack.c.b16 %v884, %v876
    %v1333 = vpack.c.b16 %v885, %v877
    %v1334 = vpack.c.b16 %v886, %v878
    %v1335 = vpack.c.b16 %v887, %v879
    %v1336 = vpack.c.b16 %v888, %v880
    %v1337 = vpack.c.b16 %v889, %v881
    %v1338 = vpack.c.b16 %v890, %v882
    %v1339 = vpack.c.b16 %v899, %v891
    %v1340 = vpack.c.b16 %v900, %v892
    %v1341 = vpack.c.b16 %v901, %v893
    %v1342 = vpack.c.b16 %v902, %v894
    %v1343 = vpack.c.b16 %v903, %v895
    %v1344 = vpack.c.b16 %v904, %v896
    %v1345 = vpack.c.b16 %v905, %v897
    %v1346 = vpack.c.b16 %v906, %v898
    %v1347 = vpack.c.b16 %v915, %v907
    %v1348 = vpack.c.b16 %v916, %v908
    %v1349 = vpack.c.b16 %v917, %v909
    %v1350 = vpack.c.b16 %v918, %v910
    %v1351 = vpack.c.b16 %v919, %v911
    %v1352 = vpack.c.b16 %v920, %v912
    %v1353 = vpack.c.b16 %v921, %v913
    %v1354 = vpack.c.b16 %v922, %v914
    %v1355 = vpack.c.b16 %v931, %v923
    %v1356 = vpack.c.b16 %v932, %v924
    %v1357 = vpack.c.b16 %v933, %v925
    %v1358 = vpack.c.b16 %v934, %v926
    %v1359 = vpack.c.b16 %v935, %v927
    %v1360 = vpack.c.b16 %v936, %v928
    %v1361 = vpack.c.b16 %v937, %v929
    %v1362 = vpack.c.b16 %v938, %v930
    %v1363 = vpack.c.b16 %v947, %v939
    %v1364 = vpack.c.b16 %v948, %v940
    %v1365 = vpack.c.b16 %v949, %v941
    %v1366 = vpack.c.b16 %v950, %v942
    %v1367 = vpack.c.b16 %v951, %v943
    %v1368 = vpack.c.b16 %v952, %v944
    %v1369 = vpack.c.b16 %v953, %v945
    %v1370 = vpack.c.b16 %v954, %v946
    %v1371 = vpack.c.b16 %v963, %v955
    %v1372 = vpack.c.b16 %v964, %v956
    %v1373 = vpack.c.b16 %v965, %v957
    %v1374 = vpack.c.b16 %v966, %v958
    %v1375 = vpack.c.b16 %v967, %v959
    %v1376 = vpack.c.b16 %v968, %v960
    %v1377 = vpack.c.b16 %v969, %v961
    %v1378 = vpack.c.b16 %v970, %v962
    %v1379 = vpack.c.b16 %v979, %v971
    %v1380 = vpack.c.b16 %v980, %v972
    %v1381 = vpack.c.b16 %v981, %v973
    %v1382 = vpack.c.b16 %v982, %v974
    %v1383 = vpack.c.b16 %v983, %v975
    %v1384 = vpack.c.b16 %v984, %v976
    %v1385 = vpack.c.b16 %v985, %v977
    %v1386 = vpack.c.b16 %v986, %v978
    %v1387 = vpack.c.b16 %v995, %v987
    %v1388 = vpack.c.b16 %v996, %v988
    %v1389 = vpack.c.b16 %v997, %v989
    %v1390 = vpack.c.b16 %v998, %v990
    %v1391 = vpack.c.b16 %v999, %v991
    %v1392 = vpack.c.b16 %v1000, %v992
    %v1393 = vpack.c.b16 %v1001, %v993
    %v1394 = vpack.c.b16 %v1002, %v994
    %v1395 = vpack.c.b16 %v1011, %v1003
    %v1396 = vpack.c.b16 %v1012, %v1004
    %v1397 = vpack.c.b16 %v1013, %v1005
    %v1398 = vpack.c.b16 %v1014, %v1006
    %v1399 = vpack.c.b16 %v1015, %v1007
    %v1400 = vpack.c.b16 %v1016, %v1008
    %v1401 = vpack.c.b16 %v1017, %v1009
    %v1402 = vpack.c.b16 %v1018, %v1010
    %v1403 = vpack.c.b16 %v1027, %v1019
    %v1404 = vpack.c.b16 %v1028, %v1020
    %v1405 = vpack.c.b16 %v1029, %v1021
    %v1406 = vpack.c.b16 %v1030, %v1022
    %v1407 = vpack.c.b16 %v1031, %v1023
    %v1408 = vpack.c.b16 %v1032, %v1024
    %v1409 = vpack.c.b16 %v1033, %v1025
    %v1410 = vpack.c.b16 %v1034, %v1026
    %v1411 = vpack.c.b16 %v1043, %v1035
    %v1412 = vpack.c.b16 %v1044, %v1036
    %v1413 = vpack.c.b16 %v1045, %v1037
    %v1414 = vpack.c.b16 %v1046, %v1038
    %v1415 = vpack.c.b16 %v1047, %v1039
    %v1416 = vpack.c.b16 %v1048, %v1040
    %v1417 = vpack.c.b16 %v1049, %v1041
    %v1418 = vpack.c.b16 %v1050, %v1042
    %v1419 = vpack.c.b16 %v1059, %v1051
    %v1420 = vpack.c.b16 %v1060, %v1052
    %v1421 = vpack.c.b16 %v1061, %v1053
    %v1422 = vpack.c.b16 %v1062, %v1054
    %v1423 = vpack.c.b16 %v1063, %v1055
    %v1424 = vpack.c.b16 %v1064, %v1056
    %v1425 = vpack.c.b16 %v1065, %v1057
    %v1426 = vpack.c.b16 %v1066, %v1058
    %v1427 = vpack.c.b16 %v1075, %v1067
    %v1428 = vpack.c.b16 %v1076, %v1068
    %v1429 = vpack.c.b16 %v1077, %v1069
    %v1430 = vpack.c.b16 %v1078, %v1070
    %v1431 = vpack.c.b16 %v1079, %v1071
    %v1432 = vpack.c.b16 %v1080, %v1072
    %v1433 = vpack.c.b16 %v1081, %v1073
    %v1434 = vpack.c.b16 %v1082, %v1074
    %v1435 = vpack.c.b16 %v1091, %v1083
    %v1436 = vpack.c.b16 %v1092, %v1084
    %v1437 = vpack.c.b16 %v1093, %v1085
    %v1438 = vpack.c.b16 %v1094, %v1086
    %v1439 = vpack.c.b16 %v1095, %v1087
    %v1440 = vpack.c.b16 %v1096, %v1088
    %v1441 = vpack.c.b16 %v1097, %v1089
    %v1442 = vpack.c.b16 %v1098, %v1090
    %v1443 = vpack.c.b16 %v1107, %v1099
    %v1444 = vpack.c.b16 %v1108, %v1100
    %v1445 = vpack.c.b16 %v1109, %v1101
    %v1446 = vpack.c.b16 %v1110, %v1102
    %v1447 = vpack.c.b16 %v1111, %v1103
    %v1448 = vpack.c.b16 %v1112, %v1104
    %v1449 = vpack.c.b16 %v1113, %v1105
    %v1450 = vpack.c.b16 %v1114, %v1106
    %v1451 = vpack.c.b16 %v1123, %v1115
    %v1452 = vpack.c.b16 %v1124, %v1116
    %v1453 = vpack.c.b16 %v1125, %v1117
    %v1454 = vpack.c.b16 %v1126, %v1118
    %v1455 = vpack.c.b16 %v1127, %v1119
    %v1456 = vpack.c.b16 %v1128, %v1120
    %v1457 = vpack.c.b16 %v1129, %v1121
    %v1458 = vpack.c.b16 %v1130, %v1122
    %v1459 = vpack.c.b16 %v1139, %v1131
    %v1460 = vpack.c.b16 %v1140, %v1132
    %v1461 = vpack.c.b16 %v1141, %v1133
    %v1462 = vpack.c.b16 %v1142, %v1134
    %v1463 = vpack.c.b16 %v1143, %v1135
    %v1464 = vpack.c.b16 %v1144, %v1136
    %v1465 = vpack.c.b16 %v1145, %v1137
    %v1466 = vpack.c.b16 %v1146, %v1138
    %v1467 = vpack.c.b16 %v1155, %v1147
    %v1468 = vpack.c.b16 %v1156, %v1148
    %v1469 = vpack.c.b16 %v1157, %v1149
    %v1470 = vpack.c.b16 %v1158, %v1150
    %v1471 = vpack.c.b16 %v1159, %v1151
    %v1472 = vpack.c.b16 %v1160, %v1152
    %v1473 = vpack.c.b16 %v1161, %v1153
    %v1474 = vpack.c.b16 %v1162, %v1154
    %v1475 = vpack.c.b16 %v1171, %v1163
    %v1476 = vpack.c.b16 %v1172, %v1164
    %v1477 = vpack.c.b16 %v1173, %v1165
    %v1478 = vpack.c.b16 %v1174, %v1166
    %v1479 = vpack.c.b16 %v1175, %v1167
    %v1480 = vpack.c.b16 %v1176, %v1168
    %v1481 = vpack.c.b16 %v1177, %v1169
    %v1482 = vpack.c.b16 %v1178, %v1170
    %v1483 = vpack.c.b16 %v1187, %v1179
    %v1484 = vpack.c.b16 %v1188, %v1180
    %v1485 = vpack.c.b16 %v1189, %v1181
    %v1486 = vpack.c.b16 %v1190, %v1182
    %v1487 = vpack.c.b16 %v1191, %v1183
    %v1488 = vpack.c.b16 %v1192, %v1184
    %v1489 = vpack.c.b16 %v1193, %v1185
    %v1490 = vpack.c.b16 %v1194, %v1186
    %v1491 = vpack.c.b16 %v1203, %v1195
    %v1492 = vpack.c.b16 %v1204, %v1196
    %v1493 = vpack.c.b16 %v1205, %v1197
    %v1494 = vpack.c.b16 %v1206, %v1198
    %v1495 = vpack.c.b16 %v1207, %v1199
    %v1496 = vpack.c.b16 %v1208, %v1200
    %v1497 = vpack.c.b16 %v1209, %v1201
    %v1498 = vpack.c.b16 %v1210, %v1202
    %v1499 = vpack.c.b16 %v1219, %v1211
    %v1500 = vpack.c.b16 %v1220, %v1212
    %v1501 = vpack.c.b16 %v1221, %v1213
    %v1502 = vpack.c.b16 %v1222, %v1214
    %v1503 = vpack.c.b16 %v1223, %v1215
    %v1504 = vpack.c.b16 %v1224, %v1216
    %v1505 = vpack.c.b16 %v1225, %v1217
    %v1506 = vpack.c.b16 %v1226, %v1218
    %v1507 = vpack.c.b16 %v1235, %v1227
    %v1508 = vpack.c.b16 %v1236, %v1228
    %v1509 = vpack.c.b16 %v1237, %v1229
    %v1510 = vpack.c.b16 %v1238, %v1230
    %v1511 = vpack.c.b16 %v1239, %v1231
    %v1512 = vpack.c.b16 %v1240, %v1232
    %v1513 = vpack.c.b16 %v1241, %v1233
    %v1514 = vpack.c.b16 %v1242, %v1234
    %v1515 = vpack.c.b16 %v1251, %v1243
    %v1516 = vpack.c.b16 %v1252, %v1244
    %v1517 = vpack.c.b16 %v1253, %v1245
    %v1518 = vpack.c.b16 %v1254, %v1246
    %v1519 = vpack.c.b16 %v1255, %v1247
    %v1520 = vpack.c.b16 %v1256, %v1248
    %v1521 = vpack.c.b16 %v1257, %v1249
    %v1522 = vpack.c.b16 %v1258, %v1250
    %v1523 = vpack.c.b16 %v1267, %v1259
    %v1524 = vpack.c.b16 %v1268, %v1260
    %v1525 = vpack.c.b16 %v1269, %v1261
    %v1526 = vpack.c.b16 %v1270, %v1262
    %v1527 = vpack.c.b16 %v1271, %v1263
    %v1528 = vpack.c.b16 %v1272, %v1264
    %v1529 = vpack.c.b16 %v1273, %v1265
    %v1530 = vpack.c.b16 %v1274, %v1266
    %1787 = vmatprep.subr.bf16.mxu0 %v1332
    %1788 = vmatpush1.bf16.msra.mxu0 %v1331
    %1789 = vmatprep.subr.bf16.mxu0 %v1324
    %1790 = vmatpush1.bf16.msra.mxu0 %v1323
    %1791 = vmatprep.subr.bf16.mxu0 %v1316
    %1792 = vmatpush1.bf16.msra.mxu0 %v1315
    %1793 = vmatprep.subr.bf16.mxu0 %v1308
    %1794 = vmatpush1.bf16.msra.mxu0 %v1307
    %1795 = vmatprep.subr.bf16.mxu0 %v1300
    %1796 = vmatpush1.bf16.msra.mxu0 %v1299
    %1797 = vmatprep.subr.bf16.mxu0 %v1292
    %1798 = vmatpush1.bf16.msra.mxu0 %v1291
    %1799 = vmatprep.subr.bf16.mxu0 %v1284
    %1800 = vmatpush1.bf16.msra.mxu0 %v1283
    %1801 = vmatprep.subr.bf16.mxu0 %v1276
    %1802 = vmatpush1.bf16.msra.mxu0 %v1275
    %1803 = vmatprep.subr.bf16.mxu0 %v1396
    %1804 = vmatpush2.bf16.msra.mxu0 %v1395
    %1805 = vmatprep.subr.bf16.mxu0 %v1388
    %1806 = vmatpush2.bf16.msra.mxu0 %v1387
    %1807 = vmatprep.subr.bf16.mxu0 %v1380
    %1808 = vmatpush2.bf16.msra.mxu0 %v1379
    %1809 = vmatprep.subr.bf16.mxu0 %v1372
    %1810 = vmatpush2.bf16.msra.mxu0 %v1371
    %1811 = vmatprep.subr.bf16.mxu0 %v1364
    %1812 = vmatpush2.bf16.msra.mxu0 %v1363
    %1813 = vmatprep.subr.bf16.mxu0 %v1356
    %1814 = vmatpush2.bf16.msra.mxu0 %v1355
    %1815 = vmatprep.subr.bf16.mxu0 %v1348
    %1816 = vmatpush2.bf16.msra.mxu0 %v1347
    %1817 = vmatprep.subr.bf16.mxu0 %v1340
    %1818 = vmatpush2.bf16.msra.mxu0 %v1339
    %1819 = vmatprep.mubr.bf16.mxu0 %v463
    %1820 = vmatmul.mubr.bf16.gmra.mxu0 %v462
    %v1821 = vpop.f32.mrf.mxu0
    %v1822 = vadd.f32 %v470, %v1821
    %v1823 = vpop.f32.mrf.mxu0
    %v1824 = vadd.f32 %v474, %v1823
    %v1825 = vpop.f32.mrf.mxu0
    %v1826 = vpop.f32.mrf.mxu0
    %1827 = vdwg.mxu0
    %1828 = vmatprep.subr.bf16.mxu0 %v1460
    %1829 = vmatpush1.bf16.msra.mxu0 %v1459
    %1830 = vmatprep.subr.bf16.mxu0 %v1452
    %1831 = vmatpush1.bf16.msra.mxu0 %v1451
    %1832 = vmatprep.subr.bf16.mxu0 %v1444
    %1833 = vmatpush1.bf16.msra.mxu0 %v1443
    %1834 = vmatprep.subr.bf16.mxu0 %v1436
    %1835 = vmatpush1.bf16.msra.mxu0 %v1435
    %1836 = vmatprep.subr.bf16.mxu0 %v1428
    %1837 = vmatpush1.bf16.msra.mxu0 %v1427
    %1838 = vmatprep.subr.bf16.mxu0 %v1420
    %1839 = vmatpush1.bf16.msra.mxu0 %v1419
    %1840 = vmatprep.subr.bf16.mxu0 %v1412
    %1841 = vmatpush1.bf16.msra.mxu0 %v1411
    %1842 = vmatprep.subr.bf16.mxu0 %v1404
    %1843 = vmatpush1.bf16.msra.mxu0 %v1403
    %1844 = vmatprep.subr.bf16.mxu0 %v1524
    %1845 = vmatpush2.bf16.msra.mxu0 %v1523
    %1846 = vmatprep.subr.bf16.mxu0 %v1516
    %1847 = vmatpush2.bf16.msra.mxu0 %v1515
    %1848 = vmatprep.subr.bf16.mxu0 %v1508
    %1849 = vmatpush2.bf16.msra.mxu0 %v1507
    %1850 = vmatprep.subr.bf16.mxu0 %v1500
    %1851 = vmatpush2.bf16.msra.mxu0 %v1499
    %1852 = vmatprep.subr.bf16.mxu0 %v1492
    %1853 = vmatpush2.bf16.msra.mxu0 %v1491
    %1854 = vmatprep.subr.bf16.mxu0 %v1484
    %1855 = vmatpush2.bf16.msra.mxu0 %v1483
    %1856 = vmatprep.subr.bf16.mxu0 %v1476
    %1857 = vmatpush2.bf16.msra.mxu0 %v1475
    %1858 = vmatprep.subr.bf16.mxu0 %v1468
    %1859 = vmatpush2.bf16.msra.mxu0 %v1467
    %1860 = vmatprep.mubr.bf16.mxu0 %v465
    %1861 = vmatmul.mubr.bf16.gmra.mxu0 %v464
    %v1862 = vpop.f32.mrf.mxu0
    %v1863 = vadd.f32 %v1822, %v1862
    %v1864 = vpop.f32.mrf.mxu0
    %v1865 = vadd.f32 %v1824, %v1864
    %v1866 = vpop.f32.mrf.mxu0
    %v1867 = vpop.f32.mrf.mxu0
    %1868 = vdwg.mxu0
    %1869 = vmatprep.subr.bf16.mxu0 %v1334
    %1870 = vmatpush1.bf16.msra.mxu0 %v1333
    %1871 = vmatprep.subr.bf16.mxu0 %v1326
    %1872 = vmatpush1.bf16.msra.mxu0 %v1325
    %1873 = vmatprep.subr.bf16.mxu0 %v1318
    %1874 = vmatpush1.bf16.msra.mxu0 %v1317
    %1875 = vmatprep.subr.bf16.mxu0 %v1310
    %1876 = vmatpush1.bf16.msra.mxu0 %v1309
    %1877 = vmatprep.subr.bf16.mxu0 %v1302
    %1878 = vmatpush1.bf16.msra.mxu0 %v1301
    %1879 = vmatprep.subr.bf16.mxu0 %v1294
    %1880 = vmatpush1.bf16.msra.mxu0 %v1293
    %1881 = vmatprep.subr.bf16.mxu0 %v1286
    %1882 = vmatpush1.bf16.msra.mxu0 %v1285
    %1883 = vmatprep.subr.bf16.mxu0 %v1278
    %1884 = vmatpush1.bf16.msra.mxu0 %v1277
    %1885 = vmatprep.subr.bf16.mxu0 %v1398
    %1886 = vmatpush2.bf16.msra.mxu0 %v1397
    %1887 = vmatprep.subr.bf16.mxu0 %v1390
    %1888 = vmatpush2.bf16.msra.mxu0 %v1389
    %1889 = vmatprep.subr.bf16.mxu0 %v1382
    %1890 = vmatpush2.bf16.msra.mxu0 %v1381
    %1891 = vmatprep.subr.bf16.mxu0 %v1374
    %1892 = vmatpush2.bf16.msra.mxu0 %v1373
    %1893 = vmatprep.subr.bf16.mxu0 %v1366
    %1894 = vmatpush2.bf16.msra.mxu0 %v1365
    %1895 = vmatprep.subr.bf16.mxu0 %v1358
    %1896 = vmatpush2.bf16.msra.mxu0 %v1357
    %1897 = vmatprep.subr.bf16.mxu0 %v1350
    %1898 = vmatpush2.bf16.msra.mxu0 %v1349
    %1899 = vmatprep.subr.bf16.mxu0 %v1342
    %1900 = vmatpush2.bf16.msra.mxu0 %v1341
    %1901 = vmatprep.mubr.bf16.mxu0 %v463
    %1902 = vmatmul.mubr.bf16.gmra.mxu0 %v462
    %v1903 = vpop.f32.mrf.mxu0
    %v1904 = vadd.f32 %v478, %v1903
    %v1905 = vpop.f32.mrf.mxu0
    %v1906 = vadd.f32 %v482, %v1905
    %v1907 = vpop.f32.mrf.mxu0
    %v1908 = vpop.f32.mrf.mxu0
    %1909 = vdwg.mxu0
    %1910 = vmatprep.subr.bf16.mxu0 %v1462
    %1911 = vmatpush1.bf16.msra.mxu0 %v1461
    %1912 = vmatprep.subr.bf16.mxu0 %v1454
    %1913 = vmatpush1.bf16.msra.mxu0 %v1453
    %1914 = vmatprep.subr.bf16.mxu0 %v1446
    %1915 = vmatpush1.bf16.msra.mxu0 %v1445
    %1916 = vmatprep.subr.bf16.mxu0 %v1438
    %1917 = vmatpush1.bf16.msra.mxu0 %v1437
    %1918 = vmatprep.subr.bf16.mxu0 %v1430
    %1919 = vmatpush1.bf16.msra.mxu0 %v1429
    %1920 = vmatprep.subr.bf16.mxu0 %v1422
    %1921 = vmatpush1.bf16.msra.mxu0 %v1421
    %1922 = vmatprep.subr.bf16.mxu0 %v1414
    %1923 = vmatpush1.bf16.msra.mxu0 %v1413
    %1924 = vmatprep.subr.bf16.mxu0 %v1406
    %1925 = vmatpush1.bf16.msra.mxu0 %v1405
    %1926 = vmatprep.subr.bf16.mxu0 %v1526
    %1927 = vmatpush2.bf16.msra.mxu0 %v1525
    %1928 = vmatprep.subr.bf16.mxu0 %v1518
    %1929 = vmatpush2.bf16.msra.mxu0 %v1517
    %1930 = vmatprep.subr.bf16.mxu0 %v1510
    %1931 = vmatpush2.bf16.msra.mxu0 %v1509
    %1932 = vmatprep.subr.bf16.mxu0 %v1502
    %1933 = vmatpush2.bf16.msra.mxu0 %v1501
    %1934 = vmatprep.subr.bf16.mxu0 %v1494
    %1935 = vmatpush2.bf16.msra.mxu0 %v1493
    %1936 = vmatprep.subr.bf16.mxu0 %v1486
    %1937 = vmatpush2.bf16.msra.mxu0 %v1485
    %1938 = vmatprep.subr.bf16.mxu0 %v1478
    %1939 = vmatpush2.bf16.msra.mxu0 %v1477
    %1940 = vmatprep.subr.bf16.mxu0 %v1470
    %1941 = vmatpush2.bf16.msra.mxu0 %v1469
    %1942 = vmatprep.mubr.bf16.mxu0 %v465
    %1943 = vmatmul.mubr.bf16.gmra.mxu0 %v464
    %v1944 = vpop.f32.mrf.mxu0
    %v1945 = vadd.f32 %v1904, %v1944
    %v1946 = vpop.f32.mrf.mxu0
    %v1947 = vadd.f32 %v1906, %v1946
    %v1948 = vpop.f32.mrf.mxu0
    %v1949 = vpop.f32.mrf.mxu0
    %1950 = vdwg.mxu0
    %1951 = vmatprep.subr.bf16.mxu0 %v1336
    %1952 = vmatpush1.bf16.msra.mxu0 %v1335
    %1953 = vmatprep.subr.bf16.mxu0 %v1328
    %1954 = vmatpush1.bf16.msra.mxu0 %v1327
    %1955 = vmatprep.subr.bf16.mxu0 %v1320
    %1956 = vmatpush1.bf16.msra.mxu0 %v1319
    %1957 = vmatprep.subr.bf16.mxu0 %v1312
    %1958 = vmatpush1.bf16.msra.mxu0 %v1311
    %1959 = vmatprep.subr.bf16.mxu0 %v1304
    %1960 = vmatpush1.bf16.msra.mxu0 %v1303
    %1961 = vmatprep.subr.bf16.mxu0 %v1296
    %1962 = vmatpush1.bf16.msra.mxu0 %v1295
    %1963 = vmatprep.subr.bf16.mxu0 %v1288
    %1964 = vmatpush1.bf16.msra.mxu0 %v1287
    %1965 = vmatprep.subr.bf16.mxu0 %v1280
    %1966 = vmatpush1.bf16.msra.mxu0 %v1279
    %1967 = vmatprep.subr.bf16.mxu0 %v1400
    %1968 = vmatpush2.bf16.msra.mxu0 %v1399
    %1969 = vmatprep.subr.bf16.mxu0 %v1392
    %1970 = vmatpush2.bf16.msra.mxu0 %v1391
    %1971 = vmatprep.subr.bf16.mxu0 %v1384
    %1972 = vmatpush2.bf16.msra.mxu0 %v1383
    %1973 = vmatprep.subr.bf16.mxu0 %v1376
    %1974 = vmatpush2.bf16.msra.mxu0 %v1375
    %1975 = vmatprep.subr.bf16.mxu0 %v1368
    %1976 = vmatpush2.bf16.msra.mxu0 %v1367
    %1977 = vmatprep.subr.bf16.mxu0 %v1360
    %1978 = vmatpush2.bf16.msra.mxu0 %v1359
    %1979 = vmatprep.subr.bf16.mxu0 %v1352
    %1980 = vmatpush2.bf16.msra.mxu0 %v1351
    %1981 = vmatprep.subr.bf16.mxu0 %v1344
    %1982 = vmatpush2.bf16.msra.mxu0 %v1343
    %1983 = vmatprep.mubr.bf16.mxu0 %v463
    %1984 = vmatmul.mubr.bf16.gmra.mxu0 %v462
    %v1985 = vpop.f32.mrf.mxu0
    %v1986 = vadd.f32 %v486, %v1985
    %v1987 = vpop.f32.mrf.mxu0
    %v1988 = vadd.f32 %v490, %v1987
    %v1989 = vpop.f32.mrf.mxu0
    %v1990 = vpop.f32.mrf.mxu0
    %1991 = vdwg.mxu0
    %1992 = vmatprep.subr.bf16.mxu0 %v1464
    %1993 = vmatpush1.bf16.msra.mxu0 %v1463
    %1994 = vmatprep.subr.bf16.mxu0 %v1456
    %1995 = vmatpush1.bf16.msra.mxu0 %v1455
    %1996 = vmatprep.subr.bf16.mxu0 %v1448
    %1997 = vmatpush1.bf16.msra.mxu0 %v1447
    %1998 = vmatprep.subr.bf16.mxu0 %v1440
    %1999 = vmatpush1.bf16.msra.mxu0 %v1439
    %2000 = vmatprep.subr.bf16.mxu0 %v1432
    %2001 = vmatpush1.bf16.msra.mxu0 %v1431
    %2002 = vmatprep.subr.bf16.mxu0 %v1424
    %2003 = vmatpush1.bf16.msra.mxu0 %v1423
    %2004 = vmatprep.subr.bf16.mxu0 %v1416
    %2005 = vmatpush1.bf16.msra.mxu0 %v1415
    %2006 = vmatprep.subr.bf16.mxu0 %v1408
    %2007 = vmatpush1.bf16.msra.mxu0 %v1407
    %2008 = vmatprep.subr.bf16.mxu0 %v1528
    %2009 = vmatpush2.bf16.msra.mxu0 %v1527
    %2010 = vmatprep.subr.bf16.mxu0 %v1520
    %2011 = vmatpush2.bf16.msra.mxu0 %v1519
    %2012 = vmatprep.subr.bf16.mxu0 %v1512
    %2013 = vmatpush2.bf16.msra.mxu0 %v1511
    %2014 = vmatprep.subr.bf16.mxu0 %v1504
    %2015 = vmatpush2.bf16.msra.mxu0 %v1503
    %2016 = vmatprep.subr.bf16.mxu0 %v1496
    %2017 = vmatpush2.bf16.msra.mxu0 %v1495
    %2018 = vmatprep.subr.bf16.mxu0 %v1488
    %2019 = vmatpush2.bf16.msra.mxu0 %v1487
    %2020 = vmatprep.subr.bf16.mxu0 %v1480
    %2021 = vmatpush2.bf16.msra.mxu0 %v1479
    %2022 = vmatprep.subr.bf16.mxu0 %v1472
    %2023 = vmatpush2.bf16.msra.mxu0 %v1471
    %2024 = vmatprep.mubr.bf16.mxu0 %v465
    %2025 = vmatmul.mubr.bf16.gmra.mxu0 %v464
    %v2026 = vpop.f32.mrf.mxu0
    %v2027 = vadd.f32 %v1986, %v2026
    %v2028 = vpop.f32.mrf.mxu0
    %v2029 = vadd.f32 %v1988, %v2028
    %v2030 = vpop.f32.mrf.mxu0
    %v2031 = vpop.f32.mrf.mxu0
    %2032 = vdwg.mxu0
    %2033 = vmatprep.subr.bf16.mxu0 %v1338
    %2034 = vmatpush1.bf16.msra.mxu0 %v1337
    %2035 = vmatprep.subr.bf16.mxu0 %v1330
    %2036 = vmatpush1.bf16.msra.mxu0 %v1329
    %2037 = vmatprep.subr.bf16.mxu0 %v1322
    %2038 = vmatpush1.bf16.msra.mxu0 %v1321
    %2039 = vmatprep.subr.bf16.mxu0 %v1314
    %2040 = vmatpush1.bf16.msra.mxu0 %v1313
    %2041 = vmatprep.subr.bf16.mxu0 %v1306
    %2042 = vmatpush1.bf16.msra.mxu0 %v1305
    %2043 = vmatprep.subr.bf16.mxu0 %v1298
    %2044 = vmatpush1.bf16.msra.mxu0 %v1297
    %2045 = vmatprep.subr.bf16.mxu0 %v1290
    %2046 = vmatpush1.bf16.msra.mxu0 %v1289
    %2047 = vmatprep.subr.bf16.mxu0 %v1282
    %2048 = vmatpush1.bf16.msra.mxu0 %v1281
    %2049 = vmatprep.subr.bf16.mxu0 %v1402
    %2050 = vmatpush2.bf16.msra.mxu0 %v1401
    %2051 = vmatprep.subr.bf16.mxu0 %v1394
    %2052 = vmatpush2.bf16.msra.mxu0 %v1393
    %2053 = vmatprep.subr.bf16.mxu0 %v1386
    %2054 = vmatpush2.bf16.msra.mxu0 %v1385
    %2055 = vmatprep.subr.bf16.mxu0 %v1378
    %2056 = vmatpush2.bf16.msra.mxu0 %v1377
    %2057 = vmatprep.subr.bf16.mxu0 %v1370
    %2058 = vmatpush2.bf16.msra.mxu0 %v1369
    %2059 = vmatprep.subr.bf16.mxu0 %v1362
    %2060 = vmatpush2.bf16.msra.mxu0 %v1361
    %2061 = vmatprep.subr.bf16.mxu0 %v1354
    %2062 = vmatpush2.bf16.msra.mxu0 %v1353
    %2063 = vmatprep.subr.bf16.mxu0 %v1346
    %2064 = vmatpush2.bf16.msra.mxu0 %v1345
    %2065 = vmatprep.mubr.bf16.mxu0 %v463
    %2066 = vmatmul.mubr.bf16.gmra.mxu0 %v462
    %v2067 = vpop.f32.mrf.mxu0
    %v2068 = vadd.f32 %v494, %v2067
    %v2069 = vpop.f32.mrf.mxu0
    %v2070 = vadd.f32 %v498, %v2069
    %v2071 = vpop.f32.mrf.mxu0
    %v2072 = vpop.f32.mrf.mxu0
    %2073 = vdwg.mxu0
    %2074 = vmatprep.subr.bf16.mxu0 %v1466
    %2075 = vmatpush1.bf16.msra.mxu0 %v1465
    %2076 = vmatprep.subr.bf16.mxu0 %v1458
    %2077 = vmatpush1.bf16.msra.mxu0 %v1457
    %2078 = vmatprep.subr.bf16.mxu0 %v1450
    %2079 = vmatpush1.bf16.msra.mxu0 %v1449
    %2080 = vmatprep.subr.bf16.mxu0 %v1442
    %2081 = vmatpush1.bf16.msra.mxu0 %v1441
    %2082 = vmatprep.subr.bf16.mxu0 %v1434
    %2083 = vmatpush1.bf16.msra.mxu0 %v1433
    %2084 = vmatprep.subr.bf16.mxu0 %v1426
    %2085 = vmatpush1.bf16.msra.mxu0 %v1425
    %2086 = vmatprep.subr.bf16.mxu0 %v1418
    %2087 = vmatpush1.bf16.msra.mxu0 %v1417
    %2088 = vmatprep.subr.bf16.mxu0 %v1410
    %2089 = vmatpush1.bf16.msra.mxu0 %v1409
    %2090 = vmatprep.subr.bf16.mxu0 %v1530
    %2091 = vmatpush2.bf16.msra.mxu0 %v1529
    %2092 = vmatprep.subr.bf16.mxu0 %v1522
    %2093 = vmatpush2.bf16.msra.mxu0 %v1521
    %2094 = vmatprep.subr.bf16.mxu0 %v1514
    %2095 = vmatpush2.bf16.msra.mxu0 %v1513
    %2096 = vmatprep.subr.bf16.mxu0 %v1506
    %2097 = vmatpush2.bf16.msra.mxu0 %v1505
    %2098 = vmatprep.subr.bf16.mxu0 %v1498
    %2099 = vmatpush2.bf16.msra.mxu0 %v1497
    %2100 = vmatprep.subr.bf16.mxu0 %v1490
    %2101 = vmatpush2.bf16.msra.mxu0 %v1489
    %2102 = vmatprep.subr.bf16.mxu0 %v1482
    %2103 = vmatpush2.bf16.msra.mxu0 %v1481
    %2104 = vmatprep.subr.bf16.mxu0 %v1474
    %2105 = vmatpush2.bf16.msra.mxu0 %v1473
    %2106 = vmatprep.mubr.bf16.mxu0 %v465
    %2107 = vmatmul.mubr.bf16.gmra.mxu0 %v464
    %v2108 = vpop.f32.mrf.mxu0
    %v2109 = vadd.f32 %v2068, %v2108
    %v2110 = vpop.f32.mrf.mxu0
    %v2111 = vadd.f32 %v2070, %v2110
    %v2112 = vpop.f32.mrf.mxu0
    %v2113 = vpop.f32.mrf.mxu0
    %2114 = vdwg.mxu0
    %v2115 = vmax.f32 %v1863, 0.0
    %v2116 = vmax.f32 %v1865, 0.0
    %v2117 = vmax.f32 %v1945, 0.0
    %v2118 = vmax.f32 %v1947, 0.0
    %v2119 = vmax.f32 %v2027, 0.0
    %v2120 = vmax.f32 %v2029, 0.0
    %v2121 = vmax.f32 %v2109, 0.0
    %v2122 = vmax.f32 %v2111, 0.0
    %s2123 = smul.u32 4, 128
    %s2124 = smul.u32 %s2123, 4
    %s2125 = sshll.u32 %s2124, 4
    %2126 = dma.done %s137, %s2125
    %v2127 = vld [vmem:[#allocation3] sm:$0xff]
    %v2128 = vld [vmem:[#allocation3 + $0x8] sm:$0xff]
    %v2129 = vld [vmem:[#allocation3 + $0x10] sm:$0xff]
    %v2130 = vld [vmem:[#allocation3 + $0x18] sm:$0xff]
    %v2131 = vld [vmem:[#allocation3 + $0x20] sm:$0xff]
    %v2132 = vld [vmem:[#allocation3 + $0x28] sm:$0xff]
    %v2133 = vld [vmem:[#allocation3 + $0x30] sm:$0xff]
    %v2134 = vld [vmem:[#allocation3 + $0x38] sm:$0xff]
    %v2135 = vld [vmem:[#allocation3 + $0x40] sm:$0xff]
    %v2136 = vld [vmem:[#allocation3 + $0x48] sm:$0xff]
    %v2137 = vld [vmem:[#allocation3 + $0x50] sm:$0xff]
    %v2138 = vld [vmem:[#allocation3 + $0x58] sm:$0xff]
    %v2139 = vld [vmem:[#allocation3 + $0x60] sm:$0xff]
    %v2140 = vld [vmem:[#allocation3 + $0x68] sm:$0xff]
    %v2141 = vld [vmem:[#allocation3 + $0x70] sm:$0xff]
    %v2142 = vld [vmem:[#allocation3 + $0x78] sm:$0xff]
    %v2143 = vld [vmem:[#allocation3 + $0x80] sm:$0xff]
    %v2144 = vld [vmem:[#allocation3 + $0x88] sm:$0xff]
    %v2145 = vld [vmem:[#allocation3 + $0x90] sm:$0xff]
    %v2146 = vld [vmem:[#allocation3 + $0x98] sm:$0xff]
    %v2147 = vld [vmem:[#allocation3 + $0xa0] sm:$0xff]
    %v2148 = vld [vmem:[#allocation3 + $0xa8] sm:$0xff]
    %v2149 = vld [vmem:[#allocation3 + $0xb0] sm:$0xff]
    %v2150 = vld [vmem:[#allocation3 + $0xb8] sm:$0xff]
    %v2151 = vld [vmem:[#allocation3 + $0xc0] sm:$0xff]
    %v2152 = vld [vmem:[#allocation3 + $0xc8] sm:$0xff]
    %v2153 = vld [vmem:[#allocation3 + $0xd0] sm:$0xff]
    %v2154 = vld [vmem:[#allocation3 + $0xd8] sm:$0xff]
    %v2155 = vld [vmem:[#allocation3 + $0xe0] sm:$0xff]
    %v2156 = vld [vmem:[#allocation3 + $0xe8] sm:$0xff]
    %v2157 = vld [vmem:[#allocation3 + $0xf0] sm:$0xff]
    %v2158 = vld [vmem:[#allocation3 + $0xf8] sm:$0xff]
    %v2159 = vld [vmem:[#allocation3 + $0x100] sm:$0xff]
    %v2160 = vld [vmem:[#allocation3 + $0x108] sm:$0xff]
    %v2161 = vld [vmem:[#allocation3 + $0x110] sm:$0xff]
    %v2162 = vld [vmem:[#allocation3 + $0x118] sm:$0xff]
    %v2163 = vld [vmem:[#allocation3 + $0x120] sm:$0xff]
    %v2164 = vld [vmem:[#allocation3 + $0x128] sm:$0xff]
    %v2165 = vld [vmem:[#allocation3 + $0x130] sm:$0xff]
    %v2166 = vld [vmem:[#allocation3 + $0x138] sm:$0xff]
    %v2167 = vld [vmem:[#allocation3 + $0x140] sm:$0xff]
    %v2168 = vld [vmem:[#allocation3 + $0x148] sm:$0xff]
    %v2169 = vld [vmem:[#allocation3 + $0x150] sm:$0xff]
    %v2170 = vld [vmem:[#allocation3 + $0x158] sm:$0xff]
    %v2171 = vld [vmem:[#allocation3 + $0x160] sm:$0xff]
    %v2172 = vld [vmem:[#allocation3 + $0x168] sm:$0xff]
    %v2173 = vld [vmem:[#allocation3 + $0x170] sm:$0xff]
    %v2174 = vld [vmem:[#allocation3 + $0x178] sm:$0xff]
    %v2175 = vld [vmem:[#allocation3 + $0x180] sm:$0xff]
    %v2176 = vld [vmem:[#allocation3 + $0x188] sm:$0xff]
    %v2177 = vld [vmem:[#allocation3 + $0x190] sm:$0xff]
    %v2178 = vld [vmem:[#allocation3 + $0x198] sm:$0xff]
    %v2179 = vld [vmem:[#allocation3 + $0x1a0] sm:$0xff]
    %v2180 = vld [vmem:[#allocation3 + $0x1a8] sm:$0xff]
    %v2181 = vld [vmem:[#allocation3 + $0x1b0] sm:$0xff]
    %v2182 = vld [vmem:[#allocation3 + $0x1b8] sm:$0xff]
    %v2183 = vld [vmem:[#allocation3 + $0x1c0] sm:$0xff]
    %v2184 = vld [vmem:[#allocation3 + $0x1c8] sm:$0xff]
    %v2185 = vld [vmem:[#allocation3 + $0x1d0] sm:$0xff]
    %v2186 = vld [vmem:[#allocation3 + $0x1d8] sm:$0xff]
    %v2187 = vld [vmem:[#allocation3 + $0x1e0] sm:$0xff]
    %v2188 = vld [vmem:[#allocation3 + $0x1e8] sm:$0xff]
    %v2189 = vld [vmem:[#allocation3 + $0x1f0] sm:$0xff]
    %v2190 = vld [vmem:[#allocation3 + $0x1f8] sm:$0xff]
    %v2191 = vld [vmem:[#allocation3 + $0x200] sm:$0xff]
    %v2192 = vld [vmem:[#allocation3 + $0x208] sm:$0xff]
    %v2193 = vld [vmem:[#allocation3 + $0x210] sm:$0xff]
    %v2194 = vld [vmem:[#allocation3 + $0x218] sm:$0xff]
    %v2195 = vld [vmem:[#allocation3 + $0x220] sm:$0xff]
    %v2196 = vld [vmem:[#allocation3 + $0x228] sm:$0xff]
    %v2197 = vld [vmem:[#allocation3 + $0x230] sm:$0xff]
    %v2198 = vld [vmem:[#allocation3 + $0x238] sm:$0xff]
    %v2199 = vld [vmem:[#allocation3 + $0x240] sm:$0xff]
    %v2200 = vld [vmem:[#allocation3 + $0x248] sm:$0xff]
    %v2201 = vld [vmem:[#allocation3 + $0x250] sm:$0xff]
    %v2202 = vld [vmem:[#allocation3 + $0x258] sm:$0xff]
    %v2203 = vld [vmem:[#allocation3 + $0x260] sm:$0xff]
    %v2204 = vld [vmem:[#allocation3 + $0x268] sm:$0xff]
    %v2205 = vld [vmem:[#allocation3 + $0x270] sm:$0xff]
    %v2206 = vld [vmem:[#allocation3 + $0x278] sm:$0xff]
    %v2207 = vld [vmem:[#allocation3 + $0x280] sm:$0xff]
    %v2208 = vld [vmem:[#allocation3 + $0x288] sm:$0xff]
    %v2209 = vld [vmem:[#allocation3 + $0x290] sm:$0xff]
    %v2210 = vld [vmem:[#allocation3 + $0x298] sm:$0xff]
    %v2211 = vld [vmem:[#allocation3 + $0x2a0] sm:$0xff]
    %v2212 = vld [vmem:[#allocation3 + $0x2a8] sm:$0xff]
    %v2213 = vld [vmem:[#allocation3 + $0x2b0] sm:$0xff]
    %v2214 = vld [vmem:[#allocation3 + $0x2b8] sm:$0xff]
    %v2215 = vld [vmem:[#allocation3 + $0x2c0] sm:$0xff]
    %v2216 = vld [vmem:[#allocation3 + $0x2c8] sm:$0xff]
    %v2217 = vld [vmem:[#allocation3 + $0x2d0] sm:$0xff]
    %v2218 = vld [vmem:[#allocation3 + $0x2d8] sm:$0xff]
    %v2219 = vld [vmem:[#allocation3 + $0x2e0] sm:$0xff]
    %v2220 = vld [vmem:[#allocation3 + $0x2e8] sm:$0xff]
    %v2221 = vld [vmem:[#allocation3 + $0x2f0] sm:$0xff]
    %v2222 = vld [vmem:[#allocation3 + $0x2f8] sm:$0xff]
    %v2223 = vld [vmem:[#allocation3 + $0x300] sm:$0xff]
    %v2224 = vld [vmem:[#allocation3 + $0x308] sm:$0xff]
    %v2225 = vld [vmem:[#allocation3 + $0x310] sm:$0xff]
    %v2226 = vld [vmem:[#allocation3 + $0x318] sm:$0xff]
    %v2227 = vld [vmem:[#allocation3 + $0x320] sm:$0xff]
    %v2228 = vld [vmem:[#allocation3 + $0x328] sm:$0xff]
    %v2229 = vld [vmem:[#allocation3 + $0x330] sm:$0xff]
    %v2230 = vld [vmem:[#allocation3 + $0x338] sm:$0xff]
    %v2231 = vld [vmem:[#allocation3 + $0x340] sm:$0xff]
    %v2232 = vld [vmem:[#allocation3 + $0x348] sm:$0xff]
    %v2233 = vld [vmem:[#allocation3 + $0x350] sm:$0xff]
    %v2234 = vld [vmem:[#allocation3 + $0x358] sm:$0xff]
    %v2235 = vld [vmem:[#allocation3 + $0x360] sm:$0xff]
    %v2236 = vld [vmem:[#allocation3 + $0x368] sm:$0xff]
    %v2237 = vld [vmem:[#allocation3 + $0x370] sm:$0xff]
    %v2238 = vld [vmem:[#allocation3 + $0x378] sm:$0xff]
    %v2239 = vld [vmem:[#allocation3 + $0x380] sm:$0xff]
    %v2240 = vld [vmem:[#allocation3 + $0x388] sm:$0xff]
    %v2241 = vld [vmem:[#allocation3 + $0x390] sm:$0xff]
    %v2242 = vld [vmem:[#allocation3 + $0x398] sm:$0xff]
    %v2243 = vld [vmem:[#allocation3 + $0x3a0] sm:$0xff]
    %v2244 = vld [vmem:[#allocation3 + $0x3a8] sm:$0xff]
    %v2245 = vld [vmem:[#allocation3 + $0x3b0] sm:$0xff]
    %v2246 = vld [vmem:[#allocation3 + $0x3b8] sm:$0xff]
    %v2247 = vld [vmem:[#allocation3 + $0x3c0] sm:$0xff]
    %v2248 = vld [vmem:[#allocation3 + $0x3c8] sm:$0xff]
    %v2249 = vld [vmem:[#allocation3 + $0x3d0] sm:$0xff]
    %v2250 = vld [vmem:[#allocation3 + $0x3d8] sm:$0xff]
    %v2251 = vld [vmem:[#allocation3 + $0x3e0] sm:$0xff]
    %v2252 = vld [vmem:[#allocation3 + $0x3e8] sm:$0xff]
    %v2253 = vld [vmem:[#allocation3 + $0x3f0] sm:$0xff]
    %v2254 = vld [vmem:[#allocation3 + $0x3f8] sm:$0xff]
    %v2255 = vld [vmem:[#allocation3 + $0x400] sm:$0xff]
    %v2256 = vld [vmem:[#allocation3 + $0x408] sm:$0xff]
    %v2257 = vld [vmem:[#allocation3 + $0x410] sm:$0xff]
    %v2258 = vld [vmem:[#allocation3 + $0x418] sm:$0xff]
    %v2259 = vld [vmem:[#allocation3 + $0x420] sm:$0xff]
    %v2260 = vld [vmem:[#allocation3 + $0x428] sm:$0xff]
    %v2261 = vld [vmem:[#allocation3 + $0x430] sm:$0xff]
    %v2262 = vld [vmem:[#allocation3 + $0x438] sm:$0xff]
    %v2263 = vld [vmem:[#allocation3 + $0x440] sm:$0xff]
    %v2264 = vld [vmem:[#allocation3 + $0x448] sm:$0xff]
    %v2265 = vld [vmem:[#allocation3 + $0x450] sm:$0xff]
    %v2266 = vld [vmem:[#allocation3 + $0x458] sm:$0xff]
    %v2267 = vld [vmem:[#allocation3 + $0x460] sm:$0xff]
    %v2268 = vld [vmem:[#allocation3 + $0x468] sm:$0xff]
    %v2269 = vld [vmem:[#allocation3 + $0x470] sm:$0xff]
    %v2270 = vld [vmem:[#allocation3 + $0x478] sm:$0xff]
    %v2271 = vld [vmem:[#allocation3 + $0x480] sm:$0xff]
    %v2272 = vld [vmem:[#allocation3 + $0x488] sm:$0xff]
    %v2273 = vld [vmem:[#allocation3 + $0x490] sm:$0xff]
    %v2274 = vld [vmem:[#allocation3 + $0x498] sm:$0xff]
    %v2275 = vld [vmem:[#allocation3 + $0x4a0] sm:$0xff]
    %v2276 = vld [vmem:[#allocation3 + $0x4a8] sm:$0xff]
    %v2277 = vld [vmem:[#allocation3 + $0x4b0] sm:$0xff]
    %v2278 = vld [vmem:[#allocation3 + $0x4b8] sm:$0xff]
    %v2279 = vld [vmem:[#allocation3 + $0x4c0] sm:$0xff]
    %v2280 = vld [vmem:[#allocation3 + $0x4c8] sm:$0xff]
    %v2281 = vld [vmem:[#allocation3 + $0x4d0] sm:$0xff]
    %v2282 = vld [vmem:[#allocation3 + $0x4d8] sm:$0xff]
    %v2283 = vld [vmem:[#allocation3 + $0x4e0] sm:$0xff]
    %v2284 = vld [vmem:[#allocation3 + $0x4e8] sm:$0xff]
    %v2285 = vld [vmem:[#allocation3 + $0x4f0] sm:$0xff]
    %v2286 = vld [vmem:[#allocation3 + $0x4f8] sm:$0xff]
    %v2287 = vld [vmem:[#allocation3 + $0x500] sm:$0xff]
    %v2288 = vld [vmem:[#allocation3 + $0x508] sm:$0xff]
    %v2289 = vld [vmem:[#allocation3 + $0x510] sm:$0xff]
    %v2290 = vld [vmem:[#allocation3 + $0x518] sm:$0xff]
    %v2291 = vld [vmem:[#allocation3 + $0x520] sm:$0xff]
    %v2292 = vld [vmem:[#allocation3 + $0x528] sm:$0xff]
    %v2293 = vld [vmem:[#allocation3 + $0x530] sm:$0xff]
    %v2294 = vld [vmem:[#allocation3 + $0x538] sm:$0xff]
    %v2295 = vld [vmem:[#allocation3 + $0x540] sm:$0xff]
    %v2296 = vld [vmem:[#allocation3 + $0x548] sm:$0xff]
    %v2297 = vld [vmem:[#allocation3 + $0x550] sm:$0xff]
    %v2298 = vld [vmem:[#allocation3 + $0x558] sm:$0xff]
    %v2299 = vld [vmem:[#allocation3 + $0x560] sm:$0xff]
    %v2300 = vld [vmem:[#allocation3 + $0x568] sm:$0xff]
    %v2301 = vld [vmem:[#allocation3 + $0x570] sm:$0xff]
    %v2302 = vld [vmem:[#allocation3 + $0x578] sm:$0xff]
    %v2303 = vld [vmem:[#allocation3 + $0x580] sm:$0xff]
    %v2304 = vld [vmem:[#allocation3 + $0x588] sm:$0xff]
    %v2305 = vld [vmem:[#allocation3 + $0x590] sm:$0xff]
    %v2306 = vld [vmem:[#allocation3 + $0x598] sm:$0xff]
    %v2307 = vld [vmem:[#allocation3 + $0x5a0] sm:$0xff]
    %v2308 = vld [vmem:[#allocation3 + $0x5a8] sm:$0xff]
    %v2309 = vld [vmem:[#allocation3 + $0x5b0] sm:$0xff]
    %v2310 = vld [vmem:[#allocation3 + $0x5b8] sm:$0xff]
    %v2311 = vld [vmem:[#allocation3 + $0x5c0] sm:$0xff]
    %v2312 = vld [vmem:[#allocation3 + $0x5c8] sm:$0xff]
    %v2313 = vld [vmem:[#allocation3 + $0x5d0] sm:$0xff]
    %v2314 = vld [vmem:[#allocation3 + $0x5d8] sm:$0xff]
    %v2315 = vld [vmem:[#allocation3 + $0x5e0] sm:$0xff]
    %v2316 = vld [vmem:[#allocation3 + $0x5e8] sm:$0xff]
    %v2317 = vld [vmem:[#allocation3 + $0x5f0] sm:$0xff]
    %v2318 = vld [vmem:[#allocation3 + $0x5f8] sm:$0xff]
    %v2319 = vld [vmem:[#allocation3 + $0x600] sm:$0xff]
    %v2320 = vld [vmem:[#allocation3 + $0x608] sm:$0xff]
    %v2321 = vld [vmem:[#allocation3 + $0x610] sm:$0xff]
    %v2322 = vld [vmem:[#allocation3 + $0x618] sm:$0xff]
    %v2323 = vld [vmem:[#allocation3 + $0x620] sm:$0xff]
    %v2324 = vld [vmem:[#allocation3 + $0x628] sm:$0xff]
    %v2325 = vld [vmem:[#allocation3 + $0x630] sm:$0xff]
    %v2326 = vld [vmem:[#allocation3 + $0x638] sm:$0xff]
    %v2327 = vld [vmem:[#allocation3 + $0x640] sm:$0xff]
    %v2328 = vld [vmem:[#allocation3 + $0x648] sm:$0xff]
    %v2329 = vld [vmem:[#allocation3 + $0x650] sm:$0xff]
    %v2330 = vld [vmem:[#allocation3 + $0x658] sm:$0xff]
    %v2331 = vld [vmem:[#allocation3 + $0x660] sm:$0xff]
    %v2332 = vld [vmem:[#allocation3 + $0x668] sm:$0xff]
    %v2333 = vld [vmem:[#allocation3 + $0x670] sm:$0xff]
    %v2334 = vld [vmem:[#allocation3 + $0x678] sm:$0xff]
    %v2335 = vld [vmem:[#allocation3 + $0x680] sm:$0xff]
    %v2336 = vld [vmem:[#allocation3 + $0x688] sm:$0xff]
    %v2337 = vld [vmem:[#allocation3 + $0x690] sm:$0xff]
    %v2338 = vld [vmem:[#allocation3 + $0x698] sm:$0xff]
    %v2339 = vld [vmem:[#allocation3 + $0x6a0] sm:$0xff]
    %v2340 = vld [vmem:[#allocation3 + $0x6a8] sm:$0xff]
    %v2341 = vld [vmem:[#allocation3 + $0x6b0] sm:$0xff]
    %v2342 = vld [vmem:[#allocation3 + $0x6b8] sm:$0xff]
    %v2343 = vld [vmem:[#allocation3 + $0x6c0] sm:$0xff]
    %v2344 = vld [vmem:[#allocation3 + $0x6c8] sm:$0xff]
    %v2345 = vld [vmem:[#allocation3 + $0x6d0] sm:$0xff]
    %v2346 = vld [vmem:[#allocation3 + $0x6d8] sm:$0xff]
    %v2347 = vld [vmem:[#allocation3 + $0x6e0] sm:$0xff]
    %v2348 = vld [vmem:[#allocation3 + $0x6e8] sm:$0xff]
    %v2349 = vld [vmem:[#allocation3 + $0x6f0] sm:$0xff]
    %v2350 = vld [vmem:[#allocation3 + $0x6f8] sm:$0xff]
    %v2351 = vld [vmem:[#allocation3 + $0x700] sm:$0xff]
    %v2352 = vld [vmem:[#allocation3 + $0x708] sm:$0xff]
    %v2353 = vld [vmem:[#allocation3 + $0x710] sm:$0xff]
    %v2354 = vld [vmem:[#allocation3 + $0x718] sm:$0xff]
    %v2355 = vld [vmem:[#allocation3 + $0x720] sm:$0xff]
    %v2356 = vld [vmem:[#allocation3 + $0x728] sm:$0xff]
    %v2357 = vld [vmem:[#allocation3 + $0x730] sm:$0xff]
    %v2358 = vld [vmem:[#allocation3 + $0x738] sm:$0xff]
    %v2359 = vld [vmem:[#allocation3 + $0x740] sm:$0xff]
    %v2360 = vld [vmem:[#allocation3 + $0x748] sm:$0xff]
    %v2361 = vld [vmem:[#allocation3 + $0x750] sm:$0xff]
    %v2362 = vld [vmem:[#allocation3 + $0x758] sm:$0xff]
    %v2363 = vld [vmem:[#allocation3 + $0x760] sm:$0xff]
    %v2364 = vld [vmem:[#allocation3 + $0x768] sm:$0xff]
    %v2365 = vld [vmem:[#allocation3 + $0x770] sm:$0xff]
    %v2366 = vld [vmem:[#allocation3 + $0x778] sm:$0xff]
    %v2367 = vld [vmem:[#allocation3 + $0x780] sm:$0xff]
    %v2368 = vld [vmem:[#allocation3 + $0x788] sm:$0xff]
    %v2369 = vld [vmem:[#allocation3 + $0x790] sm:$0xff]
    %v2370 = vld [vmem:[#allocation3 + $0x798] sm:$0xff]
    %v2371 = vld [vmem:[#allocation3 + $0x7a0] sm:$0xff]
    %v2372 = vld [vmem:[#allocation3 + $0x7a8] sm:$0xff]
    %v2373 = vld [vmem:[#allocation3 + $0x7b0] sm:$0xff]
    %v2374 = vld [vmem:[#allocation3 + $0x7b8] sm:$0xff]
    %v2375 = vld [vmem:[#allocation3 + $0x7c0] sm:$0xff]
    %v2376 = vld [vmem:[#allocation3 + $0x7c8] sm:$0xff]
    %v2377 = vld [vmem:[#allocation3 + $0x7d0] sm:$0xff]
    %v2378 = vld [vmem:[#allocation3 + $0x7d8] sm:$0xff]
    %v2379 = vld [vmem:[#allocation3 + $0x7e0] sm:$0xff]
    %v2380 = vld [vmem:[#allocation3 + $0x7e8] sm:$0xff]
    %v2381 = vld [vmem:[#allocation3 + $0x7f0] sm:$0xff]
    %v2382 = vld [vmem:[#allocation3 + $0x7f8] sm:$0xff]
    %v2383 = vld [vmem:[#allocation14 + $0x8] sm:$0xf]
    %v2384 = vpack.c.bf16 %v2115, %v2115
    %v2385 = vpack.c.bf16 %v2116, %v2116
    %v2386 = vpack.c.bf16 %v2117, %v2117
    %v2387 = vpack.c.bf16 %v2118, %v2118
    %v2388 = vpack.c.bf16 %v2119, %v2119
    %v2389 = vpack.c.bf16 %v2120, %v2120
    %v2390 = vpack.c.bf16 %v2121, %v2121
    %v2391 = vpack.c.bf16 %v2122, %v2122
    %v2393 = vlaneseq
    %v2394 = vshrl.u32 %v2393, 7
    %v2395 = vsub.s32 0, %v2394
    %v2396 = vrot.slane %v2383, %v2395
    %v2397 = vlaneseq
    %v2398 = vshrl.u32 %v2397, 7
    %v2399 = vsub.s32 1, %v2398
    %v2400 = vrot.slane %v2383, %v2399
    %v2401 = vlaneseq
    %v2402 = vshrl.u32 %v2401, 7
    %v2403 = vsub.s32 2, %v2402
    %v2404 = vrot.slane %v2383, %v2403
    %v2405 = vlaneseq
    %v2406 = vshrl.u32 %v2405, 7
    %v2407 = vsub.s32 3, %v2406
    %v2408 = vrot.slane %v2383, %v2407
    %v2669 = vunpack.c.l.b16 %v2127
    %v2670 = vunpack.c.h.b16 %v2127
    %v2671 = vunpack.c.l.b16 %v2128
    %v2672 = vunpack.c.h.b16 %v2128
    %v2673 = vunpack.c.l.b16 %v2129
    %v2674 = vunpack.c.h.b16 %v2129
    %v2675 = vunpack.c.l.b16 %v2130
    %v2676 = vunpack.c.h.b16 %v2130
    %v2677 = vunpack.c.l.b16 %v2131
    %v2678 = vunpack.c.h.b16 %v2131
    %v2679 = vunpack.c.l.b16 %v2132
    %v2680 = vunpack.c.h.b16 %v2132
    %v2681 = vunpack.c.l.b16 %v2133
    %v2682 = vunpack.c.h.b16 %v2133
    %v2683 = vunpack.c.l.b16 %v2134
    %v2684 = vunpack.c.h.b16 %v2134
    %v2685 = vunpack.c.l.b16 %v2135
    %v2686 = vunpack.c.h.b16 %v2135
    %v2687 = vunpack.c.l.b16 %v2136
    %v2688 = vunpack.c.h.b16 %v2136
    %v2689 = vunpack.c.l.b16 %v2137
    %v2690 = vunpack.c.h.b16 %v2137
    %v2691 = vunpack.c.l.b16 %v2138
    %v2692 = vunpack.c.h.b16 %v2138
    %v2693 = vunpack.c.l.b16 %v2139
    %v2694 = vunpack.c.h.b16 %v2139
    %v2695 = vunpack.c.l.b16 %v2140
    %v2696 = vunpack.c.h.b16 %v2140
    %v2697 = vunpack.c.l.b16 %v2141
    %v2698 = vunpack.c.h.b16 %v2141
    %v2699 = vunpack.c.l.b16 %v2142
    %v2700 = vunpack.c.h.b16 %v2142
    %v2701 = vunpack.c.l.b16 %v2143
    %v2702 = vunpack.c.h.b16 %v2143
    %v2703 = vunpack.c.l.b16 %v2144
    %v2704 = vunpack.c.h.b16 %v2144
    %v2705 = vunpack.c.l.b16 %v2145
    %v2706 = vunpack.c.h.b16 %v2145
    %v2707 = vunpack.c.l.b16 %v2146
    %v2708 = vunpack.c.h.b16 %v2146
    %v2709 = vunpack.c.l.b16 %v2147
    %v2710 = vunpack.c.h.b16 %v2147
    %v2711 = vunpack.c.l.b16 %v2148
    %v2712 = vunpack.c.h.b16 %v2148
    %v2713 = vunpack.c.l.b16 %v2149
    %v2714 = vunpack.c.h.b16 %v2149
    %v2715 = vunpack.c.l.b16 %v2150
    %v2716 = vunpack.c.h.b16 %v2150
    %v2717 = vunpack.c.l.b16 %v2151
    %v2718 = vunpack.c.h.b16 %v2151
    %v2719 = vunpack.c.l.b16 %v2152
    %v2720 = vunpack.c.h.b16 %v2152
    %v2721 = vunpack.c.l.b16 %v2153
    %v2722 = vunpack.c.h.b16 %v2153
    %v2723 = vunpack.c.l.b16 %v2154
    %v2724 = vunpack.c.h.b16 %v2154
    %v2725 = vunpack.c.l.b16 %v2155
    %v2726 = vunpack.c.h.b16 %v2155
    %v2727 = vunpack.c.l.b16 %v2156
    %v2728 = vunpack.c.h.b16 %v2156
    %v2729 = vunpack.c.l.b16 %v2157
    %v2730 = vunpack.c.h.b16 %v2157
    %v2731 = vunpack.c.l.b16 %v2158
    %v2732 = vunpack.c.h.b16 %v2158
    %v2733 = vunpack.c.l.b16 %v2159
    %v2734 = vunpack.c.h.b16 %v2159
    %v2735 = vunpack.c.l.b16 %v2160
    %v2736 = vunpack.c.h.b16 %v2160
    %v2737 = vunpack.c.l.b16 %v2161
    %v2738 = vunpack.c.h.b16 %v2161
    %v2739 = vunpack.c.l.b16 %v2162
    %v2740 = vunpack.c.h.b16 %v2162
    %v2741 = vunpack.c.l.b16 %v2163
    %v2742 = vunpack.c.h.b16 %v2163
    %v2743 = vunpack.c.l.b16 %v2164
    %v2744 = vunpack.c.h.b16 %v2164
    %v2745 = vunpack.c.l.b16 %v2165
    %v2746 = vunpack.c.h.b16 %v2165
    %v2747 = vunpack.c.l.b16 %v2166
    %v2748 = vunpack.c.h.b16 %v2166
    %v2749 = vunpack.c.l.b16 %v2167
    %v2750 = vunpack.c.h.b16 %v2167
    %v2751 = vunpack.c.l.b16 %v2168
    %v2752 = vunpack.c.h.b16 %v2168
    %v2753 = vunpack.c.l.b16 %v2169
    %v2754 = vunpack.c.h.b16 %v2169
    %v2755 = vunpack.c.l.b16 %v2170
    %v2756 = vunpack.c.h.b16 %v2170
    %v2757 = vunpack.c.l.b16 %v2171
    %v2758 = vunpack.c.h.b16 %v2171
    %v2759 = vunpack.c.l.b16 %v2172
    %v2760 = vunpack.c.h.b16 %v2172
    %v2761 = vunpack.c.l.b16 %v2173
    %v2762 = vunpack.c.h.b16 %v2173
    %v2763 = vunpack.c.l.b16 %v2174
    %v2764 = vunpack.c.h.b16 %v2174
    %v2765 = vunpack.c.l.b16 %v2175
    %v2766 = vunpack.c.h.b16 %v2175
    %v2767 = vunpack.c.l.b16 %v2176
    %v2768 = vunpack.c.h.b16 %v2176
    %v2769 = vunpack.c.l.b16 %v2177
    %v2770 = vunpack.c.h.b16 %v2177
    %v2771 = vunpack.c.l.b16 %v2178
    %v2772 = vunpack.c.h.b16 %v2178
    %v2773 = vunpack.c.l.b16 %v2179
    %v2774 = vunpack.c.h.b16 %v2179
    %v2775 = vunpack.c.l.b16 %v2180
    %v2776 = vunpack.c.h.b16 %v2180
    %v2777 = vunpack.c.l.b16 %v2181
    %v2778 = vunpack.c.h.b16 %v2181
    %v2779 = vunpack.c.l.b16 %v2182
    %v2780 = vunpack.c.h.b16 %v2182
    %v2781 = vunpack.c.l.b16 %v2183
    %v2782 = vunpack.c.h.b16 %v2183
    %v2783 = vunpack.c.l.b16 %v2184
    %v2784 = vunpack.c.h.b16 %v2184
    %v2785 = vunpack.c.l.b16 %v2185
    %v2786 = vunpack.c.h.b16 %v2185
    %v2787 = vunpack.c.l.b16 %v2186
    %v2788 = vunpack.c.h.b16 %v2186
    %v2789 = vunpack.c.l.b16 %v2187
    %v2790 = vunpack.c.h.b16 %v2187
    %v2791 = vunpack.c.l.b16 %v2188
    %v2792 = vunpack.c.h.b16 %v2188
    %v2793 = vunpack.c.l.b16 %v2189
    %v2794 = vunpack.c.h.b16 %v2189
    %v2795 = vunpack.c.l.b16 %v2190
    %v2796 = vunpack.c.h.b16 %v2190
    %v2797 = vunpack.c.l.b16 %v2191
    %v2798 = vunpack.c.h.b16 %v2191
    %v2799 = vunpack.c.l.b16 %v2192
    %v2800 = vunpack.c.h.b16 %v2192
    %v2801 = vunpack.c.l.b16 %v2193
    %v2802 = vunpack.c.h.b16 %v2193
    %v2803 = vunpack.c.l.b16 %v2194
    %v2804 = vunpack.c.h.b16 %v2194
    %v2805 = vunpack.c.l.b16 %v2195
    %v2806 = vunpack.c.h.b16 %v2195
    %v2807 = vunpack.c.l.b16 %v2196
    %v2808 = vunpack.c.h.b16 %v2196
    %v2809 = vunpack.c.l.b16 %v2197
    %v2810 = vunpack.c.h.b16 %v2197
    %v2811 = vunpack.c.l.b16 %v2198
    %v2812 = vunpack.c.h.b16 %v2198
    %v2813 = vunpack.c.l.b16 %v2199
    %v2814 = vunpack.c.h.b16 %v2199
    %v2815 = vunpack.c.l.b16 %v2200
    %v2816 = vunpack.c.h.b16 %v2200
    %v2817 = vunpack.c.l.b16 %v2201
    %v2818 = vunpack.c.h.b16 %v2201
    %v2819 = vunpack.c.l.b16 %v2202
    %v2820 = vunpack.c.h.b16 %v2202
    %v2821 = vunpack.c.l.b16 %v2203
    %v2822 = vunpack.c.h.b16 %v2203
    %v2823 = vunpack.c.l.b16 %v2204
    %v2824 = vunpack.c.h.b16 %v2204
    %v2825 = vunpack.c.l.b16 %v2205
    %v2826 = vunpack.c.h.b16 %v2205
    %v2827 = vunpack.c.l.b16 %v2206
    %v2828 = vunpack.c.h.b16 %v2206
    %v2829 = vunpack.c.l.b16 %v2207
    %v2830 = vunpack.c.h.b16 %v2207
    %v2831 = vunpack.c.l.b16 %v2208
    %v2832 = vunpack.c.h.b16 %v2208
    %v2833 = vunpack.c.l.b16 %v2209
    %v2834 = vunpack.c.h.b16 %v2209
    %v2835 = vunpack.c.l.b16 %v2210
    %v2836 = vunpack.c.h.b16 %v2210
    %v2837 = vunpack.c.l.b16 %v2211
    %v2838 = vunpack.c.h.b16 %v2211
    %v2839 = vunpack.c.l.b16 %v2212
    %v2840 = vunpack.c.h.b16 %v2212
    %v2841 = vunpack.c.l.b16 %v2213
    %v2842 = vunpack.c.h.b16 %v2213
    %v2843 = vunpack.c.l.b16 %v2214
    %v2844 = vunpack.c.h.b16 %v2214
    %v2845 = vunpack.c.l.b16 %v2215
    %v2846 = vunpack.c.h.b16 %v2215
    %v2847 = vunpack.c.l.b16 %v2216
    %v2848 = vunpack.c.h.b16 %v2216
    %v2849 = vunpack.c.l.b16 %v2217
    %v2850 = vunpack.c.h.b16 %v2217
    %v2851 = vunpack.c.l.b16 %v2218
    %v2852 = vunpack.c.h.b16 %v2218
    %v2853 = vunpack.c.l.b16 %v2219
    %v2854 = vunpack.c.h.b16 %v2219
    %v2855 = vunpack.c.l.b16 %v2220
    %v2856 = vunpack.c.h.b16 %v2220
    %v2857 = vunpack.c.l.b16 %v2221
    %v2858 = vunpack.c.h.b16 %v2221
    %v2859 = vunpack.c.l.b16 %v2222
    %v2860 = vunpack.c.h.b16 %v2222
    %v2861 = vunpack.c.l.b16 %v2223
    %v2862 = vunpack.c.h.b16 %v2223
    %v2863 = vunpack.c.l.b16 %v2224
    %v2864 = vunpack.c.h.b16 %v2224
    %v2865 = vunpack.c.l.b16 %v2225
    %v2866 = vunpack.c.h.b16 %v2225
    %v2867 = vunpack.c.l.b16 %v2226
    %v2868 = vunpack.c.h.b16 %v2226
    %v2869 = vunpack.c.l.b16 %v2227
    %v2870 = vunpack.c.h.b16 %v2227
    %v2871 = vunpack.c.l.b16 %v2228
    %v2872 = vunpack.c.h.b16 %v2228
    %v2873 = vunpack.c.l.b16 %v2229
    %v2874 = vunpack.c.h.b16 %v2229
    %v2875 = vunpack.c.l.b16 %v2230
    %v2876 = vunpack.c.h.b16 %v2230
    %v2877 = vunpack.c.l.b16 %v2231
    %v2878 = vunpack.c.h.b16 %v2231
    %v2879 = vunpack.c.l.b16 %v2232
    %v2880 = vunpack.c.h.b16 %v2232
    %v2881 = vunpack.c.l.b16 %v2233
    %v2882 = vunpack.c.h.b16 %v2233
    %v2883 = vunpack.c.l.b16 %v2234
    %v2884 = vunpack.c.h.b16 %v2234
    %v2885 = vunpack.c.l.b16 %v2235
    %v2886 = vunpack.c.h.b16 %v2235
    %v2887 = vunpack.c.l.b16 %v2236
    %v2888 = vunpack.c.h.b16 %v2236
    %v2889 = vunpack.c.l.b16 %v2237
    %v2890 = vunpack.c.h.b16 %v2237
    %v2891 = vunpack.c.l.b16 %v2238
    %v2892 = vunpack.c.h.b16 %v2238
    %v2893 = vunpack.c.l.b16 %v2239
    %v2894 = vunpack.c.h.b16 %v2239
    %v2895 = vunpack.c.l.b16 %v2240
    %v2896 = vunpack.c.h.b16 %v2240
    %v2897 = vunpack.c.l.b16 %v2241
    %v2898 = vunpack.c.h.b16 %v2241
    %v2899 = vunpack.c.l.b16 %v2242
    %v2900 = vunpack.c.h.b16 %v2242
    %v2901 = vunpack.c.l.b16 %v2243
    %v2902 = vunpack.c.h.b16 %v2243
    %v2903 = vunpack.c.l.b16 %v2244
    %v2904 = vunpack.c.h.b16 %v2244
    %v2905 = vunpack.c.l.b16 %v2245
    %v2906 = vunpack.c.h.b16 %v2245
    %v2907 = vunpack.c.l.b16 %v2246
    %v2908 = vunpack.c.h.b16 %v2246
    %v2909 = vunpack.c.l.b16 %v2247
    %v2910 = vunpack.c.h.b16 %v2247
    %v2911 = vunpack.c.l.b16 %v2248
    %v2912 = vunpack.c.h.b16 %v2248
    %v2913 = vunpack.c.l.b16 %v2249
    %v2914 = vunpack.c.h.b16 %v2249
    %v2915 = vunpack.c.l.b16 %v2250
    %v2916 = vunpack.c.h.b16 %v2250
    %v2917 = vunpack.c.l.b16 %v2251
    %v2918 = vunpack.c.h.b16 %v2251
    %v2919 = vunpack.c.l.b16 %v2252
    %v2920 = vunpack.c.h.b16 %v2252
    %v2921 = vunpack.c.l.b16 %v2253
    %v2922 = vunpack.c.h.b16 %v2253
    %v2923 = vunpack.c.l.b16 %v2254
    %v2924 = vunpack.c.h.b16 %v2254
    %v2925 = vunpack.c.l.b16 %v2255
    %v2926 = vunpack.c.h.b16 %v2255
    %v2927 = vunpack.c.l.b16 %v2256
    %v2928 = vunpack.c.h.b16 %v2256
    %v2929 = vunpack.c.l.b16 %v2257
    %v2930 = vunpack.c.h.b16 %v2257
    %v2931 = vunpack.c.l.b16 %v2258
    %v2932 = vunpack.c.h.b16 %v2258
    %v2933 = vunpack.c.l.b16 %v2259
    %v2934 = vunpack.c.h.b16 %v2259
    %v2935 = vunpack.c.l.b16 %v2260
    %v2936 = vunpack.c.h.b16 %v2260
    %v2937 = vunpack.c.l.b16 %v2261
    %v2938 = vunpack.c.h.b16 %v2261
    %v2939 = vunpack.c.l.b16 %v2262
    %v2940 = vunpack.c.h.b16 %v2262
    %v2941 = vunpack.c.l.b16 %v2263
    %v2942 = vunpack.c.h.b16 %v2263
    %v2943 = vunpack.c.l.b16 %v2264
    %v2944 = vunpack.c.h.b16 %v2264
    %v2945 = vunpack.c.l.b16 %v2265
    %v2946 = vunpack.c.h.b16 %v2265
    %v2947 = vunpack.c.l.b16 %v2266
    %v2948 = vunpack.c.h.b16 %v2266
    %v2949 = vunpack.c.l.b16 %v2267
    %v2950 = vunpack.c.h.b16 %v2267
    %v2951 = vunpack.c.l.b16 %v2268
    %v2952 = vunpack.c.h.b16 %v2268
    %v2953 = vunpack.c.l.b16 %v2269
    %v2954 = vunpack.c.h.b16 %v2269
    %v2955 = vunpack.c.l.b16 %v2270
    %v2956 = vunpack.c.h.b16 %v2270
    %v2957 = vunpack.c.l.b16 %v2271
    %v2958 = vunpack.c.h.b16 %v2271
    %v2959 = vunpack.c.l.b16 %v2272
    %v2960 = vunpack.c.h.b16 %v2272
    %v2961 = vunpack.c.l.b16 %v2273
    %v2962 = vunpack.c.h.b16 %v2273
    %v2963 = vunpack.c.l.b16 %v2274
    %v2964 = vunpack.c.h.b16 %v2274
    %v2965 = vunpack.c.l.b16 %v2275
    %v2966 = vunpack.c.h.b16 %v2275
    %v2967 = vunpack.c.l.b16 %v2276
    %v2968 = vunpack.c.h.b16 %v2276
    %v2969 = vunpack.c.l.b16 %v2277
    %v2970 = vunpack.c.h.b16 %v2277
    %v2971 = vunpack.c.l.b16 %v2278
    %v2972 = vunpack.c.h.b16 %v2278
    %v2973 = vunpack.c.l.b16 %v2279
    %v2974 = vunpack.c.h.b16 %v2279
    %v2975 = vunpack.c.l.b16 %v2280
    %v2976 = vunpack.c.h.b16 %v2280
    %v2977 = vunpack.c.l.b16 %v2281
    %v2978 = vunpack.c.h.b16 %v2281
    %v2979 = vunpack.c.l.b16 %v2282
    %v2980 = vunpack.c.h.b16 %v2282
    %v2981 = vunpack.c.l.b16 %v2283
    %v2982 = vunpack.c.h.b16 %v2283
    %v2983 = vunpack.c.l.b16 %v2284
    %v2984 = vunpack.c.h.b16 %v2284
    %v2985 = vunpack.c.l.b16 %v2285
    %v2986 = vunpack.c.h.b16 %v2285
    %v2987 = vunpack.c.l.b16 %v2286
    %v2988 = vunpack.c.h.b16 %v2286
    %v2989 = vunpack.c.l.b16 %v2287
    %v2990 = vunpack.c.h.b16 %v2287
    %v2991 = vunpack.c.l.b16 %v2288
    %v2992 = vunpack.c.h.b16 %v2288
    %v2993 = vunpack.c.l.b16 %v2289
    %v2994 = vunpack.c.h.b16 %v2289
    %v2995 = vunpack.c.l.b16 %v2290
    %v2996 = vunpack.c.h.b16 %v2290
    %v2997 = vunpack.c.l.b16 %v2291
    %v2998 = vunpack.c.h.b16 %v2291
    %v2999 = vunpack.c.l.b16 %v2292
    %v3000 = vunpack.c.h.b16 %v2292
    %v3001 = vunpack.c.l.b16 %v2293
    %v3002 = vunpack.c.h.b16 %v2293
    %v3003 = vunpack.c.l.b16 %v2294
    %v3004 = vunpack.c.h.b16 %v2294
    %v3005 = vunpack.c.l.b16 %v2295
    %v3006 = vunpack.c.h.b16 %v2295
    %v3007 = vunpack.c.l.b16 %v2296
    %v3008 = vunpack.c.h.b16 %v2296
    %v3009 = vunpack.c.l.b16 %v2297
    %v3010 = vunpack.c.h.b16 %v2297
    %v3011 = vunpack.c.l.b16 %v2298
    %v3012 = vunpack.c.h.b16 %v2298
    %v3013 = vunpack.c.l.b16 %v2299
    %v3014 = vunpack.c.h.b16 %v2299
    %v3015 = vunpack.c.l.b16 %v2300
    %v3016 = vunpack.c.h.b16 %v2300
    %v3017 = vunpack.c.l.b16 %v2301
    %v3018 = vunpack.c.h.b16 %v2301
    %v3019 = vunpack.c.l.b16 %v2302
    %v3020 = vunpack.c.h.b16 %v2302
    %v3021 = vunpack.c.l.b16 %v2303
    %v3022 = vunpack.c.h.b16 %v2303
    %v3023 = vunpack.c.l.b16 %v2304
    %v3024 = vunpack.c.h.b16 %v2304
    %v3025 = vunpack.c.l.b16 %v2305
    %v3026 = vunpack.c.h.b16 %v2305
    %v3027 = vunpack.c.l.b16 %v2306
    %v3028 = vunpack.c.h.b16 %v2306
    %v3029 = vunpack.c.l.b16 %v2307
    %v3030 = vunpack.c.h.b16 %v2307
    %v3031 = vunpack.c.l.b16 %v2308
    %v3032 = vunpack.c.h.b16 %v2308
    %v3033 = vunpack.c.l.b16 %v2309
    %v3034 = vunpack.c.h.b16 %v2309
    %v3035 = vunpack.c.l.b16 %v2310
    %v3036 = vunpack.c.h.b16 %v2310
    %v3037 = vunpack.c.l.b16 %v2311
    %v3038 = vunpack.c.h.b16 %v2311
    %v3039 = vunpack.c.l.b16 %v2312
    %v3040 = vunpack.c.h.b16 %v2312
    %v3041 = vunpack.c.l.b16 %v2313
    %v3042 = vunpack.c.h.b16 %v2313
    %v3043 = vunpack.c.l.b16 %v2314
    %v3044 = vunpack.c.h.b16 %v2314
    %v3045 = vunpack.c.l.b16 %v2315
    %v3046 = vunpack.c.h.b16 %v2315
    %v3047 = vunpack.c.l.b16 %v2316
    %v3048 = vunpack.c.h.b16 %v2316
    %v3049 = vunpack.c.l.b16 %v2317
    %v3050 = vunpack.c.h.b16 %v2317
    %v3051 = vunpack.c.l.b16 %v2318
    %v3052 = vunpack.c.h.b16 %v2318
    %v3053 = vunpack.c.l.b16 %v2319
    %v3054 = vunpack.c.h.b16 %v2319
    %v3055 = vunpack.c.l.b16 %v2320
    %v3056 = vunpack.c.h.b16 %v2320
    %v3057 = vunpack.c.l.b16 %v2321
    %v3058 = vunpack.c.h.b16 %v2321
    %v3059 = vunpack.c.l.b16 %v2322
    %v3060 = vunpack.c.h.b16 %v2322
    %v3061 = vunpack.c.l.b16 %v2323
    %v3062 = vunpack.c.h.b16 %v2323
    %v3063 = vunpack.c.l.b16 %v2324
    %v3064 = vunpack.c.h.b16 %v2324
    %v3065 = vunpack.c.l.b16 %v2325
    %v3066 = vunpack.c.h.b16 %v2325
    %v3067 = vunpack.c.l.b16 %v2326
    %v3068 = vunpack.c.h.b16 %v2326
    %v3069 = vunpack.c.l.b16 %v2327
    %v3070 = vunpack.c.h.b16 %v2327
    %v3071 = vunpack.c.l.b16 %v2328
    %v3072 = vunpack.c.h.b16 %v2328
    %v3073 = vunpack.c.l.b16 %v2329
    %v3074 = vunpack.c.h.b16 %v2329
    %v3075 = vunpack.c.l.b16 %v2330
    %v3076 = vunpack.c.h.b16 %v2330
    %v3077 = vunpack.c.l.b16 %v2331
    %v3078 = vunpack.c.h.b16 %v2331
    %v3079 = vunpack.c.l.b16 %v2332
    %v3080 = vunpack.c.h.b16 %v2332
    %v3081 = vunpack.c.l.b16 %v2333
    %v3082 = vunpack.c.h.b16 %v2333
    %v3083 = vunpack.c.l.b16 %v2334
    %v3084 = vunpack.c.h.b16 %v2334
    %v3085 = vunpack.c.l.b16 %v2335
    %v3086 = vunpack.c.h.b16 %v2335
    %v3087 = vunpack.c.l.b16 %v2336
    %v3088 = vunpack.c.h.b16 %v2336
    %v3089 = vunpack.c.l.b16 %v2337
    %v3090 = vunpack.c.h.b16 %v2337
    %v3091 = vunpack.c.l.b16 %v2338
    %v3092 = vunpack.c.h.b16 %v2338
    %v3093 = vunpack.c.l.b16 %v2339
    %v3094 = vunpack.c.h.b16 %v2339
    %v3095 = vunpack.c.l.b16 %v2340
    %v3096 = vunpack.c.h.b16 %v2340
    %v3097 = vunpack.c.l.b16 %v2341
    %v3098 = vunpack.c.h.b16 %v2341
    %v3099 = vunpack.c.l.b16 %v2342
    %v3100 = vunpack.c.h.b16 %v2342
    %v3101 = vunpack.c.l.b16 %v2343
    %v3102 = vunpack.c.h.b16 %v2343
    %v3103 = vunpack.c.l.b16 %v2344
    %v3104 = vunpack.c.h.b16 %v2344
    %v3105 = vunpack.c.l.b16 %v2345
    %v3106 = vunpack.c.h.b16 %v2345
    %v3107 = vunpack.c.l.b16 %v2346
    %v3108 = vunpack.c.h.b16 %v2346
    %v3109 = vunpack.c.l.b16 %v2347
    %v3110 = vunpack.c.h.b16 %v2347
    %v3111 = vunpack.c.l.b16 %v2348
    %v3112 = vunpack.c.h.b16 %v2348
    %v3113 = vunpack.c.l.b16 %v2349
    %v3114 = vunpack.c.h.b16 %v2349
    %v3115 = vunpack.c.l.b16 %v2350
    %v3116 = vunpack.c.h.b16 %v2350
    %v3117 = vunpack.c.l.b16 %v2351
    %v3118 = vunpack.c.h.b16 %v2351
    %v3119 = vunpack.c.l.b16 %v2352
    %v3120 = vunpack.c.h.b16 %v2352
    %v3121 = vunpack.c.l.b16 %v2353
    %v3122 = vunpack.c.h.b16 %v2353
    %v3123 = vunpack.c.l.b16 %v2354
    %v3124 = vunpack.c.h.b16 %v2354
    %v3125 = vunpack.c.l.b16 %v2355
    %v3126 = vunpack.c.h.b16 %v2355
    %v3127 = vunpack.c.l.b16 %v2356
    %v3128 = vunpack.c.h.b16 %v2356
    %v3129 = vunpack.c.l.b16 %v2357
    %v3130 = vunpack.c.h.b16 %v2357
    %v3131 = vunpack.c.l.b16 %v2358
    %v3132 = vunpack.c.h.b16 %v2358
    %v3133 = vunpack.c.l.b16 %v2359
    %v3134 = vunpack.c.h.b16 %v2359
    %v3135 = vunpack.c.l.b16 %v2360
    %v3136 = vunpack.c.h.b16 %v2360
    %v3137 = vunpack.c.l.b16 %v2361
    %v3138 = vunpack.c.h.b16 %v2361
    %v3139 = vunpack.c.l.b16 %v2362
    %v3140 = vunpack.c.h.b16 %v2362
    %v3141 = vunpack.c.l.b16 %v2363
    %v3142 = vunpack.c.h.b16 %v2363
    %v3143 = vunpack.c.l.b16 %v2364
    %v3144 = vunpack.c.h.b16 %v2364
    %v3145 = vunpack.c.l.b16 %v2365
    %v3146 = vunpack.c.h.b16 %v2365
    %v3147 = vunpack.c.l.b16 %v2366
    %v3148 = vunpack.c.h.b16 %v2366
    %v3149 = vunpack.c.l.b16 %v2367
    %v3150 = vunpack.c.h.b16 %v2367
    %v3151 = vunpack.c.l.b16 %v2368
    %v3152 = vunpack.c.h.b16 %v2368
    %v3153 = vunpack.c.l.b16 %v2369
    %v3154 = vunpack.c.h.b16 %v2369
    %v3155 = vunpack.c.l.b16 %v2370
    %v3156 = vunpack.c.h.b16 %v2370
    %v3157 = vunpack.c.l.b16 %v2371
    %v3158 = vunpack.c.h.b16 %v2371
    %v3159 = vunpack.c.l.b16 %v2372
    %v3160 = vunpack.c.h.b16 %v2372
    %v3161 = vunpack.c.l.b16 %v2373
    %v3162 = vunpack.c.h.b16 %v2373
    %v3163 = vunpack.c.l.b16 %v2374
    %v3164 = vunpack.c.h.b16 %v2374
    %v3165 = vunpack.c.l.b16 %v2375
    %v3166 = vunpack.c.h.b16 %v2375
    %v3167 = vunpack.c.l.b16 %v2376
    %v3168 = vunpack.c.h.b16 %v2376
    %v3169 = vunpack.c.l.b16 %v2377
    %v3170 = vunpack.c.h.b16 %v2377
    %v3171 = vunpack.c.l.b16 %v2378
    %v3172 = vunpack.c.h.b16 %v2378
    %v3173 = vunpack.c.l.b16 %v2379
    %v3174 = vunpack.c.h.b16 %v2379
    %v3175 = vunpack.c.l.b16 %v2380
    %v3176 = vunpack.c.h.b16 %v2380
    %v3177 = vunpack.c.l.b16 %v2381
    %v3178 = vunpack.c.h.b16 %v2381
    %v3179 = vunpack.c.l.b16 %v2382
    %v3180 = vunpack.c.h.b16 %v2382
    %v3181 = vpack.c.b16 %v2673, %v2669
    %v3182 = vpack.c.b16 %v2674, %v2670
    %v3183 = vpack.c.b16 %v2675, %v2671
    %v3184 = vpack.c.b16 %v2676, %v2672
    %v3185 = vpack.c.b16 %v2681, %v2677
    %v3186 = vpack.c.b16 %v2682, %v2678
    %v3187 = vpack.c.b16 %v2683, %v2679
    %v3188 = vpack.c.b16 %v2684, %v2680
    %v3189 = vpack.c.b16 %v2689, %v2685
    %v3190 = vpack.c.b16 %v2690, %v2686
    %v3191 = vpack.c.b16 %v2691, %v2687
    %v3192 = vpack.c.b16 %v2692, %v2688
    %v3193 = vpack.c.b16 %v2697, %v2693
    %v3194 = vpack.c.b16 %v2698, %v2694
    %v3195 = vpack.c.b16 %v2699, %v2695
    %v3196 = vpack.c.b16 %v2700, %v2696
    %v3197 = vpack.c.b16 %v2705, %v2701
    %v3198 = vpack.c.b16 %v2706, %v2702
    %v3199 = vpack.c.b16 %v2707, %v2703
    %v3200 = vpack.c.b16 %v2708, %v2704
    %v3201 = vpack.c.b16 %v2713, %v2709
    %v3202 = vpack.c.b16 %v2714, %v2710
    %v3203 = vpack.c.b16 %v2715, %v2711
    %v3204 = vpack.c.b16 %v2716, %v2712
    %v3205 = vpack.c.b16 %v2721, %v2717
    %v3206 = vpack.c.b16 %v2722, %v2718
    %v3207 = vpack.c.b16 %v2723, %v2719
    %v3208 = vpack.c.b16 %v2724, %v2720
    %v3209 = vpack.c.b16 %v2729, %v2725
    %v3210 = vpack.c.b16 %v2730, %v2726
    %v3211 = vpack.c.b16 %v2731, %v2727
    %v3212 = vpack.c.b16 %v2732, %v2728
    %v3213 = vpack.c.b16 %v2737, %v2733
    %v3214 = vpack.c.b16 %v2738, %v2734
    %v3215 = vpack.c.b16 %v2739, %v2735
    %v3216 = vpack.c.b16 %v2740, %v2736
    %v3217 = vpack.c.b16 %v2745, %v2741
    %v3218 = vpack.c.b16 %v2746, %v2742
    %v3219 = vpack.c.b16 %v2747, %v2743
    %v3220 = vpack.c.b16 %v2748, %v2744
    %v3221 = vpack.c.b16 %v2753, %v2749
    %v3222 = vpack.c.b16 %v2754, %v2750
    %v3223 = vpack.c.b16 %v2755, %v2751
    %v3224 = vpack.c.b16 %v2756, %v2752
    %v3225 = vpack.c.b16 %v2761, %v2757
    %v3226 = vpack.c.b16 %v2762, %v2758
    %v3227 = vpack.c.b16 %v2763, %v2759
    %v3228 = vpack.c.b16 %v2764, %v2760
    %v3229 = vpack.c.b16 %v2769, %v2765
    %v3230 = vpack.c.b16 %v2770, %v2766
    %v3231 = vpack.c.b16 %v2771, %v2767
    %v3232 = vpack.c.b16 %v2772, %v2768
    %v3233 = vpack.c.b16 %v2777, %v2773
    %v3234 = vpack.c.b16 %v2778, %v2774
    %v3235 = vpack.c.b16 %v2779, %v2775
    %v3236 = vpack.c.b16 %v2780, %v2776
    %v3237 = vpack.c.b16 %v2785, %v2781
    %v3238 = vpack.c.b16 %v2786, %v2782
    %v3239 = vpack.c.b16 %v2787, %v2783
    %v3240 = vpack.c.b16 %v2788, %v2784
    %v3241 = vpack.c.b16 %v2793, %v2789
    %v3242 = vpack.c.b16 %v2794, %v2790
    %v3243 = vpack.c.b16 %v2795, %v2791
    %v3244 = vpack.c.b16 %v2796, %v2792
    %v3245 = vpack.c.b16 %v2801, %v2797
    %v3246 = vpack.c.b16 %v2802, %v2798
    %v3247 = vpack.c.b16 %v2803, %v2799
    %v3248 = vpack.c.b16 %v2804, %v2800
    %v3249 = vpack.c.b16 %v2809, %v2805
    %v3250 = vpack.c.b16 %v2810, %v2806
    %v3251 = vpack.c.b16 %v2811, %v2807
    %v3252 = vpack.c.b16 %v2812, %v2808
    %v3253 = vpack.c.b16 %v2817, %v2813
    %v3254 = vpack.c.b16 %v2818, %v2814
    %v3255 = vpack.c.b16 %v2819, %v2815
    %v3256 = vpack.c.b16 %v2820, %v2816
    %v3257 = vpack.c.b16 %v2825, %v2821
    %v3258 = vpack.c.b16 %v2826, %v2822
    %v3259 = vpack.c.b16 %v2827, %v2823
    %v3260 = vpack.c.b16 %v2828, %v2824
    %v3261 = vpack.c.b16 %v2833, %v2829
    %v3262 = vpack.c.b16 %v2834, %v2830
    %v3263 = vpack.c.b16 %v2835, %v2831
    %v3264 = vpack.c.b16 %v2836, %v2832
    %v3265 = vpack.c.b16 %v2841, %v2837
    %v3266 = vpack.c.b16 %v2842, %v2838
    %v3267 = vpack.c.b16 %v2843, %v2839
    %v3268 = vpack.c.b16 %v2844, %v2840
    %v3269 = vpack.c.b16 %v2849, %v2845
    %v3270 = vpack.c.b16 %v2850, %v2846
    %v3271 = vpack.c.b16 %v2851, %v2847
    %v3272 = vpack.c.b16 %v2852, %v2848
    %v3273 = vpack.c.b16 %v2857, %v2853
    %v3274 = vpack.c.b16 %v2858, %v2854
    %v3275 = vpack.c.b16 %v2859, %v2855
    %v3276 = vpack.c.b16 %v2860, %v2856
    %v3277 = vpack.c.b16 %v2865, %v2861
    %v3278 = vpack.c.b16 %v2866, %v2862
    %v3279 = vpack.c.b16 %v2867, %v2863
    %v3280 = vpack.c.b16 %v2868, %v2864
    %v3281 = vpack.c.b16 %v2873, %v2869
    %v3282 = vpack.c.b16 %v2874, %v2870
    %v3283 = vpack.c.b16 %v2875, %v2871
    %v3284 = vpack.c.b16 %v2876, %v2872
    %v3285 = vpack.c.b16 %v2881, %v2877
    %v3286 = vpack.c.b16 %v2882, %v2878
    %v3287 = vpack.c.b16 %v2883, %v2879
    %v3288 = vpack.c.b16 %v2884, %v2880
    %v3289 = vpack.c.b16 %v2889, %v2885
    %v3290 = vpack.c.b16 %v2890, %v2886
    %v3291 = vpack.c.b16 %v2891, %v2887
    %v3292 = vpack.c.b16 %v2892, %v2888
    %v3293 = vpack.c.b16 %v2897, %v2893
    %v3294 = vpack.c.b16 %v2898, %v2894
    %v3295 = vpack.c.b16 %v2899, %v2895
    %v3296 = vpack.c.b16 %v2900, %v2896
    %v3297 = vpack.c.b16 %v2905, %v2901
    %v3298 = vpack.c.b16 %v2906, %v2902
    %v3299 = vpack.c.b16 %v2907, %v2903
    %v3300 = vpack.c.b16 %v2908, %v2904
    %v3301 = vpack.c.b16 %v2913, %v2909
    %v3302 = vpack.c.b16 %v2914, %v2910
    %v3303 = vpack.c.b16 %v2915, %v2911
    %v3304 = vpack.c.b16 %v2916, %v2912
    %v3305 = vpack.c.b16 %v2921, %v2917
    %v3306 = vpack.c.b16 %v2922, %v2918
    %v3307 = vpack.c.b16 %v2923, %v2919
    %v3308 = vpack.c.b16 %v2924, %v2920
    %v3309 = vpack.c.b16 %v2929, %v2925
    %v3310 = vpack.c.b16 %v2930, %v2926
    %v3311 = vpack.c.b16 %v2931, %v2927
    %v3312 = vpack.c.b16 %v2932, %v2928
    %v3313 = vpack.c.b16 %v2937, %v2933
    %v3314 = vpack.c.b16 %v2938, %v2934
    %v3315 = vpack.c.b16 %v2939, %v2935
    %v3316 = vpack.c.b16 %v2940, %v2936
    %v3317 = vpack.c.b16 %v2945, %v2941
    %v3318 = vpack.c.b16 %v2946, %v2942
    %v3319 = vpack.c.b16 %v2947, %v2943
    %v3320 = vpack.c.b16 %v2948, %v2944
    %v3321 = vpack.c.b16 %v2953, %v2949
    %v3322 = vpack.c.b16 %v2954, %v2950
    %v3323 = vpack.c.b16 %v2955, %v2951
    %v3324 = vpack.c.b16 %v2956, %v2952
    %v3325 = vpack.c.b16 %v2961, %v2957
    %v3326 = vpack.c.b16 %v2962, %v2958
    %v3327 = vpack.c.b16 %v2963, %v2959
    %v3328 = vpack.c.b16 %v2964, %v2960
    %v3329 = vpack.c.b16 %v2969, %v2965
    %v3330 = vpack.c.b16 %v2970, %v2966
    %v3331 = vpack.c.b16 %v2971, %v2967
    %v3332 = vpack.c.b16 %v2972, %v2968
    %v3333 = vpack.c.b16 %v2977, %v2973
    %v3334 = vpack.c.b16 %v2978, %v2974
    %v3335 = vpack.c.b16 %v2979, %v2975
    %v3336 = vpack.c.b16 %v2980, %v2976
    %v3337 = vpack.c.b16 %v2985, %v2981
    %v3338 = vpack.c.b16 %v2986, %v2982
    %v3339 = vpack.c.b16 %v2987, %v2983
    %v3340 = vpack.c.b16 %v2988, %v2984
    %v3341 = vpack.c.b16 %v2993, %v2989
    %v3342 = vpack.c.b16 %v2994, %v2990
    %v3343 = vpack.c.b16 %v2995, %v2991
    %v3344 = vpack.c.b16 %v2996, %v2992
    %v3345 = vpack.c.b16 %v3001, %v2997
    %v3346 = vpack.c.b16 %v3002, %v2998
    %v3347 = vpack.c.b16 %v3003, %v2999
    %v3348 = vpack.c.b16 %v3004, %v3000
    %v3349 = vpack.c.b16 %v3009, %v3005
    %v3350 = vpack.c.b16 %v3010, %v3006
    %v3351 = vpack.c.b16 %v3011, %v3007
    %v3352 = vpack.c.b16 %v3012, %v3008
    %v3353 = vpack.c.b16 %v3017, %v3013
    %v3354 = vpack.c.b16 %v3018, %v3014
    %v3355 = vpack.c.b16 %v3019, %v3015
    %v3356 = vpack.c.b16 %v3020, %v3016
    %v3357 = vpack.c.b16 %v3025, %v3021
    %v3358 = vpack.c.b16 %v3026, %v3022
    %v3359 = vpack.c.b16 %v3027, %v3023
    %v3360 = vpack.c.b16 %v3028, %v3024
    %v3361 = vpack.c.b16 %v3033, %v3029
    %v3362 = vpack.c.b16 %v3034, %v3030
    %v3363 = vpack.c.b16 %v3035, %v3031
    %v3364 = vpack.c.b16 %v3036, %v3032
    %v3365 = vpack.c.b16 %v3041, %v3037
    %v3366 = vpack.c.b16 %v3042, %v3038
    %v3367 = vpack.c.b16 %v3043, %v3039
    %v3368 = vpack.c.b16 %v3044, %v3040
    %v3369 = vpack.c.b16 %v3049, %v3045
    %v3370 = vpack.c.b16 %v3050, %v3046
    %v3371 = vpack.c.b16 %v3051, %v3047
    %v3372 = vpack.c.b16 %v3052, %v3048
    %v3373 = vpack.c.b16 %v3057, %v3053
    %v3374 = vpack.c.b16 %v3058, %v3054
    %v3375 = vpack.c.b16 %v3059, %v3055
    %v3376 = vpack.c.b16 %v3060, %v3056
    %v3377 = vpack.c.b16 %v3065, %v3061
    %v3378 = vpack.c.b16 %v3066, %v3062
    %v3379 = vpack.c.b16 %v3067, %v3063
    %v3380 = vpack.c.b16 %v3068, %v3064
    %v3381 = vpack.c.b16 %v3073, %v3069
    %v3382 = vpack.c.b16 %v3074, %v3070
    %v3383 = vpack.c.b16 %v3075, %v3071
    %v3384 = vpack.c.b16 %v3076, %v3072
    %v3385 = vpack.c.b16 %v3081, %v3077
    %v3386 = vpack.c.b16 %v3082, %v3078
    %v3387 = vpack.c.b16 %v3083, %v3079
    %v3388 = vpack.c.b16 %v3084, %v3080
    %v3389 = vpack.c.b16 %v3089, %v3085
    %v3390 = vpack.c.b16 %v3090, %v3086
    %v3391 = vpack.c.b16 %v3091, %v3087
    %v3392 = vpack.c.b16 %v3092, %v3088
    %v3393 = vpack.c.b16 %v3097, %v3093
    %v3394 = vpack.c.b16 %v3098, %v3094
    %v3395 = vpack.c.b16 %v3099, %v3095
    %v3396 = vpack.c.b16 %v3100, %v3096
    %v3397 = vpack.c.b16 %v3105, %v3101
    %v3398 = vpack.c.b16 %v3106, %v3102
    %v3399 = vpack.c.b16 %v3107, %v3103
    %v3400 = vpack.c.b16 %v3108, %v3104
    %v3401 = vpack.c.b16 %v3113, %v3109
    %v3402 = vpack.c.b16 %v3114, %v3110
    %v3403 = vpack.c.b16 %v3115, %v3111
    %v3404 = vpack.c.b16 %v3116, %v3112
    %v3405 = vpack.c.b16 %v3121, %v3117
    %v3406 = vpack.c.b16 %v3122, %v3118
    %v3407 = vpack.c.b16 %v3123, %v3119
    %v3408 = vpack.c.b16 %v3124, %v3120
    %v3409 = vpack.c.b16 %v3129, %v3125
    %v3410 = vpack.c.b16 %v3130, %v3126
    %v3411 = vpack.c.b16 %v3131, %v3127
    %v3412 = vpack.c.b16 %v3132, %v3128
    %v3413 = vpack.c.b16 %v3137, %v3133
    %v3414 = vpack.c.b16 %v3138, %v3134
    %v3415 = vpack.c.b16 %v3139, %v3135
    %v3416 = vpack.c.b16 %v3140, %v3136
    %v3417 = vpack.c.b16 %v3145, %v3141
    %v3418 = vpack.c.b16 %v3146, %v3142
    %v3419 = vpack.c.b16 %v3147, %v3143
    %v3420 = vpack.c.b16 %v3148, %v3144
    %v3421 = vpack.c.b16 %v3153, %v3149
    %v3422 = vpack.c.b16 %v3154, %v3150
    %v3423 = vpack.c.b16 %v3155, %v3151
    %v3424 = vpack.c.b16 %v3156, %v3152
    %v3425 = vpack.c.b16 %v3161, %v3157
    %v3426 = vpack.c.b16 %v3162, %v3158
    %v3427 = vpack.c.b16 %v3163, %v3159
    %v3428 = vpack.c.b16 %v3164, %v3160
    %v3429 = vpack.c.b16 %v3169, %v3165
    %v3430 = vpack.c.b16 %v3170, %v3166
    %v3431 = vpack.c.b16 %v3171, %v3167
    %v3432 = vpack.c.b16 %v3172, %v3168
    %v3433 = vpack.c.b16 %v3177, %v3173
    %v3434 = vpack.c.b16 %v3178, %v3174
    %v3435 = vpack.c.b16 %v3179, %v3175
    %v3436 = vpack.c.b16 %v3180, %v3176
    %3693 = vmatprep.subr.bf16.mxu0 %v3210
    %3694 = vmatpush1.bf16.msra.mxu0 %v3209
    %3695 = vmatprep.subr.bf16.mxu0 %v3206
    %3696 = vmatpush1.bf16.msra.mxu0 %v3205
    %3697 = vmatprep.subr.bf16.mxu0 %v3202
    %3698 = vmatpush1.bf16.msra.mxu0 %v3201
    %3699 = vmatprep.subr.bf16.mxu0 %v3198
    %3700 = vmatpush1.bf16.msra.mxu0 %v3197
    %3701 = vmatprep.subr.bf16.mxu0 %v3194
    %3702 = vmatpush1.bf16.msra.mxu0 %v3193
    %3703 = vmatprep.subr.bf16.mxu0 %v3190
    %3704 = vmatpush1.bf16.msra.mxu0 %v3189
    %3705 = vmatprep.subr.bf16.mxu0 %v3186
    %3706 = vmatpush1.bf16.msra.mxu0 %v3185
    %3707 = vmatprep.subr.bf16.mxu0 %v3182
    %3708 = vmatpush1.bf16.msra.mxu0 %v3181
    %3709 = vmatprep.subr.bf16.mxu0 %v3242
    %3710 = vmatpush2.bf16.msra.mxu0 %v3241
    %3711 = vmatprep.subr.bf16.mxu0 %v3238
    %3712 = vmatpush2.bf16.msra.mxu0 %v3237
    %3713 = vmatprep.subr.bf16.mxu0 %v3234
    %3714 = vmatpush2.bf16.msra.mxu0 %v3233
    %3715 = vmatprep.subr.bf16.mxu0 %v3230
    %3716 = vmatpush2.bf16.msra.mxu0 %v3229
    %3717 = vmatprep.subr.bf16.mxu0 %v3226
    %3718 = vmatpush2.bf16.msra.mxu0 %v3225
    %3719 = vmatprep.subr.bf16.mxu0 %v3222
    %3720 = vmatpush2.bf16.msra.mxu0 %v3221
    %3721 = vmatprep.subr.bf16.mxu0 %v3218
    %3722 = vmatpush2.bf16.msra.mxu0 %v3217
    %3723 = vmatprep.subr.bf16.mxu0 %v3214
    %3724 = vmatpush2.bf16.msra.mxu0 %v3213
    %3725 = vmatprep.mubr.bf16.mxu0 %v2385
    %3726 = vmatmul.mubr.bf16.gmra.mxu0 %v2384
    %v3727 = vpop.f32.mrf.mxu0
    %v3728 = vadd.f32 %v2396, %v3727
    %v3729 = vpop.f32.mrf.mxu0
    %v3730 = vadd.f32 %v2400, %v3729
    %v3731 = vpop.f32.mrf.mxu0
    %v3732 = vpop.f32.mrf.mxu0
    %3733 = vdwg.mxu0
    %3734 = vmatprep.subr.bf16.mxu0 %v3274
    %3735 = vmatpush1.bf16.msra.mxu0 %v3273
    %3736 = vmatprep.subr.bf16.mxu0 %v3270
    %3737 = vmatpush1.bf16.msra.mxu0 %v3269
    %3738 = vmatprep.subr.bf16.mxu0 %v3266
    %3739 = vmatpush1.bf16.msra.mxu0 %v3265
    %3740 = vmatprep.subr.bf16.mxu0 %v3262
    %3741 = vmatpush1.bf16.msra.mxu0 %v3261
    %3742 = vmatprep.subr.bf16.mxu0 %v3258
    %3743 = vmatpush1.bf16.msra.mxu0 %v3257
    %3744 = vmatprep.subr.bf16.mxu0 %v3254
    %3745 = vmatpush1.bf16.msra.mxu0 %v3253
    %3746 = vmatprep.subr.bf16.mxu0 %v3250
    %3747 = vmatpush1.bf16.msra.mxu0 %v3249
    %3748 = vmatprep.subr.bf16.mxu0 %v3246
    %3749 = vmatpush1.bf16.msra.mxu0 %v3245
    %3750 = vmatprep.subr.bf16.mxu0 %v3306
    %3751 = vmatpush2.bf16.msra.mxu0 %v3305
    %3752 = vmatprep.subr.bf16.mxu0 %v3302
    %3753 = vmatpush2.bf16.msra.mxu0 %v3301
    %3754 = vmatprep.subr.bf16.mxu0 %v3298
    %3755 = vmatpush2.bf16.msra.mxu0 %v3297
    %3756 = vmatprep.subr.bf16.mxu0 %v3294
    %3757 = vmatpush2.bf16.msra.mxu0 %v3293
    %3758 = vmatprep.subr.bf16.mxu0 %v3290
    %3759 = vmatpush2.bf16.msra.mxu0 %v3289
    %3760 = vmatprep.subr.bf16.mxu0 %v3286
    %3761 = vmatpush2.bf16.msra.mxu0 %v3285
    %3762 = vmatprep.subr.bf16.mxu0 %v3282
    %3763 = vmatpush2.bf16.msra.mxu0 %v3281
    %3764 = vmatprep.subr.bf16.mxu0 %v3278
    %3765 = vmatpush2.bf16.msra.mxu0 %v3277
    %3766 = vmatprep.mubr.bf16.mxu0 %v2387
    %3767 = vmatmul.mubr.bf16.gmra.mxu0 %v2386
    %v3768 = vpop.f32.mrf.mxu0
    %v3769 = vadd.f32 %v3728, %v3768
    %v3770 = vpop.f32.mrf.mxu0
    %v3771 = vadd.f32 %v3730, %v3770
    %v3772 = vpop.f32.mrf.mxu0
    %v3773 = vpop.f32.mrf.mxu0
    %3774 = vdwg.mxu0
    %3775 = vmatprep.subr.bf16.mxu0 %v3338
    %3776 = vmatpush1.bf16.msra.mxu0 %v3337
    %3777 = vmatprep.subr.bf16.mxu0 %v3334
    %3778 = vmatpush1.bf16.msra.mxu0 %v3333
    %3779 = vmatprep.subr.bf16.mxu0 %v3330
    %3780 = vmatpush1.bf16.msra.mxu0 %v3329
    %3781 = vmatprep.subr.bf16.mxu0 %v3326
    %3782 = vmatpush1.bf16.msra.mxu0 %v3325
    %3783 = vmatprep.subr.bf16.mxu0 %v3322
    %3784 = vmatpush1.bf16.msra.mxu0 %v3321
    %3785 = vmatprep.subr.bf16.mxu0 %v3318
    %3786 = vmatpush1.bf16.msra.mxu0 %v3317
    %3787 = vmatprep.subr.bf16.mxu0 %v3314
    %3788 = vmatpush1.bf16.msra.mxu0 %v3313
    %3789 = vmatprep.subr.bf16.mxu0 %v3310
    %3790 = vmatpush1.bf16.msra.mxu0 %v3309
    %3791 = vmatprep.subr.bf16.mxu0 %v3370
    %3792 = vmatpush2.bf16.msra.mxu0 %v3369
    %3793 = vmatprep.subr.bf16.mxu0 %v3366
    %3794 = vmatpush2.bf16.msra.mxu0 %v3365
    %3795 = vmatprep.subr.bf16.mxu0 %v3362
    %3796 = vmatpush2.bf16.msra.mxu0 %v3361
    %3797 = vmatprep.subr.bf16.mxu0 %v3358
    %3798 = vmatpush2.bf16.msra.mxu0 %v3357
    %3799 = vmatprep.subr.bf16.mxu0 %v3354
    %3800 = vmatpush2.bf16.msra.mxu0 %v3353
    %3801 = vmatprep.subr.bf16.mxu0 %v3350
    %3802 = vmatpush2.bf16.msra.mxu0 %v3349
    %3803 = vmatprep.subr.bf16.mxu0 %v3346
    %3804 = vmatpush2.bf16.msra.mxu0 %v3345
    %3805 = vmatprep.subr.bf16.mxu0 %v3342
    %3806 = vmatpush2.bf16.msra.mxu0 %v3341
    %3807 = vmatprep.mubr.bf16.mxu0 %v2389
    %3808 = vmatmul.mubr.bf16.gmra.mxu0 %v2388
    %v3809 = vpop.f32.mrf.mxu0
    %v3810 = vadd.f32 %v3769, %v3809
    %v3811 = vpop.f32.mrf.mxu0
    %v3812 = vadd.f32 %v3771, %v3811
    %v3813 = vpop.f32.mrf.mxu0
    %v3814 = vpop.f32.mrf.mxu0
    %3815 = vdwg.mxu0
    %3816 = vmatprep.subr.bf16.mxu0 %v3402
    %3817 = vmatpush1.bf16.msra.mxu0 %v3401
    %3818 = vmatprep.subr.bf16.mxu0 %v3398
    %3819 = vmatpush1.bf16.msra.mxu0 %v3397
    %3820 = vmatprep.subr.bf16.mxu0 %v3394
    %3821 = vmatpush1.bf16.msra.mxu0 %v3393
    %3822 = vmatprep.subr.bf16.mxu0 %v3390
    %3823 = vmatpush1.bf16.msra.mxu0 %v3389
    %3824 = vmatprep.subr.bf16.mxu0 %v3386
    %3825 = vmatpush1.bf16.msra.mxu0 %v3385
    %3826 = vmatprep.subr.bf16.mxu0 %v3382
    %3827 = vmatpush1.bf16.msra.mxu0 %v3381
    %3828 = vmatprep.subr.bf16.mxu0 %v3378
    %3829 = vmatpush1.bf16.msra.mxu0 %v3377
    %3830 = vmatprep.subr.bf16.mxu0 %v3374
    %3831 = vmatpush1.bf16.msra.mxu0 %v3373
    %3832 = vmatprep.subr.bf16.mxu0 %v3434
    %3833 = vmatpush2.bf16.msra.mxu0 %v3433
    %3834 = vmatprep.subr.bf16.mxu0 %v3430
    %3835 = vmatpush2.bf16.msra.mxu0 %v3429
    %3836 = vmatprep.subr.bf16.mxu0 %v3426
    %3837 = vmatpush2.bf16.msra.mxu0 %v3425
    %3838 = vmatprep.subr.bf16.mxu0 %v3422
    %3839 = vmatpush2.bf16.msra.mxu0 %v3421
    %3840 = vmatprep.subr.bf16.mxu0 %v3418
    %3841 = vmatpush2.bf16.msra.mxu0 %v3417
    %3842 = vmatprep.subr.bf16.mxu0 %v3414
    %3843 = vmatpush2.bf16.msra.mxu0 %v3413
    %3844 = vmatprep.subr.bf16.mxu0 %v3410
    %3845 = vmatpush2.bf16.msra.mxu0 %v3409
    %3846 = vmatprep.subr.bf16.mxu0 %v3406
    %3847 = vmatpush2.bf16.msra.mxu0 %v3405
    %3848 = vmatprep.mubr.bf16.mxu0 %v2391
    %3849 = vmatmul.mubr.bf16.gmra.mxu0 %v2390
    %v3850 = vpop.f32.mrf.mxu0
    %v3851 = vadd.f32 %v3810, %v3850
    %v3852 = vpop.f32.mrf.mxu0
    %v3853 = vadd.f32 %v3812, %v3852
    %v3854 = vpop.f32.mrf.mxu0
    %v3855 = vpop.f32.mrf.mxu0
    %3856 = vdwg.mxu0
    %3857 = vmatprep.subr.bf16.mxu0 %v3212
    %3858 = vmatpush1.bf16.msra.mxu0 %v3211
    %3859 = vmatprep.subr.bf16.mxu0 %v3208
    %3860 = vmatpush1.bf16.msra.mxu0 %v3207
    %3861 = vmatprep.subr.bf16.mxu0 %v3204
    %3862 = vmatpush1.bf16.msra.mxu0 %v3203
    %3863 = vmatprep.subr.bf16.mxu0 %v3200
    %3864 = vmatpush1.bf16.msra.mxu0 %v3199
    %3865 = vmatprep.subr.bf16.mxu0 %v3196
    %3866 = vmatpush1.bf16.msra.mxu0 %v3195
    %3867 = vmatprep.subr.bf16.mxu0 %v3192
    %3868 = vmatpush1.bf16.msra.mxu0 %v3191
    %3869 = vmatprep.subr.bf16.mxu0 %v3188
    %3870 = vmatpush1.bf16.msra.mxu0 %v3187
    %3871 = vmatprep.subr.bf16.mxu0 %v3184
    %3872 = vmatpush1.bf16.msra.mxu0 %v3183
    %3873 = vmatprep.subr.bf16.mxu0 %v3244
    %3874 = vmatpush2.bf16.msra.mxu0 %v3243
    %3875 = vmatprep.subr.bf16.mxu0 %v3240
    %3876 = vmatpush2.bf16.msra.mxu0 %v3239
    %3877 = vmatprep.subr.bf16.mxu0 %v3236
    %3878 = vmatpush2.bf16.msra.mxu0 %v3235
    %3879 = vmatprep.subr.bf16.mxu0 %v3232
    %3880 = vmatpush2.bf16.msra.mxu0 %v3231
    %3881 = vmatprep.subr.bf16.mxu0 %v3228
    %3882 = vmatpush2.bf16.msra.mxu0 %v3227
    %3883 = vmatprep.subr.bf16.mxu0 %v3224
    %3884 = vmatpush2.bf16.msra.mxu0 %v3223
    %3885 = vmatprep.subr.bf16.mxu0 %v3220
    %3886 = vmatpush2.bf16.msra.mxu0 %v3219
    %3887 = vmatprep.subr.bf16.mxu0 %v3216
    %3888 = vmatpush2.bf16.msra.mxu0 %v3215
    %3889 = vmatprep.mubr.bf16.mxu0 %v2385
    %3890 = vmatmul.mubr.bf16.gmra.mxu0 %v2384
    %v3891 = vpop.f32.mrf.mxu0
    %v3892 = vadd.f32 %v2404, %v3891
    %v3893 = vpop.f32.mrf.mxu0
    %v3894 = vadd.f32 %v2408, %v3893
    %v3895 = vpop.f32.mrf.mxu0
    %v3896 = vpop.f32.mrf.mxu0
    %3897 = vdwg.mxu0
    %3898 = vmatprep.subr.bf16.mxu0 %v3276
    %3899 = vmatpush1.bf16.msra.mxu0 %v3275
    %3900 = vmatprep.subr.bf16.mxu0 %v3272
    %3901 = vmatpush1.bf16.msra.mxu0 %v3271
    %3902 = vmatprep.subr.bf16.mxu0 %v3268
    %3903 = vmatpush1.bf16.msra.mxu0 %v3267
    %3904 = vmatprep.subr.bf16.mxu0 %v3264
    %3905 = vmatpush1.bf16.msra.mxu0 %v3263
    %3906 = vmatprep.subr.bf16.mxu0 %v3260
    %3907 = vmatpush1.bf16.msra.mxu0 %v3259
    %3908 = vmatprep.subr.bf16.mxu0 %v3256
    %3909 = vmatpush1.bf16.msra.mxu0 %v3255
    %3910 = vmatprep.subr.bf16.mxu0 %v3252
    %3911 = vmatpush1.bf16.msra.mxu0 %v3251
    %3912 = vmatprep.subr.bf16.mxu0 %v3248
    %3913 = vmatpush1.bf16.msra.mxu0 %v3247
    %3914 = vmatprep.subr.bf16.mxu0 %v3308
    %3915 = vmatpush2.bf16.msra.mxu0 %v3307
    %3916 = vmatprep.subr.bf16.mxu0 %v3304
    %3917 = vmatpush2.bf16.msra.mxu0 %v3303
    %3918 = vmatprep.subr.bf16.mxu0 %v3300
    %3919 = vmatpush2.bf16.msra.mxu0 %v3299
    %3920 = vmatprep.subr.bf16.mxu0 %v3296
    %3921 = vmatpush2.bf16.msra.mxu0 %v3295
    %3922 = vmatprep.subr.bf16.mxu0 %v3292
    %3923 = vmatpush2.bf16.msra.mxu0 %v3291
    %3924 = vmatprep.subr.bf16.mxu0 %v3288
    %3925 = vmatpush2.bf16.msra.mxu0 %v3287
    %3926 = vmatprep.subr.bf16.mxu0 %v3284
    %3927 = vmatpush2.bf16.msra.mxu0 %v3283
    %3928 = vmatprep.subr.bf16.mxu0 %v3280
    %3929 = vmatpush2.bf16.msra.mxu0 %v3279
    %3930 = vmatprep.mubr.bf16.mxu0 %v2387
    %3931 = vmatmul.mubr.bf16.gmra.mxu0 %v2386
    %v3932 = vpop.f32.mrf.mxu0
    %v3933 = vadd.f32 %v3892, %v3932
    %v3934 = vpop.f32.mrf.mxu0
    %v3935 = vadd.f32 %v3894, %v3934
    %v3936 = vpop.f32.mrf.mxu0
    %v3937 = vpop.f32.mrf.mxu0
    %3938 = vdwg.mxu0
    %3939 = vmatprep.subr.bf16.mxu0 %v3340
    %3940 = vmatpush1.bf16.msra.mxu0 %v3339
    %3941 = vmatprep.subr.bf16.mxu0 %v3336
    %3942 = vmatpush1.bf16.msra.mxu0 %v3335
    %3943 = vmatprep.subr.bf16.mxu0 %v3332
    %3944 = vmatpush1.bf16.msra.mxu0 %v3331
    %3945 = vmatprep.subr.bf16.mxu0 %v3328
    %3946 = vmatpush1.bf16.msra.mxu0 %v3327
    %3947 = vmatprep.subr.bf16.mxu0 %v3324
    %3948 = vmatpush1.bf16.msra.mxu0 %v3323
    %3949 = vmatprep.subr.bf16.mxu0 %v3320
    %3950 = vmatpush1.bf16.msra.mxu0 %v3319
    %3951 = vmatprep.subr.bf16.mxu0 %v3316
    %3952 = vmatpush1.bf16.msra.mxu0 %v3315
    %3953 = vmatprep.subr.bf16.mxu0 %v3312
    %3954 = vmatpush1.bf16.msra.mxu0 %v3311
    %3955 = vmatprep.subr.bf16.mxu0 %v3372
    %3956 = vmatpush2.bf16.msra.mxu0 %v3371
    %3957 = vmatprep.subr.bf16.mxu0 %v3368
    %3958 = vmatpush2.bf16.msra.mxu0 %v3367
    %3959 = vmatprep.subr.bf16.mxu0 %v3364
    %3960 = vmatpush2.bf16.msra.mxu0 %v3363
    %3961 = vmatprep.subr.bf16.mxu0 %v3360
    %3962 = vmatpush2.bf16.msra.mxu0 %v3359
    %3963 = vmatprep.subr.bf16.mxu0 %v3356
    %3964 = vmatpush2.bf16.msra.mxu0 %v3355
    %3965 = vmatprep.subr.bf16.mxu0 %v3352
    %3966 = vmatpush2.bf16.msra.mxu0 %v3351
    %3967 = vmatprep.subr.bf16.mxu0 %v3348
    %3968 = vmatpush2.bf16.msra.mxu0 %v3347
    %3969 = vmatprep.subr.bf16.mxu0 %v3344
    %3970 = vmatpush2.bf16.msra.mxu0 %v3343
    %3971 = vmatprep.mubr.bf16.mxu0 %v2389
    %3972 = vmatmul.mubr.bf16.gmra.mxu0 %v2388
    %v3973 = vpop.f32.mrf.mxu0
    %v3974 = vadd.f32 %v3933, %v3973
    %v3975 = vpop.f32.mrf.mxu0
    %v3976 = vadd.f32 %v3935, %v3975
    %v3977 = vpop.f32.mrf.mxu0
    %v3978 = vpop.f32.mrf.mxu0
    %3979 = vdwg.mxu0
    %3980 = vmatprep.subr.bf16.mxu0 %v3404
    %3981 = vmatpush1.bf16.msra.mxu0 %v3403
    %3982 = vmatprep.subr.bf16.mxu0 %v3400
    %3983 = vmatpush1.bf16.msra.mxu0 %v3399
    %3984 = vmatprep.subr.bf16.mxu0 %v3396
    %3985 = vmatpush1.bf16.msra.mxu0 %v3395
    %3986 = vmatprep.subr.bf16.mxu0 %v3392
    %3987 = vmatpush1.bf16.msra.mxu0 %v3391
    %3988 = vmatprep.subr.bf16.mxu0 %v3388
    %3989 = vmatpush1.bf16.msra.mxu0 %v3387
    %3990 = vmatprep.subr.bf16.mxu0 %v3384
    %3991 = vmatpush1.bf16.msra.mxu0 %v3383
    %3992 = vmatprep.subr.bf16.mxu0 %v3380
    %3993 = vmatpush1.bf16.msra.mxu0 %v3379
    %3994 = vmatprep.subr.bf16.mxu0 %v3376
    %3995 = vmatpush1.bf16.msra.mxu0 %v3375
    %3996 = vmatprep.subr.bf16.mxu0 %v3436
    %3997 = vmatpush2.bf16.msra.mxu0 %v3435
    %3998 = vmatprep.subr.bf16.mxu0 %v3432
    %3999 = vmatpush2.bf16.msra.mxu0 %v3431
    %4000 = vmatprep.subr.bf16.mxu0 %v3428
    %4001 = vmatpush2.bf16.msra.mxu0 %v3427
    %4002 = vmatprep.subr.bf16.mxu0 %v3424
    %4003 = vmatpush2.bf16.msra.mxu0 %v3423
    %4004 = vmatprep.subr.bf16.mxu0 %v3420
    %4005 = vmatpush2.bf16.msra.mxu0 %v3419
    %4006 = vmatprep.subr.bf16.mxu0 %v3416
    %4007 = vmatpush2.bf16.msra.mxu0 %v3415
    %4008 = vmatprep.subr.bf16.mxu0 %v3412
    %4009 = vmatpush2.bf16.msra.mxu0 %v3411
    %4010 = vmatprep.subr.bf16.mxu0 %v3408
    %4011 = vmatpush2.bf16.msra.mxu0 %v3407
    %4012 = vmatprep.mubr.bf16.mxu0 %v2391
    %4013 = vmatmul.mubr.bf16.gmra.mxu0 %v2390
    %v4014 = vpop.f32.mrf.mxu0
    %v4015 = vadd.f32 %v3974, %v4014
    %v4016 = vpop.f32.mrf.mxu0
    %v4017 = vadd.f32 %v3976, %v4016
    %v4018 = vpop.f32.mrf.mxu0
    %v4019 = vpop.f32.mrf.mxu0
    %4020 = vdwg.mxu0
    %v4021 = vmax.f32 %v3851, 0.0
    %v4022 = vmax.f32 %v3853, 0.0
    %v4023 = vmax.f32 %v4015, 0.0
    %v4024 = vmax.f32 %v4017, 0.0
    %s4025 = smul.u32 %s201, 4
    %s4026 = sshll.u32 %s4025, 4
    %4027 = dma.done %s149, %s4026
    %v4028 = vld [vmem:[#allocation4] sm:$0xff]
    %v4029 = vld [vmem:[#allocation4 + $0x8] sm:$0xff]
    %v4030 = vld [vmem:[#allocation4 + $0x10] sm:$0xff]
    %v4031 = vld [vmem:[#allocation4 + $0x18] sm:$0xff]
    %v4032 = vld [vmem:[#allocation4 + $0x20] sm:$0xff]
    %v4033 = vld [vmem:[#allocation4 + $0x28] sm:$0xff]
    %v4034 = vld [vmem:[#allocation4 + $0x30] sm:$0xff]
    %v4035 = vld [vmem:[#allocation4 + $0x38] sm:$0xff]
    %v4036 = vld [vmem:[#allocation4 + $0x40] sm:$0xff]
    %v4037 = vld [vmem:[#allocation4 + $0x48] sm:$0xff]
    %v4038 = vld [vmem:[#allocation4 + $0x50] sm:$0xff]
    %v4039 = vld [vmem:[#allocation4 + $0x58] sm:$0xff]
    %v4040 = vld [vmem:[#allocation4 + $0x60] sm:$0xff]
    %v4041 = vld [vmem:[#allocation4 + $0x68] sm:$0xff]
    %v4042 = vld [vmem:[#allocation4 + $0x70] sm:$0xff]
    %v4043 = vld [vmem:[#allocation4 + $0x78] sm:$0xff]
    %v4044 = vld [vmem:[#allocation4 + $0x80] sm:$0xff]
    %v4045 = vld [vmem:[#allocation4 + $0x88] sm:$0xff]
    %v4046 = vld [vmem:[#allocation4 + $0x90] sm:$0xff]
    %v4047 = vld [vmem:[#allocation4 + $0x98] sm:$0xff]
    %v4048 = vld [vmem:[#allocation4 + $0xa0] sm:$0xff]
    %v4049 = vld [vmem:[#allocation4 + $0xa8] sm:$0xff]
    %v4050 = vld [vmem:[#allocation4 + $0xb0] sm:$0xff]
    %v4051 = vld [vmem:[#allocation4 + $0xb8] sm:$0xff]
    %v4052 = vld [vmem:[#allocation4 + $0xc0] sm:$0xff]
    %v4053 = vld [vmem:[#allocation4 + $0xc8] sm:$0xff]
    %v4054 = vld [vmem:[#allocation4 + $0xd0] sm:$0xff]
    %v4055 = vld [vmem:[#allocation4 + $0xd8] sm:$0xff]
    %v4056 = vld [vmem:[#allocation4 + $0xe0] sm:$0xff]
    %v4057 = vld [vmem:[#allocation4 + $0xe8] sm:$0xff]
    %v4058 = vld [vmem:[#allocation4 + $0xf0] sm:$0xff]
    %v4059 = vld [vmem:[#allocation4 + $0xf8] sm:$0xff]
    %v4060 = vld [vmem:[#allocation4 + $0x100] sm:$0xff]
    %v4061 = vld [vmem:[#allocation4 + $0x108] sm:$0xff]
    %v4062 = vld [vmem:[#allocation4 + $0x110] sm:$0xff]
    %v4063 = vld [vmem:[#allocation4 + $0x118] sm:$0xff]
    %v4064 = vld [vmem:[#allocation4 + $0x120] sm:$0xff]
    %v4065 = vld [vmem:[#allocation4 + $0x128] sm:$0xff]
    %v4066 = vld [vmem:[#allocation4 + $0x130] sm:$0xff]
    %v4067 = vld [vmem:[#allocation4 + $0x138] sm:$0xff]
    %v4068 = vld [vmem:[#allocation4 + $0x140] sm:$0xff]
    %v4069 = vld [vmem:[#allocation4 + $0x148] sm:$0xff]
    %v4070 = vld [vmem:[#allocation4 + $0x150] sm:$0xff]
    %v4071 = vld [vmem:[#allocation4 + $0x158] sm:$0xff]
    %v4072 = vld [vmem:[#allocation4 + $0x160] sm:$0xff]
    %v4073 = vld [vmem:[#allocation4 + $0x168] sm:$0xff]
    %v4074 = vld [vmem:[#allocation4 + $0x170] sm:$0xff]
    %v4075 = vld [vmem:[#allocation4 + $0x178] sm:$0xff]
    %v4076 = vld [vmem:[#allocation4 + $0x180] sm:$0xff]
    %v4077 = vld [vmem:[#allocation4 + $0x188] sm:$0xff]
    %v4078 = vld [vmem:[#allocation4 + $0x190] sm:$0xff]
    %v4079 = vld [vmem:[#allocation4 + $0x198] sm:$0xff]
    %v4080 = vld [vmem:[#allocation4 + $0x1a0] sm:$0xff]
    %v4081 = vld [vmem:[#allocation4 + $0x1a8] sm:$0xff]
    %v4082 = vld [vmem:[#allocation4 + $0x1b0] sm:$0xff]
    %v4083 = vld [vmem:[#allocation4 + $0x1b8] sm:$0xff]
    %v4084 = vld [vmem:[#allocation4 + $0x1c0] sm:$0xff]
    %v4085 = vld [vmem:[#allocation4 + $0x1c8] sm:$0xff]
    %v4086 = vld [vmem:[#allocation4 + $0x1d0] sm:$0xff]
    %v4087 = vld [vmem:[#allocation4 + $0x1d8] sm:$0xff]
    %v4088 = vld [vmem:[#allocation4 + $0x1e0] sm:$0xff]
    %v4089 = vld [vmem:[#allocation4 + $0x1e8] sm:$0xff]
    %v4090 = vld [vmem:[#allocation4 + $0x1f0] sm:$0xff]
    %v4091 = vld [vmem:[#allocation4 + $0x1f8] sm:$0xff]
    %v4092 = vld [vmem:[#allocation4 + $0x200] sm:$0xff]
    %v4093 = vld [vmem:[#allocation4 + $0x208] sm:$0xff]
    %v4094 = vld [vmem:[#allocation4 + $0x210] sm:$0xff]
    %v4095 = vld [vmem:[#allocation4 + $0x218] sm:$0xff]
    %v4096 = vld [vmem:[#allocation4 + $0x220] sm:$0xff]
    %v4097 = vld [vmem:[#allocation4 + $0x228] sm:$0xff]
    %v4098 = vld [vmem:[#allocation4 + $0x230] sm:$0xff]
    %v4099 = vld [vmem:[#allocation4 + $0x238] sm:$0xff]
    %v4100 = vld [vmem:[#allocation4 + $0x240] sm:$0xff]
    %v4101 = vld [vmem:[#allocation4 + $0x248] sm:$0xff]
    %v4102 = vld [vmem:[#allocation4 + $0x250] sm:$0xff]
    %v4103 = vld [vmem:[#allocation4 + $0x258] sm:$0xff]
    %v4104 = vld [vmem:[#allocation4 + $0x260] sm:$0xff]
    %v4105 = vld [vmem:[#allocation4 + $0x268] sm:$0xff]
    %v4106 = vld [vmem:[#allocation4 + $0x270] sm:$0xff]
    %v4107 = vld [vmem:[#allocation4 + $0x278] sm:$0xff]
    %v4108 = vld [vmem:[#allocation4 + $0x280] sm:$0xff]
    %v4109 = vld [vmem:[#allocation4 + $0x288] sm:$0xff]
    %v4110 = vld [vmem:[#allocation4 + $0x290] sm:$0xff]
    %v4111 = vld [vmem:[#allocation4 + $0x298] sm:$0xff]
    %v4112 = vld [vmem:[#allocation4 + $0x2a0] sm:$0xff]
    %v4113 = vld [vmem:[#allocation4 + $0x2a8] sm:$0xff]
    %v4114 = vld [vmem:[#allocation4 + $0x2b0] sm:$0xff]
    %v4115 = vld [vmem:[#allocation4 + $0x2b8] sm:$0xff]
    %v4116 = vld [vmem:[#allocation4 + $0x2c0] sm:$0xff]
    %v4117 = vld [vmem:[#allocation4 + $0x2c8] sm:$0xff]
    %v4118 = vld [vmem:[#allocation4 + $0x2d0] sm:$0xff]
    %v4119 = vld [vmem:[#allocation4 + $0x2d8] sm:$0xff]
    %v4120 = vld [vmem:[#allocation4 + $0x2e0] sm:$0xff]
    %v4121 = vld [vmem:[#allocation4 + $0x2e8] sm:$0xff]
    %v4122 = vld [vmem:[#allocation4 + $0x2f0] sm:$0xff]
    %v4123 = vld [vmem:[#allocation4 + $0x2f8] sm:$0xff]
    %v4124 = vld [vmem:[#allocation4 + $0x300] sm:$0xff]
    %v4125 = vld [vmem:[#allocation4 + $0x308] sm:$0xff]
    %v4126 = vld [vmem:[#allocation4 + $0x310] sm:$0xff]
    %v4127 = vld [vmem:[#allocation4 + $0x318] sm:$0xff]
    %v4128 = vld [vmem:[#allocation4 + $0x320] sm:$0xff]
    %v4129 = vld [vmem:[#allocation4 + $0x328] sm:$0xff]
    %v4130 = vld [vmem:[#allocation4 + $0x330] sm:$0xff]
    %v4131 = vld [vmem:[#allocation4 + $0x338] sm:$0xff]
    %v4132 = vld [vmem:[#allocation4 + $0x340] sm:$0xff]
    %v4133 = vld [vmem:[#allocation4 + $0x348] sm:$0xff]
    %v4134 = vld [vmem:[#allocation4 + $0x350] sm:$0xff]
    %v4135 = vld [vmem:[#allocation4 + $0x358] sm:$0xff]
    %v4136 = vld [vmem:[#allocation4 + $0x360] sm:$0xff]
    %v4137 = vld [vmem:[#allocation4 + $0x368] sm:$0xff]
    %v4138 = vld [vmem:[#allocation4 + $0x370] sm:$0xff]
    %v4139 = vld [vmem:[#allocation4 + $0x378] sm:$0xff]
    %v4140 = vld [vmem:[#allocation4 + $0x380] sm:$0xff]
    %v4141 = vld [vmem:[#allocation4 + $0x388] sm:$0xff]
    %v4142 = vld [vmem:[#allocation4 + $0x390] sm:$0xff]
    %v4143 = vld [vmem:[#allocation4 + $0x398] sm:$0xff]
    %v4144 = vld [vmem:[#allocation4 + $0x3a0] sm:$0xff]
    %v4145 = vld [vmem:[#allocation4 + $0x3a8] sm:$0xff]
    %v4146 = vld [vmem:[#allocation4 + $0x3b0] sm:$0xff]
    %v4147 = vld [vmem:[#allocation4 + $0x3b8] sm:$0xff]
    %v4148 = vld [vmem:[#allocation4 + $0x3c0] sm:$0xff]
    %v4149 = vld [vmem:[#allocation4 + $0x3c8] sm:$0xff]
    %v4150 = vld [vmem:[#allocation4 + $0x3d0] sm:$0xff]
    %v4151 = vld [vmem:[#allocation4 + $0x3d8] sm:$0xff]
    %v4152 = vld [vmem:[#allocation4 + $0x3e0] sm:$0xff]
    %v4153 = vld [vmem:[#allocation4 + $0x3e8] sm:$0xff]
    %v4154 = vld [vmem:[#allocation4 + $0x3f0] sm:$0xff]
    %v4155 = vld [vmem:[#allocation4 + $0x3f8] sm:$0xff]
    %v4156 = vld [vmem:[#allocation14 + $0xc] sm:$0xf]
    %v4157 = vpack.c.bf16 %v4021, %v4021
    %v4158 = vpack.c.bf16 %v4022, %v4022
    %v4159 = vpack.c.bf16 %v4023, %v4023
    %v4160 = vpack.c.bf16 %v4024, %v4024
    %v4162 = vlaneseq
    %v4163 = vshrl.u32 %v4162, 7
    %v4164 = vsub.s32 0, %v4163
    %v4165 = vrot.slane %v4156, %v4164
    %v4166 = vlaneseq
    %v4167 = vshrl.u32 %v4166, 7
    %v4168 = vsub.s32 1, %v4167
    %v4169 = vrot.slane %v4156, %v4168
    %v4170 = vlaneseq
    %v4171 = vshrl.u32 %v4170, 7
    %v4172 = vsub.s32 2, %v4171
    %v4173 = vrot.slane %v4156, %v4172
    %v4174 = vlaneseq
    %v4175 = vshrl.u32 %v4174, 7
    %v4176 = vsub.s32 3, %v4175
    %v4177 = vrot.slane %v4156, %v4176
    %v4310 = vunpack.c.l.b16 %v4028
    %v4311 = vunpack.c.h.b16 %v4028
    %v4312 = vunpack.c.l.b16 %v4029
    %v4313 = vunpack.c.h.b16 %v4029
    %v4314 = vunpack.c.l.b16 %v4030
    %v4315 = vunpack.c.h.b16 %v4030
    %v4316 = vunpack.c.l.b16 %v4031
    %v4317 = vunpack.c.h.b16 %v4031
    %v4318 = vunpack.c.l.b16 %v4032
    %v4319 = vunpack.c.h.b16 %v4032
    %v4320 = vunpack.c.l.b16 %v4033
    %v4321 = vunpack.c.h.b16 %v4033
    %v4322 = vunpack.c.l.b16 %v4034
    %v4323 = vunpack.c.h.b16 %v4034
    %v4324 = vunpack.c.l.b16 %v4035
    %v4325 = vunpack.c.h.b16 %v4035
    %v4326 = vunpack.c.l.b16 %v4036
    %v4327 = vunpack.c.h.b16 %v4036
    %v4328 = vunpack.c.l.b16 %v4037
    %v4329 = vunpack.c.h.b16 %v4037
    %v4330 = vunpack.c.l.b16 %v4038
    %v4331 = vunpack.c.h.b16 %v4038
    %v4332 = vunpack.c.l.b16 %v4039
    %v4333 = vunpack.c.h.b16 %v4039
    %v4334 = vunpack.c.l.b16 %v4040
    %v4335 = vunpack.c.h.b16 %v4040
    %v4336 = vunpack.c.l.b16 %v4041
    %v4337 = vunpack.c.h.b16 %v4041
    %v4338 = vunpack.c.l.b16 %v4042
    %v4339 = vunpack.c.h.b16 %v4042
    %v4340 = vunpack.c.l.b16 %v4043
    %v4341 = vunpack.c.h.b16 %v4043
    %v4342 = vunpack.c.l.b16 %v4044
    %v4343 = vunpack.c.h.b16 %v4044
    %v4344 = vunpack.c.l.b16 %v4045
    %v4345 = vunpack.c.h.b16 %v4045
    %v4346 = vunpack.c.l.b16 %v4046
    %v4347 = vunpack.c.h.b16 %v4046
    %v4348 = vunpack.c.l.b16 %v4047
    %v4349 = vunpack.c.h.b16 %v4047
    %v4350 = vunpack.c.l.b16 %v4048
    %v4351 = vunpack.c.h.b16 %v4048
    %v4352 = vunpack.c.l.b16 %v4049
    %v4353 = vunpack.c.h.b16 %v4049
    %v4354 = vunpack.c.l.b16 %v4050
    %v4355 = vunpack.c.h.b16 %v4050
    %v4356 = vunpack.c.l.b16 %v4051
    %v4357 = vunpack.c.h.b16 %v4051
    %v4358 = vunpack.c.l.b16 %v4052
    %v4359 = vunpack.c.h.b16 %v4052
    %v4360 = vunpack.c.l.b16 %v4053
    %v4361 = vunpack.c.h.b16 %v4053
    %v4362 = vunpack.c.l.b16 %v4054
    %v4363 = vunpack.c.h.b16 %v4054
    %v4364 = vunpack.c.l.b16 %v4055
    %v4365 = vunpack.c.h.b16 %v4055
    %v4366 = vunpack.c.l.b16 %v4056
    %v4367 = vunpack.c.h.b16 %v4056
    %v4368 = vunpack.c.l.b16 %v4057
    %v4369 = vunpack.c.h.b16 %v4057
    %v4370 = vunpack.c.l.b16 %v4058
    %v4371 = vunpack.c.h.b16 %v4058
    %v4372 = vunpack.c.l.b16 %v4059
    %v4373 = vunpack.c.h.b16 %v4059
    %v4374 = vunpack.c.l.b16 %v4060
    %v4375 = vunpack.c.h.b16 %v4060
    %v4376 = vunpack.c.l.b16 %v4061
    %v4377 = vunpack.c.h.b16 %v4061
    %v4378 = vunpack.c.l.b16 %v4062
    %v4379 = vunpack.c.h.b16 %v4062
    %v4380 = vunpack.c.l.b16 %v4063
    %v4381 = vunpack.c.h.b16 %v4063
    %v4382 = vunpack.c.l.b16 %v4064
    %v4383 = vunpack.c.h.b16 %v4064
    %v4384 = vunpack.c.l.b16 %v4065
    %v4385 = vunpack.c.h.b16 %v4065
    %v4386 = vunpack.c.l.b16 %v4066
    %v4387 = vunpack.c.h.b16 %v4066
    %v4388 = vunpack.c.l.b16 %v4067
    %v4389 = vunpack.c.h.b16 %v4067
    %v4390 = vunpack.c.l.b16 %v4068
    %v4391 = vunpack.c.h.b16 %v4068
    %v4392 = vunpack.c.l.b16 %v4069
    %v4393 = vunpack.c.h.b16 %v4069
    %v4394 = vunpack.c.l.b16 %v4070
    %v4395 = vunpack.c.h.b16 %v4070
    %v4396 = vunpack.c.l.b16 %v4071
    %v4397 = vunpack.c.h.b16 %v4071
    %v4398 = vunpack.c.l.b16 %v4072
    %v4399 = vunpack.c.h.b16 %v4072
    %v4400 = vunpack.c.l.b16 %v4073
    %v4401 = vunpack.c.h.b16 %v4073
    %v4402 = vunpack.c.l.b16 %v4074
    %v4403 = vunpack.c.h.b16 %v4074
    %v4404 = vunpack.c.l.b16 %v4075
    %v4405 = vunpack.c.h.b16 %v4075
    %v4406 = vunpack.c.l.b16 %v4076
    %v4407 = vunpack.c.h.b16 %v4076
    %v4408 = vunpack.c.l.b16 %v4077
    %v4409 = vunpack.c.h.b16 %v4077
    %v4410 = vunpack.c.l.b16 %v4078
    %v4411 = vunpack.c.h.b16 %v4078
    %v4412 = vunpack.c.l.b16 %v4079
    %v4413 = vunpack.c.h.b16 %v4079
    %v4414 = vunpack.c.l.b16 %v4080
    %v4415 = vunpack.c.h.b16 %v4080
    %v4416 = vunpack.c.l.b16 %v4081
    %v4417 = vunpack.c.h.b16 %v4081
    %v4418 = vunpack.c.l.b16 %v4082
    %v4419 = vunpack.c.h.b16 %v4082
    %v4420 = vunpack.c.l.b16 %v4083
    %v4421 = vunpack.c.h.b16 %v4083
    %v4422 = vunpack.c.l.b16 %v4084
    %v4423 = vunpack.c.h.b16 %v4084
    %v4424 = vunpack.c.l.b16 %v4085
    %v4425 = vunpack.c.h.b16 %v4085
    %v4426 = vunpack.c.l.b16 %v4086
    %v4427 = vunpack.c.h.b16 %v4086
    %v4428 = vunpack.c.l.b16 %v4087
    %v4429 = vunpack.c.h.b16 %v4087
    %v4430 = vunpack.c.l.b16 %v4088
    %v4431 = vunpack.c.h.b16 %v4088
    %v4432 = vunpack.c.l.b16 %v4089
    %v4433 = vunpack.c.h.b16 %v4089
    %v4434 = vunpack.c.l.b16 %v4090
    %v4435 = vunpack.c.h.b16 %v4090
    %v4436 = vunpack.c.l.b16 %v4091
    %v4437 = vunpack.c.h.b16 %v4091
    %v4438 = vunpack.c.l.b16 %v4092
    %v4439 = vunpack.c.h.b16 %v4092
    %v4440 = vunpack.c.l.b16 %v4093
    %v4441 = vunpack.c.h.b16 %v4093
    %v4442 = vunpack.c.l.b16 %v4094
    %v4443 = vunpack.c.h.b16 %v4094
    %v4444 = vunpack.c.l.b16 %v4095
    %v4445 = vunpack.c.h.b16 %v4095
    %v4446 = vunpack.c.l.b16 %v4096
    %v4447 = vunpack.c.h.b16 %v4096
    %v4448 = vunpack.c.l.b16 %v4097
    %v4449 = vunpack.c.h.b16 %v4097
    %v4450 = vunpack.c.l.b16 %v4098
    %v4451 = vunpack.c.h.b16 %v4098
    %v4452 = vunpack.c.l.b16 %v4099
    %v4453 = vunpack.c.h.b16 %v4099
    %v4454 = vunpack.c.l.b16 %v4100
    %v4455 = vunpack.c.h.b16 %v4100
    %v4456 = vunpack.c.l.b16 %v4101
    %v4457 = vunpack.c.h.b16 %v4101
    %v4458 = vunpack.c.l.b16 %v4102
    %v4459 = vunpack.c.h.b16 %v4102
    %v4460 = vunpack.c.l.b16 %v4103
    %v4461 = vunpack.c.h.b16 %v4103
    %v4462 = vunpack.c.l.b16 %v4104
    %v4463 = vunpack.c.h.b16 %v4104
    %v4464 = vunpack.c.l.b16 %v4105
    %v4465 = vunpack.c.h.b16 %v4105
    %v4466 = vunpack.c.l.b16 %v4106
    %v4467 = vunpack.c.h.b16 %v4106
    %v4468 = vunpack.c.l.b16 %v4107
    %v4469 = vunpack.c.h.b16 %v4107
    %v4470 = vunpack.c.l.b16 %v4108
    %v4471 = vunpack.c.h.b16 %v4108
    %v4472 = vunpack.c.l.b16 %v4109
    %v4473 = vunpack.c.h.b16 %v4109
    %v4474 = vunpack.c.l.b16 %v4110
    %v4475 = vunpack.c.h.b16 %v4110
    %v4476 = vunpack.c.l.b16 %v4111
    %v4477 = vunpack.c.h.b16 %v4111
    %v4478 = vunpack.c.l.b16 %v4112
    %v4479 = vunpack.c.h.b16 %v4112
    %v4480 = vunpack.c.l.b16 %v4113
    %v4481 = vunpack.c.h.b16 %v4113
    %v4482 = vunpack.c.l.b16 %v4114
    %v4483 = vunpack.c.h.b16 %v4114
    %v4484 = vunpack.c.l.b16 %v4115
    %v4485 = vunpack.c.h.b16 %v4115
    %v4486 = vunpack.c.l.b16 %v4116
    %v4487 = vunpack.c.h.b16 %v4116
    %v4488 = vunpack.c.l.b16 %v4117
    %v4489 = vunpack.c.h.b16 %v4117
    %v4490 = vunpack.c.l.b16 %v4118
    %v4491 = vunpack.c.h.b16 %v4118
    %v4492 = vunpack.c.l.b16 %v4119
    %v4493 = vunpack.c.h.b16 %v4119
    %v4494 = vunpack.c.l.b16 %v4120
    %v4495 = vunpack.c.h.b16 %v4120
    %v4496 = vunpack.c.l.b16 %v4121
    %v4497 = vunpack.c.h.b16 %v4121
    %v4498 = vunpack.c.l.b16 %v4122
    %v4499 = vunpack.c.h.b16 %v4122
    %v4500 = vunpack.c.l.b16 %v4123
    %v4501 = vunpack.c.h.b16 %v4123
    %v4502 = vunpack.c.l.b16 %v4124
    %v4503 = vunpack.c.h.b16 %v4124
    %v4504 = vunpack.c.l.b16 %v4125
    %v4505 = vunpack.c.h.b16 %v4125
    %v4506 = vunpack.c.l.b16 %v4126
    %v4507 = vunpack.c.h.b16 %v4126
    %v4508 = vunpack.c.l.b16 %v4127
    %v4509 = vunpack.c.h.b16 %v4127
    %v4510 = vunpack.c.l.b16 %v4128
    %v4511 = vunpack.c.h.b16 %v4128
    %v4512 = vunpack.c.l.b16 %v4129
    %v4513 = vunpack.c.h.b16 %v4129
    %v4514 = vunpack.c.l.b16 %v4130
    %v4515 = vunpack.c.h.b16 %v4130
    %v4516 = vunpack.c.l.b16 %v4131
    %v4517 = vunpack.c.h.b16 %v4131
    %v4518 = vunpack.c.l.b16 %v4132
    %v4519 = vunpack.c.h.b16 %v4132
    %v4520 = vunpack.c.l.b16 %v4133
    %v4521 = vunpack.c.h.b16 %v4133
    %v4522 = vunpack.c.l.b16 %v4134
    %v4523 = vunpack.c.h.b16 %v4134
    %v4524 = vunpack.c.l.b16 %v4135
    %v4525 = vunpack.c.h.b16 %v4135
    %v4526 = vunpack.c.l.b16 %v4136
    %v4527 = vunpack.c.h.b16 %v4136
    %v4528 = vunpack.c.l.b16 %v4137
    %v4529 = vunpack.c.h.b16 %v4137
    %v4530 = vunpack.c.l.b16 %v4138
    %v4531 = vunpack.c.h.b16 %v4138
    %v4532 = vunpack.c.l.b16 %v4139
    %v4533 = vunpack.c.h.b16 %v4139
    %v4534 = vunpack.c.l.b16 %v4140
    %v4535 = vunpack.c.h.b16 %v4140
    %v4536 = vunpack.c.l.b16 %v4141
    %v4537 = vunpack.c.h.b16 %v4141
    %v4538 = vunpack.c.l.b16 %v4142
    %v4539 = vunpack.c.h.b16 %v4142
    %v4540 = vunpack.c.l.b16 %v4143
    %v4541 = vunpack.c.h.b16 %v4143
    %v4542 = vunpack.c.l.b16 %v4144
    %v4543 = vunpack.c.h.b16 %v4144
    %v4544 = vunpack.c.l.b16 %v4145
    %v4545 = vunpack.c.h.b16 %v4145
    %v4546 = vunpack.c.l.b16 %v4146
    %v4547 = vunpack.c.h.b16 %v4146
    %v4548 = vunpack.c.l.b16 %v4147
    %v4549 = vunpack.c.h.b16 %v4147
    %v4550 = vunpack.c.l.b16 %v4148
    %v4551 = vunpack.c.h.b16 %v4148
    %v4552 = vunpack.c.l.b16 %v4149
    %v4553 = vunpack.c.h.b16 %v4149
    %v4554 = vunpack.c.l.b16 %v4150
    %v4555 = vunpack.c.h.b16 %v4150
    %v4556 = vunpack.c.l.b16 %v4151
    %v4557 = vunpack.c.h.b16 %v4151
    %v4558 = vunpack.c.l.b16 %v4152
    %v4559 = vunpack.c.h.b16 %v4152
    %v4560 = vunpack.c.l.b16 %v4153
    %v4561 = vunpack.c.h.b16 %v4153
    %v4562 = vunpack.c.l.b16 %v4154
    %v4563 = vunpack.c.h.b16 %v4154
    %v4564 = vunpack.c.l.b16 %v4155
    %v4565 = vunpack.c.h.b16 %v4155
    %v4566 = vpack.c.b16 %v4314, %v4310
    %v4567 = vpack.c.b16 %v4315, %v4311
    %v4568 = vpack.c.b16 %v4316, %v4312
    %v4569 = vpack.c.b16 %v4317, %v4313
    %v4570 = vpack.c.b16 %v4322, %v4318
    %v4571 = vpack.c.b16 %v4323, %v4319
    %v4572 = vpack.c.b16 %v4324, %v4320
    %v4573 = vpack.c.b16 %v4325, %v4321
    %v4574 = vpack.c.b16 %v4330, %v4326
    %v4575 = vpack.c.b16 %v4331, %v4327
    %v4576 = vpack.c.b16 %v4332, %v4328
    %v4577 = vpack.c.b16 %v4333, %v4329
    %v4578 = vpack.c.b16 %v4338, %v4334
    %v4579 = vpack.c.b16 %v4339, %v4335
    %v4580 = vpack.c.b16 %v4340, %v4336
    %v4581 = vpack.c.b16 %v4341, %v4337
    %v4582 = vpack.c.b16 %v4346, %v4342
    %v4583 = vpack.c.b16 %v4347, %v4343
    %v4584 = vpack.c.b16 %v4348, %v4344
    %v4585 = vpack.c.b16 %v4349, %v4345
    %v4586 = vpack.c.b16 %v4354, %v4350
    %v4587 = vpack.c.b16 %v4355, %v4351
    %v4588 = vpack.c.b16 %v4356, %v4352
    %v4589 = vpack.c.b16 %v4357, %v4353
    %v4590 = vpack.c.b16 %v4362, %v4358
    %v4591 = vpack.c.b16 %v4363, %v4359
    %v4592 = vpack.c.b16 %v4364, %v4360
    %v4593 = vpack.c.b16 %v4365, %v4361
    %v4594 = vpack.c.b16 %v4370, %v4366
    %v4595 = vpack.c.b16 %v4371, %v4367
    %v4596 = vpack.c.b16 %v4372, %v4368
    %v4597 = vpack.c.b16 %v4373, %v4369
    %v4598 = vpack.c.b16 %v4378, %v4374
    %v4599 = vpack.c.b16 %v4379, %v4375
    %v4600 = vpack.c.b16 %v4380, %v4376
    %v4601 = vpack.c.b16 %v4381, %v4377
    %v4602 = vpack.c.b16 %v4386, %v4382
    %v4603 = vpack.c.b16 %v4387, %v4383
    %v4604 = vpack.c.b16 %v4388, %v4384
    %v4605 = vpack.c.b16 %v4389, %v4385
    %v4606 = vpack.c.b16 %v4394, %v4390
    %v4607 = vpack.c.b16 %v4395, %v4391
    %v4608 = vpack.c.b16 %v4396, %v4392
    %v4609 = vpack.c.b16 %v4397, %v4393
    %v4610 = vpack.c.b16 %v4402, %v4398
    %v4611 = vpack.c.b16 %v4403, %v4399
    %v4612 = vpack.c.b16 %v4404, %v4400
    %v4613 = vpack.c.b16 %v4405, %v4401
    %v4614 = vpack.c.b16 %v4410, %v4406
    %v4615 = vpack.c.b16 %v4411, %v4407
    %v4616 = vpack.c.b16 %v4412, %v4408
    %v4617 = vpack.c.b16 %v4413, %v4409
    %v4618 = vpack.c.b16 %v4418, %v4414
    %v4619 = vpack.c.b16 %v4419, %v4415
    %v4620 = vpack.c.b16 %v4420, %v4416
    %v4621 = vpack.c.b16 %v4421, %v4417
    %v4622 = vpack.c.b16 %v4426, %v4422
    %v4623 = vpack.c.b16 %v4427, %v4423
    %v4624 = vpack.c.b16 %v4428, %v4424
    %v4625 = vpack.c.b16 %v4429, %v4425
    %v4626 = vpack.c.b16 %v4434, %v4430
    %v4627 = vpack.c.b16 %v4435, %v4431
    %v4628 = vpack.c.b16 %v4436, %v4432
    %v4629 = vpack.c.b16 %v4437, %v4433
    %v4630 = vpack.c.b16 %v4442, %v4438
    %v4631 = vpack.c.b16 %v4443, %v4439
    %v4632 = vpack.c.b16 %v4444, %v4440
    %v4633 = vpack.c.b16 %v4445, %v4441
    %v4634 = vpack.c.b16 %v4450, %v4446
    %v4635 = vpack.c.b16 %v4451, %v4447
    %v4636 = vpack.c.b16 %v4452, %v4448
    %v4637 = vpack.c.b16 %v4453, %v4449
    %v4638 = vpack.c.b16 %v4458, %v4454
    %v4639 = vpack.c.b16 %v4459, %v4455
    %v4640 = vpack.c.b16 %v4460, %v4456
    %v4641 = vpack.c.b16 %v4461, %v4457
    %v4642 = vpack.c.b16 %v4466, %v4462
    %v4643 = vpack.c.b16 %v4467, %v4463
    %v4644 = vpack.c.b16 %v4468, %v4464
    %v4645 = vpack.c.b16 %v4469, %v4465
    %v4646 = vpack.c.b16 %v4474, %v4470
    %v4647 = vpack.c.b16 %v4475, %v4471
    %v4648 = vpack.c.b16 %v4476, %v4472
    %v4649 = vpack.c.b16 %v4477, %v4473
    %v4650 = vpack.c.b16 %v4482, %v4478
    %v4651 = vpack.c.b16 %v4483, %v4479
    %v4652 = vpack.c.b16 %v4484, %v4480
    %v4653 = vpack.c.b16 %v4485, %v4481
    %v4654 = vpack.c.b16 %v4490, %v4486
    %v4655 = vpack.c.b16 %v4491, %v4487
    %v4656 = vpack.c.b16 %v4492, %v4488
    %v4657 = vpack.c.b16 %v4493, %v4489
    %v4658 = vpack.c.b16 %v4498, %v4494
    %v4659 = vpack.c.b16 %v4499, %v4495
    %v4660 = vpack.c.b16 %v4500, %v4496
    %v4661 = vpack.c.b16 %v4501, %v4497
    %v4662 = vpack.c.b16 %v4506, %v4502
    %v4663 = vpack.c.b16 %v4507, %v4503
    %v4664 = vpack.c.b16 %v4508, %v4504
    %v4665 = vpack.c.b16 %v4509, %v4505
    %v4666 = vpack.c.b16 %v4514, %v4510
    %v4667 = vpack.c.b16 %v4515, %v4511
    %v4668 = vpack.c.b16 %v4516, %v4512
    %v4669 = vpack.c.b16 %v4517, %v4513
    %v4670 = vpack.c.b16 %v4522, %v4518
    %v4671 = vpack.c.b16 %v4523, %v4519
    %v4672 = vpack.c.b16 %v4524, %v4520
    %v4673 = vpack.c.b16 %v4525, %v4521
    %v4674 = vpack.c.b16 %v4530, %v4526
    %v4675 = vpack.c.b16 %v4531, %v4527
    %v4676 = vpack.c.b16 %v4532, %v4528
    %v4677 = vpack.c.b16 %v4533, %v4529
    %v4678 = vpack.c.b16 %v4538, %v4534
    %v4679 = vpack.c.b16 %v4539, %v4535
    %v4680 = vpack.c.b16 %v4540, %v4536
    %v4681 = vpack.c.b16 %v4541, %v4537
    %v4682 = vpack.c.b16 %v4546, %v4542
    %v4683 = vpack.c.b16 %v4547, %v4543
    %v4684 = vpack.c.b16 %v4548, %v4544
    %v4685 = vpack.c.b16 %v4549, %v4545
    %v4686 = vpack.c.b16 %v4554, %v4550
    %v4687 = vpack.c.b16 %v4555, %v4551
    %v4688 = vpack.c.b16 %v4556, %v4552
    %v4689 = vpack.c.b16 %v4557, %v4553
    %v4690 = vpack.c.b16 %v4562, %v4558
    %v4691 = vpack.c.b16 %v4563, %v4559
    %v4692 = vpack.c.b16 %v4564, %v4560
    %v4693 = vpack.c.b16 %v4565, %v4561
    %4822 = vmatprep.subr.bf16.mxu0 %v4595
    %4823 = vmatpush1.bf16.msra.mxu0 %v4594
    %4824 = vmatprep.subr.bf16.mxu0 %v4591
    %4825 = vmatpush1.bf16.msra.mxu0 %v4590
    %4826 = vmatprep.subr.bf16.mxu0 %v4587
    %4827 = vmatpush1.bf16.msra.mxu0 %v4586
    %4828 = vmatprep.subr.bf16.mxu0 %v4583
    %4829 = vmatpush1.bf16.msra.mxu0 %v4582
    %4830 = vmatprep.subr.bf16.mxu0 %v4579
    %4831 = vmatpush1.bf16.msra.mxu0 %v4578
    %4832 = vmatprep.subr.bf16.mxu0 %v4575
    %4833 = vmatpush1.bf16.msra.mxu0 %v4574
    %4834 = vmatprep.subr.bf16.mxu0 %v4571
    %4835 = vmatpush1.bf16.msra.mxu0 %v4570
    %4836 = vmatprep.subr.bf16.mxu0 %v4567
    %4837 = vmatpush1.bf16.msra.mxu0 %v4566
    %4838 = vmatprep.subr.bf16.mxu0 %v4627
    %4839 = vmatpush2.bf16.msra.mxu0 %v4626
    %4840 = vmatprep.subr.bf16.mxu0 %v4623
    %4841 = vmatpush2.bf16.msra.mxu0 %v4622
    %4842 = vmatprep.subr.bf16.mxu0 %v4619
    %4843 = vmatpush2.bf16.msra.mxu0 %v4618
    %4844 = vmatprep.subr.bf16.mxu0 %v4615
    %4845 = vmatpush2.bf16.msra.mxu0 %v4614
    %4846 = vmatprep.subr.bf16.mxu0 %v4611
    %4847 = vmatpush2.bf16.msra.mxu0 %v4610
    %4848 = vmatprep.subr.bf16.mxu0 %v4607
    %4849 = vmatpush2.bf16.msra.mxu0 %v4606
    %4850 = vmatprep.subr.bf16.mxu0 %v4603
    %4851 = vmatpush2.bf16.msra.mxu0 %v4602
    %4852 = vmatprep.subr.bf16.mxu0 %v4599
    %4853 = vmatpush2.bf16.msra.mxu0 %v4598
    %4854 = vmatprep.mubr.bf16.mxu0 %v4158
    %4855 = vmatmul.mubr.bf16.gmra.mxu0 %v4157
    %v4856 = vpop.f32.mrf.mxu0
    %v4857 = vadd.f32 %v4165, %v4856
    %v4858 = vpop.f32.mrf.mxu0
    %v4859 = vadd.f32 %v4169, %v4858
    %v4860 = vpop.f32.mrf.mxu0
    %v4861 = vpop.f32.mrf.mxu0
    %4862 = vdwg.mxu0
    %4863 = vmatprep.subr.bf16.mxu0 %v4659
    %4864 = vmatpush1.bf16.msra.mxu0 %v4658
    %4865 = vmatprep.subr.bf16.mxu0 %v4655
    %4866 = vmatpush1.bf16.msra.mxu0 %v4654
    %4867 = vmatprep.subr.bf16.mxu0 %v4651
    %4868 = vmatpush1.bf16.msra.mxu0 %v4650
    %4869 = vmatprep.subr.bf16.mxu0 %v4647
    %4870 = vmatpush1.bf16.msra.mxu0 %v4646
    %4871 = vmatprep.subr.bf16.mxu0 %v4643
    %4872 = vmatpush1.bf16.msra.mxu0 %v4642
    %4873 = vmatprep.subr.bf16.mxu0 %v4639
    %4874 = vmatpush1.bf16.msra.mxu0 %v4638
    %4875 = vmatprep.subr.bf16.mxu0 %v4635
    %4876 = vmatpush1.bf16.msra.mxu0 %v4634
    %4877 = vmatprep.subr.bf16.mxu0 %v4631
    %4878 = vmatpush1.bf16.msra.mxu0 %v4630
    %4879 = vmatprep.subr.bf16.mxu0 %v4691
    %4880 = vmatpush2.bf16.msra.mxu0 %v4690
    %4881 = vmatprep.subr.bf16.mxu0 %v4687
    %4882 = vmatpush2.bf16.msra.mxu0 %v4686
    %4883 = vmatprep.subr.bf16.mxu0 %v4683
    %4884 = vmatpush2.bf16.msra.mxu0 %v4682
    %4885 = vmatprep.subr.bf16.mxu0 %v4679
    %4886 = vmatpush2.bf16.msra.mxu0 %v4678
    %4887 = vmatprep.subr.bf16.mxu0 %v4675
    %4888 = vmatpush2.bf16.msra.mxu0 %v4674
    %4889 = vmatprep.subr.bf16.mxu0 %v4671
    %4890 = vmatpush2.bf16.msra.mxu0 %v4670
    %4891 = vmatprep.subr.bf16.mxu0 %v4667
    %4892 = vmatpush2.bf16.msra.mxu0 %v4666
    %4893 = vmatprep.subr.bf16.mxu0 %v4663
    %4894 = vmatpush2.bf16.msra.mxu0 %v4662
    %4895 = vmatprep.mubr.bf16.mxu0 %v4160
    %4896 = vmatmul.mubr.bf16.gmra.mxu0 %v4159
    %v4897 = vpop.f32.mrf.mxu0
    %v4898 = vadd.f32 %v4857, %v4897
    %v4899 = vpop.f32.mrf.mxu0
    %v4900 = vadd.f32 %v4859, %v4899
    %v4901 = vpop.f32.mrf.mxu0
    %v4902 = vpop.f32.mrf.mxu0
    %4903 = vdwg.mxu0
    %4904 = vmatprep.subr.bf16.mxu0 %v4597
    %4905 = vmatpush1.bf16.msra.mxu0 %v4596
    %4906 = vmatprep.subr.bf16.mxu0 %v4593
    %4907 = vmatpush1.bf16.msra.mxu0 %v4592
    %4908 = vmatprep.subr.bf16.mxu0 %v4589
    %4909 = vmatpush1.bf16.msra.mxu0 %v4588
    %4910 = vmatprep.subr.bf16.mxu0 %v4585
    %4911 = vmatpush1.bf16.msra.mxu0 %v4584
    %4912 = vmatprep.subr.bf16.mxu0 %v4581
    %4913 = vmatpush1.bf16.msra.mxu0 %v4580
    %4914 = vmatprep.subr.bf16.mxu0 %v4577
    %4915 = vmatpush1.bf16.msra.mxu0 %v4576
    %4916 = vmatprep.subr.bf16.mxu0 %v4573
    %4917 = vmatpush1.bf16.msra.mxu0 %v4572
    %4918 = vmatprep.subr.bf16.mxu0 %v4569
    %4919 = vmatpush1.bf16.msra.mxu0 %v4568
    %4920 = vmatprep.subr.bf16.mxu0 %v4629
    %4921 = vmatpush2.bf16.msra.mxu0 %v4628
    %4922 = vmatprep.subr.bf16.mxu0 %v4625
    %4923 = vmatpush2.bf16.msra.mxu0 %v4624
    %4924 = vmatprep.subr.bf16.mxu0 %v4621
    %4925 = vmatpush2.bf16.msra.mxu0 %v4620
    %4926 = vmatprep.subr.bf16.mxu0 %v4617
    %4927 = vmatpush2.bf16.msra.mxu0 %v4616
    %4928 = vmatprep.subr.bf16.mxu0 %v4613
    %4929 = vmatpush2.bf16.msra.mxu0 %v4612
    %4930 = vmatprep.subr.bf16.mxu0 %v4609
    %4931 = vmatpush2.bf16.msra.mxu0 %v4608
    %4932 = vmatprep.subr.bf16.mxu0 %v4605
    %4933 = vmatpush2.bf16.msra.mxu0 %v4604
    %4934 = vmatprep.subr.bf16.mxu0 %v4601
    %4935 = vmatpush2.bf16.msra.mxu0 %v4600
    %4936 = vmatprep.mubr.bf16.mxu0 %v4158
    %4937 = vmatmul.mubr.bf16.gmra.mxu0 %v4157
    %v4938 = vpop.f32.mrf.mxu0
    %v4939 = vadd.f32 %v4173, %v4938
    %v4940 = vpop.f32.mrf.mxu0
    %v4941 = vadd.f32 %v4177, %v4940
    %v4942 = vpop.f32.mrf.mxu0
    %v4943 = vpop.f32.mrf.mxu0
    %4944 = vdwg.mxu0
    %4945 = vmatprep.subr.bf16.mxu0 %v4661
    %4946 = vmatpush1.bf16.msra.mxu0 %v4660
    %4947 = vmatprep.subr.bf16.mxu0 %v4657
    %4948 = vmatpush1.bf16.msra.mxu0 %v4656
    %4949 = vmatprep.subr.bf16.mxu0 %v4653
    %4950 = vmatpush1.bf16.msra.mxu0 %v4652
    %4951 = vmatprep.subr.bf16.mxu0 %v4649
    %4952 = vmatpush1.bf16.msra.mxu0 %v4648
    %4953 = vmatprep.subr.bf16.mxu0 %v4645
    %4954 = vmatpush1.bf16.msra.mxu0 %v4644
    %4955 = vmatprep.subr.bf16.mxu0 %v4641
    %4956 = vmatpush1.bf16.msra.mxu0 %v4640
    %4957 = vmatprep.subr.bf16.mxu0 %v4637
    %4958 = vmatpush1.bf16.msra.mxu0 %v4636
    %4959 = vmatprep.subr.bf16.mxu0 %v4633
    %4960 = vmatpush1.bf16.msra.mxu0 %v4632
    %4961 = vmatprep.subr.bf16.mxu0 %v4693
    %4962 = vmatpush2.bf16.msra.mxu0 %v4692
    %4963 = vmatprep.subr.bf16.mxu0 %v4689
    %4964 = vmatpush2.bf16.msra.mxu0 %v4688
    %4965 = vmatprep.subr.bf16.mxu0 %v4685
    %4966 = vmatpush2.bf16.msra.mxu0 %v4684
    %4967 = vmatprep.subr.bf16.mxu0 %v4681
    %4968 = vmatpush2.bf16.msra.mxu0 %v4680
    %4969 = vmatprep.subr.bf16.mxu0 %v4677
    %4970 = vmatpush2.bf16.msra.mxu0 %v4676
    %4971 = vmatprep.subr.bf16.mxu0 %v4673
    %4972 = vmatpush2.bf16.msra.mxu0 %v4672
    %4973 = vmatprep.subr.bf16.mxu0 %v4669
    %4974 = vmatpush2.bf16.msra.mxu0 %v4668
    %4975 = vmatprep.subr.bf16.mxu0 %v4665
    %4976 = vmatpush2.bf16.msra.mxu0 %v4664
    %4977 = vmatprep.mubr.bf16.mxu0 %v4160
    %4978 = vmatmul.mubr.bf16.gmra.mxu0 %v4159
    %v4979 = vpop.f32.mrf.mxu0
    %v4980 = vadd.f32 %v4939, %v4979
    %v4981 = vpop.f32.mrf.mxu0
    %v4982 = vadd.f32 %v4941, %v4981
    %v4983 = vpop.f32.mrf.mxu0
    %v4984 = vpop.f32.mrf.mxu0
    %4985 = vdwg.mxu0
    %v4986 = vld [vmem:[#allocation12] sm:$0xff]
    %v4987 = vld [vmem:[#allocation12 + $0x8] sm:$0xff]
    %v4988 = vld [vmem:[#allocation12 + $0x10] sm:$0xff]
    %v4989 = vld [vmem:[#allocation12 + $0x18] sm:$0xff]
    %v4990 = vld [vmem:[#allocation12 + $0x20] sm:$0xff]
    %v4991 = vld [vmem:[#allocation12 + $0x28] sm:$0xff]
    %s4992 = smul.u32 4, 96
    %s4993 = smul.u32 %s4992, 8
    %s4994 = sshll.u32 %s4993, 4
    %4995 = dma.done %s161, %s4994
    %v4996 = vld [vmem:[#allocation5] sm:$0xff]
    %v4997 = vld [vmem:[#allocation5 + $0x8] sm:$0xff]
    %v4998 = vld [vmem:[#allocation5 + $0x10] sm:$0xff]
    %v4999 = vld [vmem:[#allocation5 + $0x18] sm:$0xff]
    %v5000 = vld [vmem:[#allocation5 + $0x20] sm:$0xff]
    %v5001 = vld [vmem:[#allocation5 + $0x28] sm:$0xff]
    %v5002 = vld [vmem:[#allocation5 + $0x30] sm:$0xff]
    %v5003 = vld [vmem:[#allocation5 + $0x38] sm:$0xff]
    %v5004 = vld [vmem:[#allocation5 + $0x40] sm:$0xff]
    %v5005 = vld [vmem:[#allocation5 + $0x48] sm:$0xff]
    %v5006 = vld [vmem:[#allocation5 + $0x50] sm:$0xff]
    %v5007 = vld [vmem:[#allocation5 + $0x58] sm:$0xff]
    %v5008 = vld [vmem:[#allocation5 + $0x60] sm:$0xff]
    %v5009 = vld [vmem:[#allocation5 + $0x68] sm:$0xff]
    %v5010 = vld [vmem:[#allocation5 + $0x70] sm:$0xff]
    %v5011 = vld [vmem:[#allocation5 + $0x78] sm:$0xff]
    %v5012 = vld [vmem:[#allocation5 + $0x80] sm:$0xff]
    %v5013 = vld [vmem:[#allocation5 + $0x88] sm:$0xff]
    %v5014 = vld [vmem:[#allocation5 + $0x90] sm:$0xff]
    %v5015 = vld [vmem:[#allocation5 + $0x98] sm:$0xff]
    %v5016 = vld [vmem:[#allocation5 + $0xa0] sm:$0xff]
    %v5017 = vld [vmem:[#allocation5 + $0xa8] sm:$0xff]
    %v5018 = vld [vmem:[#allocation5 + $0xb0] sm:$0xff]
    %v5019 = vld [vmem:[#allocation5 + $0xb8] sm:$0xff]
    %v5020 = vld [vmem:[#allocation5 + $0xc0] sm:$0xff]
    %v5021 = vld [vmem:[#allocation5 + $0xc8] sm:$0xff]
    %v5022 = vld [vmem:[#allocation5 + $0xd0] sm:$0xff]
    %v5023 = vld [vmem:[#allocation5 + $0xd8] sm:$0xff]
    %v5024 = vld [vmem:[#allocation5 + $0xe0] sm:$0xff]
    %v5025 = vld [vmem:[#allocation5 + $0xe8] sm:$0xff]
    %v5026 = vld [vmem:[#allocation5 + $0xf0] sm:$0xff]
    %v5027 = vld [vmem:[#allocation5 + $0xf8] sm:$0xff]
    %v5028 = vld [vmem:[#allocation5 + $0x100] sm:$0xff]
    %v5029 = vld [vmem:[#allocation5 + $0x108] sm:$0xff]
    %v5030 = vld [vmem:[#allocation5 + $0x110] sm:$0xff]
    %v5031 = vld [vmem:[#allocation5 + $0x118] sm:$0xff]
    %v5032 = vld [vmem:[#allocation5 + $0x120] sm:$0xff]
    %v5033 = vld [vmem:[#allocation5 + $0x128] sm:$0xff]
    %v5034 = vld [vmem:[#allocation5 + $0x130] sm:$0xff]
    %v5035 = vld [vmem:[#allocation5 + $0x138] sm:$0xff]
    %v5036 = vld [vmem:[#allocation5 + $0x140] sm:$0xff]
    %v5037 = vld [vmem:[#allocation5 + $0x148] sm:$0xff]
    %v5038 = vld [vmem:[#allocation5 + $0x150] sm:$0xff]
    %v5039 = vld [vmem:[#allocation5 + $0x158] sm:$0xff]
    %v5040 = vld [vmem:[#allocation5 + $0x160] sm:$0xff]
    %v5041 = vld [vmem:[#allocation5 + $0x168] sm:$0xff]
    %v5042 = vld [vmem:[#allocation5 + $0x170] sm:$0xff]
    %v5043 = vld [vmem:[#allocation5 + $0x178] sm:$0xff]
    %v5044 = vld [vmem:[#allocation5 + $0x180] sm:$0xff]
    %v5045 = vld [vmem:[#allocation5 + $0x188] sm:$0xff]
    %v5046 = vld [vmem:[#allocation5 + $0x190] sm:$0xff]
    %v5047 = vld [vmem:[#allocation5 + $0x198] sm:$0xff]
    %v5048 = vld [vmem:[#allocation5 + $0x1a0] sm:$0xff]
    %v5049 = vld [vmem:[#allocation5 + $0x1a8] sm:$0xff]
    %v5050 = vld [vmem:[#allocation5 + $0x1b0] sm:$0xff]
    %v5051 = vld [vmem:[#allocation5 + $0x1b8] sm:$0xff]
    %v5052 = vld [vmem:[#allocation5 + $0x1c0] sm:$0xff]
    %v5053 = vld [vmem:[#allocation5 + $0x1c8] sm:$0xff]
    %v5054 = vld [vmem:[#allocation5 + $0x1d0] sm:$0xff]
    %v5055 = vld [vmem:[#allocation5 + $0x1d8] sm:$0xff]
    %v5056 = vld [vmem:[#allocation5 + $0x1e0] sm:$0xff]
    %v5057 = vld [vmem:[#allocation5 + $0x1e8] sm:$0xff]
    %v5058 = vld [vmem:[#allocation5 + $0x1f0] sm:$0xff]
    %v5059 = vld [vmem:[#allocation5 + $0x1f8] sm:$0xff]
    %v5060 = vld [vmem:[#allocation5 + $0x200] sm:$0xff]
    %v5061 = vld [vmem:[#allocation5 + $0x208] sm:$0xff]
    %v5062 = vld [vmem:[#allocation5 + $0x210] sm:$0xff]
    %v5063 = vld [vmem:[#allocation5 + $0x218] sm:$0xff]
    %v5064 = vld [vmem:[#allocation5 + $0x220] sm:$0xff]
    %v5065 = vld [vmem:[#allocation5 + $0x228] sm:$0xff]
    %v5066 = vld [vmem:[#allocation5 + $0x230] sm:$0xff]
    %v5067 = vld [vmem:[#allocation5 + $0x238] sm:$0xff]
    %v5068 = vld [vmem:[#allocation5 + $0x240] sm:$0xff]
    %v5069 = vld [vmem:[#allocation5 + $0x248] sm:$0xff]
    %v5070 = vld [vmem:[#allocation5 + $0x250] sm:$0xff]
    %v5071 = vld [vmem:[#allocation5 + $0x258] sm:$0xff]
    %v5072 = vld [vmem:[#allocation5 + $0x260] sm:$0xff]
    %v5073 = vld [vmem:[#allocation5 + $0x268] sm:$0xff]
    %v5074 = vld [vmem:[#allocation5 + $0x270] sm:$0xff]
    %v5075 = vld [vmem:[#allocation5 + $0x278] sm:$0xff]
    %v5076 = vld [vmem:[#allocation5 + $0x280] sm:$0xff]
    %v5077 = vld [vmem:[#allocation5 + $0x288] sm:$0xff]
    %v5078 = vld [vmem:[#allocation5 + $0x290] sm:$0xff]
    %v5079 = vld [vmem:[#allocation5 + $0x298] sm:$0xff]
    %v5080 = vld [vmem:[#allocation5 + $0x2a0] sm:$0xff]
    %v5081 = vld [vmem:[#allocation5 + $0x2a8] sm:$0xff]
    %v5082 = vld [vmem:[#allocation5 + $0x2b0] sm:$0xff]
    %v5083 = vld [vmem:[#allocation5 + $0x2b8] sm:$0xff]
    %v5084 = vld [vmem:[#allocation5 + $0x2c0] sm:$0xff]
    %v5085 = vld [vmem:[#allocation5 + $0x2c8] sm:$0xff]
    %v5086 = vld [vmem:[#allocation5 + $0x2d0] sm:$0xff]
    %v5087 = vld [vmem:[#allocation5 + $0x2d8] sm:$0xff]
    %v5088 = vld [vmem:[#allocation5 + $0x2e0] sm:$0xff]
    %v5089 = vld [vmem:[#allocation5 + $0x2e8] sm:$0xff]
    %v5090 = vld [vmem:[#allocation5 + $0x2f0] sm:$0xff]
    %v5091 = vld [vmem:[#allocation5 + $0x2f8] sm:$0xff]
    %v5092 = vld [vmem:[#allocation5 + $0x300] sm:$0xff]
    %v5093 = vld [vmem:[#allocation5 + $0x308] sm:$0xff]
    %v5094 = vld [vmem:[#allocation5 + $0x310] sm:$0xff]
    %v5095 = vld [vmem:[#allocation5 + $0x318] sm:$0xff]
    %v5096 = vld [vmem:[#allocation5 + $0x320] sm:$0xff]
    %v5097 = vld [vmem:[#allocation5 + $0x328] sm:$0xff]
    %v5098 = vld [vmem:[#allocation5 + $0x330] sm:$0xff]
    %v5099 = vld [vmem:[#allocation5 + $0x338] sm:$0xff]
    %v5100 = vld [vmem:[#allocation5 + $0x340] sm:$0xff]
    %v5101 = vld [vmem:[#allocation5 + $0x348] sm:$0xff]
    %v5102 = vld [vmem:[#allocation5 + $0x350] sm:$0xff]
    %v5103 = vld [vmem:[#allocation5 + $0x358] sm:$0xff]
    %v5104 = vld [vmem:[#allocation5 + $0x360] sm:$0xff]
    %v5105 = vld [vmem:[#allocation5 + $0x368] sm:$0xff]
    %v5106 = vld [vmem:[#allocation5 + $0x370] sm:$0xff]
    %v5107 = vld [vmem:[#allocation5 + $0x378] sm:$0xff]
    %v5108 = vld [vmem:[#allocation5 + $0x380] sm:$0xff]
    %v5109 = vld [vmem:[#allocation5 + $0x388] sm:$0xff]
    %v5110 = vld [vmem:[#allocation5 + $0x390] sm:$0xff]
    %v5111 = vld [vmem:[#allocation5 + $0x398] sm:$0xff]
    %v5112 = vld [vmem:[#allocation5 + $0x3a0] sm:$0xff]
    %v5113 = vld [vmem:[#allocation5 + $0x3a8] sm:$0xff]
    %v5114 = vld [vmem:[#allocation5 + $0x3b0] sm:$0xff]
    %v5115 = vld [vmem:[#allocation5 + $0x3b8] sm:$0xff]
    %v5116 = vld [vmem:[#allocation5 + $0x3c0] sm:$0xff]
    %v5117 = vld [vmem:[#allocation5 + $0x3c8] sm:$0xff]
    %v5118 = vld [vmem:[#allocation5 + $0x3d0] sm:$0xff]
    %v5119 = vld [vmem:[#allocation5 + $0x3d8] sm:$0xff]
    %v5120 = vld [vmem:[#allocation5 + $0x3e0] sm:$0xff]
    %v5121 = vld [vmem:[#allocation5 + $0x3e8] sm:$0xff]
    %v5122 = vld [vmem:[#allocation5 + $0x3f0] sm:$0xff]
    %v5123 = vld [vmem:[#allocation5 + $0x3f8] sm:$0xff]
    %v5124 = vld [vmem:[#allocation5 + $0x400] sm:$0xff]
    %v5125 = vld [vmem:[#allocation5 + $0x408] sm:$0xff]
    %v5126 = vld [vmem:[#allocation5 + $0x410] sm:$0xff]
    %v5127 = vld [vmem:[#allocation5 + $0x418] sm:$0xff]
    %v5128 = vld [vmem:[#allocation5 + $0x420] sm:$0xff]
    %v5129 = vld [vmem:[#allocation5 + $0x428] sm:$0xff]
    %v5130 = vld [vmem:[#allocation5 + $0x430] sm:$0xff]
    %v5131 = vld [vmem:[#allocation5 + $0x438] sm:$0xff]
    %v5132 = vld [vmem:[#allocation5 + $0x440] sm:$0xff]
    %v5133 = vld [vmem:[#allocation5 + $0x448] sm:$0xff]
    %v5134 = vld [vmem:[#allocation5 + $0x450] sm:$0xff]
    %v5135 = vld [vmem:[#allocation5 + $0x458] sm:$0xff]
    %v5136 = vld [vmem:[#allocation5 + $0x460] sm:$0xff]
    %v5137 = vld [vmem:[#allocation5 + $0x468] sm:$0xff]
    %v5138 = vld [vmem:[#allocation5 + $0x470] sm:$0xff]
    %v5139 = vld [vmem:[#allocation5 + $0x478] sm:$0xff]
    %v5140 = vld [vmem:[#allocation5 + $0x480] sm:$0xff]
    %v5141 = vld [vmem:[#allocation5 + $0x488] sm:$0xff]
    %v5142 = vld [vmem:[#allocation5 + $0x490] sm:$0xff]
    %v5143 = vld [vmem:[#allocation5 + $0x498] sm:$0xff]
    %v5144 = vld [vmem:[#allocation5 + $0x4a0] sm:$0xff]
    %v5145 = vld [vmem:[#allocation5 + $0x4a8] sm:$0xff]
    %v5146 = vld [vmem:[#allocation5 + $0x4b0] sm:$0xff]
    %v5147 = vld [vmem:[#allocation5 + $0x4b8] sm:$0xff]
    %v5148 = vld [vmem:[#allocation5 + $0x4c0] sm:$0xff]
    %v5149 = vld [vmem:[#allocation5 + $0x4c8] sm:$0xff]
    %v5150 = vld [vmem:[#allocation5 + $0x4d0] sm:$0xff]
    %v5151 = vld [vmem:[#allocation5 + $0x4d8] sm:$0xff]
    %v5152 = vld [vmem:[#allocation5 + $0x4e0] sm:$0xff]
    %v5153 = vld [vmem:[#allocation5 + $0x4e8] sm:$0xff]
    %v5154 = vld [vmem:[#allocation5 + $0x4f0] sm:$0xff]
    %v5155 = vld [vmem:[#allocation5 + $0x4f8] sm:$0xff]
    %v5156 = vld [vmem:[#allocation5 + $0x500] sm:$0xff]
    %v5157 = vld [vmem:[#allocation5 + $0x508] sm:$0xff]
    %v5158 = vld [vmem:[#allocation5 + $0x510] sm:$0xff]
    %v5159 = vld [vmem:[#allocation5 + $0x518] sm:$0xff]
    %v5160 = vld [vmem:[#allocation5 + $0x520] sm:$0xff]
    %v5161 = vld [vmem:[#allocation5 + $0x528] sm:$0xff]
    %v5162 = vld [vmem:[#allocation5 + $0x530] sm:$0xff]
    %v5163 = vld [vmem:[#allocation5 + $0x538] sm:$0xff]
    %v5164 = vld [vmem:[#allocation5 + $0x540] sm:$0xff]
    %v5165 = vld [vmem:[#allocation5 + $0x548] sm:$0xff]
    %v5166 = vld [vmem:[#allocation5 + $0x550] sm:$0xff]
    %v5167 = vld [vmem:[#allocation5 + $0x558] sm:$0xff]
    %v5168 = vld [vmem:[#allocation5 + $0x560] sm:$0xff]
    %v5169 = vld [vmem:[#allocation5 + $0x568] sm:$0xff]
    %v5170 = vld [vmem:[#allocation5 + $0x570] sm:$0xff]
    %v5171 = vld [vmem:[#allocation5 + $0x578] sm:$0xff]
    %v5172 = vld [vmem:[#allocation5 + $0x580] sm:$0xff]
    %v5173 = vld [vmem:[#allocation5 + $0x588] sm:$0xff]
    %v5174 = vld [vmem:[#allocation5 + $0x590] sm:$0xff]
    %v5175 = vld [vmem:[#allocation5 + $0x598] sm:$0xff]
    %v5176 = vld [vmem:[#allocation5 + $0x5a0] sm:$0xff]
    %v5177 = vld [vmem:[#allocation5 + $0x5a8] sm:$0xff]
    %v5178 = vld [vmem:[#allocation5 + $0x5b0] sm:$0xff]
    %v5179 = vld [vmem:[#allocation5 + $0x5b8] sm:$0xff]
    %v5180 = vld [vmem:[#allocation5 + $0x5c0] sm:$0xff]
    %v5181 = vld [vmem:[#allocation5 + $0x5c8] sm:$0xff]
    %v5182 = vld [vmem:[#allocation5 + $0x5d0] sm:$0xff]
    %v5183 = vld [vmem:[#allocation5 + $0x5d8] sm:$0xff]
    %v5184 = vld [vmem:[#allocation5 + $0x5e0] sm:$0xff]
    %v5185 = vld [vmem:[#allocation5 + $0x5e8] sm:$0xff]
    %v5186 = vld [vmem:[#allocation5 + $0x5f0] sm:$0xff]
    %v5187 = vld [vmem:[#allocation5 + $0x5f8] sm:$0xff]
    %v5188 = vld [vmem:[#allocation5 + $0x600] sm:$0xff]
    %v5189 = vld [vmem:[#allocation5 + $0x608] sm:$0xff]
    %v5190 = vld [vmem:[#allocation5 + $0x610] sm:$0xff]
    %v5191 = vld [vmem:[#allocation5 + $0x618] sm:$0xff]
    %v5192 = vld [vmem:[#allocation5 + $0x620] sm:$0xff]
    %v5193 = vld [vmem:[#allocation5 + $0x628] sm:$0xff]
    %v5194 = vld [vmem:[#allocation5 + $0x630] sm:$0xff]
    %v5195 = vld [vmem:[#allocation5 + $0x638] sm:$0xff]
    %v5196 = vld [vmem:[#allocation5 + $0x640] sm:$0xff]
    %v5197 = vld [vmem:[#allocation5 + $0x648] sm:$0xff]
    %v5198 = vld [vmem:[#allocation5 + $0x650] sm:$0xff]
    %v5199 = vld [vmem:[#allocation5 + $0x658] sm:$0xff]
    %v5200 = vld [vmem:[#allocation5 + $0x660] sm:$0xff]
    %v5201 = vld [vmem:[#allocation5 + $0x668] sm:$0xff]
    %v5202 = vld [vmem:[#allocation5 + $0x670] sm:$0xff]
    %v5203 = vld [vmem:[#allocation5 + $0x678] sm:$0xff]
    %v5204 = vld [vmem:[#allocation5 + $0x680] sm:$0xff]
    %v5205 = vld [vmem:[#allocation5 + $0x688] sm:$0xff]
    %v5206 = vld [vmem:[#allocation5 + $0x690] sm:$0xff]
    %v5207 = vld [vmem:[#allocation5 + $0x698] sm:$0xff]
    %v5208 = vld [vmem:[#allocation5 + $0x6a0] sm:$0xff]
    %v5209 = vld [vmem:[#allocation5 + $0x6a8] sm:$0xff]
    %v5210 = vld [vmem:[#allocation5 + $0x6b0] sm:$0xff]
    %v5211 = vld [vmem:[#allocation5 + $0x6b8] sm:$0xff]
    %v5212 = vld [vmem:[#allocation5 + $0x6c0] sm:$0xff]
    %v5213 = vld [vmem:[#allocation5 + $0x6c8] sm:$0xff]
    %v5214 = vld [vmem:[#allocation5 + $0x6d0] sm:$0xff]
    %v5215 = vld [vmem:[#allocation5 + $0x6d8] sm:$0xff]
    %v5216 = vld [vmem:[#allocation5 + $0x6e0] sm:$0xff]
    %v5217 = vld [vmem:[#allocation5 + $0x6e8] sm:$0xff]
    %v5218 = vld [vmem:[#allocation5 + $0x6f0] sm:$0xff]
    %v5219 = vld [vmem:[#allocation5 + $0x6f8] sm:$0xff]
    %v5220 = vld [vmem:[#allocation5 + $0x700] sm:$0xff]
    %v5221 = vld [vmem:[#allocation5 + $0x708] sm:$0xff]
    %v5222 = vld [vmem:[#allocation5 + $0x710] sm:$0xff]
    %v5223 = vld [vmem:[#allocation5 + $0x718] sm:$0xff]
    %v5224 = vld [vmem:[#allocation5 + $0x720] sm:$0xff]
    %v5225 = vld [vmem:[#allocation5 + $0x728] sm:$0xff]
    %v5226 = vld [vmem:[#allocation5 + $0x730] sm:$0xff]
    %v5227 = vld [vmem:[#allocation5 + $0x738] sm:$0xff]
    %v5228 = vld [vmem:[#allocation5 + $0x740] sm:$0xff]
    %v5229 = vld [vmem:[#allocation5 + $0x748] sm:$0xff]
    %v5230 = vld [vmem:[#allocation5 + $0x750] sm:$0xff]
    %v5231 = vld [vmem:[#allocation5 + $0x758] sm:$0xff]
    %v5232 = vld [vmem:[#allocation5 + $0x760] sm:$0xff]
    %v5233 = vld [vmem:[#allocation5 + $0x768] sm:$0xff]
    %v5234 = vld [vmem:[#allocation5 + $0x770] sm:$0xff]
    %v5235 = vld [vmem:[#allocation5 + $0x778] sm:$0xff]
    %v5236 = vld [vmem:[#allocation5 + $0x780] sm:$0xff]
    %v5237 = vld [vmem:[#allocation5 + $0x788] sm:$0xff]
    %v5238 = vld [vmem:[#allocation5 + $0x790] sm:$0xff]
    %v5239 = vld [vmem:[#allocation5 + $0x798] sm:$0xff]
    %v5240 = vld [vmem:[#allocation5 + $0x7a0] sm:$0xff]
    %v5241 = vld [vmem:[#allocation5 + $0x7a8] sm:$0xff]
    %v5242 = vld [vmem:[#allocation5 + $0x7b0] sm:$0xff]
    %v5243 = vld [vmem:[#allocation5 + $0x7b8] sm:$0xff]
    %v5244 = vld [vmem:[#allocation5 + $0x7c0] sm:$0xff]
    %v5245 = vld [vmem:[#allocation5 + $0x7c8] sm:$0xff]
    %v5246 = vld [vmem:[#allocation5 + $0x7d0] sm:$0xff]
    %v5247 = vld [vmem:[#allocation5 + $0x7d8] sm:$0xff]
    %v5248 = vld [vmem:[#allocation5 + $0x7e0] sm:$0xff]
    %v5249 = vld [vmem:[#allocation5 + $0x7e8] sm:$0xff]
    %v5250 = vld [vmem:[#allocation5 + $0x7f0] sm:$0xff]
    %v5251 = vld [vmem:[#allocation5 + $0x7f8] sm:$0xff]
    %v5252 = vld [vmem:[#allocation5 + $0x800] sm:$0xff]
    %v5253 = vld [vmem:[#allocation5 + $0x808] sm:$0xff]
    %v5254 = vld [vmem:[#allocation5 + $0x810] sm:$0xff]
    %v5255 = vld [vmem:[#allocation5 + $0x818] sm:$0xff]
    %v5256 = vld [vmem:[#allocation5 + $0x820] sm:$0xff]
    %v5257 = vld [vmem:[#allocation5 + $0x828] sm:$0xff]
    %v5258 = vld [vmem:[#allocation5 + $0x830] sm:$0xff]
    %v5259 = vld [vmem:[#allocation5 + $0x838] sm:$0xff]
    %v5260 = vld [vmem:[#allocation5 + $0x840] sm:$0xff]
    %v5261 = vld [vmem:[#allocation5 + $0x848] sm:$0xff]
    %v5262 = vld [vmem:[#allocation5 + $0x850] sm:$0xff]
    %v5263 = vld [vmem:[#allocation5 + $0x858] sm:$0xff]
    %v5264 = vld [vmem:[#allocation5 + $0x860] sm:$0xff]
    %v5265 = vld [vmem:[#allocation5 + $0x868] sm:$0xff]
    %v5266 = vld [vmem:[#allocation5 + $0x870] sm:$0xff]
    %v5267 = vld [vmem:[#allocation5 + $0x878] sm:$0xff]
    %v5268 = vld [vmem:[#allocation5 + $0x880] sm:$0xff]
    %v5269 = vld [vmem:[#allocation5 + $0x888] sm:$0xff]
    %v5270 = vld [vmem:[#allocation5 + $0x890] sm:$0xff]
    %v5271 = vld [vmem:[#allocation5 + $0x898] sm:$0xff]
    %v5272 = vld [vmem:[#allocation5 + $0x8a0] sm:$0xff]
    %v5273 = vld [vmem:[#allocation5 + $0x8a8] sm:$0xff]
    %v5274 = vld [vmem:[#allocation5 + $0x8b0] sm:$0xff]
    %v5275 = vld [vmem:[#allocation5 + $0x8b8] sm:$0xff]
    %v5276 = vld [vmem:[#allocation5 + $0x8c0] sm:$0xff]
    %v5277 = vld [vmem:[#allocation5 + $0x8c8] sm:$0xff]
    %v5278 = vld [vmem:[#allocation5 + $0x8d0] sm:$0xff]
    %v5279 = vld [vmem:[#allocation5 + $0x8d8] sm:$0xff]
    %v5280 = vld [vmem:[#allocation5 + $0x8e0] sm:$0xff]
    %v5281 = vld [vmem:[#allocation5 + $0x8e8] sm:$0xff]
    %v5282 = vld [vmem:[#allocation5 + $0x8f0] sm:$0xff]
    %v5283 = vld [vmem:[#allocation5 + $0x8f8] sm:$0xff]
    %v5284 = vld [vmem:[#allocation5 + $0x900] sm:$0xff]
    %v5285 = vld [vmem:[#allocation5 + $0x908] sm:$0xff]
    %v5286 = vld [vmem:[#allocation5 + $0x910] sm:$0xff]
    %v5287 = vld [vmem:[#allocation5 + $0x918] sm:$0xff]
    %v5288 = vld [vmem:[#allocation5 + $0x920] sm:$0xff]
    %v5289 = vld [vmem:[#allocation5 + $0x928] sm:$0xff]
    %v5290 = vld [vmem:[#allocation5 + $0x930] sm:$0xff]
    %v5291 = vld [vmem:[#allocation5 + $0x938] sm:$0xff]
    %v5292 = vld [vmem:[#allocation5 + $0x940] sm:$0xff]
    %v5293 = vld [vmem:[#allocation5 + $0x948] sm:$0xff]
    %v5294 = vld [vmem:[#allocation5 + $0x950] sm:$0xff]
    %v5295 = vld [vmem:[#allocation5 + $0x958] sm:$0xff]
    %v5296 = vld [vmem:[#allocation5 + $0x960] sm:$0xff]
    %v5297 = vld [vmem:[#allocation5 + $0x968] sm:$0xff]
    %v5298 = vld [vmem:[#allocation5 + $0x970] sm:$0xff]
    %v5299 = vld [vmem:[#allocation5 + $0x978] sm:$0xff]
    %v5300 = vld [vmem:[#allocation5 + $0x980] sm:$0xff]
    %v5301 = vld [vmem:[#allocation5 + $0x988] sm:$0xff]
    %v5302 = vld [vmem:[#allocation5 + $0x990] sm:$0xff]
    %v5303 = vld [vmem:[#allocation5 + $0x998] sm:$0xff]
    %v5304 = vld [vmem:[#allocation5 + $0x9a0] sm:$0xff]
    %v5305 = vld [vmem:[#allocation5 + $0x9a8] sm:$0xff]
    %v5306 = vld [vmem:[#allocation5 + $0x9b0] sm:$0xff]
    %v5307 = vld [vmem:[#allocation5 + $0x9b8] sm:$0xff]
    %v5308 = vld [vmem:[#allocation5 + $0x9c0] sm:$0xff]
    %v5309 = vld [vmem:[#allocation5 + $0x9c8] sm:$0xff]
    %v5310 = vld [vmem:[#allocation5 + $0x9d0] sm:$0xff]
    %v5311 = vld [vmem:[#allocation5 + $0x9d8] sm:$0xff]
    %v5312 = vld [vmem:[#allocation5 + $0x9e0] sm:$0xff]
    %v5313 = vld [vmem:[#allocation5 + $0x9e8] sm:$0xff]
    %v5314 = vld [vmem:[#allocation5 + $0x9f0] sm:$0xff]
    %v5315 = vld [vmem:[#allocation5 + $0x9f8] sm:$0xff]
    %v5316 = vld [vmem:[#allocation5 + $0xa00] sm:$0xff]
    %v5317 = vld [vmem:[#allocation5 + $0xa08] sm:$0xff]
    %v5318 = vld [vmem:[#allocation5 + $0xa10] sm:$0xff]
    %v5319 = vld [vmem:[#allocation5 + $0xa18] sm:$0xff]
    %v5320 = vld [vmem:[#allocation5 + $0xa20] sm:$0xff]
    %v5321 = vld [vmem:[#allocation5 + $0xa28] sm:$0xff]
    %v5322 = vld [vmem:[#allocation5 + $0xa30] sm:$0xff]
    %v5323 = vld [vmem:[#allocation5 + $0xa38] sm:$0xff]
    %v5324 = vld [vmem:[#allocation5 + $0xa40] sm:$0xff]
    %v5325 = vld [vmem:[#allocation5 + $0xa48] sm:$0xff]
    %v5326 = vld [vmem:[#allocation5 + $0xa50] sm:$0xff]
    %v5327 = vld [vmem:[#allocation5 + $0xa58] sm:$0xff]
    %v5328 = vld [vmem:[#allocation5 + $0xa60] sm:$0xff]
    %v5329 = vld [vmem:[#allocation5 + $0xa68] sm:$0xff]
    %v5330 = vld [vmem:[#allocation5 + $0xa70] sm:$0xff]
    %v5331 = vld [vmem:[#allocation5 + $0xa78] sm:$0xff]
    %v5332 = vld [vmem:[#allocation5 + $0xa80] sm:$0xff]
    %v5333 = vld [vmem:[#allocation5 + $0xa88] sm:$0xff]
    %v5334 = vld [vmem:[#allocation5 + $0xa90] sm:$0xff]
    %v5335 = vld [vmem:[#allocation5 + $0xa98] sm:$0xff]
    %v5336 = vld [vmem:[#allocation5 + $0xaa0] sm:$0xff]
    %v5337 = vld [vmem:[#allocation5 + $0xaa8] sm:$0xff]
    %v5338 = vld [vmem:[#allocation5 + $0xab0] sm:$0xff]
    %v5339 = vld [vmem:[#allocation5 + $0xab8] sm:$0xff]
    %v5340 = vld [vmem:[#allocation5 + $0xac0] sm:$0xff]
    %v5341 = vld [vmem:[#allocation5 + $0xac8] sm:$0xff]
    %v5342 = vld [vmem:[#allocation5 + $0xad0] sm:$0xff]
    %v5343 = vld [vmem:[#allocation5 + $0xad8] sm:$0xff]
    %v5344 = vld [vmem:[#allocation5 + $0xae0] sm:$0xff]
    %v5345 = vld [vmem:[#allocation5 + $0xae8] sm:$0xff]
    %v5346 = vld [vmem:[#allocation5 + $0xaf0] sm:$0xff]
    %v5347 = vld [vmem:[#allocation5 + $0xaf8] sm:$0xff]
    %v5348 = vld [vmem:[#allocation5 + $0xb00] sm:$0xff]
    %v5349 = vld [vmem:[#allocation5 + $0xb08] sm:$0xff]
    %v5350 = vld [vmem:[#allocation5 + $0xb10] sm:$0xff]
    %v5351 = vld [vmem:[#allocation5 + $0xb18] sm:$0xff]
    %v5352 = vld [vmem:[#allocation5 + $0xb20] sm:$0xff]
    %v5353 = vld [vmem:[#allocation5 + $0xb28] sm:$0xff]
    %v5354 = vld [vmem:[#allocation5 + $0xb30] sm:$0xff]
    %v5355 = vld [vmem:[#allocation5 + $0xb38] sm:$0xff]
    %v5356 = vld [vmem:[#allocation5 + $0xb40] sm:$0xff]
    %v5357 = vld [vmem:[#allocation5 + $0xb48] sm:$0xff]
    %v5358 = vld [vmem:[#allocation5 + $0xb50] sm:$0xff]
    %v5359 = vld [vmem:[#allocation5 + $0xb58] sm:$0xff]
    %v5360 = vld [vmem:[#allocation5 + $0xb60] sm:$0xff]
    %v5361 = vld [vmem:[#allocation5 + $0xb68] sm:$0xff]
    %v5362 = vld [vmem:[#allocation5 + $0xb70] sm:$0xff]
    %v5363 = vld [vmem:[#allocation5 + $0xb78] sm:$0xff]
    %v5364 = vld [vmem:[#allocation5 + $0xb80] sm:$0xff]
    %v5365 = vld [vmem:[#allocation5 + $0xb88] sm:$0xff]
    %v5366 = vld [vmem:[#allocation5 + $0xb90] sm:$0xff]
    %v5367 = vld [vmem:[#allocation5 + $0xb98] sm:$0xff]
    %v5368 = vld [vmem:[#allocation5 + $0xba0] sm:$0xff]
    %v5369 = vld [vmem:[#allocation5 + $0xba8] sm:$0xff]
    %v5370 = vld [vmem:[#allocation5 + $0xbb0] sm:$0xff]
    %v5371 = vld [vmem:[#allocation5 + $0xbb8] sm:$0xff]
    %v5372 = vld [vmem:[#allocation5 + $0xbc0] sm:$0xff]
    %v5373 = vld [vmem:[#allocation5 + $0xbc8] sm:$0xff]
    %v5374 = vld [vmem:[#allocation5 + $0xbd0] sm:$0xff]
    %v5375 = vld [vmem:[#allocation5 + $0xbd8] sm:$0xff]
    %v5376 = vld [vmem:[#allocation5 + $0xbe0] sm:$0xff]
    %v5377 = vld [vmem:[#allocation5 + $0xbe8] sm:$0xff]
    %v5378 = vld [vmem:[#allocation5 + $0xbf0] sm:$0xff]
    %v5379 = vld [vmem:[#allocation5 + $0xbf8] sm:$0xff]
    %v5380 = vld [vmem:[#allocation14 + $0x10] sm:$0xff]
    %v5381 = vpack.c.bf16 %v4986, %v4986
    %v5382 = vpack.c.bf16 %v4987, %v4987
    %v5383 = vpack.c.bf16 %v4988, %v4988
    %v5384 = vpack.c.bf16 %v4989, %v4989
    %v5385 = vpack.c.bf16 %v4990, %v4990
    %v5386 = vpack.c.bf16 %v4991, %v4991
    %v5388 = vlaneseq
    %v5389 = vshrl.u32 %v5388, 7
    %v5390 = vsub.s32 0, %v5389
    %v5391 = vrot.slane %v5380, %v5390
    %v5392 = vlaneseq
    %v5393 = vshrl.u32 %v5392, 7
    %v5394 = vsub.s32 1, %v5393
    %v5395 = vrot.slane %v5380, %v5394
    %v5396 = vlaneseq
    %v5397 = vshrl.u32 %v5396, 7
    %v5398 = vsub.s32 2, %v5397
    %v5399 = vrot.slane %v5380, %v5398
    %v5400 = vlaneseq
    %v5401 = vshrl.u32 %v5400, 7
    %v5402 = vsub.s32 3, %v5401
    %v5403 = vrot.slane %v5380, %v5402
    %v5404 = vlaneseq
    %v5405 = vshrl.u32 %v5404, 7
    %v5406 = vsub.s32 4, %v5405
    %v5407 = vrot.slane %v5380, %v5406
    %v5408 = vlaneseq
    %v5409 = vshrl.u32 %v5408, 7
    %v5410 = vsub.s32 5, %v5409
    %v5411 = vrot.slane %v5380, %v5410
    %v5412 = vlaneseq
    %v5413 = vshrl.u32 %v5412, 7
    %v5414 = vsub.s32 6, %v5413
    %v5415 = vrot.slane %v5380, %v5414
    %v5416 = vlaneseq
    %v5417 = vshrl.u32 %v5416, 7
    %v5418 = vsub.s32 7, %v5417
    %v5419 = vrot.slane %v5380, %v5418
    %v5812 = vunpack.c.l.b16 %v4996
    %v5813 = vunpack.c.h.b16 %v4996
    %v5814 = vunpack.c.l.b16 %v4997
    %v5815 = vunpack.c.h.b16 %v4997
    %v5816 = vunpack.c.l.b16 %v4998
    %v5817 = vunpack.c.h.b16 %v4998
    %v5818 = vunpack.c.l.b16 %v4999
    %v5819 = vunpack.c.h.b16 %v4999
    %v5820 = vunpack.c.l.b16 %v5000
    %v5821 = vunpack.c.h.b16 %v5000
    %v5822 = vunpack.c.l.b16 %v5001
    %v5823 = vunpack.c.h.b16 %v5001
    %v5824 = vunpack.c.l.b16 %v5002
    %v5825 = vunpack.c.h.b16 %v5002
    %v5826 = vunpack.c.l.b16 %v5003
    %v5827 = vunpack.c.h.b16 %v5003
    %v5828 = vunpack.c.l.b16 %v5004
    %v5829 = vunpack.c.h.b16 %v5004
    %v5830 = vunpack.c.l.b16 %v5005
    %v5831 = vunpack.c.h.b16 %v5005
    %v5832 = vunpack.c.l.b16 %v5006
    %v5833 = vunpack.c.h.b16 %v5006
    %v5834 = vunpack.c.l.b16 %v5007
    %v5835 = vunpack.c.h.b16 %v5007
    %v5836 = vunpack.c.l.b16 %v5008
    %v5837 = vunpack.c.h.b16 %v5008
    %v5838 = vunpack.c.l.b16 %v5009
    %v5839 = vunpack.c.h.b16 %v5009
    %v5840 = vunpack.c.l.b16 %v5010
    %v5841 = vunpack.c.h.b16 %v5010
    %v5842 = vunpack.c.l.b16 %v5011
    %v5843 = vunpack.c.h.b16 %v5011
    %v5844 = vunpack.c.l.b16 %v5012
    %v5845 = vunpack.c.h.b16 %v5012
    %v5846 = vunpack.c.l.b16 %v5013
    %v5847 = vunpack.c.h.b16 %v5013
    %v5848 = vunpack.c.l.b16 %v5014
    %v5849 = vunpack.c.h.b16 %v5014
    %v5850 = vunpack.c.l.b16 %v5015
    %v5851 = vunpack.c.h.b16 %v5015
    %v5852 = vunpack.c.l.b16 %v5016
    %v5853 = vunpack.c.h.b16 %v5016
    %v5854 = vunpack.c.l.b16 %v5017
    %v5855 = vunpack.c.h.b16 %v5017
    %v5856 = vunpack.c.l.b16 %v5018
    %v5857 = vunpack.c.h.b16 %v5018
    %v5858 = vunpack.c.l.b16 %v5019
    %v5859 = vunpack.c.h.b16 %v5019
    %v5860 = vunpack.c.l.b16 %v5020
    %v5861 = vunpack.c.h.b16 %v5020
    %v5862 = vunpack.c.l.b16 %v5021
    %v5863 = vunpack.c.h.b16 %v5021
    %v5864 = vunpack.c.l.b16 %v5022
    %v5865 = vunpack.c.h.b16 %v5022
    %v5866 = vunpack.c.l.b16 %v5023
    %v5867 = vunpack.c.h.b16 %v5023
    %v5868 = vunpack.c.l.b16 %v5024
    %v5869 = vunpack.c.h.b16 %v5024
    %v5870 = vunpack.c.l.b16 %v5025
    %v5871 = vunpack.c.h.b16 %v5025
    %v5872 = vunpack.c.l.b16 %v5026
    %v5873 = vunpack.c.h.b16 %v5026
    %v5874 = vunpack.c.l.b16 %v5027
    %v5875 = vunpack.c.h.b16 %v5027
    %v5876 = vunpack.c.l.b16 %v5028
    %v5877 = vunpack.c.h.b16 %v5028
    %v5878 = vunpack.c.l.b16 %v5029
    %v5879 = vunpack.c.h.b16 %v5029
    %v5880 = vunpack.c.l.b16 %v5030
    %v5881 = vunpack.c.h.b16 %v5030
    %v5882 = vunpack.c.l.b16 %v5031
    %v5883 = vunpack.c.h.b16 %v5031
    %v5884 = vunpack.c.l.b16 %v5032
    %v5885 = vunpack.c.h.b16 %v5032
    %v5886 = vunpack.c.l.b16 %v5033
    %v5887 = vunpack.c.h.b16 %v5033
    %v5888 = vunpack.c.l.b16 %v5034
    %v5889 = vunpack.c.h.b16 %v5034
    %v5890 = vunpack.c.l.b16 %v5035
    %v5891 = vunpack.c.h.b16 %v5035
    %v5892 = vunpack.c.l.b16 %v5036
    %v5893 = vunpack.c.h.b16 %v5036
    %v5894 = vunpack.c.l.b16 %v5037
    %v5895 = vunpack.c.h.b16 %v5037
    %v5896 = vunpack.c.l.b16 %v5038
    %v5897 = vunpack.c.h.b16 %v5038
    %v5898 = vunpack.c.l.b16 %v5039
    %v5899 = vunpack.c.h.b16 %v5039
    %v5900 = vunpack.c.l.b16 %v5040
    %v5901 = vunpack.c.h.b16 %v5040
    %v5902 = vunpack.c.l.b16 %v5041
    %v5903 = vunpack.c.h.b16 %v5041
    %v5904 = vunpack.c.l.b16 %v5042
    %v5905 = vunpack.c.h.b16 %v5042
    %v5906 = vunpack.c.l.b16 %v5043
    %v5907 = vunpack.c.h.b16 %v5043
    %v5908 = vunpack.c.l.b16 %v5044
    %v5909 = vunpack.c.h.b16 %v5044
    %v5910 = vunpack.c.l.b16 %v5045
    %v5911 = vunpack.c.h.b16 %v5045
    %v5912 = vunpack.c.l.b16 %v5046
    %v5913 = vunpack.c.h.b16 %v5046
    %v5914 = vunpack.c.l.b16 %v5047
    %v5915 = vunpack.c.h.b16 %v5047
    %v5916 = vunpack.c.l.b16 %v5048
    %v5917 = vunpack.c.h.b16 %v5048
    %v5918 = vunpack.c.l.b16 %v5049
    %v5919 = vunpack.c.h.b16 %v5049
    %v5920 = vunpack.c.l.b16 %v5050
    %v5921 = vunpack.c.h.b16 %v5050
    %v5922 = vunpack.c.l.b16 %v5051
    %v5923 = vunpack.c.h.b16 %v5051
    %v5924 = vunpack.c.l.b16 %v5052
    %v5925 = vunpack.c.h.b16 %v5052
    %v5926 = vunpack.c.l.b16 %v5053
    %v5927 = vunpack.c.h.b16 %v5053
    %v5928 = vunpack.c.l.b16 %v5054
    %v5929 = vunpack.c.h.b16 %v5054
    %v5930 = vunpack.c.l.b16 %v5055
    %v5931 = vunpack.c.h.b16 %v5055
    %v5932 = vunpack.c.l.b16 %v5056
    %v5933 = vunpack.c.h.b16 %v5056
    %v5934 = vunpack.c.l.b16 %v5057
    %v5935 = vunpack.c.h.b16 %v5057
    %v5936 = vunpack.c.l.b16 %v5058
    %v5937 = vunpack.c.h.b16 %v5058
    %v5938 = vunpack.c.l.b16 %v5059
    %v5939 = vunpack.c.h.b16 %v5059
    %v5940 = vunpack.c.l.b16 %v5060
    %v5941 = vunpack.c.h.b16 %v5060
    %v5942 = vunpack.c.l.b16 %v5061
    %v5943 = vunpack.c.h.b16 %v5061
    %v5944 = vunpack.c.l.b16 %v5062
    %v5945 = vunpack.c.h.b16 %v5062
    %v5946 = vunpack.c.l.b16 %v5063
    %v5947 = vunpack.c.h.b16 %v5063
    %v5948 = vunpack.c.l.b16 %v5064
    %v5949 = vunpack.c.h.b16 %v5064
    %v5950 = vunpack.c.l.b16 %v5065
    %v5951 = vunpack.c.h.b16 %v5065
    %v5952 = vunpack.c.l.b16 %v5066
    %v5953 = vunpack.c.h.b16 %v5066
    %v5954 = vunpack.c.l.b16 %v5067
    %v5955 = vunpack.c.h.b16 %v5067
    %v5956 = vunpack.c.l.b16 %v5068
    %v5957 = vunpack.c.h.b16 %v5068
    %v5958 = vunpack.c.l.b16 %v5069
    %v5959 = vunpack.c.h.b16 %v5069
    %v5960 = vunpack.c.l.b16 %v5070
    %v5961 = vunpack.c.h.b16 %v5070
    %v5962 = vunpack.c.l.b16 %v5071
    %v5963 = vunpack.c.h.b16 %v5071
    %v5964 = vunpack.c.l.b16 %v5072
    %v5965 = vunpack.c.h.b16 %v5072
    %v5966 = vunpack.c.l.b16 %v5073
    %v5967 = vunpack.c.h.b16 %v5073
    %v5968 = vunpack.c.l.b16 %v5074
    %v5969 = vunpack.c.h.b16 %v5074
    %v5970 = vunpack.c.l.b16 %v5075
    %v5971 = vunpack.c.h.b16 %v5075
    %v5972 = vunpack.c.l.b16 %v5076
    %v5973 = vunpack.c.h.b16 %v5076
    %v5974 = vunpack.c.l.b16 %v5077
    %v5975 = vunpack.c.h.b16 %v5077
    %v5976 = vunpack.c.l.b16 %v5078
    %v5977 = vunpack.c.h.b16 %v5078
    %v5978 = vunpack.c.l.b16 %v5079
    %v5979 = vunpack.c.h.b16 %v5079
    %v5980 = vunpack.c.l.b16 %v5080
    %v5981 = vunpack.c.h.b16 %v5080
    %v5982 = vunpack.c.l.b16 %v5081
    %v5983 = vunpack.c.h.b16 %v5081
    %v5984 = vunpack.c.l.b16 %v5082
    %v5985 = vunpack.c.h.b16 %v5082
    %v5986 = vunpack.c.l.b16 %v5083
    %v5987 = vunpack.c.h.b16 %v5083
    %v5988 = vunpack.c.l.b16 %v5084
    %v5989 = vunpack.c.h.b16 %v5084
    %v5990 = vunpack.c.l.b16 %v5085
    %v5991 = vunpack.c.h.b16 %v5085
    %v5992 = vunpack.c.l.b16 %v5086
    %v5993 = vunpack.c.h.b16 %v5086
    %v5994 = vunpack.c.l.b16 %v5087
    %v5995 = vunpack.c.h.b16 %v5087
    %v5996 = vunpack.c.l.b16 %v5088
    %v5997 = vunpack.c.h.b16 %v5088
    %v5998 = vunpack.c.l.b16 %v5089
    %v5999 = vunpack.c.h.b16 %v5089
    %v6000 = vunpack.c.l.b16 %v5090
    %v6001 = vunpack.c.h.b16 %v5090
    %v6002 = vunpack.c.l.b16 %v5091
    %v6003 = vunpack.c.h.b16 %v5091
    %v6004 = vunpack.c.l.b16 %v5092
    %v6005 = vunpack.c.h.b16 %v5092
    %v6006 = vunpack.c.l.b16 %v5093
    %v6007 = vunpack.c.h.b16 %v5093
    %v6008 = vunpack.c.l.b16 %v5094
    %v6009 = vunpack.c.h.b16 %v5094
    %v6010 = vunpack.c.l.b16 %v5095
    %v6011 = vunpack.c.h.b16 %v5095
    %v6012 = vunpack.c.l.b16 %v5096
    %v6013 = vunpack.c.h.b16 %v5096
    %v6014 = vunpack.c.l.b16 %v5097
    %v6015 = vunpack.c.h.b16 %v5097
    %v6016 = vunpack.c.l.b16 %v5098
    %v6017 = vunpack.c.h.b16 %v5098
    %v6018 = vunpack.c.l.b16 %v5099
    %v6019 = vunpack.c.h.b16 %v5099
    %v6020 = vunpack.c.l.b16 %v5100
    %v6021 = vunpack.c.h.b16 %v5100
    %v6022 = vunpack.c.l.b16 %v5101
    %v6023 = vunpack.c.h.b16 %v5101
    %v6024 = vunpack.c.l.b16 %v5102
    %v6025 = vunpack.c.h.b16 %v5102
    %v6026 = vunpack.c.l.b16 %v5103
    %v6027 = vunpack.c.h.b16 %v5103
    %v6028 = vunpack.c.l.b16 %v5104
    %v6029 = vunpack.c.h.b16 %v5104
    %v6030 = vunpack.c.l.b16 %v5105
    %v6031 = vunpack.c.h.b16 %v5105
    %v6032 = vunpack.c.l.b16 %v5106
    %v6033 = vunpack.c.h.b16 %v5106
    %v6034 = vunpack.c.l.b16 %v5107
    %v6035 = vunpack.c.h.b16 %v5107
    %v6036 = vunpack.c.l.b16 %v5108
    %v6037 = vunpack.c.h.b16 %v5108
    %v6038 = vunpack.c.l.b16 %v5109
    %v6039 = vunpack.c.h.b16 %v5109
    %v6040 = vunpack.c.l.b16 %v5110
    %v6041 = vunpack.c.h.b16 %v5110
    %v6042 = vunpack.c.l.b16 %v5111
    %v6043 = vunpack.c.h.b16 %v5111
    %v6044 = vunpack.c.l.b16 %v5112
    %v6045 = vunpack.c.h.b16 %v5112
    %v6046 = vunpack.c.l.b16 %v5113
    %v6047 = vunpack.c.h.b16 %v5113
    %v6048 = vunpack.c.l.b16 %v5114
    %v6049 = vunpack.c.h.b16 %v5114
    %v6050 = vunpack.c.l.b16 %v5115
    %v6051 = vunpack.c.h.b16 %v5115
    %v6052 = vunpack.c.l.b16 %v5116
    %v6053 = vunpack.c.h.b16 %v5116
    %v6054 = vunpack.c.l.b16 %v5117
    %v6055 = vunpack.c.h.b16 %v5117
    %v6056 = vunpack.c.l.b16 %v5118
    %v6057 = vunpack.c.h.b16 %v5118
    %v6058 = vunpack.c.l.b16 %v5119
    %v6059 = vunpack.c.h.b16 %v5119
    %v6060 = vunpack.c.l.b16 %v5120
    %v6061 = vunpack.c.h.b16 %v5120
    %v6062 = vunpack.c.l.b16 %v5121
    %v6063 = vunpack.c.h.b16 %v5121
    %v6064 = vunpack.c.l.b16 %v5122
    %v6065 = vunpack.c.h.b16 %v5122
    %v6066 = vunpack.c.l.b16 %v5123
    %v6067 = vunpack.c.h.b16 %v5123
    %v6068 = vunpack.c.l.b16 %v5124
    %v6069 = vunpack.c.h.b16 %v5124
    %v6070 = vunpack.c.l.b16 %v5125
    %v6071 = vunpack.c.h.b16 %v5125
    %v6072 = vunpack.c.l.b16 %v5126
    %v6073 = vunpack.c.h.b16 %v5126
    %v6074 = vunpack.c.l.b16 %v5127
    %v6075 = vunpack.c.h.b16 %v5127
    %v6076 = vunpack.c.l.b16 %v5128
    %v6077 = vunpack.c.h.b16 %v5128
    %v6078 = vunpack.c.l.b16 %v5129
    %v6079 = vunpack.c.h.b16 %v5129
    %v6080 = vunpack.c.l.b16 %v5130
    %v6081 = vunpack.c.h.b16 %v5130
    %v6082 = vunpack.c.l.b16 %v5131
    %v6083 = vunpack.c.h.b16 %v5131
    %v6084 = vunpack.c.l.b16 %v5132
    %v6085 = vunpack.c.h.b16 %v5132
    %v6086 = vunpack.c.l.b16 %v5133
    %v6087 = vunpack.c.h.b16 %v5133
    %v6088 = vunpack.c.l.b16 %v5134
    %v6089 = vunpack.c.h.b16 %v5134
    %v6090 = vunpack.c.l.b16 %v5135
    %v6091 = vunpack.c.h.b16 %v5135
    %v6092 = vunpack.c.l.b16 %v5136
    %v6093 = vunpack.c.h.b16 %v5136
    %v6094 = vunpack.c.l.b16 %v5137
    %v6095 = vunpack.c.h.b16 %v5137
    %v6096 = vunpack.c.l.b16 %v5138
    %v6097 = vunpack.c.h.b16 %v5138
    %v6098 = vunpack.c.l.b16 %v5139
    %v6099 = vunpack.c.h.b16 %v5139
    %v6100 = vunpack.c.l.b16 %v5140
    %v6101 = vunpack.c.h.b16 %v5140
    %v6102 = vunpack.c.l.b16 %v5141
    %v6103 = vunpack.c.h.b16 %v5141
    %v6104 = vunpack.c.l.b16 %v5142
    %v6105 = vunpack.c.h.b16 %v5142
    %v6106 = vunpack.c.l.b16 %v5143
    %v6107 = vunpack.c.h.b16 %v5143
    %v6108 = vunpack.c.l.b16 %v5144
    %v6109 = vunpack.c.h.b16 %v5144
    %v6110 = vunpack.c.l.b16 %v5145
    %v6111 = vunpack.c.h.b16 %v5145
    %v6112 = vunpack.c.l.b16 %v5146
    %v6113 = vunpack.c.h.b16 %v5146
    %v6114 = vunpack.c.l.b16 %v5147
    %v6115 = vunpack.c.h.b16 %v5147
    %v6116 = vunpack.c.l.b16 %v5148
    %v6117 = vunpack.c.h.b16 %v5148
    %v6118 = vunpack.c.l.b16 %v5149
    %v6119 = vunpack.c.h.b16 %v5149
    %v6120 = vunpack.c.l.b16 %v5150
    %v6121 = vunpack.c.h.b16 %v5150
    %v6122 = vunpack.c.l.b16 %v5151
    %v6123 = vunpack.c.h.b16 %v5151
    %v6124 = vunpack.c.l.b16 %v5152
    %v6125 = vunpack.c.h.b16 %v5152
    %v6126 = vunpack.c.l.b16 %v5153
    %v6127 = vunpack.c.h.b16 %v5153
    %v6128 = vunpack.c.l.b16 %v5154
    %v6129 = vunpack.c.h.b16 %v5154
    %v6130 = vunpack.c.l.b16 %v5155
    %v6131 = vunpack.c.h.b16 %v5155
    %v6132 = vunpack.c.l.b16 %v5156
    %v6133 = vunpack.c.h.b16 %v5156
    %v6134 = vunpack.c.l.b16 %v5157
    %v6135 = vunpack.c.h.b16 %v5157
    %v6136 = vunpack.c.l.b16 %v5158
    %v6137 = vunpack.c.h.b16 %v5158
    %v6138 = vunpack.c.l.b16 %v5159
    %v6139 = vunpack.c.h.b16 %v5159
    %v6140 = vunpack.c.l.b16 %v5160
    %v6141 = vunpack.c.h.b16 %v5160
    %v6142 = vunpack.c.l.b16 %v5161
    %v6143 = vunpack.c.h.b16 %v5161
    %v6144 = vunpack.c.l.b16 %v5162
    %v6145 = vunpack.c.h.b16 %v5162
    %v6146 = vunpack.c.l.b16 %v5163
    %v6147 = vunpack.c.h.b16 %v5163
    %v6148 = vunpack.c.l.b16 %v5164
    %v6149 = vunpack.c.h.b16 %v5164
    %v6150 = vunpack.c.l.b16 %v5165
    %v6151 = vunpack.c.h.b16 %v5165
    %v6152 = vunpack.c.l.b16 %v5166
    %v6153 = vunpack.c.h.b16 %v5166
    %v6154 = vunpack.c.l.b16 %v5167
    %v6155 = vunpack.c.h.b16 %v5167
    %v6156 = vunpack.c.l.b16 %v5168
    %v6157 = vunpack.c.h.b16 %v5168
    %v6158 = vunpack.c.l.b16 %v5169
    %v6159 = vunpack.c.h.b16 %v5169
    %v6160 = vunpack.c.l.b16 %v5170
    %v6161 = vunpack.c.h.b16 %v5170
    %v6162 = vunpack.c.l.b16 %v5171
    %v6163 = vunpack.c.h.b16 %v5171
    %v6164 = vunpack.c.l.b16 %v5172
    %v6165 = vunpack.c.h.b16 %v5172
    %v6166 = vunpack.c.l.b16 %v5173
    %v6167 = vunpack.c.h.b16 %v5173
    %v6168 = vunpack.c.l.b16 %v5174
    %v6169 = vunpack.c.h.b16 %v5174
    %v6170 = vunpack.c.l.b16 %v5175
    %v6171 = vunpack.c.h.b16 %v5175
    %v6172 = vunpack.c.l.b16 %v5176
    %v6173 = vunpack.c.h.b16 %v5176
    %v6174 = vunpack.c.l.b16 %v5177
    %v6175 = vunpack.c.h.b16 %v5177
    %v6176 = vunpack.c.l.b16 %v5178
    %v6177 = vunpack.c.h.b16 %v5178
    %v6178 = vunpack.c.l.b16 %v5179
    %v6179 = vunpack.c.h.b16 %v5179
    %v6180 = vunpack.c.l.b16 %v5180
    %v6181 = vunpack.c.h.b16 %v5180
    %v6182 = vunpack.c.l.b16 %v5181
    %v6183 = vunpack.c.h.b16 %v5181
    %v6184 = vunpack.c.l.b16 %v5182
    %v6185 = vunpack.c.h.b16 %v5182
    %v6186 = vunpack.c.l.b16 %v5183
    %v6187 = vunpack.c.h.b16 %v5183
    %v6188 = vunpack.c.l.b16 %v5184
    %v6189 = vunpack.c.h.b16 %v5184
    %v6190 = vunpack.c.l.b16 %v5185
    %v6191 = vunpack.c.h.b16 %v5185
    %v6192 = vunpack.c.l.b16 %v5186
    %v6193 = vunpack.c.h.b16 %v5186
    %v6194 = vunpack.c.l.b16 %v5187
    %v6195 = vunpack.c.h.b16 %v5187
    %v6196 = vunpack.c.l.b16 %v5188
    %v6197 = vunpack.c.h.b16 %v5188
    %v6198 = vunpack.c.l.b16 %v5189
    %v6199 = vunpack.c.h.b16 %v5189
    %v6200 = vunpack.c.l.b16 %v5190
    %v6201 = vunpack.c.h.b16 %v5190
    %v6202 = vunpack.c.l.b16 %v5191
    %v6203 = vunpack.c.h.b16 %v5191
    %v6204 = vunpack.c.l.b16 %v5192
    %v6205 = vunpack.c.h.b16 %v5192
    %v6206 = vunpack.c.l.b16 %v5193
    %v6207 = vunpack.c.h.b16 %v5193
    %v6208 = vunpack.c.l.b16 %v5194
    %v6209 = vunpack.c.h.b16 %v5194
    %v6210 = vunpack.c.l.b16 %v5195
    %v6211 = vunpack.c.h.b16 %v5195
    %v6212 = vunpack.c.l.b16 %v5196
    %v6213 = vunpack.c.h.b16 %v5196
    %v6214 = vunpack.c.l.b16 %v5197
    %v6215 = vunpack.c.h.b16 %v5197
    %v6216 = vunpack.c.l.b16 %v5198
    %v6217 = vunpack.c.h.b16 %v5198
    %v6218 = vunpack.c.l.b16 %v5199
    %v6219 = vunpack.c.h.b16 %v5199
    %v6220 = vunpack.c.l.b16 %v5200
    %v6221 = vunpack.c.h.b16 %v5200
    %v6222 = vunpack.c.l.b16 %v5201
    %v6223 = vunpack.c.h.b16 %v5201
    %v6224 = vunpack.c.l.b16 %v5202
    %v6225 = vunpack.c.h.b16 %v5202
    %v6226 = vunpack.c.l.b16 %v5203
    %v6227 = vunpack.c.h.b16 %v5203
    %v6228 = vunpack.c.l.b16 %v5204
    %v6229 = vunpack.c.h.b16 %v5204
    %v6230 = vunpack.c.l.b16 %v5205
    %v6231 = vunpack.c.h.b16 %v5205
    %v6232 = vunpack.c.l.b16 %v5206
    %v6233 = vunpack.c.h.b16 %v5206
    %v6234 = vunpack.c.l.b16 %v5207
    %v6235 = vunpack.c.h.b16 %v5207
    %v6236 = vunpack.c.l.b16 %v5208
    %v6237 = vunpack.c.h.b16 %v5208
    %v6238 = vunpack.c.l.b16 %v5209
    %v6239 = vunpack.c.h.b16 %v5209
    %v6240 = vunpack.c.l.b16 %v5210
    %v6241 = vunpack.c.h.b16 %v5210
    %v6242 = vunpack.c.l.b16 %v5211
    %v6243 = vunpack.c.h.b16 %v5211
    %v6244 = vunpack.c.l.b16 %v5212
    %v6245 = vunpack.c.h.b16 %v5212
    %v6246 = vunpack.c.l.b16 %v5213
    %v6247 = vunpack.c.h.b16 %v5213
    %v6248 = vunpack.c.l.b16 %v5214
    %v6249 = vunpack.c.h.b16 %v5214
    %v6250 = vunpack.c.l.b16 %v5215
    %v6251 = vunpack.c.h.b16 %v5215
    %v6252 = vunpack.c.l.b16 %v5216
    %v6253 = vunpack.c.h.b16 %v5216
    %v6254 = vunpack.c.l.b16 %v5217
    %v6255 = vunpack.c.h.b16 %v5217
    %v6256 = vunpack.c.l.b16 %v5218
    %v6257 = vunpack.c.h.b16 %v5218
    %v6258 = vunpack.c.l.b16 %v5219
    %v6259 = vunpack.c.h.b16 %v5219
    %v6260 = vunpack.c.l.b16 %v5220
    %v6261 = vunpack.c.h.b16 %v5220
    %v6262 = vunpack.c.l.b16 %v5221
    %v6263 = vunpack.c.h.b16 %v5221
    %v6264 = vunpack.c.l.b16 %v5222
    %v6265 = vunpack.c.h.b16 %v5222
    %v6266 = vunpack.c.l.b16 %v5223
    %v6267 = vunpack.c.h.b16 %v5223
    %v6268 = vunpack.c.l.b16 %v5224
    %v6269 = vunpack.c.h.b16 %v5224
    %v6270 = vunpack.c.l.b16 %v5225
    %v6271 = vunpack.c.h.b16 %v5225
    %v6272 = vunpack.c.l.b16 %v5226
    %v6273 = vunpack.c.h.b16 %v5226
    %v6274 = vunpack.c.l.b16 %v5227
    %v6275 = vunpack.c.h.b16 %v5227
    %v6276 = vunpack.c.l.b16 %v5228
    %v6277 = vunpack.c.h.b16 %v5228
    %v6278 = vunpack.c.l.b16 %v5229
    %v6279 = vunpack.c.h.b16 %v5229
    %v6280 = vunpack.c.l.b16 %v5230
    %v6281 = vunpack.c.h.b16 %v5230
    %v6282 = vunpack.c.l.b16 %v5231
    %v6283 = vunpack.c.h.b16 %v5231
    %v6284 = vunpack.c.l.b16 %v5232
    %v6285 = vunpack.c.h.b16 %v5232
    %v6286 = vunpack.c.l.b16 %v5233
    %v6287 = vunpack.c.h.b16 %v5233
    %v6288 = vunpack.c.l.b16 %v5234
    %v6289 = vunpack.c.h.b16 %v5234
    %v6290 = vunpack.c.l.b16 %v5235
    %v6291 = vunpack.c.h.b16 %v5235
    %v6292 = vunpack.c.l.b16 %v5236
    %v6293 = vunpack.c.h.b16 %v5236
    %v6294 = vunpack.c.l.b16 %v5237
    %v6295 = vunpack.c.h.b16 %v5237
    %v6296 = vunpack.c.l.b16 %v5238
    %v6297 = vunpack.c.h.b16 %v5238
    %v6298 = vunpack.c.l.b16 %v5239
    %v6299 = vunpack.c.h.b16 %v5239
    %v6300 = vunpack.c.l.b16 %v5240
    %v6301 = vunpack.c.h.b16 %v5240
    %v6302 = vunpack.c.l.b16 %v5241
    %v6303 = vunpack.c.h.b16 %v5241
    %v6304 = vunpack.c.l.b16 %v5242
    %v6305 = vunpack.c.h.b16 %v5242
    %v6306 = vunpack.c.l.b16 %v5243
    %v6307 = vunpack.c.h.b16 %v5243
    %v6308 = vunpack.c.l.b16 %v5244
    %v6309 = vunpack.c.h.b16 %v5244
    %v6310 = vunpack.c.l.b16 %v5245
    %v6311 = vunpack.c.h.b16 %v5245
    %v6312 = vunpack.c.l.b16 %v5246
    %v6313 = vunpack.c.h.b16 %v5246
    %v6314 = vunpack.c.l.b16 %v5247
    %v6315 = vunpack.c.h.b16 %v5247
    %v6316 = vunpack.c.l.b16 %v5248
    %v6317 = vunpack.c.h.b16 %v5248
    %v6318 = vunpack.c.l.b16 %v5249
    %v6319 = vunpack.c.h.b16 %v5249
    %v6320 = vunpack.c.l.b16 %v5250
    %v6321 = vunpack.c.h.b16 %v5250
    %v6322 = vunpack.c.l.b16 %v5251
    %v6323 = vunpack.c.h.b16 %v5251
    %v6324 = vunpack.c.l.b16 %v5252
    %v6325 = vunpack.c.h.b16 %v5252
    %v6326 = vunpack.c.l.b16 %v5253
    %v6327 = vunpack.c.h.b16 %v5253
    %v6328 = vunpack.c.l.b16 %v5254
    %v6329 = vunpack.c.h.b16 %v5254
    %v6330 = vunpack.c.l.b16 %v5255
    %v6331 = vunpack.c.h.b16 %v5255
    %v6332 = vunpack.c.l.b16 %v5256
    %v6333 = vunpack.c.h.b16 %v5256
    %v6334 = vunpack.c.l.b16 %v5257
    %v6335 = vunpack.c.h.b16 %v5257
    %v6336 = vunpack.c.l.b16 %v5258
    %v6337 = vunpack.c.h.b16 %v5258
    %v6338 = vunpack.c.l.b16 %v5259
    %v6339 = vunpack.c.h.b16 %v5259
    %v6340 = vunpack.c.l.b16 %v5260
    %v6341 = vunpack.c.h.b16 %v5260
    %v6342 = vunpack.c.l.b16 %v5261
    %v6343 = vunpack.c.h.b16 %v5261
    %v6344 = vunpack.c.l.b16 %v5262
    %v6345 = vunpack.c.h.b16 %v5262
    %v6346 = vunpack.c.l.b16 %v5263
    %v6347 = vunpack.c.h.b16 %v5263
    %v6348 = vunpack.c.l.b16 %v5264
    %v6349 = vunpack.c.h.b16 %v5264
    %v6350 = vunpack.c.l.b16 %v5265
    %v6351 = vunpack.c.h.b16 %v5265
    %v6352 = vunpack.c.l.b16 %v5266
    %v6353 = vunpack.c.h.b16 %v5266
    %v6354 = vunpack.c.l.b16 %v5267
    %v6355 = vunpack.c.h.b16 %v5267
    %v6356 = vunpack.c.l.b16 %v5268
    %v6357 = vunpack.c.h.b16 %v5268
    %v6358 = vunpack.c.l.b16 %v5269
    %v6359 = vunpack.c.h.b16 %v5269
    %v6360 = vunpack.c.l.b16 %v5270
    %v6361 = vunpack.c.h.b16 %v5270
    %v6362 = vunpack.c.l.b16 %v5271
    %v6363 = vunpack.c.h.b16 %v5271
    %v6364 = vunpack.c.l.b16 %v5272
    %v6365 = vunpack.c.h.b16 %v5272
    %v6366 = vunpack.c.l.b16 %v5273
    %v6367 = vunpack.c.h.b16 %v5273
    %v6368 = vunpack.c.l.b16 %v5274
    %v6369 = vunpack.c.h.b16 %v5274
    %v6370 = vunpack.c.l.b16 %v5275
    %v6371 = vunpack.c.h.b16 %v5275
    %v6372 = vunpack.c.l.b16 %v5276
    %v6373 = vunpack.c.h.b16 %v5276
    %v6374 = vunpack.c.l.b16 %v5277
    %v6375 = vunpack.c.h.b16 %v5277
    %v6376 = vunpack.c.l.b16 %v5278
    %v6377 = vunpack.c.h.b16 %v5278
    %v6378 = vunpack.c.l.b16 %v5279
    %v6379 = vunpack.c.h.b16 %v5279
    %v6380 = vunpack.c.l.b16 %v5280
    %v6381 = vunpack.c.h.b16 %v5280
    %v6382 = vunpack.c.l.b16 %v5281
    %v6383 = vunpack.c.h.b16 %v5281
    %v6384 = vunpack.c.l.b16 %v5282
    %v6385 = vunpack.c.h.b16 %v5282
    %v6386 = vunpack.c.l.b16 %v5283
    %v6387 = vunpack.c.h.b16 %v5283
    %v6388 = vunpack.c.l.b16 %v5284
    %v6389 = vunpack.c.h.b16 %v5284
    %v6390 = vunpack.c.l.b16 %v5285
    %v6391 = vunpack.c.h.b16 %v5285
    %v6392 = vunpack.c.l.b16 %v5286
    %v6393 = vunpack.c.h.b16 %v5286
    %v6394 = vunpack.c.l.b16 %v5287
    %v6395 = vunpack.c.h.b16 %v5287
    %v6396 = vunpack.c.l.b16 %v5288
    %v6397 = vunpack.c.h.b16 %v5288
    %v6398 = vunpack.c.l.b16 %v5289
    %v6399 = vunpack.c.h.b16 %v5289
    %v6400 = vunpack.c.l.b16 %v5290
    %v6401 = vunpack.c.h.b16 %v5290
    %v6402 = vunpack.c.l.b16 %v5291
    %v6403 = vunpack.c.h.b16 %v5291
    %v6404 = vunpack.c.l.b16 %v5292
    %v6405 = vunpack.c.h.b16 %v5292
    %v6406 = vunpack.c.l.b16 %v5293
    %v6407 = vunpack.c.h.b16 %v5293
    %v6408 = vunpack.c.l.b16 %v5294
    %v6409 = vunpack.c.h.b16 %v5294
    %v6410 = vunpack.c.l.b16 %v5295
    %v6411 = vunpack.c.h.b16 %v5295
    %v6412 = vunpack.c.l.b16 %v5296
    %v6413 = vunpack.c.h.b16 %v5296
    %v6414 = vunpack.c.l.b16 %v5297
    %v6415 = vunpack.c.h.b16 %v5297
    %v6416 = vunpack.c.l.b16 %v5298
    %v6417 = vunpack.c.h.b16 %v5298
    %v6418 = vunpack.c.l.b16 %v5299
    %v6419 = vunpack.c.h.b16 %v5299
    %v6420 = vunpack.c.l.b16 %v5300
    %v6421 = vunpack.c.h.b16 %v5300
    %v6422 = vunpack.c.l.b16 %v5301
    %v6423 = vunpack.c.h.b16 %v5301
    %v6424 = vunpack.c.l.b16 %v5302
    %v6425 = vunpack.c.h.b16 %v5302
    %v6426 = vunpack.c.l.b16 %v5303
    %v6427 = vunpack.c.h.b16 %v5303
    %v6428 = vunpack.c.l.b16 %v5304
    %v6429 = vunpack.c.h.b16 %v5304
    %v6430 = vunpack.c.l.b16 %v5305
    %v6431 = vunpack.c.h.b16 %v5305
    %v6432 = vunpack.c.l.b16 %v5306
    %v6433 = vunpack.c.h.b16 %v5306
    %v6434 = vunpack.c.l.b16 %v5307
    %v6435 = vunpack.c.h.b16 %v5307
    %v6436 = vunpack.c.l.b16 %v5308
    %v6437 = vunpack.c.h.b16 %v5308
    %v6438 = vunpack.c.l.b16 %v5309
    %v6439 = vunpack.c.h.b16 %v5309
    %v6440 = vunpack.c.l.b16 %v5310
    %v6441 = vunpack.c.h.b16 %v5310
    %v6442 = vunpack.c.l.b16 %v5311
    %v6443 = vunpack.c.h.b16 %v5311
    %v6444 = vunpack.c.l.b16 %v5312
    %v6445 = vunpack.c.h.b16 %v5312
    %v6446 = vunpack.c.l.b16 %v5313
    %v6447 = vunpack.c.h.b16 %v5313
    %v6448 = vunpack.c.l.b16 %v5314
    %v6449 = vunpack.c.h.b16 %v5314
    %v6450 = vunpack.c.l.b16 %v5315
    %v6451 = vunpack.c.h.b16 %v5315
    %v6452 = vunpack.c.l.b16 %v5316
    %v6453 = vunpack.c.h.b16 %v5316
    %v6454 = vunpack.c.l.b16 %v5317
    %v6455 = vunpack.c.h.b16 %v5317
    %v6456 = vunpack.c.l.b16 %v5318
    %v6457 = vunpack.c.h.b16 %v5318
    %v6458 = vunpack.c.l.b16 %v5319
    %v6459 = vunpack.c.h.b16 %v5319
    %v6460 = vunpack.c.l.b16 %v5320
    %v6461 = vunpack.c.h.b16 %v5320
    %v6462 = vunpack.c.l.b16 %v5321
    %v6463 = vunpack.c.h.b16 %v5321
    %v6464 = vunpack.c.l.b16 %v5322
    %v6465 = vunpack.c.h.b16 %v5322
    %v6466 = vunpack.c.l.b16 %v5323
    %v6467 = vunpack.c.h.b16 %v5323
    %v6468 = vunpack.c.l.b16 %v5324
    %v6469 = vunpack.c.h.b16 %v5324
    %v6470 = vunpack.c.l.b16 %v5325
    %v6471 = vunpack.c.h.b16 %v5325
    %v6472 = vunpack.c.l.b16 %v5326
    %v6473 = vunpack.c.h.b16 %v5326
    %v6474 = vunpack.c.l.b16 %v5327
    %v6475 = vunpack.c.h.b16 %v5327
    %v6476 = vunpack.c.l.b16 %v5328
    %v6477 = vunpack.c.h.b16 %v5328
    %v6478 = vunpack.c.l.b16 %v5329
    %v6479 = vunpack.c.h.b16 %v5329
    %v6480 = vunpack.c.l.b16 %v5330
    %v6481 = vunpack.c.h.b16 %v5330
    %v6482 = vunpack.c.l.b16 %v5331
    %v6483 = vunpack.c.h.b16 %v5331
    %v6484 = vunpack.c.l.b16 %v5332
    %v6485 = vunpack.c.h.b16 %v5332
    %v6486 = vunpack.c.l.b16 %v5333
    %v6487 = vunpack.c.h.b16 %v5333
    %v6488 = vunpack.c.l.b16 %v5334
    %v6489 = vunpack.c.h.b16 %v5334
    %v6490 = vunpack.c.l.b16 %v5335
    %v6491 = vunpack.c.h.b16 %v5335
    %v6492 = vunpack.c.l.b16 %v5336
    %v6493 = vunpack.c.h.b16 %v5336
    %v6494 = vunpack.c.l.b16 %v5337
    %v6495 = vunpack.c.h.b16 %v5337
    %v6496 = vunpack.c.l.b16 %v5338
    %v6497 = vunpack.c.h.b16 %v5338
    %v6498 = vunpack.c.l.b16 %v5339
    %v6499 = vunpack.c.h.b16 %v5339
    %v6500 = vunpack.c.l.b16 %v5340
    %v6501 = vunpack.c.h.b16 %v5340
    %v6502 = vunpack.c.l.b16 %v5341
    %v6503 = vunpack.c.h.b16 %v5341
    %v6504 = vunpack.c.l.b16 %v5342
    %v6505 = vunpack.c.h.b16 %v5342
    %v6506 = vunpack.c.l.b16 %v5343
    %v6507 = vunpack.c.h.b16 %v5343
    %v6508 = vunpack.c.l.b16 %v5344
    %v6509 = vunpack.c.h.b16 %v5344
    %v6510 = vunpack.c.l.b16 %v5345
    %v6511 = vunpack.c.h.b16 %v5345
    %v6512 = vunpack.c.l.b16 %v5346
    %v6513 = vunpack.c.h.b16 %v5346
    %v6514 = vunpack.c.l.b16 %v5347
    %v6515 = vunpack.c.h.b16 %v5347
    %v6516 = vunpack.c.l.b16 %v5348
    %v6517 = vunpack.c.h.b16 %v5348
    %v6518 = vunpack.c.l.b16 %v5349
    %v6519 = vunpack.c.h.b16 %v5349
    %v6520 = vunpack.c.l.b16 %v5350
    %v6521 = vunpack.c.h.b16 %v5350
    %v6522 = vunpack.c.l.b16 %v5351
    %v6523 = vunpack.c.h.b16 %v5351
    %v6524 = vunpack.c.l.b16 %v5352
    %v6525 = vunpack.c.h.b16 %v5352
    %v6526 = vunpack.c.l.b16 %v5353
    %v6527 = vunpack.c.h.b16 %v5353
    %v6528 = vunpack.c.l.b16 %v5354
    %v6529 = vunpack.c.h.b16 %v5354
    %v6530 = vunpack.c.l.b16 %v5355
    %v6531 = vunpack.c.h.b16 %v5355
    %v6532 = vunpack.c.l.b16 %v5356
    %v6533 = vunpack.c.h.b16 %v5356
    %v6534 = vunpack.c.l.b16 %v5357
    %v6535 = vunpack.c.h.b16 %v5357
    %v6536 = vunpack.c.l.b16 %v5358
    %v6537 = vunpack.c.h.b16 %v5358
    %v6538 = vunpack.c.l.b16 %v5359
    %v6539 = vunpack.c.h.b16 %v5359
    %v6540 = vunpack.c.l.b16 %v5360
    %v6541 = vunpack.c.h.b16 %v5360
    %v6542 = vunpack.c.l.b16 %v5361
    %v6543 = vunpack.c.h.b16 %v5361
    %v6544 = vunpack.c.l.b16 %v5362
    %v6545 = vunpack.c.h.b16 %v5362
    %v6546 = vunpack.c.l.b16 %v5363
    %v6547 = vunpack.c.h.b16 %v5363
    %v6548 = vunpack.c.l.b16 %v5364
    %v6549 = vunpack.c.h.b16 %v5364
    %v6550 = vunpack.c.l.b16 %v5365
    %v6551 = vunpack.c.h.b16 %v5365
    %v6552 = vunpack.c.l.b16 %v5366
    %v6553 = vunpack.c.h.b16 %v5366
    %v6554 = vunpack.c.l.b16 %v5367
    %v6555 = vunpack.c.h.b16 %v5367
    %v6556 = vunpack.c.l.b16 %v5368
    %v6557 = vunpack.c.h.b16 %v5368
    %v6558 = vunpack.c.l.b16 %v5369
    %v6559 = vunpack.c.h.b16 %v5369
    %v6560 = vunpack.c.l.b16 %v5370
    %v6561 = vunpack.c.h.b16 %v5370
    %v6562 = vunpack.c.l.b16 %v5371
    %v6563 = vunpack.c.h.b16 %v5371
    %v6564 = vunpack.c.l.b16 %v5372
    %v6565 = vunpack.c.h.b16 %v5372
    %v6566 = vunpack.c.l.b16 %v5373
    %v6567 = vunpack.c.h.b16 %v5373
    %v6568 = vunpack.c.l.b16 %v5374
    %v6569 = vunpack.c.h.b16 %v5374
    %v6570 = vunpack.c.l.b16 %v5375
    %v6571 = vunpack.c.h.b16 %v5375
    %v6572 = vunpack.c.l.b16 %v5376
    %v6573 = vunpack.c.h.b16 %v5376
    %v6574 = vunpack.c.l.b16 %v5377
    %v6575 = vunpack.c.h.b16 %v5377
    %v6576 = vunpack.c.l.b16 %v5378
    %v6577 = vunpack.c.h.b16 %v5378
    %v6578 = vunpack.c.l.b16 %v5379
    %v6579 = vunpack.c.h.b16 %v5379
    %v6580 = vpack.c.b16 %v5820, %v5812
    %v6581 = vpack.c.b16 %v5821, %v5813
    %v6582 = vpack.c.b16 %v5822, %v5814
    %v6583 = vpack.c.b16 %v5823, %v5815
    %v6584 = vpack.c.b16 %v5824, %v5816
    %v6585 = vpack.c.b16 %v5825, %v5817
    %v6586 = vpack.c.b16 %v5826, %v5818
    %v6587 = vpack.c.b16 %v5827, %v5819
    %v6588 = vpack.c.b16 %v5836, %v5828
    %v6589 = vpack.c.b16 %v5837, %v5829
    %v6590 = vpack.c.b16 %v5838, %v5830
    %v6591 = vpack.c.b16 %v5839, %v5831
    %v6592 = vpack.c.b16 %v5840, %v5832
    %v6593 = vpack.c.b16 %v5841, %v5833
    %v6594 = vpack.c.b16 %v5842, %v5834
    %v6595 = vpack.c.b16 %v5843, %v5835
    %v6596 = vpack.c.b16 %v5852, %v5844
    %v6597 = vpack.c.b16 %v5853, %v5845
    %v6598 = vpack.c.b16 %v5854, %v5846
    %v6599 = vpack.c.b16 %v5855, %v5847
    %v6600 = vpack.c.b16 %v5856, %v5848
    %v6601 = vpack.c.b16 %v5857, %v5849
    %v6602 = vpack.c.b16 %v5858, %v5850
    %v6603 = vpack.c.b16 %v5859, %v5851
    %v6604 = vpack.c.b16 %v5868, %v5860
    %v6605 = vpack.c.b16 %v5869, %v5861
    %v6606 = vpack.c.b16 %v5870, %v5862
    %v6607 = vpack.c.b16 %v5871, %v5863
    %v6608 = vpack.c.b16 %v5872, %v5864
    %v6609 = vpack.c.b16 %v5873, %v5865
    %v6610 = vpack.c.b16 %v5874, %v5866
    %v6611 = vpack.c.b16 %v5875, %v5867
    %v6612 = vpack.c.b16 %v5884, %v5876
    %v6613 = vpack.c.b16 %v5885, %v5877
    %v6614 = vpack.c.b16 %v5886, %v5878
    %v6615 = vpack.c.b16 %v5887, %v5879
    %v6616 = vpack.c.b16 %v5888, %v5880
    %v6617 = vpack.c.b16 %v5889, %v5881
    %v6618 = vpack.c.b16 %v5890, %v5882
    %v6619 = vpack.c.b16 %v5891, %v5883
    %v6620 = vpack.c.b16 %v5900, %v5892
    %v6621 = vpack.c.b16 %v5901, %v5893
    %v6622 = vpack.c.b16 %v5902, %v5894
    %v6623 = vpack.c.b16 %v5903, %v5895
    %v6624 = vpack.c.b16 %v5904, %v5896
    %v6625 = vpack.c.b16 %v5905, %v5897
    %v6626 = vpack.c.b16 %v5906, %v5898
    %v6627 = vpack.c.b16 %v5907, %v5899
    %v6628 = vpack.c.b16 %v5916, %v5908
    %v6629 = vpack.c.b16 %v5917, %v5909
    %v6630 = vpack.c.b16 %v5918, %v5910
    %v6631 = vpack.c.b16 %v5919, %v5911
    %v6632 = vpack.c.b16 %v5920, %v5912
    %v6633 = vpack.c.b16 %v5921, %v5913
    %v6634 = vpack.c.b16 %v5922, %v5914
    %v6635 = vpack.c.b16 %v5923, %v5915
    %v6636 = vpack.c.b16 %v5932, %v5924
    %v6637 = vpack.c.b16 %v5933, %v5925
    %v6638 = vpack.c.b16 %v5934, %v5926
    %v6639 = vpack.c.b16 %v5935, %v5927
    %v6640 = vpack.c.b16 %v5936, %v5928
    %v6641 = vpack.c.b16 %v5937, %v5929
    %v6642 = vpack.c.b16 %v5938, %v5930
    %v6643 = vpack.c.b16 %v5939, %v5931
    %v6644 = vpack.c.b16 %v5948, %v5940
    %v6645 = vpack.c.b16 %v5949, %v5941
    %v6646 = vpack.c.b16 %v5950, %v5942
    %v6647 = vpack.c.b16 %v5951, %v5943
    %v6648 = vpack.c.b16 %v5952, %v5944
    %v6649 = vpack.c.b16 %v5953, %v5945
    %v6650 = vpack.c.b16 %v5954, %v5946
    %v6651 = vpack.c.b16 %v5955, %v5947
    %v6652 = vpack.c.b16 %v5964, %v5956
    %v6653 = vpack.c.b16 %v5965, %v5957
    %v6654 = vpack.c.b16 %v5966, %v5958
    %v6655 = vpack.c.b16 %v5967, %v5959
    %v6656 = vpack.c.b16 %v5968, %v5960
    %v6657 = vpack.c.b16 %v5969, %v5961
    %v6658 = vpack.c.b16 %v5970, %v5962
    %v6659 = vpack.c.b16 %v5971, %v5963
    %v6660 = vpack.c.b16 %v5980, %v5972
    %v6661 = vpack.c.b16 %v5981, %v5973
    %v6662 = vpack.c.b16 %v5982, %v5974
    %v6663 = vpack.c.b16 %v5983, %v5975
    %v6664 = vpack.c.b16 %v5984, %v5976
    %v6665 = vpack.c.b16 %v5985, %v5977
    %v6666 = vpack.c.b16 %v5986, %v5978
    %v6667 = vpack.c.b16 %v5987, %v5979
    %v6668 = vpack.c.b16 %v5996, %v5988
    %v6669 = vpack.c.b16 %v5997, %v5989
    %v6670 = vpack.c.b16 %v5998, %v5990
    %v6671 = vpack.c.b16 %v5999, %v5991
    %v6672 = vpack.c.b16 %v6000, %v5992
    %v6673 = vpack.c.b16 %v6001, %v5993
    %v6674 = vpack.c.b16 %v6002, %v5994
    %v6675 = vpack.c.b16 %v6003, %v5995
    %v6676 = vpack.c.b16 %v6012, %v6004
    %v6677 = vpack.c.b16 %v6013, %v6005
    %v6678 = vpack.c.b16 %v6014, %v6006
    %v6679 = vpack.c.b16 %v6015, %v6007
    %v6680 = vpack.c.b16 %v6016, %v6008
    %v6681 = vpack.c.b16 %v6017, %v6009
    %v6682 = vpack.c.b16 %v6018, %v6010
    %v6683 = vpack.c.b16 %v6019, %v6011
    %v6684 = vpack.c.b16 %v6028, %v6020
    %v6685 = vpack.c.b16 %v6029, %v6021
    %v6686 = vpack.c.b16 %v6030, %v6022
    %v6687 = vpack.c.b16 %v6031, %v6023
    %v6688 = vpack.c.b16 %v6032, %v6024
    %v6689 = vpack.c.b16 %v6033, %v6025
    %v6690 = vpack.c.b16 %v6034, %v6026
    %v6691 = vpack.c.b16 %v6035, %v6027
    %v6692 = vpack.c.b16 %v6044, %v6036
    %v6693 = vpack.c.b16 %v6045, %v6037
    %v6694 = vpack.c.b16 %v6046, %v6038
    %v6695 = vpack.c.b16 %v6047, %v6039
    %v6696 = vpack.c.b16 %v6048, %v6040
    %v6697 = vpack.c.b16 %v6049, %v6041
    %v6698 = vpack.c.b16 %v6050, %v6042
    %v6699 = vpack.c.b16 %v6051, %v6043
    %v6700 = vpack.c.b16 %v6060, %v6052
    %v6701 = vpack.c.b16 %v6061, %v6053
    %v6702 = vpack.c.b16 %v6062, %v6054
    %v6703 = vpack.c.b16 %v6063, %v6055
    %v6704 = vpack.c.b16 %v6064, %v6056
    %v6705 = vpack.c.b16 %v6065, %v6057
    %v6706 = vpack.c.b16 %v6066, %v6058
    %v6707 = vpack.c.b16 %v6067, %v6059
    %v6708 = vpack.c.b16 %v6076, %v6068
    %v6709 = vpack.c.b16 %v6077, %v6069
    %v6710 = vpack.c.b16 %v6078, %v6070
    %v6711 = vpack.c.b16 %v6079, %v6071
    %v6712 = vpack.c.b16 %v6080, %v6072
    %v6713 = vpack.c.b16 %v6081, %v6073
    %v6714 = vpack.c.b16 %v6082, %v6074
    %v6715 = vpack.c.b16 %v6083, %v6075
    %v6716 = vpack.c.b16 %v6092, %v6084
    %v6717 = vpack.c.b16 %v6093, %v6085
    %v6718 = vpack.c.b16 %v6094, %v6086
    %v6719 = vpack.c.b16 %v6095, %v6087
    %v6720 = vpack.c.b16 %v6096, %v6088
    %v6721 = vpack.c.b16 %v6097, %v6089
    %v6722 = vpack.c.b16 %v6098, %v6090
    %v6723 = vpack.c.b16 %v6099, %v6091
    %v6724 = vpack.c.b16 %v6108, %v6100
    %v6725 = vpack.c.b16 %v6109, %v6101
    %v6726 = vpack.c.b16 %v6110, %v6102
    %v6727 = vpack.c.b16 %v6111, %v6103
    %v6728 = vpack.c.b16 %v6112, %v6104
    %v6729 = vpack.c.b16 %v6113, %v6105
    %v6730 = vpack.c.b16 %v6114, %v6106
    %v6731 = vpack.c.b16 %v6115, %v6107
    %v6732 = vpack.c.b16 %v6124, %v6116
    %v6733 = vpack.c.b16 %v6125, %v6117
    %v6734 = vpack.c.b16 %v6126, %v6118
    %v6735 = vpack.c.b16 %v6127, %v6119
    %v6736 = vpack.c.b16 %v6128, %v6120
    %v6737 = vpack.c.b16 %v6129, %v6121
    %v6738 = vpack.c.b16 %v6130, %v6122
    %v6739 = vpack.c.b16 %v6131, %v6123
    %v6740 = vpack.c.b16 %v6140, %v6132
    %v6741 = vpack.c.b16 %v6141, %v6133
    %v6742 = vpack.c.b16 %v6142, %v6134
    %v6743 = vpack.c.b16 %v6143, %v6135
    %v6744 = vpack.c.b16 %v6144, %v6136
    %v6745 = vpack.c.b16 %v6145, %v6137
    %v6746 = vpack.c.b16 %v6146, %v6138
    %v6747 = vpack.c.b16 %v6147, %v6139
    %v6748 = vpack.c.b16 %v6156, %v6148
    %v6749 = vpack.c.b16 %v6157, %v6149
    %v6750 = vpack.c.b16 %v6158, %v6150
    %v6751 = vpack.c.b16 %v6159, %v6151
    %v6752 = vpack.c.b16 %v6160, %v6152
    %v6753 = vpack.c.b16 %v6161, %v6153
    %v6754 = vpack.c.b16 %v6162, %v6154
    %v6755 = vpack.c.b16 %v6163, %v6155
    %v6756 = vpack.c.b16 %v6172, %v6164
    %v6757 = vpack.c.b16 %v6173, %v6165
    %v6758 = vpack.c.b16 %v6174, %v6166
    %v6759 = vpack.c.b16 %v6175, %v6167
    %v6760 = vpack.c.b16 %v6176, %v6168
    %v6761 = vpack.c.b16 %v6177, %v6169
    %v6762 = vpack.c.b16 %v6178, %v6170
    %v6763 = vpack.c.b16 %v6179, %v6171
    %v6764 = vpack.c.b16 %v6188, %v6180
    %v6765 = vpack.c.b16 %v6189, %v6181
    %v6766 = vpack.c.b16 %v6190, %v6182
    %v6767 = vpack.c.b16 %v6191, %v6183
    %v6768 = vpack.c.b16 %v6192, %v6184
    %v6769 = vpack.c.b16 %v6193, %v6185
    %v6770 = vpack.c.b16 %v6194, %v6186
    %v6771 = vpack.c.b16 %v6195, %v6187
    %v6772 = vpack.c.b16 %v6204, %v6196
    %v6773 = vpack.c.b16 %v6205, %v6197
    %v6774 = vpack.c.b16 %v6206, %v6198
    %v6775 = vpack.c.b16 %v6207, %v6199
    %v6776 = vpack.c.b16 %v6208, %v6200
    %v6777 = vpack.c.b16 %v6209, %v6201
    %v6778 = vpack.c.b16 %v6210, %v6202
    %v6779 = vpack.c.b16 %v6211, %v6203
    %v6780 = vpack.c.b16 %v6220, %v6212
    %v6781 = vpack.c.b16 %v6221, %v6213
    %v6782 = vpack.c.b16 %v6222, %v6214
    %v6783 = vpack.c.b16 %v6223, %v6215
    %v6784 = vpack.c.b16 %v6224, %v6216
    %v6785 = vpack.c.b16 %v6225, %v6217
    %v6786 = vpack.c.b16 %v6226, %v6218
    %v6787 = vpack.c.b16 %v6227, %v6219
    %v6788 = vpack.c.b16 %v6236, %v6228
    %v6789 = vpack.c.b16 %v6237, %v6229
    %v6790 = vpack.c.b16 %v6238, %v6230
    %v6791 = vpack.c.b16 %v6239, %v6231
    %v6792 = vpack.c.b16 %v6240, %v6232
    %v6793 = vpack.c.b16 %v6241, %v6233
    %v6794 = vpack.c.b16 %v6242, %v6234
    %v6795 = vpack.c.b16 %v6243, %v6235
    %v6796 = vpack.c.b16 %v6252, %v6244
    %v6797 = vpack.c.b16 %v6253, %v6245
    %v6798 = vpack.c.b16 %v6254, %v6246
    %v6799 = vpack.c.b16 %v6255, %v6247
    %v6800 = vpack.c.b16 %v6256, %v6248
    %v6801 = vpack.c.b16 %v6257, %v6249
    %v6802 = vpack.c.b16 %v6258, %v6250
    %v6803 = vpack.c.b16 %v6259, %v6251
    %v6804 = vpack.c.b16 %v6268, %v6260
    %v6805 = vpack.c.b16 %v6269, %v6261
    %v6806 = vpack.c.b16 %v6270, %v6262
    %v6807 = vpack.c.b16 %v6271, %v6263
    %v6808 = vpack.c.b16 %v6272, %v6264
    %v6809 = vpack.c.b16 %v6273, %v6265
    %v6810 = vpack.c.b16 %v6274, %v6266
    %v6811 = vpack.c.b16 %v6275, %v6267
    %v6812 = vpack.c.b16 %v6284, %v6276
    %v6813 = vpack.c.b16 %v6285, %v6277
    %v6814 = vpack.c.b16 %v6286, %v6278
    %v6815 = vpack.c.b16 %v6287, %v6279
    %v6816 = vpack.c.b16 %v6288, %v6280
    %v6817 = vpack.c.b16 %v6289, %v6281
    %v6818 = vpack.c.b16 %v6290, %v6282
    %v6819 = vpack.c.b16 %v6291, %v6283
    %v6820 = vpack.c.b16 %v6300, %v6292
    %v6821 = vpack.c.b16 %v6301, %v6293
    %v6822 = vpack.c.b16 %v6302, %v6294
    %v6823 = vpack.c.b16 %v6303, %v6295
    %v6824 = vpack.c.b16 %v6304, %v6296
    %v6825 = vpack.c.b16 %v6305, %v6297
    %v6826 = vpack.c.b16 %v6306, %v6298
    %v6827 = vpack.c.b16 %v6307, %v6299
    %v6828 = vpack.c.b16 %v6316, %v6308
    %v6829 = vpack.c.b16 %v6317, %v6309
    %v6830 = vpack.c.b16 %v6318, %v6310
    %v6831 = vpack.c.b16 %v6319, %v6311
    %v6832 = vpack.c.b16 %v6320, %v6312
    %v6833 = vpack.c.b16 %v6321, %v6313
    %v6834 = vpack.c.b16 %v6322, %v6314
    %v6835 = vpack.c.b16 %v6323, %v6315
    %v6836 = vpack.c.b16 %v6332, %v6324
    %v6837 = vpack.c.b16 %v6333, %v6325
    %v6838 = vpack.c.b16 %v6334, %v6326
    %v6839 = vpack.c.b16 %v6335, %v6327
    %v6840 = vpack.c.b16 %v6336, %v6328
    %v6841 = vpack.c.b16 %v6337, %v6329
    %v6842 = vpack.c.b16 %v6338, %v6330
    %v6843 = vpack.c.b16 %v6339, %v6331
    %v6844 = vpack.c.b16 %v6348, %v6340
    %v6845 = vpack.c.b16 %v6349, %v6341
    %v6846 = vpack.c.b16 %v6350, %v6342
    %v6847 = vpack.c.b16 %v6351, %v6343
    %v6848 = vpack.c.b16 %v6352, %v6344
    %v6849 = vpack.c.b16 %v6353, %v6345
    %v6850 = vpack.c.b16 %v6354, %v6346
    %v6851 = vpack.c.b16 %v6355, %v6347
    %v6852 = vpack.c.b16 %v6364, %v6356
    %v6853 = vpack.c.b16 %v6365, %v6357
    %v6854 = vpack.c.b16 %v6366, %v6358
    %v6855 = vpack.c.b16 %v6367, %v6359
    %v6856 = vpack.c.b16 %v6368, %v6360
    %v6857 = vpack.c.b16 %v6369, %v6361
    %v6858 = vpack.c.b16 %v6370, %v6362
    %v6859 = vpack.c.b16 %v6371, %v6363
    %v6860 = vpack.c.b16 %v6380, %v6372
    %v6861 = vpack.c.b16 %v6381, %v6373
    %v6862 = vpack.c.b16 %v6382, %v6374
    %v6863 = vpack.c.b16 %v6383, %v6375
    %v6864 = vpack.c.b16 %v6384, %v6376
    %v6865 = vpack.c.b16 %v6385, %v6377
    %v6866 = vpack.c.b16 %v6386, %v6378
    %v6867 = vpack.c.b16 %v6387, %v6379
    %v6868 = vpack.c.b16 %v6396, %v6388
    %v6869 = vpack.c.b16 %v6397, %v6389
    %v6870 = vpack.c.b16 %v6398, %v6390
    %v6871 = vpack.c.b16 %v6399, %v6391
    %v6872 = vpack.c.b16 %v6400, %v6392
    %v6873 = vpack.c.b16 %v6401, %v6393
    %v6874 = vpack.c.b16 %v6402, %v6394
    %v6875 = vpack.c.b16 %v6403, %v6395
    %v6876 = vpack.c.b16 %v6412, %v6404
    %v6877 = vpack.c.b16 %v6413, %v6405
    %v6878 = vpack.c.b16 %v6414, %v6406
    %v6879 = vpack.c.b16 %v6415, %v6407
    %v6880 = vpack.c.b16 %v6416, %v6408
    %v6881 = vpack.c.b16 %v6417, %v6409
    %v6882 = vpack.c.b16 %v6418, %v6410
    %v6883 = vpack.c.b16 %v6419, %v6411
    %v6884 = vpack.c.b16 %v6428, %v6420
    %v6885 = vpack.c.b16 %v6429, %v6421
    %v6886 = vpack.c.b16 %v6430, %v6422
    %v6887 = vpack.c.b16 %v6431, %v6423
    %v6888 = vpack.c.b16 %v6432, %v6424
    %v6889 = vpack.c.b16 %v6433, %v6425
    %v6890 = vpack.c.b16 %v6434, %v6426
    %v6891 = vpack.c.b16 %v6435, %v6427
    %v6892 = vpack.c.b16 %v6444, %v6436
    %v6893 = vpack.c.b16 %v6445, %v6437
    %v6894 = vpack.c.b16 %v6446, %v6438
    %v6895 = vpack.c.b16 %v6447, %v6439
    %v6896 = vpack.c.b16 %v6448, %v6440
    %v6897 = vpack.c.b16 %v6449, %v6441
    %v6898 = vpack.c.b16 %v6450, %v6442
    %v6899 = vpack.c.b16 %v6451, %v6443
    %v6900 = vpack.c.b16 %v6460, %v6452
    %v6901 = vpack.c.b16 %v6461, %v6453
    %v6902 = vpack.c.b16 %v6462, %v6454
    %v6903 = vpack.c.b16 %v6463, %v6455
    %v6904 = vpack.c.b16 %v6464, %v6456
    %v6905 = vpack.c.b16 %v6465, %v6457
    %v6906 = vpack.c.b16 %v6466, %v6458
    %v6907 = vpack.c.b16 %v6467, %v6459
    %v6908 = vpack.c.b16 %v6476, %v6468
    %v6909 = vpack.c.b16 %v6477, %v6469
    %v6910 = vpack.c.b16 %v6478, %v6470
    %v6911 = vpack.c.b16 %v6479, %v6471
    %v6912 = vpack.c.b16 %v6480, %v6472
    %v6913 = vpack.c.b16 %v6481, %v6473
    %v6914 = vpack.c.b16 %v6482, %v6474
    %v6915 = vpack.c.b16 %v6483, %v6475
    %v6916 = vpack.c.b16 %v6492, %v6484
    %v6917 = vpack.c.b16 %v6493, %v6485
    %v6918 = vpack.c.b16 %v6494, %v6486
    %v6919 = vpack.c.b16 %v6495, %v6487
    %v6920 = vpack.c.b16 %v6496, %v6488
    %v6921 = vpack.c.b16 %v6497, %v6489
    %v6922 = vpack.c.b16 %v6498, %v6490
    %v6923 = vpack.c.b16 %v6499, %v6491
    %v6924 = vpack.c.b16 %v6508, %v6500
    %v6925 = vpack.c.b16 %v6509, %v6501
    %v6926 = vpack.c.b16 %v6510, %v6502
    %v6927 = vpack.c.b16 %v6511, %v6503
    %v6928 = vpack.c.b16 %v6512, %v6504
    %v6929 = vpack.c.b16 %v6513, %v6505
    %v6930 = vpack.c.b16 %v6514, %v6506
    %v6931 = vpack.c.b16 %v6515, %v6507
    %v6932 = vpack.c.b16 %v6524, %v6516
    %v6933 = vpack.c.b16 %v6525, %v6517
    %v6934 = vpack.c.b16 %v6526, %v6518
    %v6935 = vpack.c.b16 %v6527, %v6519
    %v6936 = vpack.c.b16 %v6528, %v6520
    %v6937 = vpack.c.b16 %v6529, %v6521
    %v6938 = vpack.c.b16 %v6530, %v6522
    %v6939 = vpack.c.b16 %v6531, %v6523
    %v6940 = vpack.c.b16 %v6540, %v6532
    %v6941 = vpack.c.b16 %v6541, %v6533
    %v6942 = vpack.c.b16 %v6542, %v6534
    %v6943 = vpack.c.b16 %v6543, %v6535
    %v6944 = vpack.c.b16 %v6544, %v6536
    %v6945 = vpack.c.b16 %v6545, %v6537
    %v6946 = vpack.c.b16 %v6546, %v6538
    %v6947 = vpack.c.b16 %v6547, %v6539
    %v6948 = vpack.c.b16 %v6556, %v6548
    %v6949 = vpack.c.b16 %v6557, %v6549
    %v6950 = vpack.c.b16 %v6558, %v6550
    %v6951 = vpack.c.b16 %v6559, %v6551
    %v6952 = vpack.c.b16 %v6560, %v6552
    %v6953 = vpack.c.b16 %v6561, %v6553
    %v6954 = vpack.c.b16 %v6562, %v6554
    %v6955 = vpack.c.b16 %v6563, %v6555
    %v6956 = vpack.c.b16 %v6572, %v6564
    %v6957 = vpack.c.b16 %v6573, %v6565
    %v6958 = vpack.c.b16 %v6574, %v6566
    %v6959 = vpack.c.b16 %v6575, %v6567
    %v6960 = vpack.c.b16 %v6576, %v6568
    %v6961 = vpack.c.b16 %v6577, %v6569
    %v6962 = vpack.c.b16 %v6578, %v6570
    %v6963 = vpack.c.b16 %v6579, %v6571
    %7348 = vmatprep.subr.bf16.mxu0 %v6637
    %7349 = vmatpush1.bf16.msra.mxu0 %v6636
    %7350 = vmatprep.subr.bf16.mxu0 %v6629
    %7351 = vmatpush1.bf16.msra.mxu0 %v6628
    %7352 = vmatprep.subr.bf16.mxu0 %v6621
    %7353 = vmatpush1.bf16.msra.mxu0 %v6620
    %7354 = vmatprep.subr.bf16.mxu0 %v6613
    %7355 = vmatpush1.bf16.msra.mxu0 %v6612
    %7356 = vmatprep.subr.bf16.mxu0 %v6605
    %7357 = vmatpush1.bf16.msra.mxu0 %v6604
    %7358 = vmatprep.subr.bf16.mxu0 %v6597
    %7359 = vmatpush1.bf16.msra.mxu0 %v6596
    %7360 = vmatprep.subr.bf16.mxu0 %v6589
    %7361 = vmatpush1.bf16.msra.mxu0 %v6588
    %7362 = vmatprep.subr.bf16.mxu0 %v6581
    %7363 = vmatpush1.bf16.msra.mxu0 %v6580
    %7364 = vmatprep.subr.bf16.mxu0 %v6701
    %7365 = vmatpush2.bf16.msra.mxu0 %v6700
    %7366 = vmatprep.subr.bf16.mxu0 %v6693
    %7367 = vmatpush2.bf16.msra.mxu0 %v6692
    %7368 = vmatprep.subr.bf16.mxu0 %v6685
    %7369 = vmatpush2.bf16.msra.mxu0 %v6684
    %7370 = vmatprep.subr.bf16.mxu0 %v6677
    %7371 = vmatpush2.bf16.msra.mxu0 %v6676
    %7372 = vmatprep.subr.bf16.mxu0 %v6669
    %7373 = vmatpush2.bf16.msra.mxu0 %v6668
    %7374 = vmatprep.subr.bf16.mxu0 %v6661
    %7375 = vmatpush2.bf16.msra.mxu0 %v6660
    %7376 = vmatprep.subr.bf16.mxu0 %v6653
    %7377 = vmatpush2.bf16.msra.mxu0 %v6652
    %7378 = vmatprep.subr.bf16.mxu0 %v6645
    %7379 = vmatpush2.bf16.msra.mxu0 %v6644
    %7380 = vmatprep.mubr.bf16.mxu0 %v5382
    %7381 = vmatmul.mubr.bf16.gmra.mxu0 %v5381
    %v7382 = vpop.f32.mrf.mxu0
    %v7383 = vadd.f32 %v5391, %v7382
    %v7384 = vpop.f32.mrf.mxu0
    %v7385 = vadd.f32 %v5395, %v7384
    %v7386 = vpop.f32.mrf.mxu0
    %v7387 = vpop.f32.mrf.mxu0
    %7388 = vdwg.mxu0
    %7389 = vmatprep.subr.bf16.mxu0 %v6765
    %7390 = vmatpush1.bf16.msra.mxu0 %v6764
    %7391 = vmatprep.subr.bf16.mxu0 %v6757
    %7392 = vmatpush1.bf16.msra.mxu0 %v6756
    %7393 = vmatprep.subr.bf16.mxu0 %v6749
    %7394 = vmatpush1.bf16.msra.mxu0 %v6748
    %7395 = vmatprep.subr.bf16.mxu0 %v6741
    %7396 = vmatpush1.bf16.msra.mxu0 %v6740
    %7397 = vmatprep.subr.bf16.mxu0 %v6733
    %7398 = vmatpush1.bf16.msra.mxu0 %v6732
    %7399 = vmatprep.subr.bf16.mxu0 %v6725
    %7400 = vmatpush1.bf16.msra.mxu0 %v6724
    %7401 = vmatprep.subr.bf16.mxu0 %v6717
    %7402 = vmatpush1.bf16.msra.mxu0 %v6716
    %7403 = vmatprep.subr.bf16.mxu0 %v6709
    %7404 = vmatpush1.bf16.msra.mxu0 %v6708
    %7405 = vmatprep.subr.bf16.mxu0 %v6829
    %7406 = vmatpush2.bf16.msra.mxu0 %v6828
    %7407 = vmatprep.subr.bf16.mxu0 %v6821
    %7408 = vmatpush2.bf16.msra.mxu0 %v6820
    %7409 = vmatprep.subr.bf16.mxu0 %v6813
    %7410 = vmatpush2.bf16.msra.mxu0 %v6812
    %7411 = vmatprep.subr.bf16.mxu0 %v6805
    %7412 = vmatpush2.bf16.msra.mxu0 %v6804
    %7413 = vmatprep.subr.bf16.mxu0 %v6797
    %7414 = vmatpush2.bf16.msra.mxu0 %v6796
    %7415 = vmatprep.subr.bf16.mxu0 %v6789
    %7416 = vmatpush2.bf16.msra.mxu0 %v6788
    %7417 = vmatprep.subr.bf16.mxu0 %v6781
    %7418 = vmatpush2.bf16.msra.mxu0 %v6780
    %7419 = vmatprep.subr.bf16.mxu0 %v6773
    %7420 = vmatpush2.bf16.msra.mxu0 %v6772
    %7421 = vmatprep.mubr.bf16.mxu0 %v5384
    %7422 = vmatmul.mubr.bf16.gmra.mxu0 %v5383
    %v7423 = vpop.f32.mrf.mxu0
    %v7424 = vadd.f32 %v7383, %v7423
    %v7425 = vpop.f32.mrf.mxu0
    %v7426 = vadd.f32 %v7385, %v7425
    %v7427 = vpop.f32.mrf.mxu0
    %v7428 = vpop.f32.mrf.mxu0
    %7429 = vdwg.mxu0
    %7430 = vmatprep.subr.bf16.mxu0 %v6893
    %7431 = vmatpush1.bf16.msra.mxu0 %v6892
    %7432 = vmatprep.subr.bf16.mxu0 %v6885
    %7433 = vmatpush1.bf16.msra.mxu0 %v6884
    %7434 = vmatprep.subr.bf16.mxu0 %v6877
    %7435 = vmatpush1.bf16.msra.mxu0 %v6876
    %7436 = vmatprep.subr.bf16.mxu0 %v6869
    %7437 = vmatpush1.bf16.msra.mxu0 %v6868
    %7438 = vmatprep.subr.bf16.mxu0 %v6861
    %7439 = vmatpush1.bf16.msra.mxu0 %v6860
    %7440 = vmatprep.subr.bf16.mxu0 %v6853
    %7441 = vmatpush1.bf16.msra.mxu0 %v6852
    %7442 = vmatprep.subr.bf16.mxu0 %v6845
    %7443 = vmatpush1.bf16.msra.mxu0 %v6844
    %7444 = vmatprep.subr.bf16.mxu0 %v6837
    %7445 = vmatpush1.bf16.msra.mxu0 %v6836
    %7446 = vmatprep.subr.bf16.mxu0 %v6957
    %7447 = vmatpush2.bf16.msra.mxu0 %v6956
    %7448 = vmatprep.subr.bf16.mxu0 %v6949
    %7449 = vmatpush2.bf16.msra.mxu0 %v6948
    %7450 = vmatprep.subr.bf16.mxu0 %v6941
    %7451 = vmatpush2.bf16.msra.mxu0 %v6940
    %7452 = vmatprep.subr.bf16.mxu0 %v6933
    %7453 = vmatpush2.bf16.msra.mxu0 %v6932
    %7454 = vmatprep.subr.bf16.mxu0 %v6925
    %7455 = vmatpush2.bf16.msra.mxu0 %v6924
    %7456 = vmatprep.subr.bf16.mxu0 %v6917
    %7457 = vmatpush2.bf16.msra.mxu0 %v6916
    %7458 = vmatprep.subr.bf16.mxu0 %v6909
    %7459 = vmatpush2.bf16.msra.mxu0 %v6908
    %7460 = vmatprep.subr.bf16.mxu0 %v6901
    %7461 = vmatpush2.bf16.msra.mxu0 %v6900
    %7462 = vmatprep.mubr.bf16.mxu0 %v5386
    %7463 = vmatmul.mubr.bf16.gmra.mxu0 %v5385
    %v7464 = vpop.f32.mrf.mxu0
    %v7465 = vadd.f32 %v7424, %v7464
    %v7466 = vpop.f32.mrf.mxu0
    %v7467 = vadd.f32 %v7426, %v7466
    %v7468 = vpop.f32.mrf.mxu0
    %v7469 = vpop.f32.mrf.mxu0
    %7470 = vdwg.mxu0
    %7471 = vmatprep.subr.bf16.mxu0 %v6639
    %7472 = vmatpush1.bf16.msra.mxu0 %v6638
    %7473 = vmatprep.subr.bf16.mxu0 %v6631
    %7474 = vmatpush1.bf16.msra.mxu0 %v6630
    %7475 = vmatprep.subr.bf16.mxu0 %v6623
    %7476 = vmatpush1.bf16.msra.mxu0 %v6622
    %7477 = vmatprep.subr.bf16.mxu0 %v6615
    %7478 = vmatpush1.bf16.msra.mxu0 %v6614
    %7479 = vmatprep.subr.bf16.mxu0 %v6607
    %7480 = vmatpush1.bf16.msra.mxu0 %v6606
    %7481 = vmatprep.subr.bf16.mxu0 %v6599
    %7482 = vmatpush1.bf16.msra.mxu0 %v6598
    %7483 = vmatprep.subr.bf16.mxu0 %v6591
    %7484 = vmatpush1.bf16.msra.mxu0 %v6590
    %7485 = vmatprep.subr.bf16.mxu0 %v6583
    %7486 = vmatpush1.bf16.msra.mxu0 %v6582
    %7487 = vmatprep.subr.bf16.mxu0 %v6703
    %7488 = vmatpush2.bf16.msra.mxu0 %v6702
    %7489 = vmatprep.subr.bf16.mxu0 %v6695
    %7490 = vmatpush2.bf16.msra.mxu0 %v6694
    %7491 = vmatprep.subr.bf16.mxu0 %v6687
    %7492 = vmatpush2.bf16.msra.mxu0 %v6686
    %7493 = vmatprep.subr.bf16.mxu0 %v6679
    %7494 = vmatpush2.bf16.msra.mxu0 %v6678
    %7495 = vmatprep.subr.bf16.mxu0 %v6671
    %7496 = vmatpush2.bf16.msra.mxu0 %v6670
    %7497 = vmatprep.subr.bf16.mxu0 %v6663
    %7498 = vmatpush2.bf16.msra.mxu0 %v6662
    %7499 = vmatprep.subr.bf16.mxu0 %v6655
    %7500 = vmatpush2.bf16.msra.mxu0 %v6654
    %7501 = vmatprep.subr.bf16.mxu0 %v6647
    %7502 = vmatpush2.bf16.msra.mxu0 %v6646
    %7503 = vmatprep.mubr.bf16.mxu0 %v5382
    %7504 = vmatmul.mubr.bf16.gmra.mxu0 %v5381
    %v7505 = vpop.f32.mrf.mxu0
    %v7506 = vadd.f32 %v5399, %v7505
    %v7507 = vpop.f32.mrf.mxu0
    %v7508 = vadd.f32 %v5403, %v7507
    %v7509 = vpop.f32.mrf.mxu0
    %v7510 = vpop.f32.mrf.mxu0
    %7511 = vdwg.mxu0
    %7512 = vmatprep.subr.bf16.mxu0 %v6767
    %7513 = vmatpush1.bf16.msra.mxu0 %v6766
    %7514 = vmatprep.subr.bf16.mxu0 %v6759
    %7515 = vmatpush1.bf16.msra.mxu0 %v6758
    %7516 = vmatprep.subr.bf16.mxu0 %v6751
    %7517 = vmatpush1.bf16.msra.mxu0 %v6750
    %7518 = vmatprep.subr.bf16.mxu0 %v6743
    %7519 = vmatpush1.bf16.msra.mxu0 %v6742
    %7520 = vmatprep.subr.bf16.mxu0 %v6735
    %7521 = vmatpush1.bf16.msra.mxu0 %v6734
    %7522 = vmatprep.subr.bf16.mxu0 %v6727
    %7523 = vmatpush1.bf16.msra.mxu0 %v6726
    %7524 = vmatprep.subr.bf16.mxu0 %v6719
    %7525 = vmatpush1.bf16.msra.mxu0 %v6718
    %7526 = vmatprep.subr.bf16.mxu0 %v6711
    %7527 = vmatpush1.bf16.msra.mxu0 %v6710
    %7528 = vmatprep.subr.bf16.mxu0 %v6831
    %7529 = vmatpush2.bf16.msra.mxu0 %v6830
    %7530 = vmatprep.subr.bf16.mxu0 %v6823
    %7531 = vmatpush2.bf16.msra.mxu0 %v6822
    %7532 = vmatprep.subr.bf16.mxu0 %v6815
    %7533 = vmatpush2.bf16.msra.mxu0 %v6814
    %7534 = vmatprep.subr.bf16.mxu0 %v6807
    %7535 = vmatpush2.bf16.msra.mxu0 %v6806
    %7536 = vmatprep.subr.bf16.mxu0 %v6799
    %7537 = vmatpush2.bf16.msra.mxu0 %v6798
    %7538 = vmatprep.subr.bf16.mxu0 %v6791
    %7539 = vmatpush2.bf16.msra.mxu0 %v6790
    %7540 = vmatprep.subr.bf16.mxu0 %v6783
    %7541 = vmatpush2.bf16.msra.mxu0 %v6782
    %7542 = vmatprep.subr.bf16.mxu0 %v6775
    %7543 = vmatpush2.bf16.msra.mxu0 %v6774
    %7544 = vmatprep.mubr.bf16.mxu0 %v5384
    %7545 = vmatmul.mubr.bf16.gmra.mxu0 %v5383
    %v7546 = vpop.f32.mrf.mxu0
    %v7547 = vadd.f32 %v7506, %v7546
    %v7548 = vpop.f32.mrf.mxu0
    %v7549 = vadd.f32 %v7508, %v7548
    %v7550 = vpop.f32.mrf.mxu0
    %v7551 = vpop.f32.mrf.mxu0
    %7552 = vdwg.mxu0
    %7553 = vmatprep.subr.bf16.mxu0 %v6895
    %7554 = vmatpush1.bf16.msra.mxu0 %v6894
    %7555 = vmatprep.subr.bf16.mxu0 %v6887
    %7556 = vmatpush1.bf16.msra.mxu0 %v6886
    %7557 = vmatprep.subr.bf16.mxu0 %v6879
    %7558 = vmatpush1.bf16.msra.mxu0 %v6878
    %7559 = vmatprep.subr.bf16.mxu0 %v6871
    %7560 = vmatpush1.bf16.msra.mxu0 %v6870
    %7561 = vmatprep.subr.bf16.mxu0 %v6863
    %7562 = vmatpush1.bf16.msra.mxu0 %v6862
    %7563 = vmatprep.subr.bf16.mxu0 %v6855
    %7564 = vmatpush1.bf16.msra.mxu0 %v6854
    %7565 = vmatprep.subr.bf16.mxu0 %v6847
    %7566 = vmatpush1.bf16.msra.mxu0 %v6846
    %7567 = vmatprep.subr.bf16.mxu0 %v6839
    %7568 = vmatpush1.bf16.msra.mxu0 %v6838
    %7569 = vmatprep.subr.bf16.mxu0 %v6959
    %7570 = vmatpush2.bf16.msra.mxu0 %v6958
    %7571 = vmatprep.subr.bf16.mxu0 %v6951
    %7572 = vmatpush2.bf16.msra.mxu0 %v6950
    %7573 = vmatprep.subr.bf16.mxu0 %v6943
    %7574 = vmatpush2.bf16.msra.mxu0 %v6942
    %7575 = vmatprep.subr.bf16.mxu0 %v6935
    %7576 = vmatpush2.bf16.msra.mxu0 %v6934
    %7577 = vmatprep.subr.bf16.mxu0 %v6927
    %7578 = vmatpush2.bf16.msra.mxu0 %v6926
    %7579 = vmatprep.subr.bf16.mxu0 %v6919
    %7580 = vmatpush2.bf16.msra.mxu0 %v6918
    %7581 = vmatprep.subr.bf16.mxu0 %v6911
    %7582 = vmatpush2.bf16.msra.mxu0 %v6910
    %7583 = vmatprep.subr.bf16.mxu0 %v6903
    %7584 = vmatpush2.bf16.msra.mxu0 %v6902
    %7585 = vmatprep.mubr.bf16.mxu0 %v5386
    %7586 = vmatmul.mubr.bf16.gmra.mxu0 %v5385
    %v7587 = vpop.f32.mrf.mxu0
    %v7588 = vadd.f32 %v7547, %v7587
    %v7589 = vpop.f32.mrf.mxu0
    %v7590 = vadd.f32 %v7549, %v7589
    %v7591 = vpop.f32.mrf.mxu0
    %v7592 = vpop.f32.mrf.mxu0
    %7593 = vdwg.mxu0
    %7594 = vmatprep.subr.bf16.mxu0 %v6641
    %7595 = vmatpush1.bf16.msra.mxu0 %v6640
    %7596 = vmatprep.subr.bf16.mxu0 %v6633
    %7597 = vmatpush1.bf16.msra.mxu0 %v6632
    %7598 = vmatprep.subr.bf16.mxu0 %v6625
    %7599 = vmatpush1.bf16.msra.mxu0 %v6624
    %7600 = vmatprep.subr.bf16.mxu0 %v6617
    %7601 = vmatpush1.bf16.msra.mxu0 %v6616
    %7602 = vmatprep.subr.bf16.mxu0 %v6609
    %7603 = vmatpush1.bf16.msra.mxu0 %v6608
    %7604 = vmatprep.subr.bf16.mxu0 %v6601
    %7605 = vmatpush1.bf16.msra.mxu0 %v6600
    %7606 = vmatprep.subr.bf16.mxu0 %v6593
    %7607 = vmatpush1.bf16.msra.mxu0 %v6592
    %7608 = vmatprep.subr.bf16.mxu0 %v6585
    %7609 = vmatpush1.bf16.msra.mxu0 %v6584
    %7610 = vmatprep.subr.bf16.mxu0 %v6705
    %7611 = vmatpush2.bf16.msra.mxu0 %v6704
    %7612 = vmatprep.subr.bf16.mxu0 %v6697
    %7613 = vmatpush2.bf16.msra.mxu0 %v6696
    %7614 = vmatprep.subr.bf16.mxu0 %v6689
    %7615 = vmatpush2.bf16.msra.mxu0 %v6688
    %7616 = vmatprep.subr.bf16.mxu0 %v6681
    %7617 = vmatpush2.bf16.msra.mxu0 %v6680
    %7618 = vmatprep.subr.bf16.mxu0 %v6673
    %7619 = vmatpush2.bf16.msra.mxu0 %v6672
    %7620 = vmatprep.subr.bf16.mxu0 %v6665
    %7621 = vmatpush2.bf16.msra.mxu0 %v6664
    %7622 = vmatprep.subr.bf16.mxu0 %v6657
    %7623 = vmatpush2.bf16.msra.mxu0 %v6656
    %7624 = vmatprep.subr.bf16.mxu0 %v6649
    %7625 = vmatpush2.bf16.msra.mxu0 %v6648
    %7626 = vmatprep.mubr.bf16.mxu0 %v5382
    %7627 = vmatmul.mubr.bf16.gmra.mxu0 %v5381
    %v7628 = vpop.f32.mrf.mxu0
    %v7629 = vadd.f32 %v5407, %v7628
    %v7630 = vpop.f32.mrf.mxu0
    %v7631 = vadd.f32 %v5411, %v7630
    %v7632 = vpop.f32.mrf.mxu0
    %v7633 = vpop.f32.mrf.mxu0
    %7634 = vdwg.mxu0
    %7635 = vmatprep.subr.bf16.mxu0 %v6769
    %7636 = vmatpush1.bf16.msra.mxu0 %v6768
    %7637 = vmatprep.subr.bf16.mxu0 %v6761
    %7638 = vmatpush1.bf16.msra.mxu0 %v6760
    %7639 = vmatprep.subr.bf16.mxu0 %v6753
    %7640 = vmatpush1.bf16.msra.mxu0 %v6752
    %7641 = vmatprep.subr.bf16.mxu0 %v6745
    %7642 = vmatpush1.bf16.msra.mxu0 %v6744
    %7643 = vmatprep.subr.bf16.mxu0 %v6737
    %7644 = vmatpush1.bf16.msra.mxu0 %v6736
    %7645 = vmatprep.subr.bf16.mxu0 %v6729
    %7646 = vmatpush1.bf16.msra.mxu0 %v6728
    %7647 = vmatprep.subr.bf16.mxu0 %v6721
    %7648 = vmatpush1.bf16.msra.mxu0 %v6720
    %7649 = vmatprep.subr.bf16.mxu0 %v6713
    %7650 = vmatpush1.bf16.msra.mxu0 %v6712
    %7651 = vmatprep.subr.bf16.mxu0 %v6833
    %7652 = vmatpush2.bf16.msra.mxu0 %v6832
    %7653 = vmatprep.subr.bf16.mxu0 %v6825
    %7654 = vmatpush2.bf16.msra.mxu0 %v6824
    %7655 = vmatprep.subr.bf16.mxu0 %v6817
    %7656 = vmatpush2.bf16.msra.mxu0 %v6816
    %7657 = vmatprep.subr.bf16.mxu0 %v6809
    %7658 = vmatpush2.bf16.msra.mxu0 %v6808
    %7659 = vmatprep.subr.bf16.mxu0 %v6801
    %7660 = vmatpush2.bf16.msra.mxu0 %v6800
    %7661 = vmatprep.subr.bf16.mxu0 %v6793
    %7662 = vmatpush2.bf16.msra.mxu0 %v6792
    %7663 = vmatprep.subr.bf16.mxu0 %v6785
    %7664 = vmatpush2.bf16.msra.mxu0 %v6784
    %7665 = vmatprep.subr.bf16.mxu0 %v6777
    %7666 = vmatpush2.bf16.msra.mxu0 %v6776
    %7667 = vmatprep.mubr.bf16.mxu0 %v5384
    %7668 = vmatmul.mubr.bf16.gmra.mxu0 %v5383
    %v7669 = vpop.f32.mrf.mxu0
    %v7670 = vadd.f32 %v7629, %v7669
    %v7671 = vpop.f32.mrf.mxu0
    %v7672 = vadd.f32 %v7631, %v7671
    %v7673 = vpop.f32.mrf.mxu0
    %v7674 = vpop.f32.mrf.mxu0
    %7675 = vdwg.mxu0
    %7676 = vmatprep.subr.bf16.mxu0 %v6897
    %7677 = vmatpush1.bf16.msra.mxu0 %v6896
    %7678 = vmatprep.subr.bf16.mxu0 %v6889
    %7679 = vmatpush1.bf16.msra.mxu0 %v6888
    %7680 = vmatprep.subr.bf16.mxu0 %v6881
    %7681 = vmatpush1.bf16.msra.mxu0 %v6880
    %7682 = vmatprep.subr.bf16.mxu0 %v6873
    %7683 = vmatpush1.bf16.msra.mxu0 %v6872
    %7684 = vmatprep.subr.bf16.mxu0 %v6865
    %7685 = vmatpush1.bf16.msra.mxu0 %v6864
    %7686 = vmatprep.subr.bf16.mxu0 %v6857
    %7687 = vmatpush1.bf16.msra.mxu0 %v6856
    %7688 = vmatprep.subr.bf16.mxu0 %v6849
    %7689 = vmatpush1.bf16.msra.mxu0 %v6848
    %7690 = vmatprep.subr.bf16.mxu0 %v6841
    %7691 = vmatpush1.bf16.msra.mxu0 %v6840
    %7692 = vmatprep.subr.bf16.mxu0 %v6961
    %7693 = vmatpush2.bf16.msra.mxu0 %v6960
    %7694 = vmatprep.subr.bf16.mxu0 %v6953
    %7695 = vmatpush2.bf16.msra.mxu0 %v6952
    %7696 = vmatprep.subr.bf16.mxu0 %v6945
    %7697 = vmatpush2.bf16.msra.mxu0 %v6944
    %7698 = vmatprep.subr.bf16.mxu0 %v6937
    %7699 = vmatpush2.bf16.msra.mxu0 %v6936
    %7700 = vmatprep.subr.bf16.mxu0 %v6929
    %7701 = vmatpush2.bf16.msra.mxu0 %v6928
    %7702 = vmatprep.subr.bf16.mxu0 %v6921
    %7703 = vmatpush2.bf16.msra.mxu0 %v6920
    %7704 = vmatprep.subr.bf16.mxu0 %v6913
    %7705 = vmatpush2.bf16.msra.mxu0 %v6912
    %7706 = vmatprep.subr.bf16.mxu0 %v6905
    %7707 = vmatpush2.bf16.msra.mxu0 %v6904
    %7708 = vmatprep.mubr.bf16.mxu0 %v5386
    %7709 = vmatmul.mubr.bf16.gmra.mxu0 %v5385
    %v7710 = vpop.f32.mrf.mxu0
    %v7711 = vadd.f32 %v7670, %v7710
    %v7712 = vpop.f32.mrf.mxu0
    %v7713 = vadd.f32 %v7672, %v7712
    %v7714 = vpop.f32.mrf.mxu0
    %v7715 = vpop.f32.mrf.mxu0
    %7716 = vdwg.mxu0
    %7717 = vmatprep.subr.bf16.mxu0 %v6643
    %7718 = vmatpush1.bf16.msra.mxu0 %v6642
    %7719 = vmatprep.subr.bf16.mxu0 %v6635
    %7720 = vmatpush1.bf16.msra.mxu0 %v6634
    %7721 = vmatprep.subr.bf16.mxu0 %v6627
    %7722 = vmatpush1.bf16.msra.mxu0 %v6626
    %7723 = vmatprep.subr.bf16.mxu0 %v6619
    %7724 = vmatpush1.bf16.msra.mxu0 %v6618
    %7725 = vmatprep.subr.bf16.mxu0 %v6611
    %7726 = vmatpush1.bf16.msra.mxu0 %v6610
    %7727 = vmatprep.subr.bf16.mxu0 %v6603
    %7728 = vmatpush1.bf16.msra.mxu0 %v6602
    %7729 = vmatprep.subr.bf16.mxu0 %v6595
    %7730 = vmatpush1.bf16.msra.mxu0 %v6594
    %7731 = vmatprep.subr.bf16.mxu0 %v6587
    %7732 = vmatpush1.bf16.msra.mxu0 %v6586
    %7733 = vmatprep.subr.bf16.mxu0 %v6707
    %7734 = vmatpush2.bf16.msra.mxu0 %v6706
    %7735 = vmatprep.subr.bf16.mxu0 %v6699
    %7736 = vmatpush2.bf16.msra.mxu0 %v6698
    %7737 = vmatprep.subr.bf16.mxu0 %v6691
    %7738 = vmatpush2.bf16.msra.mxu0 %v6690
    %7739 = vmatprep.subr.bf16.mxu0 %v6683
    %7740 = vmatpush2.bf16.msra.mxu0 %v6682
    %7741 = vmatprep.subr.bf16.mxu0 %v6675
    %7742 = vmatpush2.bf16.msra.mxu0 %v6674
    %7743 = vmatprep.subr.bf16.mxu0 %v6667
    %7744 = vmatpush2.bf16.msra.mxu0 %v6666
    %7745 = vmatprep.subr.bf16.mxu0 %v6659
    %7746 = vmatpush2.bf16.msra.mxu0 %v6658
    %7747 = vmatprep.subr.bf16.mxu0 %v6651
    %7748 = vmatpush2.bf16.msra.mxu0 %v6650
    %7749 = vmatprep.mubr.bf16.mxu0 %v5382
    %7750 = vmatmul.mubr.bf16.gmra.mxu0 %v5381
    %v7751 = vpop.f32.mrf.mxu0
    %v7752 = vadd.f32 %v5415, %v7751
    %v7753 = vpop.f32.mrf.mxu0
    %v7754 = vadd.f32 %v5419, %v7753
    %v7755 = vpop.f32.mrf.mxu0
    %v7756 = vpop.f32.mrf.mxu0
    %7757 = vdwg.mxu0
    %7758 = vmatprep.subr.bf16.mxu0 %v6771
    %7759 = vmatpush1.bf16.msra.mxu0 %v6770
    %7760 = vmatprep.subr.bf16.mxu0 %v6763
    %7761 = vmatpush1.bf16.msra.mxu0 %v6762
    %7762 = vmatprep.subr.bf16.mxu0 %v6755
    %7763 = vmatpush1.bf16.msra.mxu0 %v6754
    %7764 = vmatprep.subr.bf16.mxu0 %v6747
    %7765 = vmatpush1.bf16.msra.mxu0 %v6746
    %7766 = vmatprep.subr.bf16.mxu0 %v6739
    %7767 = vmatpush1.bf16.msra.mxu0 %v6738
    %7768 = vmatprep.subr.bf16.mxu0 %v6731
    %7769 = vmatpush1.bf16.msra.mxu0 %v6730
    %7770 = vmatprep.subr.bf16.mxu0 %v6723
    %7771 = vmatpush1.bf16.msra.mxu0 %v6722
    %7772 = vmatprep.subr.bf16.mxu0 %v6715
    %7773 = vmatpush1.bf16.msra.mxu0 %v6714
    %7774 = vmatprep.subr.bf16.mxu0 %v6835
    %7775 = vmatpush2.bf16.msra.mxu0 %v6834
    %7776 = vmatprep.subr.bf16.mxu0 %v6827
    %7777 = vmatpush2.bf16.msra.mxu0 %v6826
    %7778 = vmatprep.subr.bf16.mxu0 %v6819
    %7779 = vmatpush2.bf16.msra.mxu0 %v6818
    %7780 = vmatprep.subr.bf16.mxu0 %v6811
    %7781 = vmatpush2.bf16.msra.mxu0 %v6810
    %7782 = vmatprep.subr.bf16.mxu0 %v6803
    %7783 = vmatpush2.bf16.msra.mxu0 %v6802
    %7784 = vmatprep.subr.bf16.mxu0 %v6795
    %7785 = vmatpush2.bf16.msra.mxu0 %v6794
    %7786 = vmatprep.subr.bf16.mxu0 %v6787
    %7787 = vmatpush2.bf16.msra.mxu0 %v6786
    %7788 = vmatprep.subr.bf16.mxu0 %v6779
    %7789 = vmatpush2.bf16.msra.mxu0 %v6778
    %7790 = vmatprep.mubr.bf16.mxu0 %v5384
    %7791 = vmatmul.mubr.bf16.gmra.mxu0 %v5383
    %v7792 = vpop.f32.mrf.mxu0
    %v7793 = vadd.f32 %v7752, %v7792
    %v7794 = vpop.f32.mrf.mxu0
    %v7795 = vadd.f32 %v7754, %v7794
    %v7796 = vpop.f32.mrf.mxu0
    %v7797 = vpop.f32.mrf.mxu0
    %7798 = vdwg.mxu0
    %7799 = vmatprep.subr.bf16.mxu0 %v6899
    %7800 = vmatpush1.bf16.msra.mxu0 %v6898
    %7801 = vmatprep.subr.bf16.mxu0 %v6891
    %7802 = vmatpush1.bf16.msra.mxu0 %v6890
    %7803 = vmatprep.subr.bf16.mxu0 %v6883
    %7804 = vmatpush1.bf16.msra.mxu0 %v6882
    %7805 = vmatprep.subr.bf16.mxu0 %v6875
    %7806 = vmatpush1.bf16.msra.mxu0 %v6874
    %7807 = vmatprep.subr.bf16.mxu0 %v6867
    %7808 = vmatpush1.bf16.msra.mxu0 %v6866
    %7809 = vmatprep.subr.bf16.mxu0 %v6859
    %7810 = vmatpush1.bf16.msra.mxu0 %v6858
    %7811 = vmatprep.subr.bf16.mxu0 %v6851
    %7812 = vmatpush1.bf16.msra.mxu0 %v6850
    %7813 = vmatprep.subr.bf16.mxu0 %v6843
    %7814 = vmatpush1.bf16.msra.mxu0 %v6842
    %7815 = vmatprep.subr.bf16.mxu0 %v6963
    %7816 = vmatpush2.bf16.msra.mxu0 %v6962
    %7817 = vmatprep.subr.bf16.mxu0 %v6955
    %7818 = vmatpush2.bf16.msra.mxu0 %v6954
    %7819 = vmatprep.subr.bf16.mxu0 %v6947
    %7820 = vmatpush2.bf16.msra.mxu0 %v6946
    %7821 = vmatprep.subr.bf16.mxu0 %v6939
    %7822 = vmatpush2.bf16.msra.mxu0 %v6938
    %7823 = vmatprep.subr.bf16.mxu0 %v6931
    %7824 = vmatpush2.bf16.msra.mxu0 %v6930
    %7825 = vmatprep.subr.bf16.mxu0 %v6923
    %7826 = vmatpush2.bf16.msra.mxu0 %v6922
    %7827 = vmatprep.subr.bf16.mxu0 %v6915
    %7828 = vmatpush2.bf16.msra.mxu0 %v6914
    %7829 = vmatprep.subr.bf16.mxu0 %v6907
    %7830 = vmatpush2.bf16.msra.mxu0 %v6906
    %7831 = vmatprep.mubr.bf16.mxu0 %v5386
    %7832 = vmatmul.mubr.bf16.gmra.mxu0 %v5385
    %v7833 = vpop.f32.mrf.mxu0
    %v7834 = vadd.f32 %v7793, %v7833
    %v7835 = vpop.f32.mrf.mxu0
    %v7836 = vadd.f32 %v7795, %v7835
    %v7837 = vpop.f32.mrf.mxu0
    %v7838 = vpop.f32.mrf.mxu0
    %7839 = vdwg.mxu0
    %v7840 = vmax.f32 %v7465, 0.0
    %v7841 = vmax.f32 %v7467, 0.0
    %v7842 = vmax.f32 %v7588, 0.0
    %v7843 = vmax.f32 %v7590, 0.0
    %v7844 = vmax.f32 %v7711, 0.0
    %v7845 = vmax.f32 %v7713, 0.0
    %v7846 = vmax.f32 %v7834, 0.0
    %v7847 = vmax.f32 %v7836, 0.0
    %s7848 = sshll.u32 %s2124, 4
    %7849 = dma.done %s173, %s7848
    %v7850 = vld [vmem:[#allocation6] sm:$0xff]
    %v7851 = vld [vmem:[#allocation6 + $0x8] sm:$0xff]
    %v7852 = vld [vmem:[#allocation6 + $0x10] sm:$0xff]
    %v7853 = vld [vmem:[#allocation6 + $0x18] sm:$0xff]
    %v7854 = vld [vmem:[#allocation6 + $0x20] sm:$0xff]
    %v7855 = vld [vmem:[#allocation6 + $0x28] sm:$0xff]
    %v7856 = vld [vmem:[#allocation6 + $0x30] sm:$0xff]
    %v7857 = vld [vmem:[#allocation6 + $0x38] sm:$0xff]
    %v7858 = vld [vmem:[#allocation6 + $0x40] sm:$0xff]
    %v7859 = vld [vmem:[#allocation6 + $0x48] sm:$0xff]
    %v7860 = vld [vmem:[#allocation6 + $0x50] sm:$0xff]
    %v7861 = vld [vmem:[#allocation6 + $0x58] sm:$0xff]
    %v7862 = vld [vmem:[#allocation6 + $0x60] sm:$0xff]
    %v7863 = vld [vmem:[#allocation6 + $0x68] sm:$0xff]
    %v7864 = vld [vmem:[#allocation6 + $0x70] sm:$0xff]
    %v7865 = vld [vmem:[#allocation6 + $0x78] sm:$0xff]
    %v7866 = vld [vmem:[#allocation6 + $0x80] sm:$0xff]
    %v7867 = vld [vmem:[#allocation6 + $0x88] sm:$0xff]
    %v7868 = vld [vmem:[#allocation6 + $0x90] sm:$0xff]
    %v7869 = vld [vmem:[#allocation6 + $0x98] sm:$0xff]
    %v7870 = vld [vmem:[#allocation6 + $0xa0] sm:$0xff]
    %v7871 = vld [vmem:[#allocation6 + $0xa8] sm:$0xff]
    %v7872 = vld [vmem:[#allocation6 + $0xb0] sm:$0xff]
    %v7873 = vld [vmem:[#allocation6 + $0xb8] sm:$0xff]
    %v7874 = vld [vmem:[#allocation6 + $0xc0] sm:$0xff]
    %v7875 = vld [vmem:[#allocation6 + $0xc8] sm:$0xff]
    %v7876 = vld [vmem:[#allocation6 + $0xd0] sm:$0xff]
    %v7877 = vld [vmem:[#allocation6 + $0xd8] sm:$0xff]
    %v7878 = vld [vmem:[#allocation6 + $0xe0] sm:$0xff]
    %v7879 = vld [vmem:[#allocation6 + $0xe8] sm:$0xff]
    %v7880 = vld [vmem:[#allocation6 + $0xf0] sm:$0xff]
    %v7881 = vld [vmem:[#allocation6 + $0xf8] sm:$0xff]
    %v7882 = vld [vmem:[#allocation6 + $0x100] sm:$0xff]
    %v7883 = vld [vmem:[#allocation6 + $0x108] sm:$0xff]
    %v7884 = vld [vmem:[#allocation6 + $0x110] sm:$0xff]
    %v7885 = vld [vmem:[#allocation6 + $0x118] sm:$0xff]
    %v7886 = vld [vmem:[#allocation6 + $0x120] sm:$0xff]
    %v7887 = vld [vmem:[#allocation6 + $0x128] sm:$0xff]
    %v7888 = vld [vmem:[#allocation6 + $0x130] sm:$0xff]
    %v7889 = vld [vmem:[#allocation6 + $0x138] sm:$0xff]
    %v7890 = vld [vmem:[#allocation6 + $0x140] sm:$0xff]
    %v7891 = vld [vmem:[#allocation6 + $0x148] sm:$0xff]
    %v7892 = vld [vmem:[#allocation6 + $0x150] sm:$0xff]
    %v7893 = vld [vmem:[#allocation6 + $0x158] sm:$0xff]
    %v7894 = vld [vmem:[#allocation6 + $0x160] sm:$0xff]
    %v7895 = vld [vmem:[#allocation6 + $0x168] sm:$0xff]
    %v7896 = vld [vmem:[#allocation6 + $0x170] sm:$0xff]
    %v7897 = vld [vmem:[#allocation6 + $0x178] sm:$0xff]
    %v7898 = vld [vmem:[#allocation6 + $0x180] sm:$0xff]
    %v7899 = vld [vmem:[#allocation6 + $0x188] sm:$0xff]
    %v7900 = vld [vmem:[#allocation6 + $0x190] sm:$0xff]
    %v7901 = vld [vmem:[#allocation6 + $0x198] sm:$0xff]
    %v7902 = vld [vmem:[#allocation6 + $0x1a0] sm:$0xff]
    %v7903 = vld [vmem:[#allocation6 + $0x1a8] sm:$0xff]
    %v7904 = vld [vmem:[#allocation6 + $0x1b0] sm:$0xff]
    %v7905 = vld [vmem:[#allocation6 + $0x1b8] sm:$0xff]
    %v7906 = vld [vmem:[#allocation6 + $0x1c0] sm:$0xff]
    %v7907 = vld [vmem:[#allocation6 + $0x1c8] sm:$0xff]
    %v7908 = vld [vmem:[#allocation6 + $0x1d0] sm:$0xff]
    %v7909 = vld [vmem:[#allocation6 + $0x1d8] sm:$0xff]
    %v7910 = vld [vmem:[#allocation6 + $0x1e0] sm:$0xff]
    %v7911 = vld [vmem:[#allocation6 + $0x1e8] sm:$0xff]
    %v7912 = vld [vmem:[#allocation6 + $0x1f0] sm:$0xff]
    %v7913 = vld [vmem:[#allocation6 + $0x1f8] sm:$0xff]
    %v7914 = vld [vmem:[#allocation6 + $0x200] sm:$0xff]
    %v7915 = vld [vmem:[#allocation6 + $0x208] sm:$0xff]
    %v7916 = vld [vmem:[#allocation6 + $0x210] sm:$0xff]
    %v7917 = vld [vmem:[#allocation6 + $0x218] sm:$0xff]
    %v7918 = vld [vmem:[#allocation6 + $0x220] sm:$0xff]
    %v7919 = vld [vmem:[#allocation6 + $0x228] sm:$0xff]
    %v7920 = vld [vmem:[#allocation6 + $0x230] sm:$0xff]
    %v7921 = vld [vmem:[#allocation6 + $0x238] sm:$0xff]
    %v7922 = vld [vmem:[#allocation6 + $0x240] sm:$0xff]
    %v7923 = vld [vmem:[#allocation6 + $0x248] sm:$0xff]
    %v7924 = vld [vmem:[#allocation6 + $0x250] sm:$0xff]
    %v7925 = vld [vmem:[#allocation6 + $0x258] sm:$0xff]
    %v7926 = vld [vmem:[#allocation6 + $0x260] sm:$0xff]
    %v7927 = vld [vmem:[#allocation6 + $0x268] sm:$0xff]
    %v7928 = vld [vmem:[#allocation6 + $0x270] sm:$0xff]
    %v7929 = vld [vmem:[#allocation6 + $0x278] sm:$0xff]
    %v7930 = vld [vmem:[#allocation6 + $0x280] sm:$0xff]
    %v7931 = vld [vmem:[#allocation6 + $0x288] sm:$0xff]
    %v7932 = vld [vmem:[#allocation6 + $0x290] sm:$0xff]
    %v7933 = vld [vmem:[#allocation6 + $0x298] sm:$0xff]
    %v7934 = vld [vmem:[#allocation6 + $0x2a0] sm:$0xff]
    %v7935 = vld [vmem:[#allocation6 + $0x2a8] sm:$0xff]
    %v7936 = vld [vmem:[#allocation6 + $0x2b0] sm:$0xff]
    %v7937 = vld [vmem:[#allocation6 + $0x2b8] sm:$0xff]
    %v7938 = vld [vmem:[#allocation6 + $0x2c0] sm:$0xff]
    %v7939 = vld [vmem:[#allocation6 + $0x2c8] sm:$0xff]
    %v7940 = vld [vmem:[#allocation6 + $0x2d0] sm:$0xff]
    %v7941 = vld [vmem:[#allocation6 + $0x2d8] sm:$0xff]
    %v7942 = vld [vmem:[#allocation6 + $0x2e0] sm:$0xff]
    %v7943 = vld [vmem:[#allocation6 + $0x2e8] sm:$0xff]
    %v7944 = vld [vmem:[#allocation6 + $0x2f0] sm:$0xff]
    %v7945 = vld [vmem:[#allocation6 + $0x2f8] sm:$0xff]
    %v7946 = vld [vmem:[#allocation6 + $0x300] sm:$0xff]
    %v7947 = vld [vmem:[#allocation6 + $0x308] sm:$0xff]
    %v7948 = vld [vmem:[#allocation6 + $0x310] sm:$0xff]
    %v7949 = vld [vmem:[#allocation6 + $0x318] sm:$0xff]
    %v7950 = vld [vmem:[#allocation6 + $0x320] sm:$0xff]
    %v7951 = vld [vmem:[#allocation6 + $0x328] sm:$0xff]
    %v7952 = vld [vmem:[#allocation6 + $0x330] sm:$0xff]
    %v7953 = vld [vmem:[#allocation6 + $0x338] sm:$0xff]
    %v7954 = vld [vmem:[#allocation6 + $0x340] sm:$0xff]
    %v7955 = vld [vmem:[#allocation6 + $0x348] sm:$0xff]
    %v7956 = vld [vmem:[#allocation6 + $0x350] sm:$0xff]
    %v7957 = vld [vmem:[#allocation6 + $0x358] sm:$0xff]
    %v7958 = vld [vmem:[#allocation6 + $0x360] sm:$0xff]
    %v7959 = vld [vmem:[#allocation6 + $0x368] sm:$0xff]
    %v7960 = vld [vmem:[#allocation6 + $0x370] sm:$0xff]
    %v7961 = vld [vmem:[#allocation6 + $0x378] sm:$0xff]
    %v7962 = vld [vmem:[#allocation6 + $0x380] sm:$0xff]
    %v7963 = vld [vmem:[#allocation6 + $0x388] sm:$0xff]
    %v7964 = vld [vmem:[#allocation6 + $0x390] sm:$0xff]
    %v7965 = vld [vmem:[#allocation6 + $0x398] sm:$0xff]
    %v7966 = vld [vmem:[#allocation6 + $0x3a0] sm:$0xff]
    %v7967 = vld [vmem:[#allocation6 + $0x3a8] sm:$0xff]
    %v7968 = vld [vmem:[#allocation6 + $0x3b0] sm:$0xff]
    %v7969 = vld [vmem:[#allocation6 + $0x3b8] sm:$0xff]
    %v7970 = vld [vmem:[#allocation6 + $0x3c0] sm:$0xff]
    %v7971 = vld [vmem:[#allocation6 + $0x3c8] sm:$0xff]
    %v7972 = vld [vmem:[#allocation6 + $0x3d0] sm:$0xff]
    %v7973 = vld [vmem:[#allocation6 + $0x3d8] sm:$0xff]
    %v7974 = vld [vmem:[#allocation6 + $0x3e0] sm:$0xff]
    %v7975 = vld [vmem:[#allocation6 + $0x3e8] sm:$0xff]
    %v7976 = vld [vmem:[#allocation6 + $0x3f0] sm:$0xff]
    %v7977 = vld [vmem:[#allocation6 + $0x3f8] sm:$0xff]
    %v7978 = vld [vmem:[#allocation6 + $0x400] sm:$0xff]
    %v7979 = vld [vmem:[#allocation6 + $0x408] sm:$0xff]
    %v7980 = vld [vmem:[#allocation6 + $0x410] sm:$0xff]
    %v7981 = vld [vmem:[#allocation6 + $0x418] sm:$0xff]
    %v7982 = vld [vmem:[#allocation6 + $0x420] sm:$0xff]
    %v7983 = vld [vmem:[#allocation6 + $0x428] sm:$0xff]
    %v7984 = vld [vmem:[#allocation6 + $0x430] sm:$0xff]
    %v7985 = vld [vmem:[#allocation6 + $0x438] sm:$0xff]
    %v7986 = vld [vmem:[#allocation6 + $0x440] sm:$0xff]
    %v7987 = vld [vmem:[#allocation6 + $0x448] sm:$0xff]
    %v7988 = vld [vmem:[#allocation6 + $0x450] sm:$0xff]
    %v7989 = vld [vmem:[#allocation6 + $0x458] sm:$0xff]
    %v7990 = vld [vmem:[#allocation6 + $0x460] sm:$0xff]
    %v7991 = vld [vmem:[#allocation6 + $0x468] sm:$0xff]
    %v7992 = vld [vmem:[#allocation6 + $0x470] sm:$0xff]
    %v7993 = vld [vmem:[#allocation6 + $0x478] sm:$0xff]
    %v7994 = vld [vmem:[#allocation6 + $0x480] sm:$0xff]
    %v7995 = vld [vmem:[#allocation6 + $0x488] sm:$0xff]
    %v7996 = vld [vmem:[#allocation6 + $0x490] sm:$0xff]
    %v7997 = vld [vmem:[#allocation6 + $0x498] sm:$0xff]
    %v7998 = vld [vmem:[#allocation6 + $0x4a0] sm:$0xff]
    %v7999 = vld [vmem:[#allocation6 + $0x4a8] sm:$0xff]
    %v8000 = vld [vmem:[#allocation6 + $0x4b0] sm:$0xff]
    %v8001 = vld [vmem:[#allocation6 + $0x4b8] sm:$0xff]
    %v8002 = vld [vmem:[#allocation6 + $0x4c0] sm:$0xff]
    %v8003 = vld [vmem:[#allocation6 + $0x4c8] sm:$0xff]
    %v8004 = vld [vmem:[#allocation6 + $0x4d0] sm:$0xff]
    %v8005 = vld [vmem:[#allocation6 + $0x4d8] sm:$0xff]
    %v8006 = vld [vmem:[#allocation6 + $0x4e0] sm:$0xff]
    %v8007 = vld [vmem:[#allocation6 + $0x4e8] sm:$0xff]
    %v8008 = vld [vmem:[#allocation6 + $0x4f0] sm:$0xff]
    %v8009 = vld [vmem:[#allocation6 + $0x4f8] sm:$0xff]
    %v8010 = vld [vmem:[#allocation6 + $0x500] sm:$0xff]
    %v8011 = vld [vmem:[#allocation6 + $0x508] sm:$0xff]
    %v8012 = vld [vmem:[#allocation6 + $0x510] sm:$0xff]
    %v8013 = vld [vmem:[#allocation6 + $0x518] sm:$0xff]
    %v8014 = vld [vmem:[#allocation6 + $0x520] sm:$0xff]
    %v8015 = vld [vmem:[#allocation6 + $0x528] sm:$0xff]
    %v8016 = vld [vmem:[#allocation6 + $0x530] sm:$0xff]
    %v8017 = vld [vmem:[#allocation6 + $0x538] sm:$0xff]
    %v8018 = vld [vmem:[#allocation6 + $0x540] sm:$0xff]
    %v8019 = vld [vmem:[#allocation6 + $0x548] sm:$0xff]
    %v8020 = vld [vmem:[#allocation6 + $0x550] sm:$0xff]
    %v8021 = vld [vmem:[#allocation6 + $0x558] sm:$0xff]
    %v8022 = vld [vmem:[#allocation6 + $0x560] sm:$0xff]
    %v8023 = vld [vmem:[#allocation6 + $0x568] sm:$0xff]
    %v8024 = vld [vmem:[#allocation6 + $0x570] sm:$0xff]
    %v8025 = vld [vmem:[#allocation6 + $0x578] sm:$0xff]
    %v8026 = vld [vmem:[#allocation6 + $0x580] sm:$0xff]
    %v8027 = vld [vmem:[#allocation6 + $0x588] sm:$0xff]
    %v8028 = vld [vmem:[#allocation6 + $0x590] sm:$0xff]
    %v8029 = vld [vmem:[#allocation6 + $0x598] sm:$0xff]
    %v8030 = vld [vmem:[#allocation6 + $0x5a0] sm:$0xff]
    %v8031 = vld [vmem:[#allocation6 + $0x5a8] sm:$0xff]
    %v8032 = vld [vmem:[#allocation6 + $0x5b0] sm:$0xff]
    %v8033 = vld [vmem:[#allocation6 + $0x5b8] sm:$0xff]
    %v8034 = vld [vmem:[#allocation6 + $0x5c0] sm:$0xff]
    %v8035 = vld [vmem:[#allocation6 + $0x5c8] sm:$0xff]
    %v8036 = vld [vmem:[#allocation6 + $0x5d0] sm:$0xff]
    %v8037 = vld [vmem:[#allocation6 + $0x5d8] sm:$0xff]
    %v8038 = vld [vmem:[#allocation6 + $0x5e0] sm:$0xff]
    %v8039 = vld [vmem:[#allocation6 + $0x5e8] sm:$0xff]
    %v8040 = vld [vmem:[#allocation6 + $0x5f0] sm:$0xff]
    %v8041 = vld [vmem:[#allocation6 + $0x5f8] sm:$0xff]
    %v8042 = vld [vmem:[#allocation6 + $0x600] sm:$0xff]
    %v8043 = vld [vmem:[#allocation6 + $0x608] sm:$0xff]
    %v8044 = vld [vmem:[#allocation6 + $0x610] sm:$0xff]
    %v8045 = vld [vmem:[#allocation6 + $0x618] sm:$0xff]
    %v8046 = vld [vmem:[#allocation6 + $0x620] sm:$0xff]
    %v8047 = vld [vmem:[#allocation6 + $0x628] sm:$0xff]
    %v8048 = vld [vmem:[#allocation6 + $0x630] sm:$0xff]
    %v8049 = vld [vmem:[#allocation6 + $0x638] sm:$0xff]
    %v8050 = vld [vmem:[#allocation6 + $0x640] sm:$0xff]
    %v8051 = vld [vmem:[#allocation6 + $0x648] sm:$0xff]
    %v8052 = vld [vmem:[#allocation6 + $0x650] sm:$0xff]
    %v8053 = vld [vmem:[#allocation6 + $0x658] sm:$0xff]
    %v8054 = vld [vmem:[#allocation6 + $0x660] sm:$0xff]
    %v8055 = vld [vmem:[#allocation6 + $0x668] sm:$0xff]
    %v8056 = vld [vmem:[#allocation6 + $0x670] sm:$0xff]
    %v8057 = vld [vmem:[#allocation6 + $0x678] sm:$0xff]
    %v8058 = vld [vmem:[#allocation6 + $0x680] sm:$0xff]
    %v8059 = vld [vmem:[#allocation6 + $0x688] sm:$0xff]
    %v8060 = vld [vmem:[#allocation6 + $0x690] sm:$0xff]
    %v8061 = vld [vmem:[#allocation6 + $0x698] sm:$0xff]
    %v8062 = vld [vmem:[#allocation6 + $0x6a0] sm:$0xff]
    %v8063 = vld [vmem:[#allocation6 + $0x6a8] sm:$0xff]
    %v8064 = vld [vmem:[#allocation6 + $0x6b0] sm:$0xff]
    %v8065 = vld [vmem:[#allocation6 + $0x6b8] sm:$0xff]
    %v8066 = vld [vmem:[#allocation6 + $0x6c0] sm:$0xff]
    %v8067 = vld [vmem:[#allocation6 + $0x6c8] sm:$0xff]
    %v8068 = vld [vmem:[#allocation6 + $0x6d0] sm:$0xff]
    %v8069 = vld [vmem:[#allocation6 + $0x6d8] sm:$0xff]
    %v8070 = vld [vmem:[#allocation6 + $0x6e0] sm:$0xff]
    %v8071 = vld [vmem:[#allocation6 + $0x6e8] sm:$0xff]
    %v8072 = vld [vmem:[#allocation6 + $0x6f0] sm:$0xff]
    %v8073 = vld [vmem:[#allocation6 + $0x6f8] sm:$0xff]
    %v8074 = vld [vmem:[#allocation6 + $0x700] sm:$0xff]
    %v8075 = vld [vmem:[#allocation6 + $0x708] sm:$0xff]
    %v8076 = vld [vmem:[#allocation6 + $0x710] sm:$0xff]
    %v8077 = vld [vmem:[#allocation6 + $0x718] sm:$0xff]
    %v8078 = vld [vmem:[#allocation6 + $0x720] sm:$0xff]
    %v8079 = vld [vmem:[#allocation6 + $0x728] sm:$0xff]
    %v8080 = vld [vmem:[#allocation6 + $0x730] sm:$0xff]
    %v8081 = vld [vmem:[#allocation6 + $0x738] sm:$0xff]
    %v8082 = vld [vmem:[#allocation6 + $0x740] sm:$0xff]
    %v8083 = vld [vmem:[#allocation6 + $0x748] sm:$0xff]
    %v8084 = vld [vmem:[#allocation6 + $0x750] sm:$0xff]
    %v8085 = vld [vmem:[#allocation6 + $0x758] sm:$0xff]
    %v8086 = vld [vmem:[#allocation6 + $0x760] sm:$0xff]
    %v8087 = vld [vmem:[#allocation6 + $0x768] sm:$0xff]
    %v8088 = vld [vmem:[#allocation6 + $0x770] sm:$0xff]
    %v8089 = vld [vmem:[#allocation6 + $0x778] sm:$0xff]
    %v8090 = vld [vmem:[#allocation6 + $0x780] sm:$0xff]
    %v8091 = vld [vmem:[#allocation6 + $0x788] sm:$0xff]
    %v8092 = vld [vmem:[#allocation6 + $0x790] sm:$0xff]
    %v8093 = vld [vmem:[#allocation6 + $0x798] sm:$0xff]
    %v8094 = vld [vmem:[#allocation6 + $0x7a0] sm:$0xff]
    %v8095 = vld [vmem:[#allocation6 + $0x7a8] sm:$0xff]
    %v8096 = vld [vmem:[#allocation6 + $0x7b0] sm:$0xff]
    %v8097 = vld [vmem:[#allocation6 + $0x7b8] sm:$0xff]
    %v8098 = vld [vmem:[#allocation6 + $0x7c0] sm:$0xff]
    %v8099 = vld [vmem:[#allocation6 + $0x7c8] sm:$0xff]
    %v8100 = vld [vmem:[#allocation6 + $0x7d0] sm:$0xff]
    %v8101 = vld [vmem:[#allocation6 + $0x7d8] sm:$0xff]
    %v8102 = vld [vmem:[#allocation6 + $0x7e0] sm:$0xff]
    %v8103 = vld [vmem:[#allocation6 + $0x7e8] sm:$0xff]
    %v8104 = vld [vmem:[#allocation6 + $0x7f0] sm:$0xff]
    %v8105 = vld [vmem:[#allocation6 + $0x7f8] sm:$0xff]
    %v8106 = vld [vmem:[#allocation14 + $0x18] sm:$0xf]
    %v8107 = vpack.c.bf16 %v7840, %v7840
    %v8108 = vpack.c.bf16 %v7841, %v7841
    %v8109 = vpack.c.bf16 %v7842, %v7842
    %v8110 = vpack.c.bf16 %v7843, %v7843
    %v8111 = vpack.c.bf16 %v7844, %v7844
    %v8112 = vpack.c.bf16 %v7845, %v7845
    %v8113 = vpack.c.bf16 %v7846, %v7846
    %v8114 = vpack.c.bf16 %v7847, %v7847
    %v8116 = vlaneseq
    %v8117 = vshrl.u32 %v8116, 7
    %v8118 = vsub.s32 0, %v8117
    %v8119 = vrot.slane %v8106, %v8118
    %v8120 = vlaneseq
    %v8121 = vshrl.u32 %v8120, 7
    %v8122 = vsub.s32 1, %v8121
    %v8123 = vrot.slane %v8106, %v8122
    %v8124 = vlaneseq
    %v8125 = vshrl.u32 %v8124, 7
    %v8126 = vsub.s32 2, %v8125
    %v8127 = vrot.slane %v8106, %v8126
    %v8128 = vlaneseq
    %v8129 = vshrl.u32 %v8128, 7
    %v8130 = vsub.s32 3, %v8129
    %v8131 = vrot.slane %v8106, %v8130
    %v8392 = vunpack.c.l.b16 %v7850
    %v8393 = vunpack.c.h.b16 %v7850
    %v8394 = vunpack.c.l.b16 %v7851
    %v8395 = vunpack.c.h.b16 %v7851
    %v8396 = vunpack.c.l.b16 %v7852
    %v8397 = vunpack.c.h.b16 %v7852
    %v8398 = vunpack.c.l.b16 %v7853
    %v8399 = vunpack.c.h.b16 %v7853
    %v8400 = vunpack.c.l.b16 %v7854
    %v8401 = vunpack.c.h.b16 %v7854
    %v8402 = vunpack.c.l.b16 %v7855
    %v8403 = vunpack.c.h.b16 %v7855
    %v8404 = vunpack.c.l.b16 %v7856
    %v8405 = vunpack.c.h.b16 %v7856
    %v8406 = vunpack.c.l.b16 %v7857
    %v8407 = vunpack.c.h.b16 %v7857
    %v8408 = vunpack.c.l.b16 %v7858
    %v8409 = vunpack.c.h.b16 %v7858
    %v8410 = vunpack.c.l.b16 %v7859
    %v8411 = vunpack.c.h.b16 %v7859
    %v8412 = vunpack.c.l.b16 %v7860
    %v8413 = vunpack.c.h.b16 %v7860
    %v8414 = vunpack.c.l.b16 %v7861
    %v8415 = vunpack.c.h.b16 %v7861
    %v8416 = vunpack.c.l.b16 %v7862
    %v8417 = vunpack.c.h.b16 %v7862
    %v8418 = vunpack.c.l.b16 %v7863
    %v8419 = vunpack.c.h.b16 %v7863
    %v8420 = vunpack.c.l.b16 %v7864
    %v8421 = vunpack.c.h.b16 %v7864
    %v8422 = vunpack.c.l.b16 %v7865
    %v8423 = vunpack.c.h.b16 %v7865
    %v8424 = vunpack.c.l.b16 %v7866
    %v8425 = vunpack.c.h.b16 %v7866
    %v8426 = vunpack.c.l.b16 %v7867
    %v8427 = vunpack.c.h.b16 %v7867
    %v8428 = vunpack.c.l.b16 %v7868
    %v8429 = vunpack.c.h.b16 %v7868
    %v8430 = vunpack.c.l.b16 %v7869
    %v8431 = vunpack.c.h.b16 %v7869
    %v8432 = vunpack.c.l.b16 %v7870
    %v8433 = vunpack.c.h.b16 %v7870
    %v8434 = vunpack.c.l.b16 %v7871
    %v8435 = vunpack.c.h.b16 %v7871
    %v8436 = vunpack.c.l.b16 %v7872
    %v8437 = vunpack.c.h.b16 %v7872
    %v8438 = vunpack.c.l.b16 %v7873
    %v8439 = vunpack.c.h.b16 %v7873
    %v8440 = vunpack.c.l.b16 %v7874
    %v8441 = vunpack.c.h.b16 %v7874
    %v8442 = vunpack.c.l.b16 %v7875
    %v8443 = vunpack.c.h.b16 %v7875
    %v8444 = vunpack.c.l.b16 %v7876
    %v8445 = vunpack.c.h.b16 %v7876
    %v8446 = vunpack.c.l.b16 %v7877
    %v8447 = vunpack.c.h.b16 %v7877
    %v8448 = vunpack.c.l.b16 %v7878
    %v8449 = vunpack.c.h.b16 %v7878
    %v8450 = vunpack.c.l.b16 %v7879
    %v8451 = vunpack.c.h.b16 %v7879
    %v8452 = vunpack.c.l.b16 %v7880
    %v8453 = vunpack.c.h.b16 %v7880
    %v8454 = vunpack.c.l.b16 %v7881
    %v8455 = vunpack.c.h.b16 %v7881
    %v8456 = vunpack.c.l.b16 %v7882
    %v8457 = vunpack.c.h.b16 %v7882
    %v8458 = vunpack.c.l.b16 %v7883
    %v8459 = vunpack.c.h.b16 %v7883
    %v8460 = vunpack.c.l.b16 %v7884
    %v8461 = vunpack.c.h.b16 %v7884
    %v8462 = vunpack.c.l.b16 %v7885
    %v8463 = vunpack.c.h.b16 %v7885
    %v8464 = vunpack.c.l.b16 %v7886
    %v8465 = vunpack.c.h.b16 %v7886
    %v8466 = vunpack.c.l.b16 %v7887
    %v8467 = vunpack.c.h.b16 %v7887
    %v8468 = vunpack.c.l.b16 %v7888
    %v8469 = vunpack.c.h.b16 %v7888
    %v8470 = vunpack.c.l.b16 %v7889
    %v8471 = vunpack.c.h.b16 %v7889
    %v8472 = vunpack.c.l.b16 %v7890
    %v8473 = vunpack.c.h.b16 %v7890
    %v8474 = vunpack.c.l.b16 %v7891
    %v8475 = vunpack.c.h.b16 %v7891
    %v8476 = vunpack.c.l.b16 %v7892
    %v8477 = vunpack.c.h.b16 %v7892
    %v8478 = vunpack.c.l.b16 %v7893
    %v8479 = vunpack.c.h.b16 %v7893
    %v8480 = vunpack.c.l.b16 %v7894
    %v8481 = vunpack.c.h.b16 %v7894
    %v8482 = vunpack.c.l.b16 %v7895
    %v8483 = vunpack.c.h.b16 %v7895
    %v8484 = vunpack.c.l.b16 %v7896
    %v8485 = vunpack.c.h.b16 %v7896
    %v8486 = vunpack.c.l.b16 %v7897
    %v8487 = vunpack.c.h.b16 %v7897
    %v8488 = vunpack.c.l.b16 %v7898
    %v8489 = vunpack.c.h.b16 %v7898
    %v8490 = vunpack.c.l.b16 %v7899
    %v8491 = vunpack.c.h.b16 %v7899
    %v8492 = vunpack.c.l.b16 %v7900
    %v8493 = vunpack.c.h.b16 %v7900
    %v8494 = vunpack.c.l.b16 %v7901
    %v8495 = vunpack.c.h.b16 %v7901
    %v8496 = vunpack.c.l.b16 %v7902
    %v8497 = vunpack.c.h.b16 %v7902
    %v8498 = vunpack.c.l.b16 %v7903
    %v8499 = vunpack.c.h.b16 %v7903
    %v8500 = vunpack.c.l.b16 %v7904
    %v8501 = vunpack.c.h.b16 %v7904
    %v8502 = vunpack.c.l.b16 %v7905
    %v8503 = vunpack.c.h.b16 %v7905
    %v8504 = vunpack.c.l.b16 %v7906
    %v8505 = vunpack.c.h.b16 %v7906
    %v8506 = vunpack.c.l.b16 %v7907
    %v8507 = vunpack.c.h.b16 %v7907
    %v8508 = vunpack.c.l.b16 %v7908
    %v8509 = vunpack.c.h.b16 %v7908
    %v8510 = vunpack.c.l.b16 %v7909
    %v8511 = vunpack.c.h.b16 %v7909
    %v8512 = vunpack.c.l.b16 %v7910
    %v8513 = vunpack.c.h.b16 %v7910
    %v8514 = vunpack.c.l.b16 %v7911
    %v8515 = vunpack.c.h.b16 %v7911
    %v8516 = vunpack.c.l.b16 %v7912
    %v8517 = vunpack.c.h.b16 %v7912
    %v8518 = vunpack.c.l.b16 %v7913
    %v8519 = vunpack.c.h.b16 %v7913
    %v8520 = vunpack.c.l.b16 %v7914
    %v8521 = vunpack.c.h.b16 %v7914
    %v8522 = vunpack.c.l.b16 %v7915
    %v8523 = vunpack.c.h.b16 %v7915
    %v8524 = vunpack.c.l.b16 %v7916
    %v8525 = vunpack.c.h.b16 %v7916
    %v8526 = vunpack.c.l.b16 %v7917
    %v8527 = vunpack.c.h.b16 %v7917
    %v8528 = vunpack.c.l.b16 %v7918
    %v8529 = vunpack.c.h.b16 %v7918
    %v8530 = vunpack.c.l.b16 %v7919
    %v8531 = vunpack.c.h.b16 %v7919
    %v8532 = vunpack.c.l.b16 %v7920
    %v8533 = vunpack.c.h.b16 %v7920
    %v8534 = vunpack.c.l.b16 %v7921
    %v8535 = vunpack.c.h.b16 %v7921
    %v8536 = vunpack.c.l.b16 %v7922
    %v8537 = vunpack.c.h.b16 %v7922
    %v8538 = vunpack.c.l.b16 %v7923
    %v8539 = vunpack.c.h.b16 %v7923
    %v8540 = vunpack.c.l.b16 %v7924
    %v8541 = vunpack.c.h.b16 %v7924
    %v8542 = vunpack.c.l.b16 %v7925
    %v8543 = vunpack.c.h.b16 %v7925
    %v8544 = vunpack.c.l.b16 %v7926
    %v8545 = vunpack.c.h.b16 %v7926
    %v8546 = vunpack.c.l.b16 %v7927
    %v8547 = vunpack.c.h.b16 %v7927
    %v8548 = vunpack.c.l.b16 %v7928
    %v8549 = vunpack.c.h.b16 %v7928
    %v8550 = vunpack.c.l.b16 %v7929
    %v8551 = vunpack.c.h.b16 %v7929
    %v8552 = vunpack.c.l.b16 %v7930
    %v8553 = vunpack.c.h.b16 %v7930
    %v8554 = vunpack.c.l.b16 %v7931
    %v8555 = vunpack.c.h.b16 %v7931
    %v8556 = vunpack.c.l.b16 %v7932
    %v8557 = vunpack.c.h.b16 %v7932
    %v8558 = vunpack.c.l.b16 %v7933
    %v8559 = vunpack.c.h.b16 %v7933
    %v8560 = vunpack.c.l.b16 %v7934
    %v8561 = vunpack.c.h.b16 %v7934
    %v8562 = vunpack.c.l.b16 %v7935
    %v8563 = vunpack.c.h.b16 %v7935
    %v8564 = vunpack.c.l.b16 %v7936
    %v8565 = vunpack.c.h.b16 %v7936
    %v8566 = vunpack.c.l.b16 %v7937
    %v8567 = vunpack.c.h.b16 %v7937
    %v8568 = vunpack.c.l.b16 %v7938
    %v8569 = vunpack.c.h.b16 %v7938
    %v8570 = vunpack.c.l.b16 %v7939
    %v8571 = vunpack.c.h.b16 %v7939
    %v8572 = vunpack.c.l.b16 %v7940
    %v8573 = vunpack.c.h.b16 %v7940
    %v8574 = vunpack.c.l.b16 %v7941
    %v8575 = vunpack.c.h.b16 %v7941
    %v8576 = vunpack.c.l.b16 %v7942
    %v8577 = vunpack.c.h.b16 %v7942
    %v8578 = vunpack.c.l.b16 %v7943
    %v8579 = vunpack.c.h.b16 %v7943
    %v8580 = vunpack.c.l.b16 %v7944
    %v8581 = vunpack.c.h.b16 %v7944
    %v8582 = vunpack.c.l.b16 %v7945
    %v8583 = vunpack.c.h.b16 %v7945
    %v8584 = vunpack.c.l.b16 %v7946
    %v8585 = vunpack.c.h.b16 %v7946
    %v8586 = vunpack.c.l.b16 %v7947
    %v8587 = vunpack.c.h.b16 %v7947
    %v8588 = vunpack.c.l.b16 %v7948
    %v8589 = vunpack.c.h.b16 %v7948
    %v8590 = vunpack.c.l.b16 %v7949
    %v8591 = vunpack.c.h.b16 %v7949
    %v8592 = vunpack.c.l.b16 %v7950
    %v8593 = vunpack.c.h.b16 %v7950
    %v8594 = vunpack.c.l.b16 %v7951
    %v8595 = vunpack.c.h.b16 %v7951
    %v8596 = vunpack.c.l.b16 %v7952
    %v8597 = vunpack.c.h.b16 %v7952
    %v8598 = vunpack.c.l.b16 %v7953
    %v8599 = vunpack.c.h.b16 %v7953
    %v8600 = vunpack.c.l.b16 %v7954
    %v8601 = vunpack.c.h.b16 %v7954
    %v8602 = vunpack.c.l.b16 %v7955
    %v8603 = vunpack.c.h.b16 %v7955
    %v8604 = vunpack.c.l.b16 %v7956
    %v8605 = vunpack.c.h.b16 %v7956
    %v8606 = vunpack.c.l.b16 %v7957
    %v8607 = vunpack.c.h.b16 %v7957
    %v8608 = vunpack.c.l.b16 %v7958
    %v8609 = vunpack.c.h.b16 %v7958
    %v8610 = vunpack.c.l.b16 %v7959
    %v8611 = vunpack.c.h.b16 %v7959
    %v8612 = vunpack.c.l.b16 %v7960
    %v8613 = vunpack.c.h.b16 %v7960
    %v8614 = vunpack.c.l.b16 %v7961
    %v8615 = vunpack.c.h.b16 %v7961
    %v8616 = vunpack.c.l.b16 %v7962
    %v8617 = vunpack.c.h.b16 %v7962
    %v8618 = vunpack.c.l.b16 %v7963
    %v8619 = vunpack.c.h.b16 %v7963
    %v8620 = vunpack.c.l.b16 %v7964
    %v8621 = vunpack.c.h.b16 %v7964
    %v8622 = vunpack.c.l.b16 %v7965
    %v8623 = vunpack.c.h.b16 %v7965
    %v8624 = vunpack.c.l.b16 %v7966
    %v8625 = vunpack.c.h.b16 %v7966
    %v8626 = vunpack.c.l.b16 %v7967
    %v8627 = vunpack.c.h.b16 %v7967
    %v8628 = vunpack.c.l.b16 %v7968
    %v8629 = vunpack.c.h.b16 %v7968
    %v8630 = vunpack.c.l.b16 %v7969
    %v8631 = vunpack.c.h.b16 %v7969
    %v8632 = vunpack.c.l.b16 %v7970
    %v8633 = vunpack.c.h.b16 %v7970
    %v8634 = vunpack.c.l.b16 %v7971
    %v8635 = vunpack.c.h.b16 %v7971
    %v8636 = vunpack.c.l.b16 %v7972
    %v8637 = vunpack.c.h.b16 %v7972
    %v8638 = vunpack.c.l.b16 %v7973
    %v8639 = vunpack.c.h.b16 %v7973
    %v8640 = vunpack.c.l.b16 %v7974
    %v8641 = vunpack.c.h.b16 %v7974
    %v8642 = vunpack.c.l.b16 %v7975
    %v8643 = vunpack.c.h.b16 %v7975
    %v8644 = vunpack.c.l.b16 %v7976
    %v8645 = vunpack.c.h.b16 %v7976
    %v8646 = vunpack.c.l.b16 %v7977
    %v8647 = vunpack.c.h.b16 %v7977
    %v8648 = vunpack.c.l.b16 %v7978
    %v8649 = vunpack.c.h.b16 %v7978
    %v8650 = vunpack.c.l.b16 %v7979
    %v8651 = vunpack.c.h.b16 %v7979
    %v8652 = vunpack.c.l.b16 %v7980
    %v8653 = vunpack.c.h.b16 %v7980
    %v8654 = vunpack.c.l.b16 %v7981
    %v8655 = vunpack.c.h.b16 %v7981
    %v8656 = vunpack.c.l.b16 %v7982
    %v8657 = vunpack.c.h.b16 %v7982
    %v8658 = vunpack.c.l.b16 %v7983
    %v8659 = vunpack.c.h.b16 %v7983
    %v8660 = vunpack.c.l.b16 %v7984
    %v8661 = vunpack.c.h.b16 %v7984
    %v8662 = vunpack.c.l.b16 %v7985
    %v8663 = vunpack.c.h.b16 %v7985
    %v8664 = vunpack.c.l.b16 %v7986
    %v8665 = vunpack.c.h.b16 %v7986
    %v8666 = vunpack.c.l.b16 %v7987
    %v8667 = vunpack.c.h.b16 %v7987
    %v8668 = vunpack.c.l.b16 %v7988
    %v8669 = vunpack.c.h.b16 %v7988
    %v8670 = vunpack.c.l.b16 %v7989
    %v8671 = vunpack.c.h.b16 %v7989
    %v8672 = vunpack.c.l.b16 %v7990
    %v8673 = vunpack.c.h.b16 %v7990
    %v8674 = vunpack.c.l.b16 %v7991
    %v8675 = vunpack.c.h.b16 %v7991
    %v8676 = vunpack.c.l.b16 %v7992
    %v8677 = vunpack.c.h.b16 %v7992
    %v8678 = vunpack.c.l.b16 %v7993
    %v8679 = vunpack.c.h.b16 %v7993
    %v8680 = vunpack.c.l.b16 %v7994
    %v8681 = vunpack.c.h.b16 %v7994
    %v8682 = vunpack.c.l.b16 %v7995
    %v8683 = vunpack.c.h.b16 %v7995
    %v8684 = vunpack.c.l.b16 %v7996
    %v8685 = vunpack.c.h.b16 %v7996
    %v8686 = vunpack.c.l.b16 %v7997
    %v8687 = vunpack.c.h.b16 %v7997
    %v8688 = vunpack.c.l.b16 %v7998
    %v8689 = vunpack.c.h.b16 %v7998
    %v8690 = vunpack.c.l.b16 %v7999
    %v8691 = vunpack.c.h.b16 %v7999
    %v8692 = vunpack.c.l.b16 %v8000
    %v8693 = vunpack.c.h.b16 %v8000
    %v8694 = vunpack.c.l.b16 %v8001
    %v8695 = vunpack.c.h.b16 %v8001
    %v8696 = vunpack.c.l.b16 %v8002
    %v8697 = vunpack.c.h.b16 %v8002
    %v8698 = vunpack.c.l.b16 %v8003
    %v8699 = vunpack.c.h.b16 %v8003
    %v8700 = vunpack.c.l.b16 %v8004
    %v8701 = vunpack.c.h.b16 %v8004
    %v8702 = vunpack.c.l.b16 %v8005
    %v8703 = vunpack.c.h.b16 %v8005
    %v8704 = vunpack.c.l.b16 %v8006
    %v8705 = vunpack.c.h.b16 %v8006
    %v8706 = vunpack.c.l.b16 %v8007
    %v8707 = vunpack.c.h.b16 %v8007
    %v8708 = vunpack.c.l.b16 %v8008
    %v8709 = vunpack.c.h.b16 %v8008
    %v8710 = vunpack.c.l.b16 %v8009
    %v8711 = vunpack.c.h.b16 %v8009
    %v8712 = vunpack.c.l.b16 %v8010
    %v8713 = vunpack.c.h.b16 %v8010
    %v8714 = vunpack.c.l.b16 %v8011
    %v8715 = vunpack.c.h.b16 %v8011
    %v8716 = vunpack.c.l.b16 %v8012
    %v8717 = vunpack.c.h.b16 %v8012
    %v8718 = vunpack.c.l.b16 %v8013
    %v8719 = vunpack.c.h.b16 %v8013
    %v8720 = vunpack.c.l.b16 %v8014
    %v8721 = vunpack.c.h.b16 %v8014
    %v8722 = vunpack.c.l.b16 %v8015
    %v8723 = vunpack.c.h.b16 %v8015
    %v8724 = vunpack.c.l.b16 %v8016
    %v8725 = vunpack.c.h.b16 %v8016
    %v8726 = vunpack.c.l.b16 %v8017
    %v8727 = vunpack.c.h.b16 %v8017
    %v8728 = vunpack.c.l.b16 %v8018
    %v8729 = vunpack.c.h.b16 %v8018
    %v8730 = vunpack.c.l.b16 %v8019
    %v8731 = vunpack.c.h.b16 %v8019
    %v8732 = vunpack.c.l.b16 %v8020
    %v8733 = vunpack.c.h.b16 %v8020
    %v8734 = vunpack.c.l.b16 %v8021
    %v8735 = vunpack.c.h.b16 %v8021
    %v8736 = vunpack.c.l.b16 %v8022
    %v8737 = vunpack.c.h.b16 %v8022
    %v8738 = vunpack.c.l.b16 %v8023
    %v8739 = vunpack.c.h.b16 %v8023
    %v8740 = vunpack.c.l.b16 %v8024
    %v8741 = vunpack.c.h.b16 %v8024
    %v8742 = vunpack.c.l.b16 %v8025
    %v8743 = vunpack.c.h.b16 %v8025
    %v8744 = vunpack.c.l.b16 %v8026
    %v8745 = vunpack.c.h.b16 %v8026
    %v8746 = vunpack.c.l.b16 %v8027
    %v8747 = vunpack.c.h.b16 %v8027
    %v8748 = vunpack.c.l.b16 %v8028
    %v8749 = vunpack.c.h.b16 %v8028
    %v8750 = vunpack.c.l.b16 %v8029
    %v8751 = vunpack.c.h.b16 %v8029
    %v8752 = vunpack.c.l.b16 %v8030
    %v8753 = vunpack.c.h.b16 %v8030
    %v8754 = vunpack.c.l.b16 %v8031
    %v8755 = vunpack.c.h.b16 %v8031
    %v8756 = vunpack.c.l.b16 %v8032
    %v8757 = vunpack.c.h.b16 %v8032
    %v8758 = vunpack.c.l.b16 %v8033
    %v8759 = vunpack.c.h.b16 %v8033
    %v8760 = vunpack.c.l.b16 %v8034
    %v8761 = vunpack.c.h.b16 %v8034
    %v8762 = vunpack.c.l.b16 %v8035
    %v8763 = vunpack.c.h.b16 %v8035
    %v8764 = vunpack.c.l.b16 %v8036
    %v8765 = vunpack.c.h.b16 %v8036
    %v8766 = vunpack.c.l.b16 %v8037
    %v8767 = vunpack.c.h.b16 %v8037
    %v8768 = vunpack.c.l.b16 %v8038
    %v8769 = vunpack.c.h.b16 %v8038
    %v8770 = vunpack.c.l.b16 %v8039
    %v8771 = vunpack.c.h.b16 %v8039
    %v8772 = vunpack.c.l.b16 %v8040
    %v8773 = vunpack.c.h.b16 %v8040
    %v8774 = vunpack.c.l.b16 %v8041
    %v8775 = vunpack.c.h.b16 %v8041
    %v8776 = vunpack.c.l.b16 %v8042
    %v8777 = vunpack.c.h.b16 %v8042
    %v8778 = vunpack.c.l.b16 %v8043
    %v8779 = vunpack.c.h.b16 %v8043
    %v8780 = vunpack.c.l.b16 %v8044
    %v8781 = vunpack.c.h.b16 %v8044
    %v8782 = vunpack.c.l.b16 %v8045
    %v8783 = vunpack.c.h.b16 %v8045
    %v8784 = vunpack.c.l.b16 %v8046
    %v8785 = vunpack.c.h.b16 %v8046
    %v8786 = vunpack.c.l.b16 %v8047
    %v8787 = vunpack.c.h.b16 %v8047
    %v8788 = vunpack.c.l.b16 %v8048
    %v8789 = vunpack.c.h.b16 %v8048
    %v8790 = vunpack.c.l.b16 %v8049
    %v8791 = vunpack.c.h.b16 %v8049
    %v8792 = vunpack.c.l.b16 %v8050
    %v8793 = vunpack.c.h.b16 %v8050
    %v8794 = vunpack.c.l.b16 %v8051
    %v8795 = vunpack.c.h.b16 %v8051
    %v8796 = vunpack.c.l.b16 %v8052
    %v8797 = vunpack.c.h.b16 %v8052
    %v8798 = vunpack.c.l.b16 %v8053
    %v8799 = vunpack.c.h.b16 %v8053
    %v8800 = vunpack.c.l.b16 %v8054
    %v8801 = vunpack.c.h.b16 %v8054
    %v8802 = vunpack.c.l.b16 %v8055
    %v8803 = vunpack.c.h.b16 %v8055
    %v8804 = vunpack.c.l.b16 %v8056
    %v8805 = vunpack.c.h.b16 %v8056
    %v8806 = vunpack.c.l.b16 %v8057
    %v8807 = vunpack.c.h.b16 %v8057
    %v8808 = vunpack.c.l.b16 %v8058
    %v8809 = vunpack.c.h.b16 %v8058
    %v8810 = vunpack.c.l.b16 %v8059
    %v8811 = vunpack.c.h.b16 %v8059
    %v8812 = vunpack.c.l.b16 %v8060
    %v8813 = vunpack.c.h.b16 %v8060
    %v8814 = vunpack.c.l.b16 %v8061
    %v8815 = vunpack.c.h.b16 %v8061
    %v8816 = vunpack.c.l.b16 %v8062
    %v8817 = vunpack.c.h.b16 %v8062
    %v8818 = vunpack.c.l.b16 %v8063
    %v8819 = vunpack.c.h.b16 %v8063
    %v8820 = vunpack.c.l.b16 %v8064
    %v8821 = vunpack.c.h.b16 %v8064
    %v8822 = vunpack.c.l.b16 %v8065
    %v8823 = vunpack.c.h.b16 %v8065
    %v8824 = vunpack.c.l.b16 %v8066
    %v8825 = vunpack.c.h.b16 %v8066
    %v8826 = vunpack.c.l.b16 %v8067
    %v8827 = vunpack.c.h.b16 %v8067
    %v8828 = vunpack.c.l.b16 %v8068
    %v8829 = vunpack.c.h.b16 %v8068
    %v8830 = vunpack.c.l.b16 %v8069
    %v8831 = vunpack.c.h.b16 %v8069
    %v8832 = vunpack.c.l.b16 %v8070
    %v8833 = vunpack.c.h.b16 %v8070
    %v8834 = vunpack.c.l.b16 %v8071
    %v8835 = vunpack.c.h.b16 %v8071
    %v8836 = vunpack.c.l.b16 %v8072
    %v8837 = vunpack.c.h.b16 %v8072
    %v8838 = vunpack.c.l.b16 %v8073
    %v8839 = vunpack.c.h.b16 %v8073
    %v8840 = vunpack.c.l.b16 %v8074
    %v8841 = vunpack.c.h.b16 %v8074
    %v8842 = vunpack.c.l.b16 %v8075
    %v8843 = vunpack.c.h.b16 %v8075
    %v8844 = vunpack.c.l.b16 %v8076
    %v8845 = vunpack.c.h.b16 %v8076
    %v8846 = vunpack.c.l.b16 %v8077
    %v8847 = vunpack.c.h.b16 %v8077
    %v8848 = vunpack.c.l.b16 %v8078
    %v8849 = vunpack.c.h.b16 %v8078
    %v8850 = vunpack.c.l.b16 %v8079
    %v8851 = vunpack.c.h.b16 %v8079
    %v8852 = vunpack.c.l.b16 %v8080
    %v8853 = vunpack.c.h.b16 %v8080
    %v8854 = vunpack.c.l.b16 %v8081
    %v8855 = vunpack.c.h.b16 %v8081
    %v8856 = vunpack.c.l.b16 %v8082
    %v8857 = vunpack.c.h.b16 %v8082
    %v8858 = vunpack.c.l.b16 %v8083
    %v8859 = vunpack.c.h.b16 %v8083
    %v8860 = vunpack.c.l.b16 %v8084
    %v8861 = vunpack.c.h.b16 %v8084
    %v8862 = vunpack.c.l.b16 %v8085
    %v8863 = vunpack.c.h.b16 %v8085
    %v8864 = vunpack.c.l.b16 %v8086
    %v8865 = vunpack.c.h.b16 %v8086
    %v8866 = vunpack.c.l.b16 %v8087
    %v8867 = vunpack.c.h.b16 %v8087
    %v8868 = vunpack.c.l.b16 %v8088
    %v8869 = vunpack.c.h.b16 %v8088
    %v8870 = vunpack.c.l.b16 %v8089
    %v8871 = vunpack.c.h.b16 %v8089
    %v8872 = vunpack.c.l.b16 %v8090
    %v8873 = vunpack.c.h.b16 %v8090
    %v8874 = vunpack.c.l.b16 %v8091
    %v8875 = vunpack.c.h.b16 %v8091
    %v8876 = vunpack.c.l.b16 %v8092
    %v8877 = vunpack.c.h.b16 %v8092
    %v8878 = vunpack.c.l.b16 %v8093
    %v8879 = vunpack.c.h.b16 %v8093
    %v8880 = vunpack.c.l.b16 %v8094
    %v8881 = vunpack.c.h.b16 %v8094
    %v8882 = vunpack.c.l.b16 %v8095
    %v8883 = vunpack.c.h.b16 %v8095
    %v8884 = vunpack.c.l.b16 %v8096
    %v8885 = vunpack.c.h.b16 %v8096
    %v8886 = vunpack.c.l.b16 %v8097
    %v8887 = vunpack.c.h.b16 %v8097
    %v8888 = vunpack.c.l.b16 %v8098
    %v8889 = vunpack.c.h.b16 %v8098
    %v8890 = vunpack.c.l.b16 %v8099
    %v8891 = vunpack.c.h.b16 %v8099
    %v8892 = vunpack.c.l.b16 %v8100
    %v8893 = vunpack.c.h.b16 %v8100
    %v8894 = vunpack.c.l.b16 %v8101
    %v8895 = vunpack.c.h.b16 %v8101
    %v8896 = vunpack.c.l.b16 %v8102
    %v8897 = vunpack.c.h.b16 %v8102
    %v8898 = vunpack.c.l.b16 %v8103
    %v8899 = vunpack.c.h.b16 %v8103
    %v8900 = vunpack.c.l.b16 %v8104
    %v8901 = vunpack.c.h.b16 %v8104
    %v8902 = vunpack.c.l.b16 %v8105
    %v8903 = vunpack.c.h.b16 %v8105
    %v8904 = vpack.c.b16 %v8396, %v8392
    %v8905 = vpack.c.b16 %v8397, %v8393
    %v8906 = vpack.c.b16 %v8398, %v8394
    %v8907 = vpack.c.b16 %v8399, %v8395
    %v8908 = vpack.c.b16 %v8404, %v8400
    %v8909 = vpack.c.b16 %v8405, %v8401
    %v8910 = vpack.c.b16 %v8406, %v8402
    %v8911 = vpack.c.b16 %v8407, %v8403
    %v8912 = vpack.c.b16 %v8412, %v8408
    %v8913 = vpack.c.b16 %v8413, %v8409
    %v8914 = vpack.c.b16 %v8414, %v8410
    %v8915 = vpack.c.b16 %v8415, %v8411
    %v8916 = vpack.c.b16 %v8420, %v8416
    %v8917 = vpack.c.b16 %v8421, %v8417
    %v8918 = vpack.c.b16 %v8422, %v8418
    %v8919 = vpack.c.b16 %v8423, %v8419
    %v8920 = vpack.c.b16 %v8428, %v8424
    %v8921 = vpack.c.b16 %v8429, %v8425
    %v8922 = vpack.c.b16 %v8430, %v8426
    %v8923 = vpack.c.b16 %v8431, %v8427
    %v8924 = vpack.c.b16 %v8436, %v8432
    %v8925 = vpack.c.b16 %v8437, %v8433
    %v8926 = vpack.c.b16 %v8438, %v8434
    %v8927 = vpack.c.b16 %v8439, %v8435
    %v8928 = vpack.c.b16 %v8444, %v8440
    %v8929 = vpack.c.b16 %v8445, %v8441
    %v8930 = vpack.c.b16 %v8446, %v8442
    %v8931 = vpack.c.b16 %v8447, %v8443
    %v8932 = vpack.c.b16 %v8452, %v8448
    %v8933 = vpack.c.b16 %v8453, %v8449
    %v8934 = vpack.c.b16 %v8454, %v8450
    %v8935 = vpack.c.b16 %v8455, %v8451
    %v8936 = vpack.c.b16 %v8460, %v8456
    %v8937 = vpack.c.b16 %v8461, %v8457
    %v8938 = vpack.c.b16 %v8462, %v8458
    %v8939 = vpack.c.b16 %v8463, %v8459
    %v8940 = vpack.c.b16 %v8468, %v8464
    %v8941 = vpack.c.b16 %v8469, %v8465
    %v8942 = vpack.c.b16 %v8470, %v8466
    %v8943 = vpack.c.b16 %v8471, %v8467
    %v8944 = vpack.c.b16 %v8476, %v8472
    %v8945 = vpack.c.b16 %v8477, %v8473
    %v8946 = vpack.c.b16 %v8478, %v8474
    %v8947 = vpack.c.b16 %v8479, %v8475
    %v8948 = vpack.c.b16 %v8484, %v8480
    %v8949 = vpack.c.b16 %v8485, %v8481
    %v8950 = vpack.c.b16 %v8486, %v8482
    %v8951 = vpack.c.b16 %v8487, %v8483
    %v8952 = vpack.c.b16 %v8492, %v8488
    %v8953 = vpack.c.b16 %v8493, %v8489
    %v8954 = vpack.c.b16 %v8494, %v8490
    %v8955 = vpack.c.b16 %v8495, %v8491
    %v8956 = vpack.c.b16 %v8500, %v8496
    %v8957 = vpack.c.b16 %v8501, %v8497
    %v8958 = vpack.c.b16 %v8502, %v8498
    %v8959 = vpack.c.b16 %v8503, %v8499
    %v8960 = vpack.c.b16 %v8508, %v8504
    %v8961 = vpack.c.b16 %v8509, %v8505
    %v8962 = vpack.c.b16 %v8510, %v8506
    %v8963 = vpack.c.b16 %v8511, %v8507
    %v8964 = vpack.c.b16 %v8516, %v8512
    %v8965 = vpack.c.b16 %v8517, %v8513
    %v8966 = vpack.c.b16 %v8518, %v8514
    %v8967 = vpack.c.b16 %v8519, %v8515
    %v8968 = vpack.c.b16 %v8524, %v8520
    %v8969 = vpack.c.b16 %v8525, %v8521
    %v8970 = vpack.c.b16 %v8526, %v8522
    %v8971 = vpack.c.b16 %v8527, %v8523
    %v8972 = vpack.c.b16 %v8532, %v8528
    %v8973 = vpack.c.b16 %v8533, %v8529
    %v8974 = vpack.c.b16 %v8534, %v8530
    %v8975 = vpack.c.b16 %v8535, %v8531
    %v8976 = vpack.c.b16 %v8540, %v8536
    %v8977 = vpack.c.b16 %v8541, %v8537
    %v8978 = vpack.c.b16 %v8542, %v8538
    %v8979 = vpack.c.b16 %v8543, %v8539
    %v8980 = vpack.c.b16 %v8548, %v8544
    %v8981 = vpack.c.b16 %v8549, %v8545
    %v8982 = vpack.c.b16 %v8550, %v8546
    %v8983 = vpack.c.b16 %v8551, %v8547
    %v8984 = vpack.c.b16 %v8556, %v8552
    %v8985 = vpack.c.b16 %v8557, %v8553
    %v8986 = vpack.c.b16 %v8558, %v8554
    %v8987 = vpack.c.b16 %v8559, %v8555
    %v8988 = vpack.c.b16 %v8564, %v8560
    %v8989 = vpack.c.b16 %v8565, %v8561
    %v8990 = vpack.c.b16 %v8566, %v8562
    %v8991 = vpack.c.b16 %v8567, %v8563
    %v8992 = vpack.c.b16 %v8572, %v8568
    %v8993 = vpack.c.b16 %v8573, %v8569
    %v8994 = vpack.c.b16 %v8574, %v8570
    %v8995 = vpack.c.b16 %v8575, %v8571
    %v8996 = vpack.c.b16 %v8580, %v8576
    %v8997 = vpack.c.b16 %v8581, %v8577
    %v8998 = vpack.c.b16 %v8582, %v8578
    %v8999 = vpack.c.b16 %v8583, %v8579
    %v9000 = vpack.c.b16 %v8588, %v8584
    %v9001 = vpack.c.b16 %v8589, %v8585
    %v9002 = vpack.c.b16 %v8590, %v8586
    %v9003 = vpack.c.b16 %v8591, %v8587
    %v9004 = vpack.c.b16 %v8596, %v8592
    %v9005 = vpack.c.b16 %v8597, %v8593
    %v9006 = vpack.c.b16 %v8598, %v8594
    %v9007 = vpack.c.b16 %v8599, %v8595
    %v9008 = vpack.c.b16 %v8604, %v8600
    %v9009 = vpack.c.b16 %v8605, %v8601
    %v9010 = vpack.c.b16 %v8606, %v8602
    %v9011 = vpack.c.b16 %v8607, %v8603
    %v9012 = vpack.c.b16 %v8612, %v8608
    %v9013 = vpack.c.b16 %v8613, %v8609
    %v9014 = vpack.c.b16 %v8614, %v8610
    %v9015 = vpack.c.b16 %v8615, %v8611
    %v9016 = vpack.c.b16 %v8620, %v8616
    %v9017 = vpack.c.b16 %v8621, %v8617
    %v9018 = vpack.c.b16 %v8622, %v8618
    %v9019 = vpack.c.b16 %v8623, %v8619
    %v9020 = vpack.c.b16 %v8628, %v8624
    %v9021 = vpack.c.b16 %v8629, %v8625
    %v9022 = vpack.c.b16 %v8630, %v8626
    %v9023 = vpack.c.b16 %v8631, %v8627
    %v9024 = vpack.c.b16 %v8636, %v8632
    %v9025 = vpack.c.b16 %v8637, %v8633
    %v9026 = vpack.c.b16 %v8638, %v8634
    %v9027 = vpack.c.b16 %v8639, %v8635
    %v9028 = vpack.c.b16 %v8644, %v8640
    %v9029 = vpack.c.b16 %v8645, %v8641
    %v9030 = vpack.c.b16 %v8646, %v8642
    %v9031 = vpack.c.b16 %v8647, %v8643
    %v9032 = vpack.c.b16 %v8652, %v8648
    %v9033 = vpack.c.b16 %v8653, %v8649
    %v9034 = vpack.c.b16 %v8654, %v8650
    %v9035 = vpack.c.b16 %v8655, %v8651
    %v9036 = vpack.c.b16 %v8660, %v8656
    %v9037 = vpack.c.b16 %v8661, %v8657
    %v9038 = vpack.c.b16 %v8662, %v8658
    %v9039 = vpack.c.b16 %v8663, %v8659
    %v9040 = vpack.c.b16 %v8668, %v8664
    %v9041 = vpack.c.b16 %v8669, %v8665
    %v9042 = vpack.c.b16 %v8670, %v8666
    %v9043 = vpack.c.b16 %v8671, %v8667
    %v9044 = vpack.c.b16 %v8676, %v8672
    %v9045 = vpack.c.b16 %v8677, %v8673
    %v9046 = vpack.c.b16 %v8678, %v8674
    %v9047 = vpack.c.b16 %v8679, %v8675
    %v9048 = vpack.c.b16 %v8684, %v8680
    %v9049 = vpack.c.b16 %v8685, %v8681
    %v9050 = vpack.c.b16 %v8686, %v8682
    %v9051 = vpack.c.b16 %v8687, %v8683
    %v9052 = vpack.c.b16 %v8692, %v8688
    %v9053 = vpack.c.b16 %v8693, %v8689
    %v9054 = vpack.c.b16 %v8694, %v8690
    %v9055 = vpack.c.b16 %v8695, %v8691
    %v9056 = vpack.c.b16 %v8700, %v8696
    %v9057 = vpack.c.b16 %v8701, %v8697
    %v9058 = vpack.c.b16 %v8702, %v8698
    %v9059 = vpack.c.b16 %v8703, %v8699
    %v9060 = vpack.c.b16 %v8708, %v8704
    %v9061 = vpack.c.b16 %v8709, %v8705
    %v9062 = vpack.c.b16 %v8710, %v8706
    %v9063 = vpack.c.b16 %v8711, %v8707
    %v9064 = vpack.c.b16 %v8716, %v8712
    %v9065 = vpack.c.b16 %v8717, %v8713
    %v9066 = vpack.c.b16 %v8718, %v8714
    %v9067 = vpack.c.b16 %v8719, %v8715
    %v9068 = vpack.c.b16 %v8724, %v8720
    %v9069 = vpack.c.b16 %v8725, %v8721
    %v9070 = vpack.c.b16 %v8726, %v8722
    %v9071 = vpack.c.b16 %v8727, %v8723
    %v9072 = vpack.c.b16 %v8732, %v8728
    %v9073 = vpack.c.b16 %v8733, %v8729
    %v9074 = vpack.c.b16 %v8734, %v8730
    %v9075 = vpack.c.b16 %v8735, %v8731
    %v9076 = vpack.c.b16 %v8740, %v8736
    %v9077 = vpack.c.b16 %v8741, %v8737
    %v9078 = vpack.c.b16 %v8742, %v8738
    %v9079 = vpack.c.b16 %v8743, %v8739
    %v9080 = vpack.c.b16 %v8748, %v8744
    %v9081 = vpack.c.b16 %v8749, %v8745
    %v9082 = vpack.c.b16 %v8750, %v8746
    %v9083 = vpack.c.b16 %v8751, %v8747
    %v9084 = vpack.c.b16 %v8756, %v8752
    %v9085 = vpack.c.b16 %v8757, %v8753
    %v9086 = vpack.c.b16 %v8758, %v8754
    %v9087 = vpack.c.b16 %v8759, %v8755
    %v9088 = vpack.c.b16 %v8764, %v8760
    %v9089 = vpack.c.b16 %v8765, %v8761
    %v9090 = vpack.c.b16 %v8766, %v8762
    %v9091 = vpack.c.b16 %v8767, %v8763
    %v9092 = vpack.c.b16 %v8772, %v8768
    %v9093 = vpack.c.b16 %v8773, %v8769
    %v9094 = vpack.c.b16 %v8774, %v8770
    %v9095 = vpack.c.b16 %v8775, %v8771
    %v9096 = vpack.c.b16 %v8780, %v8776
    %v9097 = vpack.c.b16 %v8781, %v8777
    %v9098 = vpack.c.b16 %v8782, %v8778
    %v9099 = vpack.c.b16 %v8783, %v8779
    %v9100 = vpack.c.b16 %v8788, %v8784
    %v9101 = vpack.c.b16 %v8789, %v8785
    %v9102 = vpack.c.b16 %v8790, %v8786
    %v9103 = vpack.c.b16 %v8791, %v8787
    %v9104 = vpack.c.b16 %v8796, %v8792
    %v9105 = vpack.c.b16 %v8797, %v8793
    %v9106 = vpack.c.b16 %v8798, %v8794
    %v9107 = vpack.c.b16 %v8799, %v8795
    %v9108 = vpack.c.b16 %v8804, %v8800
    %v9109 = vpack.c.b16 %v8805, %v8801
    %v9110 = vpack.c.b16 %v8806, %v8802
    %v9111 = vpack.c.b16 %v8807, %v8803
    %v9112 = vpack.c.b16 %v8812, %v8808
    %v9113 = vpack.c.b16 %v8813, %v8809
    %v9114 = vpack.c.b16 %v8814, %v8810
    %v9115 = vpack.c.b16 %v8815, %v8811
    %v9116 = vpack.c.b16 %v8820, %v8816
    %v9117 = vpack.c.b16 %v8821, %v8817
    %v9118 = vpack.c.b16 %v8822, %v8818
    %v9119 = vpack.c.b16 %v8823, %v8819
    %v9120 = vpack.c.b16 %v8828, %v8824
    %v9121 = vpack.c.b16 %v8829, %v8825
    %v9122 = vpack.c.b16 %v8830, %v8826
    %v9123 = vpack.c.b16 %v8831, %v8827
    %v9124 = vpack.c.b16 %v8836, %v8832
    %v9125 = vpack.c.b16 %v8837, %v8833
    %v9126 = vpack.c.b16 %v8838, %v8834
    %v9127 = vpack.c.b16 %v8839, %v8835
    %v9128 = vpack.c.b16 %v8844, %v8840
    %v9129 = vpack.c.b16 %v8845, %v8841
    %v9130 = vpack.c.b16 %v8846, %v8842
    %v9131 = vpack.c.b16 %v8847, %v8843
    %v9132 = vpack.c.b16 %v8852, %v8848
    %v9133 = vpack.c.b16 %v8853, %v8849
    %v9134 = vpack.c.b16 %v8854, %v8850
    %v9135 = vpack.c.b16 %v8855, %v8851
    %v9136 = vpack.c.b16 %v8860, %v8856
    %v9137 = vpack.c.b16 %v8861, %v8857
    %v9138 = vpack.c.b16 %v8862, %v8858
    %v9139 = vpack.c.b16 %v8863, %v8859
    %v9140 = vpack.c.b16 %v8868, %v8864
    %v9141 = vpack.c.b16 %v8869, %v8865
    %v9142 = vpack.c.b16 %v8870, %v8866
    %v9143 = vpack.c.b16 %v8871, %v8867
    %v9144 = vpack.c.b16 %v8876, %v8872
    %v9145 = vpack.c.b16 %v8877, %v8873
    %v9146 = vpack.c.b16 %v8878, %v8874
    %v9147 = vpack.c.b16 %v8879, %v8875
    %v9148 = vpack.c.b16 %v8884, %v8880
    %v9149 = vpack.c.b16 %v8885, %v8881
    %v9150 = vpack.c.b16 %v8886, %v8882
    %v9151 = vpack.c.b16 %v8887, %v8883
    %v9152 = vpack.c.b16 %v8892, %v8888
    %v9153 = vpack.c.b16 %v8893, %v8889
    %v9154 = vpack.c.b16 %v8894, %v8890
    %v9155 = vpack.c.b16 %v8895, %v8891
    %v9156 = vpack.c.b16 %v8900, %v8896
    %v9157 = vpack.c.b16 %v8901, %v8897
    %v9158 = vpack.c.b16 %v8902, %v8898
    %v9159 = vpack.c.b16 %v8903, %v8899
    %9416 = vmatprep.subr.bf16.mxu0 %v8933
    %9417 = vmatpush1.bf16.msra.mxu0 %v8932
    %9418 = vmatprep.subr.bf16.mxu0 %v8929
    %9419 = vmatpush1.bf16.msra.mxu0 %v8928
    %9420 = vmatprep.subr.bf16.mxu0 %v8925
    %9421 = vmatpush1.bf16.msra.mxu0 %v8924
    %9422 = vmatprep.subr.bf16.mxu0 %v8921
    %9423 = vmatpush1.bf16.msra.mxu0 %v8920
    %9424 = vmatprep.subr.bf16.mxu0 %v8917
    %9425 = vmatpush1.bf16.msra.mxu0 %v8916
    %9426 = vmatprep.subr.bf16.mxu0 %v8913
    %9427 = vmatpush1.bf16.msra.mxu0 %v8912
    %9428 = vmatprep.subr.bf16.mxu0 %v8909
    %9429 = vmatpush1.bf16.msra.mxu0 %v8908
    %9430 = vmatprep.subr.bf16.mxu0 %v8905
    %9431 = vmatpush1.bf16.msra.mxu0 %v8904
    %9432 = vmatprep.subr.bf16.mxu0 %v8965
    %9433 = vmatpush2.bf16.msra.mxu0 %v8964
    %9434 = vmatprep.subr.bf16.mxu0 %v8961
    %9435 = vmatpush2.bf16.msra.mxu0 %v8960
    %9436 = vmatprep.subr.bf16.mxu0 %v8957
    %9437 = vmatpush2.bf16.msra.mxu0 %v8956
    %9438 = vmatprep.subr.bf16.mxu0 %v8953
    %9439 = vmatpush2.bf16.msra.mxu0 %v8952
    %9440 = vmatprep.subr.bf16.mxu0 %v8949
    %9441 = vmatpush2.bf16.msra.mxu0 %v8948
    %9442 = vmatprep.subr.bf16.mxu0 %v8945
    %9443 = vmatpush2.bf16.msra.mxu0 %v8944
    %9444 = vmatprep.subr.bf16.mxu0 %v8941
    %9445 = vmatpush2.bf16.msra.mxu0 %v8940
    %9446 = vmatprep.subr.bf16.mxu0 %v8937
    %9447 = vmatpush2.bf16.msra.mxu0 %v8936
    %9448 = vmatprep.mubr.bf16.mxu0 %v8108
    %9449 = vmatmul.mubr.bf16.gmra.mxu0 %v8107
    %v9450 = vpop.f32.mrf.mxu0
    %v9451 = vadd.f32 %v8119, %v9450
    %v9452 = vpop.f32.mrf.mxu0
    %v9453 = vadd.f32 %v8123, %v9452
    %v9454 = vpop.f32.mrf.mxu0
    %v9455 = vpop.f32.mrf.mxu0
    %9456 = vdwg.mxu0
    %9457 = vmatprep.subr.bf16.mxu0 %v8997
    %9458 = vmatpush1.bf16.msra.mxu0 %v8996
    %9459 = vmatprep.subr.bf16.mxu0 %v8993
    %9460 = vmatpush1.bf16.msra.mxu0 %v8992
    %9461 = vmatprep.subr.bf16.mxu0 %v8989
    %9462 = vmatpush1.bf16.msra.mxu0 %v8988
    %9463 = vmatprep.subr.bf16.mxu0 %v8985
    %9464 = vmatpush1.bf16.msra.mxu0 %v8984
    %9465 = vmatprep.subr.bf16.mxu0 %v8981
    %9466 = vmatpush1.bf16.msra.mxu0 %v8980
    %9467 = vmatprep.subr.bf16.mxu0 %v8977
    %9468 = vmatpush1.bf16.msra.mxu0 %v8976
    %9469 = vmatprep.subr.bf16.mxu0 %v8973
    %9470 = vmatpush1.bf16.msra.mxu0 %v8972
    %9471 = vmatprep.subr.bf16.mxu0 %v8969
    %9472 = vmatpush1.bf16.msra.mxu0 %v8968
    %9473 = vmatprep.subr.bf16.mxu0 %v9029
    %9474 = vmatpush2.bf16.msra.mxu0 %v9028
    %9475 = vmatprep.subr.bf16.mxu0 %v9025
    %9476 = vmatpush2.bf16.msra.mxu0 %v9024
    %9477 = vmatprep.subr.bf16.mxu0 %v9021
    %9478 = vmatpush2.bf16.msra.mxu0 %v9020
    %9479 = vmatprep.subr.bf16.mxu0 %v9017
    %9480 = vmatpush2.bf16.msra.mxu0 %v9016
    %9481 = vmatprep.subr.bf16.mxu0 %v9013
    %9482 = vmatpush2.bf16.msra.mxu0 %v9012
    %9483 = vmatprep.subr.bf16.mxu0 %v9009
    %9484 = vmatpush2.bf16.msra.mxu0 %v9008
    %9485 = vmatprep.subr.bf16.mxu0 %v9005
    %9486 = vmatpush2.bf16.msra.mxu0 %v9004
    %9487 = vmatprep.subr.bf16.mxu0 %v9001
    %9488 = vmatpush2.bf16.msra.mxu0 %v9000
    %9489 = vmatprep.mubr.bf16.mxu0 %v8110
    %9490 = vmatmul.mubr.bf16.gmra.mxu0 %v8109
    %v9491 = vpop.f32.mrf.mxu0
    %v9492 = vadd.f32 %v9451, %v9491
    %v9493 = vpop.f32.mrf.mxu0
    %v9494 = vadd.f32 %v9453, %v9493
    %v9495 = vpop.f32.mrf.mxu0
    %v9496 = vpop.f32.mrf.mxu0
    %9497 = vdwg.mxu0
    %9498 = vmatprep.subr.bf16.mxu0 %v9061
    %9499 = vmatpush1.bf16.msra.mxu0 %v9060
    %9500 = vmatprep.subr.bf16.mxu0 %v9057
    %9501 = vmatpush1.bf16.msra.mxu0 %v9056
    %9502 = vmatprep.subr.bf16.mxu0 %v9053
    %9503 = vmatpush1.bf16.msra.mxu0 %v9052
    %9504 = vmatprep.subr.bf16.mxu0 %v9049
    %9505 = vmatpush1.bf16.msra.mxu0 %v9048
    %9506 = vmatprep.subr.bf16.mxu0 %v9045
    %9507 = vmatpush1.bf16.msra.mxu0 %v9044
    %9508 = vmatprep.subr.bf16.mxu0 %v9041
    %9509 = vmatpush1.bf16.msra.mxu0 %v9040
    %9510 = vmatprep.subr.bf16.mxu0 %v9037
    %9511 = vmatpush1.bf16.msra.mxu0 %v9036
    %9512 = vmatprep.subr.bf16.mxu0 %v9033
    %9513 = vmatpush1.bf16.msra.mxu0 %v9032
    %9514 = vmatprep.subr.bf16.mxu0 %v9093
    %9515 = vmatpush2.bf16.msra.mxu0 %v9092
    %9516 = vmatprep.subr.bf16.mxu0 %v9089
    %9517 = vmatpush2.bf16.msra.mxu0 %v9088
    %9518 = vmatprep.subr.bf16.mxu0 %v9085
    %9519 = vmatpush2.bf16.msra.mxu0 %v9084
    %9520 = vmatprep.subr.bf16.mxu0 %v9081
    %9521 = vmatpush2.bf16.msra.mxu0 %v9080
    %9522 = vmatprep.subr.bf16.mxu0 %v9077
    %9523 = vmatpush2.bf16.msra.mxu0 %v9076
    %9524 = vmatprep.subr.bf16.mxu0 %v9073
    %9525 = vmatpush2.bf16.msra.mxu0 %v9072
    %9526 = vmatprep.subr.bf16.mxu0 %v9069
    %9527 = vmatpush2.bf16.msra.mxu0 %v9068
    %9528 = vmatprep.subr.bf16.mxu0 %v9065
    %9529 = vmatpush2.bf16.msra.mxu0 %v9064
    %9530 = vmatprep.mubr.bf16.mxu0 %v8112
    %9531 = vmatmul.mubr.bf16.gmra.mxu0 %v8111
    %v9532 = vpop.f32.mrf.mxu0
    %v9533 = vadd.f32 %v9492, %v9532
    %v9534 = vpop.f32.mrf.mxu0
    %v9535 = vadd.f32 %v9494, %v9534
    %v9536 = vpop.f32.mrf.mxu0
    %v9537 = vpop.f32.mrf.mxu0
    %9538 = vdwg.mxu0
    %9539 = vmatprep.subr.bf16.mxu0 %v9125
    %9540 = vmatpush1.bf16.msra.mxu0 %v9124
    %9541 = vmatprep.subr.bf16.mxu0 %v9121
    %9542 = vmatpush1.bf16.msra.mxu0 %v9120
    %9543 = vmatprep.subr.bf16.mxu0 %v9117
    %9544 = vmatpush1.bf16.msra.mxu0 %v9116
    %9545 = vmatprep.subr.bf16.mxu0 %v9113
    %9546 = vmatpush1.bf16.msra.mxu0 %v9112
    %9547 = vmatprep.subr.bf16.mxu0 %v9109
    %9548 = vmatpush1.bf16.msra.mxu0 %v9108
    %9549 = vmatprep.subr.bf16.mxu0 %v9105
    %9550 = vmatpush1.bf16.msra.mxu0 %v9104
    %9551 = vmatprep.subr.bf16.mxu0 %v9101
    %9552 = vmatpush1.bf16.msra.mxu0 %v9100
    %9553 = vmatprep.subr.bf16.mxu0 %v9097
    %9554 = vmatpush1.bf16.msra.mxu0 %v9096
    %9555 = vmatprep.subr.bf16.mxu0 %v9157
    %9556 = vmatpush2.bf16.msra.mxu0 %v9156
    %9557 = vmatprep.subr.bf16.mxu0 %v9153
    %9558 = vmatpush2.bf16.msra.mxu0 %v9152
    %9559 = vmatprep.subr.bf16.mxu0 %v9149
    %9560 = vmatpush2.bf16.msra.mxu0 %v9148
    %9561 = vmatprep.subr.bf16.mxu0 %v9145
    %9562 = vmatpush2.bf16.msra.mxu0 %v9144
    %9563 = vmatprep.subr.bf16.mxu0 %v9141
    %9564 = vmatpush2.bf16.msra.mxu0 %v9140
    %9565 = vmatprep.subr.bf16.mxu0 %v9137
    %9566 = vmatpush2.bf16.msra.mxu0 %v9136
    %9567 = vmatprep.subr.bf16.mxu0 %v9133
    %9568 = vmatpush2.bf16.msra.mxu0 %v9132
    %9569 = vmatprep.subr.bf16.mxu0 %v9129
    %9570 = vmatpush2.bf16.msra.mxu0 %v9128
    %9571 = vmatprep.mubr.bf16.mxu0 %v8114
    %9572 = vmatmul.mubr.bf16.gmra.mxu0 %v8113
    %v9573 = vpop.f32.mrf.mxu0
    %v9574 = vadd.f32 %v9533, %v9573
    %v9575 = vpop.f32.mrf.mxu0
    %v9576 = vadd.f32 %v9535, %v9575
    %v9577 = vpop.f32.mrf.mxu0
    %v9578 = vpop.f32.mrf.mxu0
    %9579 = vdwg.mxu0
    %9580 = vmatprep.subr.bf16.mxu0 %v8935
    %9581 = vmatpush1.bf16.msra.mxu0 %v8934
    %9582 = vmatprep.subr.bf16.mxu0 %v8931
    %9583 = vmatpush1.bf16.msra.mxu0 %v8930
    %9584 = vmatprep.subr.bf16.mxu0 %v8927
    %9585 = vmatpush1.bf16.msra.mxu0 %v8926
    %9586 = vmatprep.subr.bf16.mxu0 %v8923
    %9587 = vmatpush1.bf16.msra.mxu0 %v8922
    %9588 = vmatprep.subr.bf16.mxu0 %v8919
    %9589 = vmatpush1.bf16.msra.mxu0 %v8918
    %9590 = vmatprep.subr.bf16.mxu0 %v8915
    %9591 = vmatpush1.bf16.msra.mxu0 %v8914
    %9592 = vmatprep.subr.bf16.mxu0 %v8911
    %9593 = vmatpush1.bf16.msra.mxu0 %v8910
    %9594 = vmatprep.subr.bf16.mxu0 %v8907
    %9595 = vmatpush1.bf16.msra.mxu0 %v8906
    %9596 = vmatprep.subr.bf16.mxu0 %v8967
    %9597 = vmatpush2.bf16.msra.mxu0 %v8966
    %9598 = vmatprep.subr.bf16.mxu0 %v8963
    %9599 = vmatpush2.bf16.msra.mxu0 %v8962
    %9600 = vmatprep.subr.bf16.mxu0 %v8959
    %9601 = vmatpush2.bf16.msra.mxu0 %v8958
    %9602 = vmatprep.subr.bf16.mxu0 %v8955
    %9603 = vmatpush2.bf16.msra.mxu0 %v8954
    %9604 = vmatprep.subr.bf16.mxu0 %v8951
    %9605 = vmatpush2.bf16.msra.mxu0 %v8950
    %9606 = vmatprep.subr.bf16.mxu0 %v8947
    %9607 = vmatpush2.bf16.msra.mxu0 %v8946
    %9608 = vmatprep.subr.bf16.mxu0 %v8943
    %9609 = vmatpush2.bf16.msra.mxu0 %v8942
    %9610 = vmatprep.subr.bf16.mxu0 %v8939
    %9611 = vmatpush2.bf16.msra.mxu0 %v8938
    %9612 = vmatprep.mubr.bf16.mxu0 %v8108
    %9613 = vmatmul.mubr.bf16.gmra.mxu0 %v8107
    %v9614 = vpop.f32.mrf.mxu0
    %v9615 = vadd.f32 %v8127, %v9614
    %v9616 = vpop.f32.mrf.mxu0
    %v9617 = vadd.f32 %v8131, %v9616
    %v9618 = vpop.f32.mrf.mxu0
    %v9619 = vpop.f32.mrf.mxu0
    %9620 = vdwg.mxu0
    %9621 = vmatprep.subr.bf16.mxu0 %v8999
    %9622 = vmatpush1.bf16.msra.mxu0 %v8998
    %9623 = vmatprep.subr.bf16.mxu0 %v8995
    %9624 = vmatpush1.bf16.msra.mxu0 %v8994
    %9625 = vmatprep.subr.bf16.mxu0 %v8991
    %9626 = vmatpush1.bf16.msra.mxu0 %v8990
    %9627 = vmatprep.subr.bf16.mxu0 %v8987
    %9628 = vmatpush1.bf16.msra.mxu0 %v8986
    %9629 = vmatprep.subr.bf16.mxu0 %v8983
    %9630 = vmatpush1.bf16.msra.mxu0 %v8982
    %9631 = vmatprep.subr.bf16.mxu0 %v8979
    %9632 = vmatpush1.bf16.msra.mxu0 %v8978
    %9633 = vmatprep.subr.bf16.mxu0 %v8975
    %9634 = vmatpush1.bf16.msra.mxu0 %v8974
    %9635 = vmatprep.subr.bf16.mxu0 %v8971
    %9636 = vmatpush1.bf16.msra.mxu0 %v8970
    %9637 = vmatprep.subr.bf16.mxu0 %v9031
    %9638 = vmatpush2.bf16.msra.mxu0 %v9030
    %9639 = vmatprep.subr.bf16.mxu0 %v9027
    %9640 = vmatpush2.bf16.msra.mxu0 %v9026
    %9641 = vmatprep.subr.bf16.mxu0 %v9023
    %9642 = vmatpush2.bf16.msra.mxu0 %v9022
    %9643 = vmatprep.subr.bf16.mxu0 %v9019
    %9644 = vmatpush2.bf16.msra.mxu0 %v9018
    %9645 = vmatprep.subr.bf16.mxu0 %v9015
    %9646 = vmatpush2.bf16.msra.mxu0 %v9014
    %9647 = vmatprep.subr.bf16.mxu0 %v9011
    %9648 = vmatpush2.bf16.msra.mxu0 %v9010
    %9649 = vmatprep.subr.bf16.mxu0 %v9007
    %9650 = vmatpush2.bf16.msra.mxu0 %v9006
    %9651 = vmatprep.subr.bf16.mxu0 %v9003
    %9652 = vmatpush2.bf16.msra.mxu0 %v9002
    %9653 = vmatprep.mubr.bf16.mxu0 %v8110
    %9654 = vmatmul.mubr.bf16.gmra.mxu0 %v8109
    %v9655 = vpop.f32.mrf.mxu0
    %v9656 = vadd.f32 %v9615, %v9655
    %v9657 = vpop.f32.mrf.mxu0
    %v9658 = vadd.f32 %v9617, %v9657
    %v9659 = vpop.f32.mrf.mxu0
    %v9660 = vpop.f32.mrf.mxu0
    %9661 = vdwg.mxu0
    %9662 = vmatprep.subr.bf16.mxu0 %v9063
    %9663 = vmatpush1.bf16.msra.mxu0 %v9062
    %9664 = vmatprep.subr.bf16.mxu0 %v9059
    %9665 = vmatpush1.bf16.msra.mxu0 %v9058
    %9666 = vmatprep.subr.bf16.mxu0 %v9055
    %9667 = vmatpush1.bf16.msra.mxu0 %v9054
    %9668 = vmatprep.subr.bf16.mxu0 %v9051
    %9669 = vmatpush1.bf16.msra.mxu0 %v9050
    %9670 = vmatprep.subr.bf16.mxu0 %v9047
    %9671 = vmatpush1.bf16.msra.mxu0 %v9046
    %9672 = vmatprep.subr.bf16.mxu0 %v9043
    %9673 = vmatpush1.bf16.msra.mxu0 %v9042
    %9674 = vmatprep.subr.bf16.mxu0 %v9039
    %9675 = vmatpush1.bf16.msra.mxu0 %v9038
    %9676 = vmatprep.subr.bf16.mxu0 %v9035
    %9677 = vmatpush1.bf16.msra.mxu0 %v9034
    %9678 = vmatprep.subr.bf16.mxu0 %v9095
    %9679 = vmatpush2.bf16.msra.mxu0 %v9094
    %9680 = vmatprep.subr.bf16.mxu0 %v9091
    %9681 = vmatpush2.bf16.msra.mxu0 %v9090
    %9682 = vmatprep.subr.bf16.mxu0 %v9087
    %9683 = vmatpush2.bf16.msra.mxu0 %v9086
    %9684 = vmatprep.subr.bf16.mxu0 %v9083
    %9685 = vmatpush2.bf16.msra.mxu0 %v9082
    %9686 = vmatprep.subr.bf16.mxu0 %v9079
    %9687 = vmatpush2.bf16.msra.mxu0 %v9078
    %9688 = vmatprep.subr.bf16.mxu0 %v9075
    %9689 = vmatpush2.bf16.msra.mxu0 %v9074
    %9690 = vmatprep.subr.bf16.mxu0 %v9071
    %9691 = vmatpush2.bf16.msra.mxu0 %v9070
    %9692 = vmatprep.subr.bf16.mxu0 %v9067
    %9693 = vmatpush2.bf16.msra.mxu0 %v9066
    %9694 = vmatprep.mubr.bf16.mxu0 %v8112
    %9695 = vmatmul.mubr.bf16.gmra.mxu0 %v8111
    %v9696 = vpop.f32.mrf.mxu0
    %v9697 = vadd.f32 %v9656, %v9696
    %v9698 = vpop.f32.mrf.mxu0
    %v9699 = vadd.f32 %v9658, %v9698
    %v9700 = vpop.f32.mrf.mxu0
    %v9701 = vpop.f32.mrf.mxu0
    %9702 = vdwg.mxu0
    %9703 = vmatprep.subr.bf16.mxu0 %v9127
    %9704 = vmatpush1.bf16.msra.mxu0 %v9126
    %9705 = vmatprep.subr.bf16.mxu0 %v9123
    %9706 = vmatpush1.bf16.msra.mxu0 %v9122
    %9707 = vmatprep.subr.bf16.mxu0 %v9119
    %9708 = vmatpush1.bf16.msra.mxu0 %v9118
    %9709 = vmatprep.subr.bf16.mxu0 %v9115
    %9710 = vmatpush1.bf16.msra.mxu0 %v9114
    %9711 = vmatprep.subr.bf16.mxu0 %v9111
    %9712 = vmatpush1.bf16.msra.mxu0 %v9110
    %9713 = vmatprep.subr.bf16.mxu0 %v9107
    %9714 = vmatpush1.bf16.msra.mxu0 %v9106
    %9715 = vmatprep.subr.bf16.mxu0 %v9103
    %9716 = vmatpush1.bf16.msra.mxu0 %v9102
    %9717 = vmatprep.subr.bf16.mxu0 %v9099
    %9718 = vmatpush1.bf16.msra.mxu0 %v9098
    %9719 = vmatprep.subr.bf16.mxu0 %v9159
    %9720 = vmatpush2.bf16.msra.mxu0 %v9158
    %9721 = vmatprep.subr.bf16.mxu0 %v9155
    %9722 = vmatpush2.bf16.msra.mxu0 %v9154
    %9723 = vmatprep.subr.bf16.mxu0 %v9151
    %9724 = vmatpush2.bf16.msra.mxu0 %v9150
    %9725 = vmatprep.subr.bf16.mxu0 %v9147
    %9726 = vmatpush2.bf16.msra.mxu0 %v9146
    %9727 = vmatprep.subr.bf16.mxu0 %v9143
    %9728 = vmatpush2.bf16.msra.mxu0 %v9142
    %9729 = vmatprep.subr.bf16.mxu0 %v9139
    %9730 = vmatpush2.bf16.msra.mxu0 %v9138
    %9731 = vmatprep.subr.bf16.mxu0 %v9135
    %9732 = vmatpush2.bf16.msra.mxu0 %v9134
    %9733 = vmatprep.subr.bf16.mxu0 %v9131
    %9734 = vmatpush2.bf16.msra.mxu0 %v9130
    %9735 = vmatprep.mubr.bf16.mxu0 %v8114
    %9736 = vmatmul.mubr.bf16.gmra.mxu0 %v8113
    %v9737 = vpop.f32.mrf.mxu0
    %v9738 = vadd.f32 %v9697, %v9737
    %v9739 = vpop.f32.mrf.mxu0
    %v9740 = vadd.f32 %v9699, %v9739
    %v9741 = vpop.f32.mrf.mxu0
    %v9742 = vpop.f32.mrf.mxu0
    %9743 = vdwg.mxu0
    %v9744 = vmax.f32 %v9574, 0.0
    %v9745 = vmax.f32 %v9576, 0.0
    %v9746 = vmax.f32 %v9738, 0.0
    %v9747 = vmax.f32 %v9740, 0.0
    %s9748 = sshll.u32 %s4025, 4
    %9749 = dma.done %s185, %s9748
    %v9750 = vld [vmem:[#allocation7] sm:$0xff]
    %v9751 = vld [vmem:[#allocation7 + $0x8] sm:$0xff]
    %v9752 = vld [vmem:[#allocation7 + $0x10] sm:$0xff]
    %v9753 = vld [vmem:[#allocation7 + $0x18] sm:$0xff]
    %v9754 = vld [vmem:[#allocation7 + $0x20] sm:$0xff]
    %v9755 = vld [vmem:[#allocation7 + $0x28] sm:$0xff]
    %v9756 = vld [vmem:[#allocation7 + $0x30] sm:$0xff]
    %v9757 = vld [vmem:[#allocation7 + $0x38] sm:$0xff]
    %v9758 = vld [vmem:[#allocation7 + $0x40] sm:$0xff]
    %v9759 = vld [vmem:[#allocation7 + $0x48] sm:$0xff]
    %v9760 = vld [vmem:[#allocation7 + $0x50] sm:$0xff]
    %v9761 = vld [vmem:[#allocation7 + $0x58] sm:$0xff]
    %v9762 = vld [vmem:[#allocation7 + $0x60] sm:$0xff]
    %v9763 = vld [vmem:[#allocation7 + $0x68] sm:$0xff]
    %v9764 = vld [vmem:[#allocation7 + $0x70] sm:$0xff]
    %v9765 = vld [vmem:[#allocation7 + $0x78] sm:$0xff]
    %v9766 = vld [vmem:[#allocation7 + $0x80] sm:$0xff]
    %v9767 = vld [vmem:[#allocation7 + $0x88] sm:$0xff]
    %v9768 = vld [vmem:[#allocation7 + $0x90] sm:$0xff]
    %v9769 = vld [vmem:[#allocation7 + $0x98] sm:$0xff]
    %v9770 = vld [vmem:[#allocation7 + $0xa0] sm:$0xff]
    %v9771 = vld [vmem:[#allocation7 + $0xa8] sm:$0xff]
    %v9772 = vld [vmem:[#allocation7 + $0xb0] sm:$0xff]
    %v9773 = vld [vmem:[#allocation7 + $0xb8] sm:$0xff]
    %v9774 = vld [vmem:[#allocation7 + $0xc0] sm:$0xff]
    %v9775 = vld [vmem:[#allocation7 + $0xc8] sm:$0xff]
    %v9776 = vld [vmem:[#allocation7 + $0xd0] sm:$0xff]
    %v9777 = vld [vmem:[#allocation7 + $0xd8] sm:$0xff]
    %v9778 = vld [vmem:[#allocation7 + $0xe0] sm:$0xff]
    %v9779 = vld [vmem:[#allocation7 + $0xe8] sm:$0xff]
    %v9780 = vld [vmem:[#allocation7 + $0xf0] sm:$0xff]
    %v9781 = vld [vmem:[#allocation7 + $0xf8] sm:$0xff]
    %v9782 = vld [vmem:[#allocation7 + $0x100] sm:$0xff]
    %v9783 = vld [vmem:[#allocation7 + $0x108] sm:$0xff]
    %v9784 = vld [vmem:[#allocation7 + $0x110] sm:$0xff]
    %v9785 = vld [vmem:[#allocation7 + $0x118] sm:$0xff]
    %v9786 = vld [vmem:[#allocation7 + $0x120] sm:$0xff]
    %v9787 = vld [vmem:[#allocation7 + $0x128] sm:$0xff]
    %v9788 = vld [vmem:[#allocation7 + $0x130] sm:$0xff]
    %v9789 = vld [vmem:[#allocation7 + $0x138] sm:$0xff]
    %v9790 = vld [vmem:[#allocation7 + $0x140] sm:$0xff]
    %v9791 = vld [vmem:[#allocation7 + $0x148] sm:$0xff]
    %v9792 = vld [vmem:[#allocation7 + $0x150] sm:$0xff]
    %v9793 = vld [vmem:[#allocation7 + $0x158] sm:$0xff]
    %v9794 = vld [vmem:[#allocation7 + $0x160] sm:$0xff]
    %v9795 = vld [vmem:[#allocation7 + $0x168] sm:$0xff]
    %v9796 = vld [vmem:[#allocation7 + $0x170] sm:$0xff]
    %v9797 = vld [vmem:[#allocation7 + $0x178] sm:$0xff]
    %v9798 = vld [vmem:[#allocation7 + $0x180] sm:$0xff]
    %v9799 = vld [vmem:[#allocation7 + $0x188] sm:$0xff]
    %v9800 = vld [vmem:[#allocation7 + $0x190] sm:$0xff]
    %v9801 = vld [vmem:[#allocation7 + $0x198] sm:$0xff]
    %v9802 = vld [vmem:[#allocation7 + $0x1a0] sm:$0xff]
    %v9803 = vld [vmem:[#allocation7 + $0x1a8] sm:$0xff]
    %v9804 = vld [vmem:[#allocation7 + $0x1b0] sm:$0xff]
    %v9805 = vld [vmem:[#allocation7 + $0x1b8] sm:$0xff]
    %v9806 = vld [vmem:[#allocation7 + $0x1c0] sm:$0xff]
    %v9807 = vld [vmem:[#allocation7 + $0x1c8] sm:$0xff]
    %v9808 = vld [vmem:[#allocation7 + $0x1d0] sm:$0xff]
    %v9809 = vld [vmem:[#allocation7 + $0x1d8] sm:$0xff]
    %v9810 = vld [vmem:[#allocation7 + $0x1e0] sm:$0xff]
    %v9811 = vld [vmem:[#allocation7 + $0x1e8] sm:$0xff]
    %v9812 = vld [vmem:[#allocation7 + $0x1f0] sm:$0xff]
    %v9813 = vld [vmem:[#allocation7 + $0x1f8] sm:$0xff]
    %v9814 = vld [vmem:[#allocation7 + $0x200] sm:$0xff]
    %v9815 = vld [vmem:[#allocation7 + $0x208] sm:$0xff]
    %v9816 = vld [vmem:[#allocation7 + $0x210] sm:$0xff]
    %v9817 = vld [vmem:[#allocation7 + $0x218] sm:$0xff]
    %v9818 = vld [vmem:[#allocation7 + $0x220] sm:$0xff]
    %v9819 = vld [vmem:[#allocation7 + $0x228] sm:$0xff]
    %v9820 = vld [vmem:[#allocation7 + $0x230] sm:$0xff]
    %v9821 = vld [vmem:[#allocation7 + $0x238] sm:$0xff]
    %v9822 = vld [vmem:[#allocation7 + $0x240] sm:$0xff]
    %v9823 = vld [vmem:[#allocation7 + $0x248] sm:$0xff]
    %v9824 = vld [vmem:[#allocation7 + $0x250] sm:$0xff]
    %v9825 = vld [vmem:[#allocation7 + $0x258] sm:$0xff]
    %v9826 = vld [vmem:[#allocation7 + $0x260] sm:$0xff]
    %v9827 = vld [vmem:[#allocation7 + $0x268] sm:$0xff]
    %v9828 = vld [vmem:[#allocation7 + $0x270] sm:$0xff]
    %v9829 = vld [vmem:[#allocation7 + $0x278] sm:$0xff]
    %v9830 = vld [vmem:[#allocation7 + $0x280] sm:$0xff]
    %v9831 = vld [vmem:[#allocation7 + $0x288] sm:$0xff]
    %v9832 = vld [vmem:[#allocation7 + $0x290] sm:$0xff]
    %v9833 = vld [vmem:[#allocation7 + $0x298] sm:$0xff]
    %v9834 = vld [vmem:[#allocation7 + $0x2a0] sm:$0xff]
    %v9835 = vld [vmem:[#allocation7 + $0x2a8] sm:$0xff]
    %v9836 = vld [vmem:[#allocation7 + $0x2b0] sm:$0xff]
    %v9837 = vld [vmem:[#allocation7 + $0x2b8] sm:$0xff]
    %v9838 = vld [vmem:[#allocation7 + $0x2c0] sm:$0xff]
    %v9839 = vld [vmem:[#allocation7 + $0x2c8] sm:$0xff]
    %v9840 = vld [vmem:[#allocation7 + $0x2d0] sm:$0xff]
    %v9841 = vld [vmem:[#allocation7 + $0x2d8] sm:$0xff]
    %v9842 = vld [vmem:[#allocation7 + $0x2e0] sm:$0xff]
    %v9843 = vld [vmem:[#allocation7 + $0x2e8] sm:$0xff]
    %v9844 = vld [vmem:[#allocation7 + $0x2f0] sm:$0xff]
    %v9845 = vld [vmem:[#allocation7 + $0x2f8] sm:$0xff]
    %v9846 = vld [vmem:[#allocation7 + $0x300] sm:$0xff]
    %v9847 = vld [vmem:[#allocation7 + $0x308] sm:$0xff]
    %v9848 = vld [vmem:[#allocation7 + $0x310] sm:$0xff]
    %v9849 = vld [vmem:[#allocation7 + $0x318] sm:$0xff]
    %v9850 = vld [vmem:[#allocation7 + $0x320] sm:$0xff]
    %v9851 = vld [vmem:[#allocation7 + $0x328] sm:$0xff]
    %v9852 = vld [vmem:[#allocation7 + $0x330] sm:$0xff]
    %v9853 = vld [vmem:[#allocation7 + $0x338] sm:$0xff]
    %v9854 = vld [vmem:[#allocation7 + $0x340] sm:$0xff]
    %v9855 = vld [vmem:[#allocation7 + $0x348] sm:$0xff]
    %v9856 = vld [vmem:[#allocation7 + $0x350] sm:$0xff]
    %v9857 = vld [vmem:[#allocation7 + $0x358] sm:$0xff]
    %v9858 = vld [vmem:[#allocation7 + $0x360] sm:$0xff]
    %v9859 = vld [vmem:[#allocation7 + $0x368] sm:$0xff]
    %v9860 = vld [vmem:[#allocation7 + $0x370] sm:$0xff]
    %v9861 = vld [vmem:[#allocation7 + $0x378] sm:$0xff]
    %v9862 = vld [vmem:[#allocation7 + $0x380] sm:$0xff]
    %v9863 = vld [vmem:[#allocation7 + $0x388] sm:$0xff]
    %v9864 = vld [vmem:[#allocation7 + $0x390] sm:$0xff]
    %v9865 = vld [vmem:[#allocation7 + $0x398] sm:$0xff]
    %v9866 = vld [vmem:[#allocation7 + $0x3a0] sm:$0xff]
    %v9867 = vld [vmem:[#allocation7 + $0x3a8] sm:$0xff]
    %v9868 = vld [vmem:[#allocation7 + $0x3b0] sm:$0xff]
    %v9869 = vld [vmem:[#allocation7 + $0x3b8] sm:$0xff]
    %v9870 = vld [vmem:[#allocation7 + $0x3c0] sm:$0xff]
    %v9871 = vld [vmem:[#allocation7 + $0x3c8] sm:$0xff]
    %v9872 = vld [vmem:[#allocation7 + $0x3d0] sm:$0xff]
    %v9873 = vld [vmem:[#allocation7 + $0x3d8] sm:$0xff]
    %v9874 = vld [vmem:[#allocation7 + $0x3e0] sm:$0xff]
    %v9875 = vld [vmem:[#allocation7 + $0x3e8] sm:$0xff]
    %v9876 = vld [vmem:[#allocation7 + $0x3f0] sm:$0xff]
    %v9877 = vld [vmem:[#allocation7 + $0x3f8] sm:$0xff]
    %v9878 = vld [vmem:[#allocation14 + $0x1c] sm:$0xf]
    %v9879 = vpack.c.bf16 %v9744, %v9744
    %v9880 = vpack.c.bf16 %v9745, %v9745
    %v9881 = vpack.c.bf16 %v9746, %v9746
    %v9882 = vpack.c.bf16 %v9747, %v9747
    %v9884 = vlaneseq
    %v9885 = vshrl.u32 %v9884, 7
    %v9886 = vsub.s32 0, %v9885
    %v9887 = vrot.slane %v9878, %v9886
    %v9888 = vlaneseq
    %v9889 = vshrl.u32 %v9888, 7
    %v9890 = vsub.s32 1, %v9889
    %v9891 = vrot.slane %v9878, %v9890
    %v9892 = vlaneseq
    %v9893 = vshrl.u32 %v9892, 7
    %v9894 = vsub.s32 2, %v9893
    %v9895 = vrot.slane %v9878, %v9894
    %v9896 = vlaneseq
    %v9897 = vshrl.u32 %v9896, 7
    %v9898 = vsub.s32 3, %v9897
    %v9899 = vrot.slane %v9878, %v9898
    %v10032 = vunpack.c.l.b16 %v9750
    %v10033 = vunpack.c.h.b16 %v9750
    %v10034 = vunpack.c.l.b16 %v9751
    %v10035 = vunpack.c.h.b16 %v9751
    %v10036 = vunpack.c.l.b16 %v9752
    %v10037 = vunpack.c.h.b16 %v9752
    %v10038 = vunpack.c.l.b16 %v9753
    %v10039 = vunpack.c.h.b16 %v9753
    %v10040 = vunpack.c.l.b16 %v9754
    %v10041 = vunpack.c.h.b16 %v9754
    %v10042 = vunpack.c.l.b16 %v9755
    %v10043 = vunpack.c.h.b16 %v9755
    %v10044 = vunpack.c.l.b16 %v9756
    %v10045 = vunpack.c.h.b16 %v9756
    %v10046 = vunpack.c.l.b16 %v9757
    %v10047 = vunpack.c.h.b16 %v9757
    %v10048 = vunpack.c.l.b16 %v9758
    %v10049 = vunpack.c.h.b16 %v9758
    %v10050 = vunpack.c.l.b16 %v9759
    %v10051 = vunpack.c.h.b16 %v9759
    %v10052 = vunpack.c.l.b16 %v9760
    %v10053 = vunpack.c.h.b16 %v9760
    %v10054 = vunpack.c.l.b16 %v9761
    %v10055 = vunpack.c.h.b16 %v9761
    %v10056 = vunpack.c.l.b16 %v9762
    %v10057 = vunpack.c.h.b16 %v9762
    %v10058 = vunpack.c.l.b16 %v9763
    %v10059 = vunpack.c.h.b16 %v9763
    %v10060 = vunpack.c.l.b16 %v9764
    %v10061 = vunpack.c.h.b16 %v9764
    %v10062 = vunpack.c.l.b16 %v9765
    %v10063 = vunpack.c.h.b16 %v9765
    %v10064 = vunpack.c.l.b16 %v9766
    %v10065 = vunpack.c.h.b16 %v9766
    %v10066 = vunpack.c.l.b16 %v9767
    %v10067 = vunpack.c.h.b16 %v9767
    %v10068 = vunpack.c.l.b16 %v9768
    %v10069 = vunpack.c.h.b16 %v9768
    %v10070 = vunpack.c.l.b16 %v9769
    %v10071 = vunpack.c.h.b16 %v9769
    %v10072 = vunpack.c.l.b16 %v9770
    %v10073 = vunpack.c.h.b16 %v9770
    %v10074 = vunpack.c.l.b16 %v9771
    %v10075 = vunpack.c.h.b16 %v9771
    %v10076 = vunpack.c.l.b16 %v9772
    %v10077 = vunpack.c.h.b16 %v9772
    %v10078 = vunpack.c.l.b16 %v9773
    %v10079 = vunpack.c.h.b16 %v9773
    %v10080 = vunpack.c.l.b16 %v9774
    %v10081 = vunpack.c.h.b16 %v9774
    %v10082 = vunpack.c.l.b16 %v9775
    %v10083 = vunpack.c.h.b16 %v9775
    %v10084 = vunpack.c.l.b16 %v9776
    %v10085 = vunpack.c.h.b16 %v9776
    %v10086 = vunpack.c.l.b16 %v9777
    %v10087 = vunpack.c.h.b16 %v9777
    %v10088 = vunpack.c.l.b16 %v9778
    %v10089 = vunpack.c.h.b16 %v9778
    %v10090 = vunpack.c.l.b16 %v9779
    %v10091 = vunpack.c.h.b16 %v9779
    %v10092 = vunpack.c.l.b16 %v9780
    %v10093 = vunpack.c.h.b16 %v9780
    %v10094 = vunpack.c.l.b16 %v9781
    %v10095 = vunpack.c.h.b16 %v9781
    %v10096 = vunpack.c.l.b16 %v9782
    %v10097 = vunpack.c.h.b16 %v9782
    %v10098 = vunpack.c.l.b16 %v9783
    %v10099 = vunpack.c.h.b16 %v9783
    %v10100 = vunpack.c.l.b16 %v9784
    %v10101 = vunpack.c.h.b16 %v9784
    %v10102 = vunpack.c.l.b16 %v9785
    %v10103 = vunpack.c.h.b16 %v9785
    %v10104 = vunpack.c.l.b16 %v9786
    %v10105 = vunpack.c.h.b16 %v9786
    %v10106 = vunpack.c.l.b16 %v9787
    %v10107 = vunpack.c.h.b16 %v9787
    %v10108 = vunpack.c.l.b16 %v9788
    %v10109 = vunpack.c.h.b16 %v9788
    %v10110 = vunpack.c.l.b16 %v9789
    %v10111 = vunpack.c.h.b16 %v9789
    %v10112 = vunpack.c.l.b16 %v9790
    %v10113 = vunpack.c.h.b16 %v9790
    %v10114 = vunpack.c.l.b16 %v9791
    %v10115 = vunpack.c.h.b16 %v9791
    %v10116 = vunpack.c.l.b16 %v9792
    %v10117 = vunpack.c.h.b16 %v9792
    %v10118 = vunpack.c.l.b16 %v9793
    %v10119 = vunpack.c.h.b16 %v9793
    %v10120 = vunpack.c.l.b16 %v9794
    %v10121 = vunpack.c.h.b16 %v9794
    %v10122 = vunpack.c.l.b16 %v9795
    %v10123 = vunpack.c.h.b16 %v9795
    %v10124 = vunpack.c.l.b16 %v9796
    %v10125 = vunpack.c.h.b16 %v9796
    %v10126 = vunpack.c.l.b16 %v9797
    %v10127 = vunpack.c.h.b16 %v9797
    %v10128 = vunpack.c.l.b16 %v9798
    %v10129 = vunpack.c.h.b16 %v9798
    %v10130 = vunpack.c.l.b16 %v9799
    %v10131 = vunpack.c.h.b16 %v9799
    %v10132 = vunpack.c.l.b16 %v9800
    %v10133 = vunpack.c.h.b16 %v9800
    %v10134 = vunpack.c.l.b16 %v9801
    %v10135 = vunpack.c.h.b16 %v9801
    %v10136 = vunpack.c.l.b16 %v9802
    %v10137 = vunpack.c.h.b16 %v9802
    %v10138 = vunpack.c.l.b16 %v9803
    %v10139 = vunpack.c.h.b16 %v9803
    %v10140 = vunpack.c.l.b16 %v9804
    %v10141 = vunpack.c.h.b16 %v9804
    %v10142 = vunpack.c.l.b16 %v9805
    %v10143 = vunpack.c.h.b16 %v9805
    %v10144 = vunpack.c.l.b16 %v9806
    %v10145 = vunpack.c.h.b16 %v9806
    %v10146 = vunpack.c.l.b16 %v9807
    %v10147 = vunpack.c.h.b16 %v9807
    %v10148 = vunpack.c.l.b16 %v9808
    %v10149 = vunpack.c.h.b16 %v9808
    %v10150 = vunpack.c.l.b16 %v9809
    %v10151 = vunpack.c.h.b16 %v9809
    %v10152 = vunpack.c.l.b16 %v9810
    %v10153 = vunpack.c.h.b16 %v9810
    %v10154 = vunpack.c.l.b16 %v9811
    %v10155 = vunpack.c.h.b16 %v9811
    %v10156 = vunpack.c.l.b16 %v9812
    %v10157 = vunpack.c.h.b16 %v9812
    %v10158 = vunpack.c.l.b16 %v9813
    %v10159 = vunpack.c.h.b16 %v9813
    %v10160 = vunpack.c.l.b16 %v9814
    %v10161 = vunpack.c.h.b16 %v9814
    %v10162 = vunpack.c.l.b16 %v9815
    %v10163 = vunpack.c.h.b16 %v9815
    %v10164 = vunpack.c.l.b16 %v9816
    %v10165 = vunpack.c.h.b16 %v9816
    %v10166 = vunpack.c.l.b16 %v9817
    %v10167 = vunpack.c.h.b16 %v9817
    %v10168 = vunpack.c.l.b16 %v9818
    %v10169 = vunpack.c.h.b16 %v9818
    %v10170 = vunpack.c.l.b16 %v9819
    %v10171 = vunpack.c.h.b16 %v9819
    %v10172 = vunpack.c.l.b16 %v9820
    %v10173 = vunpack.c.h.b16 %v9820
    %v10174 = vunpack.c.l.b16 %v9821
    %v10175 = vunpack.c.h.b16 %v9821
    %v10176 = vunpack.c.l.b16 %v9822
    %v10177 = vunpack.c.h.b16 %v9822
    %v10178 = vunpack.c.l.b16 %v9823
    %v10179 = vunpack.c.h.b16 %v9823
    %v10180 = vunpack.c.l.b16 %v9824
    %v10181 = vunpack.c.h.b16 %v9824
    %v10182 = vunpack.c.l.b16 %v9825
    %v10183 = vunpack.c.h.b16 %v9825
    %v10184 = vunpack.c.l.b16 %v9826
    %v10185 = vunpack.c.h.b16 %v9826
    %v10186 = vunpack.c.l.b16 %v9827
    %v10187 = vunpack.c.h.b16 %v9827
    %v10188 = vunpack.c.l.b16 %v9828
    %v10189 = vunpack.c.h.b16 %v9828
    %v10190 = vunpack.c.l.b16 %v9829
    %v10191 = vunpack.c.h.b16 %v9829
    %v10192 = vunpack.c.l.b16 %v9830
    %v10193 = vunpack.c.h.b16 %v9830
    %v10194 = vunpack.c.l.b16 %v9831
    %v10195 = vunpack.c.h.b16 %v9831
    %v10196 = vunpack.c.l.b16 %v9832
    %v10197 = vunpack.c.h.b16 %v9832
    %v10198 = vunpack.c.l.b16 %v9833
    %v10199 = vunpack.c.h.b16 %v9833
    %v10200 = vunpack.c.l.b16 %v9834
    %v10201 = vunpack.c.h.b16 %v9834
    %v10202 = vunpack.c.l.b16 %v9835
    %v10203 = vunpack.c.h.b16 %v9835
    %v10204 = vunpack.c.l.b16 %v9836
    %v10205 = vunpack.c.h.b16 %v9836
    %v10206 = vunpack.c.l.b16 %v9837
    %v10207 = vunpack.c.h.b16 %v9837
    %v10208 = vunpack.c.l.b16 %v9838
    %v10209 = vunpack.c.h.b16 %v9838
    %v10210 = vunpack.c.l.b16 %v9839
    %v10211 = vunpack.c.h.b16 %v9839
    %v10212 = vunpack.c.l.b16 %v9840
    %v10213 = vunpack.c.h.b16 %v9840
    %v10214 = vunpack.c.l.b16 %v9841
    %v10215 = vunpack.c.h.b16 %v9841
    %v10216 = vunpack.c.l.b16 %v9842
    %v10217 = vunpack.c.h.b16 %v9842
    %v10218 = vunpack.c.l.b16 %v9843
    %v10219 = vunpack.c.h.b16 %v9843
    %v10220 = vunpack.c.l.b16 %v9844
    %v10221 = vunpack.c.h.b16 %v9844
    %v10222 = vunpack.c.l.b16 %v9845
    %v10223 = vunpack.c.h.b16 %v9845
    %v10224 = vunpack.c.l.b16 %v9846
    %v10225 = vunpack.c.h.b16 %v9846
    %v10226 = vunpack.c.l.b16 %v9847
    %v10227 = vunpack.c.h.b16 %v9847
    %v10228 = vunpack.c.l.b16 %v9848
    %v10229 = vunpack.c.h.b16 %v9848
    %v10230 = vunpack.c.l.b16 %v9849
    %v10231 = vunpack.c.h.b16 %v9849
    %v10232 = vunpack.c.l.b16 %v9850
    %v10233 = vunpack.c.h.b16 %v9850
    %v10234 = vunpack.c.l.b16 %v9851
    %v10235 = vunpack.c.h.b16 %v9851
    %v10236 = vunpack.c.l.b16 %v9852
    %v10237 = vunpack.c.h.b16 %v9852
    %v10238 = vunpack.c.l.b16 %v9853
    %v10239 = vunpack.c.h.b16 %v9853
    %v10240 = vunpack.c.l.b16 %v9854
    %v10241 = vunpack.c.h.b16 %v9854
    %v10242 = vunpack.c.l.b16 %v9855
    %v10243 = vunpack.c.h.b16 %v9855
    %v10244 = vunpack.c.l.b16 %v9856
    %v10245 = vunpack.c.h.b16 %v9856
    %v10246 = vunpack.c.l.b16 %v9857
    %v10247 = vunpack.c.h.b16 %v9857
    %v10248 = vunpack.c.l.b16 %v9858
    %v10249 = vunpack.c.h.b16 %v9858
    %v10250 = vunpack.c.l.b16 %v9859
    %v10251 = vunpack.c.h.b16 %v9859
    %v10252 = vunpack.c.l.b16 %v9860
    %v10253 = vunpack.c.h.b16 %v9860
    %v10254 = vunpack.c.l.b16 %v9861
    %v10255 = vunpack.c.h.b16 %v9861
    %v10256 = vunpack.c.l.b16 %v9862
    %v10257 = vunpack.c.h.b16 %v9862
    %v10258 = vunpack.c.l.b16 %v9863
    %v10259 = vunpack.c.h.b16 %v9863
    %v10260 = vunpack.c.l.b16 %v9864
    %v10261 = vunpack.c.h.b16 %v9864
    %v10262 = vunpack.c.l.b16 %v9865
    %v10263 = vunpack.c.h.b16 %v9865
    %v10264 = vunpack.c.l.b16 %v9866
    %v10265 = vunpack.c.h.b16 %v9866
    %v10266 = vunpack.c.l.b16 %v9867
    %v10267 = vunpack.c.h.b16 %v9867
    %v10268 = vunpack.c.l.b16 %v9868
    %v10269 = vunpack.c.h.b16 %v9868
    %v10270 = vunpack.c.l.b16 %v9869
    %v10271 = vunpack.c.h.b16 %v9869
    %v10272 = vunpack.c.l.b16 %v9870
    %v10273 = vunpack.c.h.b16 %v9870
    %v10274 = vunpack.c.l.b16 %v9871
    %v10275 = vunpack.c.h.b16 %v9871
    %v10276 = vunpack.c.l.b16 %v9872
    %v10277 = vunpack.c.h.b16 %v9872
    %v10278 = vunpack.c.l.b16 %v9873
    %v10279 = vunpack.c.h.b16 %v9873
    %v10280 = vunpack.c.l.b16 %v9874
    %v10281 = vunpack.c.h.b16 %v9874
    %v10282 = vunpack.c.l.b16 %v9875
    %v10283 = vunpack.c.h.b16 %v9875
    %v10284 = vunpack.c.l.b16 %v9876
    %v10285 = vunpack.c.h.b16 %v9876
    %v10286 = vunpack.c.l.b16 %v9877
    %v10287 = vunpack.c.h.b16 %v9877
    %v10288 = vpack.c.b16 %v10036, %v10032
    %v10289 = vpack.c.b16 %v10037, %v10033
    %v10290 = vpack.c.b16 %v10038, %v10034
    %v10291 = vpack.c.b16 %v10039, %v10035
    %v10292 = vpack.c.b16 %v10044, %v10040
    %v10293 = vpack.c.b16 %v10045, %v10041
    %v10294 = vpack.c.b16 %v10046, %v10042
    %v10295 = vpack.c.b16 %v10047, %v10043
    %v10296 = vpack.c.b16 %v10052, %v10048
    %v10297 = vpack.c.b16 %v10053, %v10049
    %v10298 = vpack.c.b16 %v10054, %v10050
    %v10299 = vpack.c.b16 %v10055, %v10051
    %v10300 = vpack.c.b16 %v10060, %v10056
    %v10301 = vpack.c.b16 %v10061, %v10057
    %v10302 = vpack.c.b16 %v10062, %v10058
    %v10303 = vpack.c.b16 %v10063, %v10059
    %v10304 = vpack.c.b16 %v10068, %v10064
    %v10305 = vpack.c.b16 %v10069, %v10065
    %v10306 = vpack.c.b16 %v10070, %v10066
    %v10307 = vpack.c.b16 %v10071, %v10067
    %v10308 = vpack.c.b16 %v10076, %v10072
    %v10309 = vpack.c.b16 %v10077, %v10073
    %v10310 = vpack.c.b16 %v10078, %v10074
    %v10311 = vpack.c.b16 %v10079, %v10075
    %v10312 = vpack.c.b16 %v10084, %v10080
    %v10313 = vpack.c.b16 %v10085, %v10081
    %v10314 = vpack.c.b16 %v10086, %v10082
    %v10315 = vpack.c.b16 %v10087, %v10083
    %v10316 = vpack.c.b16 %v10092, %v10088
    %v10317 = vpack.c.b16 %v10093, %v10089
    %v10318 = vpack.c.b16 %v10094, %v10090
    %v10319 = vpack.c.b16 %v10095, %v10091
    %v10320 = vpack.c.b16 %v10100, %v10096
    %v10321 = vpack.c.b16 %v10101, %v10097
    %v10322 = vpack.c.b16 %v10102, %v10098
    %v10323 = vpack.c.b16 %v10103, %v10099
    %v10324 = vpack.c.b16 %v10108, %v10104
    %v10325 = vpack.c.b16 %v10109, %v10105
    %v10326 = vpack.c.b16 %v10110, %v10106
    %v10327 = vpack.c.b16 %v10111, %v10107
    %v10328 = vpack.c.b16 %v10116, %v10112
    %v10329 = vpack.c.b16 %v10117, %v10113
    %v10330 = vpack.c.b16 %v10118, %v10114
    %v10331 = vpack.c.b16 %v10119, %v10115
    %v10332 = vpack.c.b16 %v10124, %v10120
    %v10333 = vpack.c.b16 %v10125, %v10121
    %v10334 = vpack.c.b16 %v10126, %v10122
    %v10335 = vpack.c.b16 %v10127, %v10123
    %v10336 = vpack.c.b16 %v10132, %v10128
    %v10337 = vpack.c.b16 %v10133, %v10129
    %v10338 = vpack.c.b16 %v10134, %v10130
    %v10339 = vpack.c.b16 %v10135, %v10131
    %v10340 = vpack.c.b16 %v10140, %v10136
    %v10341 = vpack.c.b16 %v10141, %v10137
    %v10342 = vpack.c.b16 %v10142, %v10138
    %v10343 = vpack.c.b16 %v10143, %v10139
    %v10344 = vpack.c.b16 %v10148, %v10144
    %v10345 = vpack.c.b16 %v10149, %v10145
    %v10346 = vpack.c.b16 %v10150, %v10146
    %v10347 = vpack.c.b16 %v10151, %v10147
    %v10348 = vpack.c.b16 %v10156, %v10152
    %v10349 = vpack.c.b16 %v10157, %v10153
    %v10350 = vpack.c.b16 %v10158, %v10154
    %v10351 = vpack.c.b16 %v10159, %v10155
    %v10352 = vpack.c.b16 %v10164, %v10160
    %v10353 = vpack.c.b16 %v10165, %v10161
    %v10354 = vpack.c.b16 %v10166, %v10162
    %v10355 = vpack.c.b16 %v10167, %v10163
    %v10356 = vpack.c.b16 %v10172, %v10168
    %v10357 = vpack.c.b16 %v10173, %v10169
    %v10358 = vpack.c.b16 %v10174, %v10170
    %v10359 = vpack.c.b16 %v10175, %v10171
    %v10360 = vpack.c.b16 %v10180, %v10176
    %v10361 = vpack.c.b16 %v10181, %v10177
    %v10362 = vpack.c.b16 %v10182, %v10178
    %v10363 = vpack.c.b16 %v10183, %v10179
    %v10364 = vpack.c.b16 %v10188, %v10184
    %v10365 = vpack.c.b16 %v10189, %v10185
    %v10366 = vpack.c.b16 %v10190, %v10186
    %v10367 = vpack.c.b16 %v10191, %v10187
    %v10368 = vpack.c.b16 %v10196, %v10192
    %v10369 = vpack.c.b16 %v10197, %v10193
    %v10370 = vpack.c.b16 %v10198, %v10194
    %v10371 = vpack.c.b16 %v10199, %v10195
    %v10372 = vpack.c.b16 %v10204, %v10200
    %v10373 = vpack.c.b16 %v10205, %v10201
    %v10374 = vpack.c.b16 %v10206, %v10202
    %v10375 = vpack.c.b16 %v10207, %v10203
    %v10376 = vpack.c.b16 %v10212, %v10208
    %v10377 = vpack.c.b16 %v10213, %v10209
    %v10378 = vpack.c.b16 %v10214, %v10210
    %v10379 = vpack.c.b16 %v10215, %v10211
    %v10380 = vpack.c.b16 %v10220, %v10216
    %v10381 = vpack.c.b16 %v10221, %v10217
    %v10382 = vpack.c.b16 %v10222, %v10218
    %v10383 = vpack.c.b16 %v10223, %v10219
    %v10384 = vpack.c.b16 %v10228, %v10224
    %v10385 = vpack.c.b16 %v10229, %v10225
    %v10386 = vpack.c.b16 %v10230, %v10226
    %v10387 = vpack.c.b16 %v10231, %v10227
    %v10388 = vpack.c.b16 %v10236, %v10232
    %v10389 = vpack.c.b16 %v10237, %v10233
    %v10390 = vpack.c.b16 %v10238, %v10234
    %v10391 = vpack.c.b16 %v10239, %v10235
    %v10392 = vpack.c.b16 %v10244, %v10240
    %v10393 = vpack.c.b16 %v10245, %v10241
    %v10394 = vpack.c.b16 %v10246, %v10242
    %v10395 = vpack.c.b16 %v10247, %v10243
    %v10396 = vpack.c.b16 %v10252, %v10248
    %v10397 = vpack.c.b16 %v10253, %v10249
    %v10398 = vpack.c.b16 %v10254, %v10250
    %v10399 = vpack.c.b16 %v10255, %v10251
    %v10400 = vpack.c.b16 %v10260, %v10256
    %v10401 = vpack.c.b16 %v10261, %v10257
    %v10402 = vpack.c.b16 %v10262, %v10258
    %v10403 = vpack.c.b16 %v10263, %v10259
    %v10404 = vpack.c.b16 %v10268, %v10264
    %v10405 = vpack.c.b16 %v10269, %v10265
    %v10406 = vpack.c.b16 %v10270, %v10266
    %v10407 = vpack.c.b16 %v10271, %v10267
    %v10408 = vpack.c.b16 %v10276, %v10272
    %v10409 = vpack.c.b16 %v10277, %v10273
    %v10410 = vpack.c.b16 %v10278, %v10274
    %v10411 = vpack.c.b16 %v10279, %v10275
    %v10412 = vpack.c.b16 %v10284, %v10280
    %v10413 = vpack.c.b16 %v10285, %v10281
    %v10414 = vpack.c.b16 %v10286, %v10282
    %v10415 = vpack.c.b16 %v10287, %v10283
    %10544 = vmatprep.subr.bf16.mxu0 %v10317
    %10545 = vmatpush1.bf16.msra.mxu0 %v10316
    %10546 = vmatprep.subr.bf16.mxu0 %v10313
    %10547 = vmatpush1.bf16.msra.mxu0 %v10312
    %10548 = vmatprep.subr.bf16.mxu0 %v10309
    %10549 = vmatpush1.bf16.msra.mxu0 %v10308
    %10550 = vmatprep.subr.bf16.mxu0 %v10305
    %10551 = vmatpush1.bf16.msra.mxu0 %v10304
    %10552 = vmatprep.subr.bf16.mxu0 %v10301
    %10553 = vmatpush1.bf16.msra.mxu0 %v10300
    %10554 = vmatprep.subr.bf16.mxu0 %v10297
    %10555 = vmatpush1.bf16.msra.mxu0 %v10296
    %10556 = vmatprep.subr.bf16.mxu0 %v10293
    %10557 = vmatpush1.bf16.msra.mxu0 %v10292
    %10558 = vmatprep.subr.bf16.mxu0 %v10289
    %10559 = vmatpush1.bf16.msra.mxu0 %v10288
    %10560 = vmatprep.subr.bf16.mxu0 %v10349
    %10561 = vmatpush2.bf16.msra.mxu0 %v10348
    %10562 = vmatprep.subr.bf16.mxu0 %v10345
    %10563 = vmatpush2.bf16.msra.mxu0 %v10344
    %10564 = vmatprep.subr.bf16.mxu0 %v10341
    %10565 = vmatpush2.bf16.msra.mxu0 %v10340
    %10566 = vmatprep.subr.bf16.mxu0 %v10337
    %10567 = vmatpush2.bf16.msra.mxu0 %v10336
    %10568 = vmatprep.subr.bf16.mxu0 %v10333
    %10569 = vmatpush2.bf16.msra.mxu0 %v10332
    %10570 = vmatprep.subr.bf16.mxu0 %v10329
    %10571 = vmatpush2.bf16.msra.mxu0 %v10328
    %10572 = vmatprep.subr.bf16.mxu0 %v10325
    %10573 = vmatpush2.bf16.msra.mxu0 %v10324
    %10574 = vmatprep.subr.bf16.mxu0 %v10321
    %10575 = vmatpush2.bf16.msra.mxu0 %v10320
    %10576 = vmatprep.mubr.bf16.mxu0 %v9880
    %10577 = vmatmul.mubr.bf16.gmra.mxu0 %v9879
    %v10578 = vpop.f32.mrf.mxu0
    %v10579 = vadd.f32 %v9887, %v10578
    %v10580 = vpop.f32.mrf.mxu0
    %v10581 = vadd.f32 %v9891, %v10580
    %v10582 = vpop.f32.mrf.mxu0
    %v10583 = vpop.f32.mrf.mxu0
    %10584 = vdwg.mxu0
    %10585 = vmatprep.subr.bf16.mxu0 %v10381
    %10586 = vmatpush1.bf16.msra.mxu0 %v10380
    %10587 = vmatprep.subr.bf16.mxu0 %v10377
    %10588 = vmatpush1.bf16.msra.mxu0 %v10376
    %10589 = vmatprep.subr.bf16.mxu0 %v10373
    %10590 = vmatpush1.bf16.msra.mxu0 %v10372
    %10591 = vmatprep.subr.bf16.mxu0 %v10369
    %10592 = vmatpush1.bf16.msra.mxu0 %v10368
    %10593 = vmatprep.subr.bf16.mxu0 %v10365
    %10594 = vmatpush1.bf16.msra.mxu0 %v10364
    %10595 = vmatprep.subr.bf16.mxu0 %v10361
    %10596 = vmatpush1.bf16.msra.mxu0 %v10360
    %10597 = vmatprep.subr.bf16.mxu0 %v10357
    %10598 = vmatpush1.bf16.msra.mxu0 %v10356
    %10599 = vmatprep.subr.bf16.mxu0 %v10353
    %10600 = vmatpush1.bf16.msra.mxu0 %v10352
    %10601 = vmatprep.subr.bf16.mxu0 %v10413
    %10602 = vmatpush2.bf16.msra.mxu0 %v10412
    %10603 = vmatprep.subr.bf16.mxu0 %v10409
    %10604 = vmatpush2.bf16.msra.mxu0 %v10408
    %10605 = vmatprep.subr.bf16.mxu0 %v10405
    %10606 = vmatpush2.bf16.msra.mxu0 %v10404
    %10607 = vmatprep.subr.bf16.mxu0 %v10401
    %10608 = vmatpush2.bf16.msra.mxu0 %v10400
    %10609 = vmatprep.subr.bf16.mxu0 %v10397
    %10610 = vmatpush2.bf16.msra.mxu0 %v10396
    %10611 = vmatprep.subr.bf16.mxu0 %v10393
    %10612 = vmatpush2.bf16.msra.mxu0 %v10392
    %10613 = vmatprep.subr.bf16.mxu0 %v10389
    %10614 = vmatpush2.bf16.msra.mxu0 %v10388
    %10615 = vmatprep.subr.bf16.mxu0 %v10385
    %10616 = vmatpush2.bf16.msra.mxu0 %v10384
    %10617 = vmatprep.mubr.bf16.mxu0 %v9882
    %10618 = vmatmul.mubr.bf16.gmra.mxu0 %v9881
    %v10619 = vpop.f32.mrf.mxu0
    %v10620 = vadd.f32 %v10579, %v10619
    %v10621 = vpop.f32.mrf.mxu0
    %v10622 = vadd.f32 %v10581, %v10621
    %v10623 = vpop.f32.mrf.mxu0
    %v10624 = vpop.f32.mrf.mxu0
    %10625 = vdwg.mxu0
    %10626 = vmatprep.subr.bf16.mxu0 %v10319
    %10627 = vmatpush1.bf16.msra.mxu0 %v10318
    %10628 = vmatprep.subr.bf16.mxu0 %v10315
    %10629 = vmatpush1.bf16.msra.mxu0 %v10314
    %10630 = vmatprep.subr.bf16.mxu0 %v10311
    %10631 = vmatpush1.bf16.msra.mxu0 %v10310
    %10632 = vmatprep.subr.bf16.mxu0 %v10307
    %10633 = vmatpush1.bf16.msra.mxu0 %v10306
    %10634 = vmatprep.subr.bf16.mxu0 %v10303
    %10635 = vmatpush1.bf16.msra.mxu0 %v10302
    %10636 = vmatprep.subr.bf16.mxu0 %v10299
    %10637 = vmatpush1.bf16.msra.mxu0 %v10298
    %10638 = vmatprep.subr.bf16.mxu0 %v10295
    %10639 = vmatpush1.bf16.msra.mxu0 %v10294
    %10640 = vmatprep.subr.bf16.mxu0 %v10291
    %10641 = vmatpush1.bf16.msra.mxu0 %v10290
    %10642 = vmatprep.subr.bf16.mxu0 %v10351
    %10643 = vmatpush2.bf16.msra.mxu0 %v10350
    %10644 = vmatprep.subr.bf16.mxu0 %v10347
    %10645 = vmatpush2.bf16.msra.mxu0 %v10346
    %10646 = vmatprep.subr.bf16.mxu0 %v10343
    %10647 = vmatpush2.bf16.msra.mxu0 %v10342
    %10648 = vmatprep.subr.bf16.mxu0 %v10339
    %10649 = vmatpush2.bf16.msra.mxu0 %v10338
    %10650 = vmatprep.subr.bf16.mxu0 %v10335
    %10651 = vmatpush2.bf16.msra.mxu0 %v10334
    %10652 = vmatprep.subr.bf16.mxu0 %v10331
    %10653 = vmatpush2.bf16.msra.mxu0 %v10330
    %10654 = vmatprep.subr.bf16.mxu0 %v10327
    %10655 = vmatpush2.bf16.msra.mxu0 %v10326
    %10656 = vmatprep.subr.bf16.mxu0 %v10323
    %10657 = vmatpush2.bf16.msra.mxu0 %v10322
    %10658 = vmatprep.mubr.bf16.mxu0 %v9880
    %10659 = vmatmul.mubr.bf16.gmra.mxu0 %v9879
    %v10660 = vpop.f32.mrf.mxu0
    %v10661 = vadd.f32 %v9895, %v10660
    %v10662 = vpop.f32.mrf.mxu0
    %v10663 = vadd.f32 %v9899, %v10662
    %v10664 = vpop.f32.mrf.mxu0
    %v10665 = vpop.f32.mrf.mxu0
    %10666 = vdwg.mxu0
    %10667 = vmatprep.subr.bf16.mxu0 %v10383
    %10668 = vmatpush1.bf16.msra.mxu0 %v10382
    %10669 = vmatprep.subr.bf16.mxu0 %v10379
    %10670 = vmatpush1.bf16.msra.mxu0 %v10378
    %10671 = vmatprep.subr.bf16.mxu0 %v10375
    %10672 = vmatpush1.bf16.msra.mxu0 %v10374
    %10673 = vmatprep.subr.bf16.mxu0 %v10371
    %10674 = vmatpush1.bf16.msra.mxu0 %v10370
    %10675 = vmatprep.subr.bf16.mxu0 %v10367
    %10676 = vmatpush1.bf16.msra.mxu0 %v10366
    %10677 = vmatprep.subr.bf16.mxu0 %v10363
    %10678 = vmatpush1.bf16.msra.mxu0 %v10362
    %10679 = vmatprep.subr.bf16.mxu0 %v10359
    %10680 = vmatpush1.bf16.msra.mxu0 %v10358
    %10681 = vmatprep.subr.bf16.mxu0 %v10355
    %10682 = vmatpush1.bf16.msra.mxu0 %v10354
    %10683 = vmatprep.subr.bf16.mxu0 %v10415
    %10684 = vmatpush2.bf16.msra.mxu0 %v10414
    %10685 = vmatprep.subr.bf16.mxu0 %v10411
    %10686 = vmatpush2.bf16.msra.mxu0 %v10410
    %10687 = vmatprep.subr.bf16.mxu0 %v10407
    %10688 = vmatpush2.bf16.msra.mxu0 %v10406
    %10689 = vmatprep.subr.bf16.mxu0 %v10403
    %10690 = vmatpush2.bf16.msra.mxu0 %v10402
    %10691 = vmatprep.subr.bf16.mxu0 %v10399
    %10692 = vmatpush2.bf16.msra.mxu0 %v10398
    %10693 = vmatprep.subr.bf16.mxu0 %v10395
    %10694 = vmatpush2.bf16.msra.mxu0 %v10394
    %10695 = vmatprep.subr.bf16.mxu0 %v10391
    %10696 = vmatpush2.bf16.msra.mxu0 %v10390
    %10697 = vmatprep.subr.bf16.mxu0 %v10387
    %10698 = vmatpush2.bf16.msra.mxu0 %v10386
    %10699 = vmatprep.mubr.bf16.mxu0 %v9882
    %10700 = vmatmul.mubr.bf16.gmra.mxu0 %v9881
    %v10701 = vpop.f32.mrf.mxu0
    %v10702 = vadd.f32 %v10661, %v10701
    %v10703 = vpop.f32.mrf.mxu0
    %v10704 = vadd.f32 %v10663, %v10703
    %v10705 = vpop.f32.mrf.mxu0
    %v10706 = vpop.f32.mrf.mxu0
    %10707 = vdwg.mxu0
    %v10708 = vld [vmem:[#allocation15] sm:$0xf]
    %v10709 = vld [vmem:[#allocation14 + $0x23] sm:$0x1]
    %v10711 = vlaneseq
    %v10712 = vshrl.u32 %v10711, 7
    %v10713 = vsub.s32 0, %v10712
    %v10714 = vrot.slane %v10708, %v10713
    %v10715 = vlaneseq
    %v10716 = vshrl.u32 %v10715, 7
    %v10717 = vsub.s32 1, %v10716
    %v10718 = vrot.slane %v10708, %v10717
    %v10719 = vlaneseq
    %v10720 = vshrl.u32 %v10719, 7
    %v10721 = vsub.s32 2, %v10720
    %v10722 = vrot.slane %v10708, %v10721
    %v10723 = vlaneseq
    %v10724 = vshrl.u32 %v10723, 7
    %v10725 = vsub.s32 3, %v10724
    %v10726 = vrot.slane %v10708, %v10725
    %v10731 = vmul.f32 %v4898, %v10714
    %v10732 = vmul.f32 %v4900, %v10718
    %v10733 = vmul.f32 %v4980, %v10722
    %v10734 = vmul.f32 %v4982, %v10726
    %v10735 = vadd.f32 %v10731, %v10732
    %v10736 = vadd.f32 %v10735, %v10733
    %v10737 = vadd.f32 %v10736, %v10734
    %10738 = vadd.xlane.f32.xlu0 %v10737
    %v10739 = vpop.xlane.xlu0 %10738
    %v10741 = vlaneseq
    %v10742 = vshrl.u32 %v10741, 7
    %v10743 = vsub.s32 0, %v10742
    %v10744 = vrot.slane %v10709, %v10743
    %v10746 = vadd.f32 %v10739, %v10744
    %v10747 = vxor.u32 %v10746, 2147483648
    %v10748 = vmul.f32 %v10747, 1.442695
    %v10749 = vpow.pop %v10748
    %v10750 = vadd.f32 %v10749, 1.0
    %v10751 = vrcp.pop %v10750
    %v10752 = vmul.f32 1.0, %v10751
    %v10753 = vmul.f32 %v10620, %v10714
    %v10754 = vmul.f32 %v10622, %v10718
    %v10755 = vmul.f32 %v10702, %v10722
    %v10756 = vmul.f32 %v10704, %v10726
    %v10757 = vadd.f32 %v10753, %v10754
    %v10758 = vadd.f32 %v10757, %v10755
    %v10759 = vadd.f32 %v10758, %v10756
    %10760 = vadd.xlane.f32.xlu0 %v10759
    %v10761 = vpop.xlane.xlu0 %10760
    %v10762 = vadd.f32 %v10761, %v10744
    %v10763 = vxor.u32 %v10762, 2147483648
    %v10764 = vmul.f32 %v10763, 1.442695
    %v10765 = vpow.pop %v10764
    %v10766 = vadd.f32 %v10765, 1.0
    %v10767 = vrcp.pop %v10766
    %v10768 = vmul.f32 1.0, %v10767
    %v10769 = vmax.f32 %v10752, %v10768
    %v10770 = vsub.f32 %v10752, %v10769
    %v10771 = vmul.f32 %v10770, 1.442695
    %v10772 = vpow.pop %v10771
    %v10773 = vsub.f32 %v10768, %v10769
    %v10774 = vmul.f32 %v10773, 1.442695
    %v10775 = vpow.pop %v10774
    %v10776 = vadd.f32 %v10772, %v10775
    %v10777 = vrcp.pop %v10776
    %v10778 = vmul.f32 %v10772, %v10777
    %10780 = vset.pattern.permute.xlu0 0
    %10781 = vperm.xlu0 %10780, %v10778
    %v10782 = vpop.permute.xlu0 %10781
    %v10784 = vmul.f32 %v10782, %v4898
    %v10785 = vmul.f32 %v10782, %v4900
    %v10786 = vmul.f32 %v10782, %v4980
    %v10787 = vmul.f32 %v10782, %v4982
    %v10788 = vmul.f32 %v10775, %v10777
    %10790 = vset.pattern.permute.xlu0 0
    %10791 = vperm.xlu0 %10790, %v10788
    %v10792 = vpop.permute.xlu0 %10791
    %v10794 = vmul.f32 %v10792, %v10620
    %v10795 = vmul.f32 %v10792, %v10622
    %v10796 = vmul.f32 %v10792, %v10702
    %v10797 = vmul.f32 %v10792, %v10704
    %v10798 = vadd.f32 %v10784, %v10794
    %v10799 = vadd.f32 %v10785, %v10795
    %v10800 = vadd.f32 %v10786, %v10796
    %v10801 = vadd.f32 %v10787, %v10797
    %v10802 = vld [vmem:[#allocation17] sm:$0xf]
    %v10803 = vld [vmem:[#allocation17 + $0x4] sm:$0xf]
    %v10804 = vld [vmem:[#allocation17 + $0x8] sm:$0xf]
    %v10805 = vld [vmem:[#allocation17 + $0xc] sm:$0xf]
    %v10806 = vld [vmem:[#allocation17 + $0x10] sm:$0xf]
    %v10807 = vld [vmem:[#allocation17 + $0x14] sm:$0xf]
    %v10808 = vld [vmem:[#allocation17 + $0x18] sm:$0xf]
    %v10809 = vld [vmem:[#allocation17 + $0x1c] sm:$0xf]
    %v10810 = vld [vmem:[#allocation17 + $0x20] sm:$0xf]
    %v10811 = vld [vmem:[#allocation17 + $0x24] sm:$0xf]
    %v10812 = vld [vmem:[#allocation17 + $0x28] sm:$0xf]
    %v10813 = vld [vmem:[#allocation17 + $0x2c] sm:$0xf]
    %v10814 = vld [vmem:[#allocation17 + $0x30] sm:$0xf]
    %v10815 = vld [vmem:[#allocation17 + $0x34] sm:$0xf]
    %v10816 = vld [vmem:[#allocation17 + $0x38] sm:$0xf]
    %v10817 = vld [vmem:[#allocation17 + $0x3c] sm:$0xf]
    %v10818 = vld [vmem:[#allocation17 + $0x40] sm:$0xf]
    %v10819 = vld [vmem:[#allocation17 + $0x44] sm:$0xf]
    %v10820 = vld [vmem:[#allocation17 + $0x48] sm:$0xf]
    %v10821 = vld [vmem:[#allocation17 + $0x4c] sm:$0xf]
    %v10822 = vld [vmem:[#allocation17 + $0x50] sm:$0xf]
    %v10823 = vld [vmem:[#allocation17 + $0x54] sm:$0xf]
    %v10824 = vld [vmem:[#allocation17 + $0x58] sm:$0xf]
    %v10825 = vld [vmem:[#allocation17 + $0x5c] sm:$0xf]
    %v10826 = vld [vmem:[#allocation17 + $0x60] sm:$0xf]
    %v10827 = vld [vmem:[#allocation17 + $0x64] sm:$0xf]
    %v10828 = vld [vmem:[#allocation17 + $0x68] sm:$0xf]
    %v10829 = vld [vmem:[#allocation17 + $0x6c] sm:$0xf]
    %v10830 = vld [vmem:[#allocation17 + $0x70] sm:$0xf]
    %v10831 = vld [vmem:[#allocation17 + $0x74] sm:$0xf]
    %v10832 = vld [vmem:[#allocation17 + $0x78] sm:$0xf]
    %v10833 = vld [vmem:[#allocation17 + $0x7c] sm:$0xf]
    %v10834 = vld [vmem:[#allocation17 + $0x80] sm:$0xf]
    %v10835 = vld [vmem:[#allocation17 + $0x84] sm:$0xf]
    %v10836 = vld [vmem:[#allocation17 + $0x88] sm:$0xf]
    %v10837 = vld [vmem:[#allocation17 + $0x8c] sm:$0xf]
    %v10838 = vld [vmem:[#allocation17 + $0x90] sm:$0xf]
    %v10839 = vld [vmem:[#allocation17 + $0x94] sm:$0xf]
    %v10840 = vld [vmem:[#allocation17 + $0x98] sm:$0xf]
    %v10841 = vld [vmem:[#allocation17 + $0x9c] sm:$0xf]
    %v10842 = vld [vmem:[#allocation17 + $0xa0] sm:$0xf]
    %v10843 = vld [vmem:[#allocation17 + $0xa4] sm:$0xf]
    %v10844 = vld [vmem:[#allocation17 + $0xa8] sm:$0xf]
    %v10845 = vld [vmem:[#allocation17 + $0xac] sm:$0xf]
    %v10846 = vld [vmem:[#allocation17 + $0xb0] sm:$0xf]
    %v10847 = vld [vmem:[#allocation17 + $0xb4] sm:$0xf]
    %v10848 = vld [vmem:[#allocation17 + $0xb8] sm:$0xf]
    %v10849 = vld [vmem:[#allocation17 + $0xbc] sm:$0xf]
    %v10850 = vld [vmem:[#allocation17 + $0xc0] sm:$0xf]
    %v10851 = vld [vmem:[#allocation17 + $0xc4] sm:$0xf]
    %v10852 = vld [vmem:[#allocation17 + $0xc8] sm:$0xf]
    %v10853 = vld [vmem:[#allocation17 + $0xcc] sm:$0xf]
    %v10854 = vld [vmem:[#allocation17 + $0xd0] sm:$0xf]
    %v10855 = vld [vmem:[#allocation17 + $0xd4] sm:$0xf]
    %v10856 = vld [vmem:[#allocation17 + $0xd8] sm:$0xf]
    %v10857 = vld [vmem:[#allocation17 + $0xdc] sm:$0xf]
    %v10858 = vld [vmem:[#allocation17 + $0xe0] sm:$0xf]
    %v10859 = vld [vmem:[#allocation17 + $0xe4] sm:$0xf]
    %v10860 = vld [vmem:[#allocation17 + $0xe8] sm:$0xf]
    %v10861 = vld [vmem:[#allocation17 + $0xec] sm:$0xf]
    %v10862 = vld [vmem:[#allocation17 + $0xf0] sm:$0xf]
    %v10863 = vld [vmem:[#allocation17 + $0xf4] sm:$0xf]
    %v10864 = vld [vmem:[#allocation17 + $0xf8] sm:$0xf]
    %v10865 = vld [vmem:[#allocation17 + $0xfc] sm:$0xf]
    %v10866 = vld [vmem:[#allocation14 + $0x20] sm:$0x1]
    %v10867 = vpack.c.bf16 %v10798, %v10798
    %v10868 = vpack.c.bf16 %v10799, %v10799
    %v10869 = vpack.c.bf16 %v10800, %v10800
    %v10870 = vpack.c.bf16 %v10801, %v10801
    %v10872 = vlaneseq
    %v10873 = vshrl.u32 %v10872, 7
    %v10874 = vsub.s32 0, %v10873
    %v10875 = vrot.slane %v10866, %v10874
    %v10941 = vunpack.c.l.b16 %v10802
    %v10942 = vunpack.c.l.b16 %v10803
    %v10943 = vunpack.c.l.b16 %v10804
    %v10944 = vunpack.c.l.b16 %v10805
    %v10945 = vunpack.c.l.b16 %v10806
    %v10946 = vunpack.c.l.b16 %v10807
    %v10947 = vunpack.c.l.b16 %v10808
    %v10948 = vunpack.c.l.b16 %v10809
    %v10949 = vunpack.c.l.b16 %v10810
    %v10950 = vunpack.c.l.b16 %v10811
    %v10951 = vunpack.c.l.b16 %v10812
    %v10952 = vunpack.c.l.b16 %v10813
    %v10953 = vunpack.c.l.b16 %v10814
    %v10954 = vunpack.c.l.b16 %v10815
    %v10955 = vunpack.c.l.b16 %v10816
    %v10956 = vunpack.c.l.b16 %v10817
    %v10957 = vunpack.c.l.b16 %v10818
    %v10958 = vunpack.c.l.b16 %v10819
    %v10959 = vunpack.c.l.b16 %v10820
    %v10960 = vunpack.c.l.b16 %v10821
    %v10961 = vunpack.c.l.b16 %v10822
    %v10962 = vunpack.c.l.b16 %v10823
    %v10963 = vunpack.c.l.b16 %v10824
    %v10964 = vunpack.c.l.b16 %v10825
    %v10965 = vunpack.c.l.b16 %v10826
    %v10966 = vunpack.c.l.b16 %v10827
    %v10967 = vunpack.c.l.b16 %v10828
    %v10968 = vunpack.c.l.b16 %v10829
    %v10969 = vunpack.c.l.b16 %v10830
    %v10970 = vunpack.c.l.b16 %v10831
    %v10971 = vunpack.c.l.b16 %v10832
    %v10972 = vunpack.c.l.b16 %v10833
    %v10973 = vunpack.c.l.b16 %v10834
    %v10974 = vunpack.c.l.b16 %v10835
    %v10975 = vunpack.c.l.b16 %v10836
    %v10976 = vunpack.c.l.b16 %v10837
    %v10977 = vunpack.c.l.b16 %v10838
    %v10978 = vunpack.c.l.b16 %v10839
    %v10979 = vunpack.c.l.b16 %v10840
    %v10980 = vunpack.c.l.b16 %v10841
    %v10981 = vunpack.c.l.b16 %v10842
    %v10982 = vunpack.c.l.b16 %v10843
    %v10983 = vunpack.c.l.b16 %v10844
    %v10984 = vunpack.c.l.b16 %v10845
    %v10985 = vunpack.c.l.b16 %v10846
    %v10986 = vunpack.c.l.b16 %v10847
    %v10987 = vunpack.c.l.b16 %v10848
    %v10988 = vunpack.c.l.b16 %v10849
    %v10989 = vunpack.c.l.b16 %v10850
    %v10990 = vunpack.c.l.b16 %v10851
    %v10991 = vunpack.c.l.b16 %v10852
    %v10992 = vunpack.c.l.b16 %v10853
    %v10993 = vunpack.c.l.b16 %v10854
    %v10994 = vunpack.c.l.b16 %v10855
    %v10995 = vunpack.c.l.b16 %v10856
    %v10996 = vunpack.c.l.b16 %v10857
    %v10997 = vunpack.c.l.b16 %v10858
    %v10998 = vunpack.c.l.b16 %v10859
    %v10999 = vunpack.c.l.b16 %v10860
    %v11000 = vunpack.c.l.b16 %v10861
    %v11001 = vunpack.c.l.b16 %v10862
    %v11002 = vunpack.c.l.b16 %v10863
    %v11003 = vunpack.c.l.b16 %v10864
    %v11004 = vunpack.c.l.b16 %v10865
    %v11005 = vpack.c.b16 %v10942, %v10941
    %v11006 = vpack.c.b16 %v10944, %v10943
    %v11007 = vpack.c.b16 %v10946, %v10945
    %v11008 = vpack.c.b16 %v10948, %v10947
    %v11009 = vpack.c.b16 %v10950, %v10949
    %v11010 = vpack.c.b16 %v10952, %v10951
    %v11011 = vpack.c.b16 %v10954, %v10953
    %v11012 = vpack.c.b16 %v10956, %v10955
    %v11013 = vpack.c.b16 %v10958, %v10957
    %v11014 = vpack.c.b16 %v10960, %v10959
    %v11015 = vpack.c.b16 %v10962, %v10961
    %v11016 = vpack.c.b16 %v10964, %v10963
    %v11017 = vpack.c.b16 %v10966, %v10965
    %v11018 = vpack.c.b16 %v10968, %v10967
    %v11019 = vpack.c.b16 %v10970, %v10969
    %v11020 = vpack.c.b16 %v10972, %v10971
    %v11021 = vpack.c.b16 %v10974, %v10973
    %v11022 = vpack.c.b16 %v10976, %v10975
    %v11023 = vpack.c.b16 %v10978, %v10977
    %v11024 = vpack.c.b16 %v10980, %v10979
    %v11025 = vpack.c.b16 %v10982, %v10981
    %v11026 = vpack.c.b16 %v10984, %v10983
    %v11027 = vpack.c.b16 %v10986, %v10985
    %v11028 = vpack.c.b16 %v10988, %v10987
    %v11029 = vpack.c.b16 %v10990, %v10989
    %v11030 = vpack.c.b16 %v10992, %v10991
    %v11031 = vpack.c.b16 %v10994, %v10993
    %v11032 = vpack.c.b16 %v10996, %v10995
    %v11033 = vpack.c.b16 %v10998, %v10997
    %v11034 = vpack.c.b16 %v11000, %v10999
    %v11035 = vpack.c.b16 %v11002, %v11001
    %v11036 = vpack.c.b16 %v11004, %v11003
    %11069 = vmatprep.subr.bf16.mxu0 0
    %11070 = vmatpush1.bf16.msra.mxu0 %v11012
    %11071 = vmatprep.subr.bf16.mxu0 0
    %11072 = vmatpush1.bf16.msra.mxu0 %v11011
    %11073 = vmatprep.subr.bf16.mxu0 0
    %11074 = vmatpush1.bf16.msra.mxu0 %v11010
    %11075 = vmatprep.subr.bf16.mxu0 0
    %11076 = vmatpush1.bf16.msra.mxu0 %v11009
    %11077 = vmatprep.subr.bf16.mxu0 0
    %11078 = vmatpush1.bf16.msra.mxu0 %v11008
    %11079 = vmatprep.subr.bf16.mxu0 0
    %11080 = vmatpush1.bf16.msra.mxu0 %v11007
    %11081 = vmatprep.subr.bf16.mxu0 0
    %11082 = vmatpush1.bf16.msra.mxu0 %v11006
    %11083 = vmatprep.subr.bf16.mxu0 0
    %11084 = vmatpush1.bf16.msra.mxu0 %v11005
    %11085 = vmatprep.subr.bf16.mxu0 0
    %11086 = vmatpush2.bf16.msra.mxu0 %v11020
    %11087 = vmatprep.subr.bf16.mxu0 0
    %11088 = vmatpush2.bf16.msra.mxu0 %v11019
    %11089 = vmatprep.subr.bf16.mxu0 0
    %11090 = vmatpush2.bf16.msra.mxu0 %v11018
    %11091 = vmatprep.subr.bf16.mxu0 0
    %11092 = vmatpush2.bf16.msra.mxu0 %v11017
    %11093 = vmatprep.subr.bf16.mxu0 0
    %11094 = vmatpush2.bf16.msra.mxu0 %v11016
    %11095 = vmatprep.subr.bf16.mxu0 0
    %11096 = vmatpush2.bf16.msra.mxu0 %v11015
    %11097 = vmatprep.subr.bf16.mxu0 0
    %11098 = vmatpush2.bf16.msra.mxu0 %v11014
    %11099 = vmatprep.subr.bf16.mxu0 0
    %11100 = vmatpush2.bf16.msra.mxu0 %v11013
    %11101 = vmatprep.mubr.bf16.mxu0 %v10868
    %11102 = vmatmul.mubr.bf16.gmra.mxu0 %v10867
    %v11103 = vpop.f32.mrf.mxu0
    %v11104 = vadd.f32 %v10875, %v11103
    %v11105 = vpop.f32.mrf.mxu0
    %v11106 = vpop.f32.mrf.mxu0
    %v11107 = vpop.f32.mrf.mxu0
    %11108 = vdwg.mxu0
    %11109 = vmatprep.subr.bf16.mxu0 0
    %11110 = vmatpush1.bf16.msra.mxu0 %v11028
    %11111 = vmatprep.subr.bf16.mxu0 0
    %11112 = vmatpush1.bf16.msra.mxu0 %v11027
    %11113 = vmatprep.subr.bf16.mxu0 0
    %11114 = vmatpush1.bf16.msra.mxu0 %v11026
    %11115 = vmatprep.subr.bf16.mxu0 0
    %11116 = vmatpush1.bf16.msra.mxu0 %v11025
    %11117 = vmatprep.subr.bf16.mxu0 0
    %11118 = vmatpush1.bf16.msra.mxu0 %v11024
    %11119 = vmatprep.subr.bf16.mxu0 0
    %11120 = vmatpush1.bf16.msra.mxu0 %v11023
    %11121 = vmatprep.subr.bf16.mxu0 0
    %11122 = vmatpush1.bf16.msra.mxu0 %v11022
    %11123 = vmatprep.subr.bf16.mxu0 0
    %11124 = vmatpush1.bf16.msra.mxu0 %v11021
    %11125 = vmatprep.subr.bf16.mxu0 0
    %11126 = vmatpush2.bf16.msra.mxu0 %v11036
    %11127 = vmatprep.subr.bf16.mxu0 0
    %11128 = vmatpush2.bf16.msra.mxu0 %v11035
    %11129 = vmatprep.subr.bf16.mxu0 0
    %11130 = vmatpush2.bf16.msra.mxu0 %v11034
    %11131 = vmatprep.subr.bf16.mxu0 0
    %11132 = vmatpush2.bf16.msra.mxu0 %v11033
    %11133 = vmatprep.subr.bf16.mxu0 0
    %11134 = vmatpush2.bf16.msra.mxu0 %v11032
    %11135 = vmatprep.subr.bf16.mxu0 0
    %11136 = vmatpush2.bf16.msra.mxu0 %v11031
    %11137 = vmatprep.subr.bf16.mxu0 0
    %11138 = vmatpush2.bf16.msra.mxu0 %v11030
    %11139 = vmatprep.subr.bf16.mxu0 0
    %11140 = vmatpush2.bf16.msra.mxu0 %v11029
    %11141 = vmatprep.mubr.bf16.mxu0 %v10870
    %11142 = vmatmul.mubr.bf16.gmra.mxu0 %v10869
    %v11143 = vpop.f32.mrf.mxu0
    %v11144 = vadd.f32 %v11104, %v11143
    %v11145 = vpop.f32.mrf.mxu0
    %v11146 = vpop.f32.mrf.mxu0
    %v11147 = vpop.f32.mrf.mxu0
    %11148 = vdwg.mxu0
    %v11149 = vmax.f32 %v11144, 0.0
    %v11150 = vld [vmem:[#allocation18] sm:$0xf]
    %v11151 = vld [vmem:[#allocation18 + $0x4] sm:$0xf]
    %v11152 = vld [vmem:[#allocation18 + $0x8] sm:$0xf]
    %v11153 = vld [vmem:[#allocation18 + $0xc] sm:$0xf]
    %v11154 = vld [vmem:[#allocation18 + $0x10] sm:$0xf]
    %v11155 = vld [vmem:[#allocation18 + $0x14] sm:$0xf]
    %v11156 = vld [vmem:[#allocation18 + $0x18] sm:$0xf]
    %v11157 = vld [vmem:[#allocation18 + $0x1c] sm:$0xf]
    %v11158 = vld [vmem:[#allocation18 + $0x20] sm:$0xf]
    %v11159 = vld [vmem:[#allocation18 + $0x24] sm:$0xf]
    %v11160 = vld [vmem:[#allocation18 + $0x28] sm:$0xf]
    %v11161 = vld [vmem:[#allocation18 + $0x2c] sm:$0xf]
    %v11162 = vld [vmem:[#allocation18 + $0x30] sm:$0xf]
    %v11163 = vld [vmem:[#allocation18 + $0x34] sm:$0xf]
    %v11164 = vld [vmem:[#allocation18 + $0x38] sm:$0xf]
    %v11165 = vld [vmem:[#allocation18 + $0x3c] sm:$0xf]
    %v11166 = vld [vmem:[#allocation14 + $0x21] sm:$0x1]
    %v11167 = vpack.c.bf16 %v11149, %v11149
    %v11169 = vlaneseq
    %v11170 = vshrl.u32 %v11169, 7
    %v11171 = vsub.s32 0, %v11170
    %v11172 = vrot.slane %v11166, %v11171
    %v11190 = vunpack.c.l.b16 %v11150
    %v11191 = vunpack.c.l.b16 %v11151
    %v11192 = vunpack.c.l.b16 %v11152
    %v11193 = vunpack.c.l.b16 %v11153
    %v11194 = vunpack.c.l.b16 %v11154
    %v11195 = vunpack.c.l.b16 %v11155
    %v11196 = vunpack.c.l.b16 %v11156
    %v11197 = vunpack.c.l.b16 %v11157
    %v11198 = vunpack.c.l.b16 %v11158
    %v11199 = vunpack.c.l.b16 %v11159
    %v11200 = vunpack.c.l.b16 %v11160
    %v11201 = vunpack.c.l.b16 %v11161
    %v11202 = vunpack.c.l.b16 %v11162
    %v11203 = vunpack.c.l.b16 %v11163
    %v11204 = vunpack.c.l.b16 %v11164
    %v11205 = vunpack.c.l.b16 %v11165
    %v11206 = vpack.c.b16 %v11191, %v11190
    %v11207 = vpack.c.b16 %v11193, %v11192
    %v11208 = vpack.c.b16 %v11195, %v11194
    %v11209 = vpack.c.b16 %v11197, %v11196
    %v11210 = vpack.c.b16 %v11199, %v11198
    %v11211 = vpack.c.b16 %v11201, %v11200
    %v11212 = vpack.c.b16 %v11203, %v11202
    %v11213 = vpack.c.b16 %v11205, %v11204
    %11222 = vmatprep.subr.bf16.mxu0 0
    %11223 = vmatpush1.bf16.msra.mxu0 %v11213
    %11224 = vmatprep.subr.bf16.mxu0 0
    %11225 = vmatpush1.bf16.msra.mxu0 %v11212
    %11226 = vmatprep.subr.bf16.mxu0 0
    %11227 = vmatpush1.bf16.msra.mxu0 %v11211
    %11228 = vmatprep.subr.bf16.mxu0 0
    %11229 = vmatpush1.bf16.msra.mxu0 %v11210
    %11230 = vmatprep.subr.bf16.mxu0 0
    %11231 = vmatpush1.bf16.msra.mxu0 %v11209
    %11232 = vmatprep.subr.bf16.mxu0 0
    %11233 = vmatpush1.bf16.msra.mxu0 %v11208
    %11234 = vmatprep.subr.bf16.mxu0 0
    %11235 = vmatpush1.bf16.msra.mxu0 %v11207
    %11236 = vmatprep.subr.bf16.mxu0 0
    %11237 = vmatpush1.bf16.msra.mxu0 %v11206
    %11238 = vmatprep.subr.bf16.mxu0 0
    %11239 = vmatpush2.bf16.msra.mxu0 0
    %11240 = vmatprep.subr.bf16.mxu0 0
    %11241 = vmatpush2.bf16.msra.mxu0 0
    %11242 = vmatprep.subr.bf16.mxu0 0
    %11243 = vmatpush2.bf16.msra.mxu0 0
    %11244 = vmatprep.subr.bf16.mxu0 0
    %11245 = vmatpush2.bf16.msra.mxu0 0
    %11246 = vmatprep.subr.bf16.mxu0 0
    %11247 = vmatpush2.bf16.msra.mxu0 0
    %11248 = vmatprep.subr.bf16.mxu0 0
    %11249 = vmatpush2.bf16.msra.mxu0 0
    %11250 = vmatprep.subr.bf16.mxu0 0
    %11251 = vmatpush2.bf16.msra.mxu0 0
    %11252 = vmatprep.subr.bf16.mxu0 0
    %11253 = vmatpush2.bf16.msra.mxu0 0
    %11254 = vmatprep.mubr.bf16.mxu0 0
    %11255 = vmatmul.mubr.bf16.gmra.mxu0 %v11167
    %v11256 = vpop.f32.mrf.mxu0
    %v11257 = vadd.f32 %v11172, %v11256
    %v11258 = vpop.f32.mrf.mxu0
    %v11259 = vpop.f32.mrf.mxu0
    %v11260 = vpop.f32.mrf.mxu0
    %11261 = vdwg.mxu0
    %v11262 = vmax.f32 %v11257, 0.0
    %v11263 = vld [vmem:[#allocation20] sm:$0xf]
    %v11264 = vld [vmem:[#allocation20 + $0x4] sm:$0xf]
    %v11265 = vld [vmem:[#allocation20 + $0x8] sm:$0xf]
    %v11266 = vld [vmem:[#allocation20 + $0xc] sm:$0xf]
    %v11267 = vld [vmem:[#allocation20 + $0x10] sm:$0xf]
    %v11268 = vld [vmem:[#allocation20 + $0x14] sm:$0xf]
    %v11269 = vld [vmem:[#allocation20 + $0x18] sm:$0xf]
    %v11270 = vld [vmem:[#allocation20 + $0x1c] sm:$0xf]
    %v11271 = vld [vmem:[#allocation20 + $0x20] sm:$0xf]
    %v11272 = vld [vmem:[#allocation20 + $0x24] sm:$0xf]
    %v11273 = vld [vmem:[#allocation20 + $0x28] sm:$0xf]
    %v11274 = vld [vmem:[#allocation20 + $0x2c] sm:$0xf]
    %v11275 = vld [vmem:[#allocation20 + $0x30] sm:$0xf]
    %v11276 = vld [vmem:[#allocation20 + $0x34] sm:$0xf]
    %v11277 = vld [vmem:[#allocation20 + $0x38] sm:$0xf]
    %v11278 = vld [vmem:[#allocation20 + $0x3c] sm:$0xf]
    %v11279 = vld [vmem:[#allocation14 + $0x22] sm:$0x1]
    %v11280 = vpack.c.bf16 %v11262, %v11262
    %v11282 = vlaneseq
    %v11283 = vshrl.u32 %v11282, 7
    %v11284 = vsub.s32 0, %v11283
    %v11285 = vrot.slane %v11279, %v11284
    %v11303 = vunpack.c.l.b16 %v11263
    %v11304 = vunpack.c.l.b16 %v11264
    %v11305 = vunpack.c.l.b16 %v11265
    %v11306 = vunpack.c.l.b16 %v11266
    %v11307 = vunpack.c.l.b16 %v11267
    %v11308 = vunpack.c.l.b16 %v11268
    %v11309 = vunpack.c.l.b16 %v11269
    %v11310 = vunpack.c.l.b16 %v11270
    %v11311 = vunpack.c.l.b16 %v11271
    %v11312 = vunpack.c.l.b16 %v11272
    %v11313 = vunpack.c.l.b16 %v11273
    %v11314 = vunpack.c.l.b16 %v11274
    %v11315 = vunpack.c.l.b16 %v11275
    %v11316 = vunpack.c.l.b16 %v11276
    %v11317 = vunpack.c.l.b16 %v11277
    %v11318 = vunpack.c.l.b16 %v11278
    %v11319 = vpack.c.b16 %v11304, %v11303
    %v11320 = vpack.c.b16 %v11306, %v11305
    %v11321 = vpack.c.b16 %v11308, %v11307
    %v11322 = vpack.c.b16 %v11310, %v11309
    %v11323 = vpack.c.b16 %v11312, %v11311
    %v11324 = vpack.c.b16 %v11314, %v11313
    %v11325 = vpack.c.b16 %v11316, %v11315
    %v11326 = vpack.c.b16 %v11318, %v11317
    %11335 = vmatprep.subr.bf16.mxu0 0
    %11336 = vmatpush1.bf16.msra.mxu0 %v11326
    %11337 = vmatprep.subr.bf16.mxu0 0
    %11338 = vmatpush1.bf16.msra.mxu0 %v11325
    %11339 = vmatprep.subr.bf16.mxu0 0
    %11340 = vmatpush1.bf16.msra.mxu0 %v11324
    %11341 = vmatprep.subr.bf16.mxu0 0
    %11342 = vmatpush1.bf16.msra.mxu0 %v11323
    %11343 = vmatprep.subr.bf16.mxu0 0
    %11344 = vmatpush1.bf16.msra.mxu0 %v11322
    %11345 = vmatprep.subr.bf16.mxu0 0
    %11346 = vmatpush1.bf16.msra.mxu0 %v11321
    %11347 = vmatprep.subr.bf16.mxu0 0
    %11348 = vmatpush1.bf16.msra.mxu0 %v11320
    %11349 = vmatprep.subr.bf16.mxu0 0
    %11350 = vmatpush1.bf16.msra.mxu0 %v11319
    %11351 = vmatprep.subr.bf16.mxu0 0
    %11352 = vmatpush2.bf16.msra.mxu0 0
    %11353 = vmatprep.subr.bf16.mxu0 0
    %11354 = vmatpush2.bf16.msra.mxu0 0
    %11355 = vmatprep.subr.bf16.mxu0 0
    %11356 = vmatpush2.bf16.msra.mxu0 0
    %11357 = vmatprep.subr.bf16.mxu0 0
    %11358 = vmatpush2.bf16.msra.mxu0 0
    %11359 = vmatprep.subr.bf16.mxu0 0
    %11360 = vmatpush2.bf16.msra.mxu0 0
    %11361 = vmatprep.subr.bf16.mxu0 0
    %11362 = vmatpush2.bf16.msra.mxu0 0
    %11363 = vmatprep.subr.bf16.mxu0 0
    %11364 = vmatpush2.bf16.msra.mxu0 0
    %11365 = vmatprep.subr.bf16.mxu0 0
    %11366 = vmatpush2.bf16.msra.mxu0 0
    %11367 = vmatprep.mubr.bf16.mxu0 0
    %11368 = vmatmul.mubr.bf16.gmra.mxu0 %v11280
    %v11369 = vpop.f32.mrf.mxu0
    %v11370 = vadd.f32 %v11285, %v11369
    %v11371 = vpop.f32.mrf.mxu0
    %v11372 = vpop.f32.mrf.mxu0
    %v11373 = vpop.f32.mrf.mxu0
    %11374 = vdwg.mxu0
    %11375 = vst [vmem:[%s13] sm:$0xff] %v11370
    %11376 = vst [vmem:[#allocation21] sm:$0xff] %v10798
    %11377 = vst [vmem:[#allocation21 + $0x8] sm:$0xff] %v10799
    %11378 = vst [vmem:[#allocation21 + $0x10] sm:$0xff] %v10800
    %11379 = vst [vmem:[#allocation21 + $0x18] sm:$0xff] %v10801
    %11380 = vst [vmem:[#allocation22] sm:$0xff] %v4898
    %11381 = vst [vmem:[#allocation22 + $0x8] sm:$0xff] %v4900
    %11382 = vst [vmem:[#allocation22 + $0x10] sm:$0xff] %v4980
    %11383 = vst [vmem:[#allocation22 + $0x18] sm:$0xff] %v4982
    %11384 = vst [vmem:[#allocation24] sm:$0xff] %v10620
    %11385 = vst [vmem:[#allocation24 + $0x8] sm:$0xff] %v10622
    %11386 = vst [vmem:[#allocation24 + $0x10] sm:$0xff] %v10702
    %11387 = vst [vmem:[#allocation24 + $0x18] sm:$0xff] %v10704
    // Predicated region
    $region82: #{teacher_model2_forward.1} parent=1 // pred_check
      _
    $region83: #{teacher_model2_forward.1} parent=1 // pred_check_branch
      %11389 = sbr.rel (0) target = $region85
    $region84: #{teacher_model2_forward.1} parent=1 // pred_region
      _
    $region85: #{teacher_model2_forward.1} parent=1 // pred_fallthru
      _
    // Predicated region
    $region86: #{teacher_model2_forward.1} parent=1 // pred_check
      _
    $region87: #{teacher_model2_forward.1} parent=1 // pred_check_branch
      %11391 = sbr.rel (0) target = $region89
    $region88: #{teacher_model2_forward.1} parent=1 // pred_region
      %s11393 = ssub.s32 512, 512
      %11394 = vsyncadd [#allocation11], %s11393
      %s11396 = sshll.u32 [#allocation21], 4
      %s11397 = int_to_ptr.vmem [resolvable:$true] %s11396
      %11399 = dma.vmem_to_hbm [thread:$0]  %s11397, 512, %s14, [#allocation11]
    $region89: #{teacher_model2_forward.1} parent=1 // pred_fallthru
      _
    // Predicated region
    $region90: #{teacher_model2_forward.1} parent=1 // pred_check
      _
    $region91: #{teacher_model2_forward.1} parent=1 // pred_check_branch
      %11401 = sbr.rel (0) target = $region93
    $region92: #{teacher_model2_forward.1} parent=1 // pred_region
      %s11403 = ssub.s32 512, 512
      %11404 = vsyncadd [#allocation23], %s11403
      %s11406 = sshll.u32 [#allocation22], 4
      %s11407 = int_to_ptr.vmem [resolvable:$true] %s11406
      %11409 = dma.vmem_to_hbm [thread:$0]  %s11407, 512, %s15, [#allocation23]
    $region93: #{teacher_model2_forward.1} parent=1 // pred_fallthru
      _
    // Predicated region
    $region94: #{teacher_model2_forward.1} parent=1 // pred_check
      _
    $region95: #{teacher_model2_forward.1} parent=1 // pred_check_branch
      %11411 = sbr.rel (0) target = $region97
    $region96: #{teacher_model2_forward.1} parent=1 // pred_region
      %s11413 = ssub.s32 512, 512
      %11414 = vsyncadd [#allocation23], %s11413
      %s11416 = sshll.u32 [#allocation24], 4
      %s11417 = int_to_ptr.vmem [resolvable:$true] %s11416
      %11419 = dma.vmem_to_hbm [thread:$0]  %s11417, 512, %s16, [#allocation23]
    $region97: #{teacher_model2_forward.1} parent=1 // pred_fallthru
      _
    // Predicated region
    $region98: #{teacher_model2_forward.1} parent=1 // pred_check
      _
    $region99: #{teacher_model2_forward.1} parent=1 // pred_check_branch
      %11421 = sbr.rel (0) target = $region101
    $region100: #{teacher_model2_forward.1} parent=1 // pred_region
      _
    $region101: #{teacher_model2_forward.1} parent=1 // pred_fallthru
      _
    // Predicated region
    $region102: #{teacher_model2_forward.1} parent=1 // pred_check
      _
    $region103: #{teacher_model2_forward.1} parent=1 // pred_check_branch
      %11423 = sbr.rel (0) target = $region105
    $region104: #{teacher_model2_forward.1} parent=1 // pred_region
      %11424 = dma.done [#allocation11], 512
    $region105: #{teacher_model2_forward.1} parent=1 // pred_fallthru
      _
    // Predicated region
    $region106: #{teacher_model2_forward.1} parent=1 // pred_check
      _
    $region107: #{teacher_model2_forward.1} parent=1 // pred_check_branch
      %11426 = sbr.rel (0) target = $region109
    $region108: #{teacher_model2_forward.1} parent=1 // pred_region
      %11427 = dma.done [#allocation23], 512
    $region109: #{teacher_model2_forward.1} parent=1 // pred_fallthru
      _
    // Predicated region
    $region110: #{teacher_model2_forward.1} parent=1 // pred_check
      _
    $region111: #{teacher_model2_forward.1} parent=1 // pred_check_branch
      %11429 = sbr.rel (0) target = $region113
    $region112: #{teacher_model2_forward.1} parent=1 // pred_region
      %11430 = dma.done [#allocation23], 512
    $region113: #{teacher_model2_forward.1} parent=1 // pred_fallthru
      _
    %11431 = vsyncpa [#allocation10], 1
    %11432 = vsyncpa [#allocation13], 1
    %11433 = vsyncpa [#allocation16], 1
    %11434 = vsyncpa [#allocation19], 1
    %11435 = vsyncpa [#allocation11], 1
    %11436 = vsyncpa [#allocation23], 1
  %11437 = vsyncmov [#allocation8]
  %s11438 = vpop.sfrf %11437
  %p11439 = scmp.eq.s32.totalorder %s11438, 0
  %p11440 = pneg %p11439
  %11442 = shalt.err (%p11440)
  %s11443 = scalar_lea.sflag [#allocation8], 1
  %11444 = vsyncmov %s11443
  %s11445 = vpop.sfrf %11444
  %p11446 = scmp.eq.s32.totalorder %s11445, 0
  %p11447 = pneg %p11446
  %11449 = shalt.err (%p11447)
  %s11450 = scalar_lea.sflag [#allocation8], 2
  %11451 = vsyncmov %s11450
  %s11452 = vpop.sfrf %11451
  %p11453 = scmp.eq.s32.totalorder %s11452, 0
  %p11454 = pneg %p11453
  %11456 = shalt.err (%p11454)
  %s11457 = scalar_lea.sflag [#allocation8], 3
  %11458 = vsyncmov %s11457
  %s11459 = vpop.sfrf %11458
  %p11460 = scmp.eq.s32.totalorder %s11459, 0
  %p11461 = pneg %p11460
  %11463 = shalt.err (%p11461)
  %s11464 = scalar_lea.sflag [#allocation8], 4
  %11465 = vsyncmov %s11464
  %s11466 = vpop.sfrf %11465
  %p11467 = scmp.eq.s32.totalorder %s11466, 0
  %p11468 = pneg %p11467
  %11470 = shalt.err (%p11468)
  %s11471 = scalar_lea.sflag [#allocation8], 5
  %11472 = vsyncmov %s11471
  %s11473 = vpop.sfrf %11472
  %p11474 = scmp.eq.s32.totalorder %s11473, 0
  %p11475 = pneg %p11474
  %11477 = shalt.err (%p11475)

</llo_original>
